<compile_context>
chip_gen: v7x
topology: tpu7x:2x2x1
jax: 0.10.0
libtpu: 0.0.40
codegen_flags: <defaults>
</compile_context>

<pallas_src>
import jax
import jax.numpy as jnp
from jax.experimental import pallas as pl
from jax.experimental.pallas import tpu as pltpu


# ----------------------------------------------------------------------------
# Fused kernel: conv branch + dconv branch + BAM attention + final combine
# ----------------------------------------------------------------------------
def _make_fused_kernel(B, C, CP, H, W, OF, P, Wc, S_img, G, N, dil_table):
    def kernel(mask_ref, xc_ref, xf_ref, x3_ref, w_ref, b_ref, wqkb_ref,
               wql_ref, wkl_ref, bq_ref, bk_ref, ws_ref, bs_ref, gamma_ref,
               o_ref, buf_ref, taps_ref, v_ref, v3_ref):
        x = xc_ref[...]            # (CP, N)   zero-padded flat canvas (lane dense)
        m = mask_ref[...]          # (1, N)    1.0 at valid pixels, 0.0 at padding
        w_all = w_ref[...]         # (2, 3, CP, 9*CP)  packed weights (BN scale folded)
        b_all = b_ref[...]         # (2, 3, CP, 1)     folded bias

        # Guard-padded staging buffer: zero once, guard lanes stay zero and
        # provide the conv zero-padding in-kernel (no host jnp.pad per layer).
        buf_ref[...] = jnp.zeros((CP, N + 2 * G), jnp.float32)

        def run_branch(br, dils):
            y = x
            for l, d in enumerate(dils):
                buf_ref[:, G:G + N] = y
                # Stack the 9 dilated taps -> one K = 9*CP dot per layer.
                for kh in range(3):
                    for kw in range(3):
                        t = kh * 3 + kw
                        off = (kh - 1) * d * Wc + (kw - 1) * d
                        taps_ref[t * CP:(t + 1) * CP, :] = \
                            buf_ref[:, G + off:G + off + N]
                acc = jnp.dot(w_all[br, l], taps_ref[...],
                              preferred_element_type=jnp.float32)   # (CP, N)
                # conv bias + BN folded into bias; ReLU; re-zero padding lanes
                # so the next (dilated) layer reads zeros there.
                y = jnp.maximum(acc + b_all[br, l], 0.0) * m
            return y

        # v = Conv(x) + DConv(x), kept in VMEM in canvas layout.
        v_ref[...] = run_branch(0, dil_table[0])
        v_ref[...] = v_ref[...] + run_branch(1, dil_table[1])

        # canvas -> compact (B*C, H, W) for the attention matmul / residuals.
        for b in range(B):
            base = b * S_img + P * Wc + P
            for h in range(H):
                v3_ref[b * C:(b + 1) * C, h:h + 1, :] = \
                    v_ref[:C, base + h * Wc: base + h * Wc + W][:, None, :]

        # ------------------- BAM attention + final combine ------------------
        xf = xf_ref[...]                                        # (B*C, HW) lane dense
        # Both 1x1 convs (C -> 1), query & key, both images: one block dot.
        qk = jnp.dot(wqkb_ref[...], xf,
                     preferred_element_type=jnp.float32)        # (2B, HW)
        # query/key Linear layers batched over images (1x1-conv scalar biases
        # folded into bq/bk host-side).  No wasted merged columns.
        qv = jnp.dot(qk[:B], wql_ref[...],
                     preferred_element_type=jnp.float32) + bq_ref[...]   # (B, OF)
        kv = jnp.dot(qk[B:], wkl_ref[...],
                     preferred_element_type=jnp.float32) + bk_ref[...]   # (B, OF)

        ws = ws_ref[...]                                        # (C, 1, 1)
        bs = bs_ref[...]                                        # (C, 1, 1)
        gamma = gamma_ref[0]

        for b in range(B):
            q_b = qv[b:b + 1]                                   # (1, OF)
            k_b = kv[b:b + 1]                                   # (1, OF)
            att0 = q_b[:, :, None] * k_b[:, None, :]            # (1, OF, OF)
            s = ws * att0 + bs                                  # (C, OF, OF)
            # exact softmax(dim=-1), batched over channels (review fidelity note)
            mx = jnp.max(s, axis=-1, keepdims=True)
            e = jnp.exp(s - mx)
            patt = e / jnp.sum(e, axis=-1, keepdims=True)       # (C, OF, OF)
            v_b = v3_ref[b * C:(b + 1) * C]                     # (C, H, W)
            out_b = jnp.einsum('cij,cjw->ciw', patt, v_b,
                               preferred_element_type=jnp.float32)  # (C, OF, W)
            o_ref[b * C:(b + 1) * C, :, :] = (
                gamma * out_b + v_b + x3_ref[b * C:(b + 1) * C])

    return kernel


def fused_conv_attention(mask, x_canvas, x_flat, x3, w_all, b_all, wqk_blk,
                         wql, wkl, bq_fold, bk_fold, ws3, bs3, gamma,
                         *, B, C, CP, H, W, P, Wc, S_img, G, dil_table):
    N = x_canvas.shape[1]
    OF = wql.shape[1]
    kernel = _make_fused_kernel(B, C, CP, H, W, OF, P, Wc, S_img, G, N,
                                dil_table)
    vmem = pl.BlockSpec(memory_space=pltpu.MemorySpace.VMEM)
    smem = pl.BlockSpec(memory_space=pltpu.MemorySpace.SMEM)
    return pl.pallas_call(
        kernel,
        out_shape=jax.ShapeDtypeStruct((B * C, H, W), jnp.float32),
        in_specs=[vmem] * 13 + [smem],
        out_specs=vmem,
        scratch_shapes=[
            pltpu.VMEM((CP, N + 2 * G), jnp.float32),   # guard-padded layer input
            pltpu.VMEM((9 * CP, N), jnp.float32),       # stacked conv taps
            pltpu.VMEM((CP, N), jnp.float32),           # v in canvas layout
            pltpu.VMEM((B * C, H, W), jnp.float32),     # v in compact layout
        ],
    )(mask, x_canvas, x_flat, x3, w_all, b_all, wqk_blk, wql, wkl,
      bq_fold, bk_fold, ws3, bs3, gamma)


# ----------------------------------------------------------------------------
# Full ConvAttention forward
# ----------------------------------------------------------------------------
def conv_attention_forward(x, p, eps=1e-5):
    B, C, H, W = x.shape
    HW = H * W
    OF = p['wql'].shape[1]
    # The module's shape algebra (att @ v + residual add) requires these.
    assert p['wql'].shape[0] == HW, "in_feature must equal H*W"
    assert OF == H, "out_feature must equal H"

    dil_conv = tuple(lp['d'] for lp in p['conv'])
    dil_dconv = tuple(lp['d'] for lp in p['dconv'])
    P = max(max(dil_conv), max(dil_dconv))
    Hc, Wc = H + 2 * P, W + 2 * P
    S_img = pl.cdiv(Hc * Wc, 128) * 128          # per-image canvas slot (lane aligned)
    N = B * S_img
    G = pl.cdiv(P * (Wc + 1), 128) * 128         # guard lanes (>= max tap shift)
    CP = ((C + 7) // 8) * 8                      # channels padded to sublanes
    # Guard/halo safety (review correctness concern): max tap shift must fit in
    # the guard region and a padded image must fit in its canvas slot.
    assert P * (Wc + 1) <= G and Hc * Wc <= S_img

    # ---------------- host-side layout prep (tiny, one-time) ----------------
    xpad = jnp.pad(x, ((0, 0), (0, 0), (P, P), (P, P)))          # (B,C,Hc,Wc)
    xflat = jnp.pad(xpad.reshape(B, C, Hc * Wc),
                    ((0, 0), (0, 0), (0, S_img - Hc * Wc)))
    x_canvas = xflat.transpose(1, 0, 2).reshape(C, N)
    x_canvas = jnp.pad(x_canvas, ((0, CP - C), (0, 0)))          # (CP, N)

    mrow = jnp.pad(jnp.ones((H, W), jnp.float32), ((P, P), (P, P)))
    mrow = jnp.pad(mrow.reshape(1, Hc * Wc), ((0, 0), (0, S_img - Hc * Wc)))
    mask = jnp.tile(mrow, (1, B))                                # (1, N)

    # Conv weights packed for the stacked-tap dot, BN scale folded into them.
    def fold_branch(branch):
        ws_, bs_ = [], []
        for lp in branch:
            scale = lp['bn_g'] / jnp.sqrt(lp['bn_v'] + eps)
            bias = (lp['b'] - lp['bn_m']) * scale + lp['bn_b']
            wt = jnp.transpose(lp['w'], (0, 2, 3, 1)).reshape(C, 9, C)
            wt = wt * scale[:, None, None]                       # fold BN scale
            wt = jnp.pad(wt, ((0, CP - C), (0, 0), (0, CP - C)))
            ws_.append(wt.reshape(CP, 9 * CP))                   # col = t*CP + cin
            bs_.append(jnp.pad(bias.reshape(C, 1), ((0, CP - C), (0, 0))))
        return jnp.stack(ws_), jnp.stack(bs_)

    wA, bA = fold_branch(p['conv'])
    wB_, bB = fold_branch(p['dconv'])
    w_all = jnp.stack([wA, wB_])         # (2, 3, CP, 9*CP)
    b_all = jnp.stack([bA, bB])          # (2, 3, CP, 1)

    # ---------------- BAM parameters ----------------------------------------
    x_flat = x.reshape(B * C, HW)                                # lane dense
    x3 = x.reshape(B * C, H, W)
    # Block weight so ONE dot applies both 1x1 convs to both images:
    #   rows [0, B): query conv, rows [B, 2B): key conv.
    wqk_blk = jnp.zeros((2 * B, B * C), jnp.float32)
    for b in range(B):
        wqk_blk = wqk_blk.at[b, b * C:(b + 1) * C].set(p['wq'])
        wqk_blk = wqk_blk.at[B + b, b * C:(b + 1) * C].set(p['wk'])
    # Fold the 1x1-conv scalar biases through the Linear layers.
    bq_fold = p['bql'] + p['bq'][0] * jnp.sum(p['wql'], axis=0, keepdims=True)
    bk_fold = p['bkl'] + p['bk'][0] * jnp.sum(p['wkl'], axis=0, keepdims=True)

    out3 = fused_conv_attention(
        mask, x_canvas, x_flat, x3, w_all, b_all, wqk_blk,
        p['wql'], p['wkl'], bq_fold, bk_fold,
        p['ws'].reshape(C, 1, 1), p['bs'].reshape(C, 1, 1), p['gamma'],
        B=B, C=C, CP=CP, H=H, W=W, P=P, Wc=Wc, S_img=S_img, G=G,
        dil_table=(dil_conv, dil_dconv))                         # (B*C, H, W)
    return out3.reshape(B, C, H, W)


# ----------------------------------------------------------------------------
# Parameters (deterministic, synthetic)
# ----------------------------------------------------------------------------
def init_params(key, in_dim, in_feature, out_feature):
    keys = iter(jax.random.split(key, 64))

    def nrm(shape, scale=0.15):
        return scale * jax.random.normal(next(keys), shape, jnp.float32)

    def crb_params(d):
        return dict(
            w=nrm((in_dim, in_dim, 3, 3)),
            b=nrm((in_dim,), 0.05),
            bn_g=1.0 + 0.1 * jax.random.normal(next(keys), (in_dim,), jnp.float32),
            bn_b=nrm((in_dim,), 0.05),
            bn_m=nrm((in_dim,), 0.05),
            bn_v=jax.random.uniform(next(keys), (in_dim,), jnp.float32, 0.5, 1.5),
            d=d,
        )

    return dict(
        conv=[crb_params(1) for _ in range(3)],
        dconv=[crb_params(d) for d in (2, 4, 2)],
        wq=nrm((in_dim,)), bq=nrm((1,), 0.05),
        wk=nrm((in_dim,)), bk=nrm((1,), 0.05),
        # nn.Linear weights stored as (in_features, out_features) = W^T.
        wql=nrm((in_feature, out_feature), 0.05), bql=nrm((1, out_feature), 0.05),
        wkl=nrm((in_feature, out_feature), 0.05), bkl=nrm((1, out_feature), 0.05),
        ws=nrm((in_dim,)), bs=nrm((in_dim,), 0.05),
        # Module inits gamma=0; use a nonzero value so the attention branch
        # actually contributes numerically to the test.
        gamma=jnp.array([0.5], jnp.float32),
    )


# ----------------------------------------------------------------------------
# Pure-JAX reference (for correctness check)
# ----------------------------------------------------------------------------
def ref_forward(x, p, eps=1e-5):
    HIGH = jax.lax.Precision.HIGHEST

    def crb(y, lp):
        d = lp['d']
        z = jax.lax.conv_general_dilated(
            y, lp['w'], (1, 1), ((d, d), (d, d)), rhs_dilation=(d, d),
            dimension_numbers=('NCHW', 'OIHW', 'NCHW'), precision=HIGH)
        z = z + lp['b'][None, :, None, None]
        z = (z - lp['bn_m'][None, :, None, None]) / jnp.sqrt(
            lp['bn_v'][None, :, None, None] + eps)
        z = z * lp['bn_g'][None, :, None, None] + lp['bn_b'][None, :, None, None]
        return jnp.maximum(z, 0.0)

    q = x
    for lp in p['conv']:
        q = crb(q, lp)
    k = x
    for lp in p['dconv']:
        k = crb(k, lp)
    v = q + k

    B, C, H, W = x.shape
    qc = jnp.einsum('bchw,c->bhw', x, p['wq'], precision=HIGH) + p['bq'][0]
    kc = jnp.einsum('bchw,c->bhw', x, p['wk'], precision=HIGH) + p['bk'][0]
    qv = jnp.dot(qc.reshape(B, -1), p['wql'], precision=HIGH) + p['bql']
    kv = jnp.dot(kc.reshape(B, -1), p['wkl'], precision=HIGH) + p['bkl']
    att0 = qv[:, :, None] * kv[:, None, :]                       # (B, OF, OF)
    s = p['ws'][None, :, None, None] * att0[:, None, :, :] + \
        p['bs'][None, :, None, None]
    att = jax.nn.softmax(s, axis=-1)                             # (B, C, OF, OF)
    out = jnp.einsum('bcij,bcjw->bciw', att, v, precision=HIGH)
    return p['gamma'][0] * out + v + x


# ----------------------------------------------------------------------------
if __name__ == "__main__":
    B, C, H, W = 2, 4, 16, 16
    # The module's shape algebra requires in_feature = H*W and out_feature = H.
    in_feature, out_feature = H * W, H

    key = jax.random.PRNGKey(0)
    kx, kp = jax.random.split(key)
    x = jax.random.normal(kx, (B, C, H, W), jnp.float32)
    params = init_params(kp, C, in_feature, out_feature)

    fwd = jax.jit(lambda xx: conv_attention_forward(xx, params))
    out = jax.block_until_ready(fwd(x))
    ref = jax.block_until_ready(ref_forward(x, params))

    assert out.shape == (B, C, H, W)
    if not bool(jnp.allclose(out, ref, rtol=5e-2, atol=5e-2)):
        raise AssertionError(
            f"mismatch vs reference, max abs err = {jnp.max(jnp.abs(out - ref))}")
    print("KERNEL_OK")
</pallas_src>

<mosaic_0001>
module attributes {stable_mosaic.version = 11 : i64} {
  func.func @kernel(%arg0: memref<1x1280xf32, #tpu.memory_space<vmem>>, %arg1: memref<8x1280xf32, #tpu.memory_space<vmem>>, %arg2: memref<8x256xf32, #tpu.memory_space<vmem>>, %arg3: memref<8x16x16xf32, #tpu.memory_space<vmem>>, %arg4: memref<2x3x8x72xf32, #tpu.memory_space<vmem>>, %arg5: memref<2x3x8x1xf32, #tpu.memory_space<vmem>>, %arg6: memref<4x8xf32, #tpu.memory_space<vmem>>, %arg7: memref<256x16xf32, #tpu.memory_space<vmem>>, %arg8: memref<256x16xf32, #tpu.memory_space<vmem>>, %arg9: memref<1x16xf32, #tpu.memory_space<vmem>>, %arg10: memref<1x16xf32, #tpu.memory_space<vmem>>, %arg11: memref<4x1x1xf32, #tpu.memory_space<vmem>>, %arg12: memref<4x1x1xf32, #tpu.memory_space<vmem>>, %arg13: memref<1xf32, #tpu.memory_space<smem>>, %arg14: memref<8x16x16xf32, #tpu.memory_space<vmem>>, %arg15: memref<8x1536xf32, #tpu.memory_space<vmem>>, %arg16: memref<72x1280xf32, #tpu.memory_space<vmem>>, %arg17: memref<8x1280xf32, #tpu.memory_space<vmem>>, %arg18: memref<8x16x16xf32, #tpu.memory_space<vmem>>) attributes {dimension_semantics = [], scalar_prefetch = 0 : i64, scratch_operands = 4 : i64, tpu.core_type = #tpu.core_type<tc>} {
    %c0 = arith.constant 0 : index
    %c0_0 = arith.constant 0 : index
    %0 = vector.load %arg1[%c0, %c0_0] : memref<8x1280xf32, #tpu.memory_space<vmem>>, vector<8x1280xf32>
    %c0_1 = arith.constant 0 : index
    %c0_2 = arith.constant 0 : index
    %1 = vector.load %arg0[%c0_1, %c0_2] : memref<1x1280xf32, #tpu.memory_space<vmem>>, vector<1x1280xf32>
    %c0_3 = arith.constant 0 : index
    %c0_4 = arith.constant 0 : index
    %c0_5 = arith.constant 0 : index
    %c0_6 = arith.constant 0 : index
    %2 = vector.load %arg4[%c0_3, %c0_4, %c0_5, %c0_6] : memref<2x3x8x72xf32, #tpu.memory_space<vmem>>, vector<2x3x8x72xf32>
    %c0_7 = arith.constant 0 : index
    %c0_8 = arith.constant 0 : index
    %c0_9 = arith.constant 0 : index
    %c0_10 = arith.constant 0 : index
    %3 = vector.load %arg5[%c0_7, %c0_8, %c0_9, %c0_10] : memref<2x3x8x1xf32, #tpu.memory_space<vmem>>, vector<2x3x8x1xf32>
    %cst = arith.constant 0.000000e+00 : f32
    %4 = vector.broadcast %cst : f32 to vector<8x1536xf32>
    %c0_11 = arith.constant 0 : index
    %c0_12 = arith.constant 0 : index
    %5 = vector.load %arg15[%c0_11, %c0_12] : memref<8x1536xf32, #tpu.memory_space<vmem>>, vector<8x1536xf32>
    tpu.vector_store %arg15[%c0_11, %c0_12], %4 {strides = array<i32>} : memref<8x1536xf32, #tpu.memory_space<vmem>>, vector<8x1536xf32>,
    %c0_13 = arith.constant 0 : index
    %c128 = arith.constant 128 : index
    %6 = vector.load %arg15[%c0_13, %c128] : memref<8x1536xf32, #tpu.memory_space<vmem>>, vector<8x1280xf32>
    tpu.vector_store %arg15[%c0_13, %c128], %0 {strides = array<i32>} : memref<8x1536xf32, #tpu.memory_space<vmem>>, vector<8x1280xf32>,
    %c0_14 = arith.constant 0 : index
    %c103 = arith.constant 103 : index
    %7 = vector.load %arg15[%c0_14, %c103] : memref<8x1536xf32, #tpu.memory_space<vmem>>, vector<8x1280xf32>
    %c0_15 = arith.constant 0 : index
    %c0_16 = arith.constant 0 : index
    %8 = vector.load %arg16[%c0_15, %c0_16] : memref<72x1280xf32, #tpu.memory_space<vmem>>, vector<8x1280xf32>
    tpu.vector_store %arg16[%c0_15, %c0_16], %7 {strides = array<i32>} : memref<72x1280xf32, #tpu.memory_space<vmem>>, vector<8x1280xf32>,
    %c0_17 = arith.constant 0 : index
    %c104 = arith.constant 104 : index
    %9 = vector.load %arg15[%c0_17, %c104] : memref<8x1536xf32, #tpu.memory_space<vmem>>, vector<8x1280xf32>
    %c8 = arith.constant 8 : index
    %c0_18 = arith.constant 0 : index
    %10 = vector.load %arg16[%c8, %c0_18] : memref<72x1280xf32, #tpu.memory_space<vmem>>, vector<8x1280xf32>
    tpu.vector_store %arg16[%c8, %c0_18], %9 {strides = array<i32>} : memref<72x1280xf32, #tpu.memory_space<vmem>>, vector<8x1280xf32>,
    %c0_19 = arith.constant 0 : index
    %c105 = arith.constant 105 : index
    %11 = vector.load %arg15[%c0_19, %c105] : memref<8x1536xf32, #tpu.memory_space<vmem>>, vector<8x1280xf32>
    %c16 = arith.constant 16 : index
    %c0_20 = arith.constant 0 : index
    %12 = vector.load %arg16[%c16, %c0_20] : memref<72x1280xf32, #tpu.memory_space<vmem>>, vector<8x1280xf32>
    tpu.vector_store %arg16[%c16, %c0_20], %11 {strides = array<i32>} : memref<72x1280xf32, #tpu.memory_space<vmem>>, vector<8x1280xf32>,
    %c0_21 = arith.constant 0 : index
    %c127 = arith.constant 127 : index
    %13 = vector.load %arg15[%c0_21, %c127] : memref<8x1536xf32, #tpu.memory_space<vmem>>, vector<8x1280xf32>
    %c24 = arith.constant 24 : index
    %c0_22 = arith.constant 0 : index
    %14 = vector.load %arg16[%c24, %c0_22] : memref<72x1280xf32, #tpu.memory_space<vmem>>, vector<8x1280xf32>
    tpu.vector_store %arg16[%c24, %c0_22], %13 {strides = array<i32>} : memref<72x1280xf32, #tpu.memory_space<vmem>>, vector<8x1280xf32>,
    %c0_23 = arith.constant 0 : index
    %c128_24 = arith.constant 128 : index
    %15 = vector.load %arg15[%c0_23, %c128_24] : memref<8x1536xf32, #tpu.memory_space<vmem>>, vector<8x1280xf32>
    %c32 = arith.constant 32 : index
    %c0_25 = arith.constant 0 : index
    %16 = vector.load %arg16[%c32, %c0_25] : memref<72x1280xf32, #tpu.memory_space<vmem>>, vector<8x1280xf32>
    tpu.vector_store %arg16[%c32, %c0_25], %15 {strides = array<i32>} : memref<72x1280xf32, #tpu.memory_space<vmem>>, vector<8x1280xf32>,
    %c0_26 = arith.constant 0 : index
    %c129 = arith.constant 129 : index
    %17 = vector.load %arg15[%c0_26, %c129] : memref<8x1536xf32, #tpu.memory_space<vmem>>, vector<8x1280xf32>
    %c40 = arith.constant 40 : index
    %c0_27 = arith.constant 0 : index
    %18 = vector.load %arg16[%c40, %c0_27] : memref<72x1280xf32, #tpu.memory_space<vmem>>, vector<8x1280xf32>
    tpu.vector_store %arg16[%c40, %c0_27], %17 {strides = array<i32>} : memref<72x1280xf32, #tpu.memory_space<vmem>>, vector<8x1280xf32>,
    %c0_28 = arith.constant 0 : index
    %c151 = arith.constant 151 : index
    %19 = vector.load %arg15[%c0_28, %c151] : memref<8x1536xf32, #tpu.memory_space<vmem>>, vector<8x1280xf32>
    %c48 = arith.constant 48 : index
    %c0_29 = arith.constant 0 : index
    %20 = vector.load %arg16[%c48, %c0_29] : memref<72x1280xf32, #tpu.memory_space<vmem>>, vector<8x1280xf32>
    tpu.vector_store %arg16[%c48, %c0_29], %19 {strides = array<i32>} : memref<72x1280xf32, #tpu.memory_space<vmem>>, vector<8x1280xf32>,
    %c0_30 = arith.constant 0 : index
    %c152 = arith.constant 152 : index
    %21 = vector.load %arg15[%c0_30, %c152] : memref<8x1536xf32, #tpu.memory_space<vmem>>, vector<8x1280xf32>
    %c56 = arith.constant 56 : index
    %c0_31 = arith.constant 0 : index
    %22 = vector.load %arg16[%c56, %c0_31] : memref<72x1280xf32, #tpu.memory_space<vmem>>, vector<8x1280xf32>
    tpu.vector_store %arg16[%c56, %c0_31], %21 {strides = array<i32>} : memref<72x1280xf32, #tpu.memory_space<vmem>>, vector<8x1280xf32>,
    %c0_32 = arith.constant 0 : index
    %c153 = arith.constant 153 : index
    %23 = vector.load %arg15[%c0_32, %c153] : memref<8x1536xf32, #tpu.memory_space<vmem>>, vector<8x1280xf32>
    %c64 = arith.constant 64 : index
    %c0_33 = arith.constant 0 : index
    %24 = vector.load %arg16[%c64, %c0_33] : memref<72x1280xf32, #tpu.memory_space<vmem>>, vector<8x1280xf32>
    tpu.vector_store %arg16[%c64, %c0_33], %23 {strides = array<i32>} : memref<72x1280xf32, #tpu.memory_space<vmem>>, vector<8x1280xf32>,
    %25 = vector.extract_strided_slice %2 {offsets = [0, 0, 0, 0], sizes = [1, 1, 8, 72], strides = [1, 1, 1, 1]} : vector<2x3x8x72xf32> to vector<1x1x8x72xf32>
    %26 = vector.shape_cast %25 : vector<1x1x8x72xf32> to vector<8x72xf32>
    %c0_34 = arith.constant 0 : index
    %c0_35 = arith.constant 0 : index
    %27 = vector.load %arg16[%c0_34, %c0_35] : memref<72x1280xf32, #tpu.memory_space<vmem>>, vector<72x1280xf32>
    %cst_36 = arith.constant dense<0.000000e+00> : vector<8x1280xf32>
    %28 = tpu.matmul %26, %27, %cst_36 {dimension_numbers = #tpu.dot_dimension_numbers<[1], [0], [0], [1], [0, 0, 1, 1], [], []>} : vector<8x72xf32>, vector<72x1280xf32>, vector<8x1280xf32> -> vector<8x1280xf32>
    %29 = vector.extract_strided_slice %3 {offsets = [0, 0, 0, 0], sizes = [1, 1, 8, 1], strides = [1, 1, 1, 1]} : vector<2x3x8x1xf32> to vector<1x1x8x1xf32>
    %30 = vector.shape_cast %29 : vector<1x1x8x1xf32> to vector<8x1xf32>
    %31 = vector.broadcast %30 : vector<8x1xf32> to vector<8x1280xf32>
    %32 = arith.addf %28, %31 : vector<8x1280xf32>
    %cst_37 = arith.constant 0.000000e+00 : f32
    %33 = vector.broadcast %cst_37 : f32 to vector<8x1280xf32>
    %34 = arith.maximumf %32, %33 : vector<8x1280xf32>
    %35 = vector.broadcast %1 : vector<1x1280xf32> to vector<8x1280xf32>
    %36 = arith.mulf %34, %35 : vector<8x1280xf32>
    %c0_38 = arith.constant 0 : index
    %c128_39 = arith.constant 128 : index
    %37 = vector.load %arg15[%c0_38, %c128_39] : memref<8x1536xf32, #tpu.memory_space<vmem>>, vector<8x1280xf32>
    tpu.vector_store %arg15[%c0_38, %c128_39], %36 {strides = array<i32>} : memref<8x1536xf32, #tpu.memory_space<vmem>>, vector<8x1280xf32>,
    %c0_40 = arith.constant 0 : index
    %c103_41 = arith.constant 103 : index
    %38 = vector.load %arg15[%c0_40, %c103_41] : memref<8x1536xf32, #tpu.memory_space<vmem>>, vector<8x1280xf32>
    %c0_42 = arith.constant 0 : index
    %c0_43 = arith.constant 0 : index
    %39 = vector.load %arg16[%c0_42, %c0_43] : memref<72x1280xf32, #tpu.memory_space<vmem>>, vector<8x1280xf32>
    tpu.vector_store %arg16[%c0_42, %c0_43], %38 {strides = array<i32>} : memref<72x1280xf32, #tpu.memory_space<vmem>>, vector<8x1280xf32>,
    %c0_44 = arith.constant 0 : index
    %c104_45 = arith.constant 104 : index
    %40 = vector.load %arg15[%c0_44, %c104_45] : memref<8x1536xf32, #tpu.memory_space<vmem>>, vector<8x1280xf32>
    %c8_46 = arith.constant 8 : index
    %c0_47 = arith.constant 0 : index
    %41 = vector.load %arg16[%c8_46, %c0_47] : memref<72x1280xf32, #tpu.memory_space<vmem>>, vector<8x1280xf32>
    tpu.vector_store %arg16[%c8_46, %c0_47], %40 {strides = array<i32>} : memref<72x1280xf32, #tpu.memory_space<vmem>>, vector<8x1280xf32>,
    %c0_48 = arith.constant 0 : index
    %c105_49 = arith.constant 105 : index
    %42 = vector.load %arg15[%c0_48, %c105_49] : memref<8x1536xf32, #tpu.memory_space<vmem>>, vector<8x1280xf32>
    %c16_50 = arith.constant 16 : index
    %c0_51 = arith.constant 0 : index
    %43 = vector.load %arg16[%c16_50, %c0_51] : memref<72x1280xf32, #tpu.memory_space<vmem>>, vector<8x1280xf32>
    tpu.vector_store %arg16[%c16_50, %c0_51], %42 {strides = array<i32>} : memref<72x1280xf32, #tpu.memory_space<vmem>>, vector<8x1280xf32>,
    %c0_52 = arith.constant 0 : index
    %c127_53 = arith.constant 127 : index
    %44 = vector.load %arg15[%c0_52, %c127_53] : memref<8x1536xf32, #tpu.memory_space<vmem>>, vector<8x1280xf32>
    %c24_54 = arith.constant 24 : index
    %c0_55 = arith.constant 0 : index
    %45 = vector.load %arg16[%c24_54, %c0_55] : memref<72x1280xf32, #tpu.memory_space<vmem>>, vector<8x1280xf32>
    tpu.vector_store %arg16[%c24_54, %c0_55], %44 {strides = array<i32>} : memref<72x1280xf32, #tpu.memory_space<vmem>>, vector<8x1280xf32>,
    %c0_56 = arith.constant 0 : index
    %c128_57 = arith.constant 128 : index
    %46 = vector.load %arg15[%c0_56, %c128_57] : memref<8x1536xf32, #tpu.memory_space<vmem>>, vector<8x1280xf32>
    %c32_58 = arith.constant 32 : index
    %c0_59 = arith.constant 0 : index
    %47 = vector.load %arg16[%c32_58, %c0_59] : memref<72x1280xf32, #tpu.memory_space<vmem>>, vector<8x1280xf32>
    tpu.vector_store %arg16[%c32_58, %c0_59], %46 {strides = array<i32>} : memref<72x1280xf32, #tpu.memory_space<vmem>>, vector<8x1280xf32>,
    %c0_60 = arith.constant 0 : index
    %c129_61 = arith.constant 129 : index
    %48 = vector.load %arg15[%c0_60, %c129_61] : memref<8x1536xf32, #tpu.memory_space<vmem>>, vector<8x1280xf32>
    %c40_62 = arith.constant 40 : index
    %c0_63 = arith.constant 0 : index
    %49 = vector.load %arg16[%c40_62, %c0_63] : memref<72x1280xf32, #tpu.memory_space<vmem>>, vector<8x1280xf32>
    tpu.vector_store %arg16[%c40_62, %c0_63], %48 {strides = array<i32>} : memref<72x1280xf32, #tpu.memory_space<vmem>>, vector<8x1280xf32>,
    %c0_64 = arith.constant 0 : index
    %c151_65 = arith.constant 151 : index
    %50 = vector.load %arg15[%c0_64, %c151_65] : memref<8x1536xf32, #tpu.memory_space<vmem>>, vector<8x1280xf32>
    %c48_66 = arith.constant 48 : index
    %c0_67 = arith.constant 0 : index
    %51 = vector.load %arg16[%c48_66, %c0_67] : memref<72x1280xf32, #tpu.memory_space<vmem>>, vector<8x1280xf32>
    tpu.vector_store %arg16[%c48_66, %c0_67], %50 {strides = array<i32>} : memref<72x1280xf32, #tpu.memory_space<vmem>>, vector<8x1280xf32>,
    %c0_68 = arith.constant 0 : index
    %c152_69 = arith.constant 152 : index
    %52 = vector.load %arg15[%c0_68, %c152_69] : memref<8x1536xf32, #tpu.memory_space<vmem>>, vector<8x1280xf32>
    %c56_70 = arith.constant 56 : index
    %c0_71 = arith.constant 0 : index
    %53 = vector.load %arg16[%c56_70, %c0_71] : memref<72x1280xf32, #tpu.memory_space<vmem>>, vector<8x1280xf32>
    tpu.vector_store %arg16[%c56_70, %c0_71], %52 {strides = array<i32>} : memref<72x1280xf32, #tpu.memory_space<vmem>>, vector<8x1280xf32>,
    %c0_72 = arith.constant 0 : index
    %c153_73 = arith.constant 153 : index
    %54 = vector.load %arg15[%c0_72, %c153_73] : memref<8x1536xf32, #tpu.memory_space<vmem>>, vector<8x1280xf32>
    %c64_74 = arith.constant 64 : index
    %c0_75 = arith.constant 0 : index
    %55 = vector.load %arg16[%c64_74, %c0_75] : memref<72x1280xf32, #tpu.memory_space<vmem>>, vector<8x1280xf32>
    tpu.vector_store %arg16[%c64_74, %c0_75], %54 {strides = array<i32>} : memref<72x1280xf32, #tpu.memory_space<vmem>>, vector<8x1280xf32>,
    %56 = vector.extract_strided_slice %2 {offsets = [0, 1, 0, 0], sizes = [1, 1, 8, 72], strides = [1, 1, 1, 1]} : vector<2x3x8x72xf32> to vector<1x1x8x72xf32>
    %57 = vector.shape_cast %56 : vector<1x1x8x72xf32> to vector<8x72xf32>
    %c0_76 = arith.constant 0 : index
    %c0_77 = arith.constant 0 : index
    %58 = vector.load %arg16[%c0_76, %c0_77] : memref<72x1280xf32, #tpu.memory_space<vmem>>, vector<72x1280xf32>
    %cst_78 = arith.constant dense<0.000000e+00> : vector<8x1280xf32>
    %59 = tpu.matmul %57, %58, %cst_78 {dimension_numbers = #tpu.dot_dimension_numbers<[1], [0], [0], [1], [0, 0, 1, 1], [], []>} : vector<8x72xf32>, vector<72x1280xf32>, vector<8x1280xf32> -> vector<8x1280xf32>
    %60 = vector.extract_strided_slice %3 {offsets = [0, 1, 0, 0], sizes = [1, 1, 8, 1], strides = [1, 1, 1, 1]} : vector<2x3x8x1xf32> to vector<1x1x8x1xf32>
    %61 = vector.shape_cast %60 : vector<1x1x8x1xf32> to vector<8x1xf32>
    %62 = vector.broadcast %61 : vector<8x1xf32> to vector<8x1280xf32>
    %63 = arith.addf %59, %62 : vector<8x1280xf32>
    %cst_79 = arith.constant 0.000000e+00 : f32
    %64 = vector.broadcast %cst_79 : f32 to vector<8x1280xf32>
    %65 = arith.maximumf %63, %64 : vector<8x1280xf32>
    %66 = vector.broadcast %1 : vector<1x1280xf32> to vector<8x1280xf32>
    %67 = arith.mulf %65, %66 : vector<8x1280xf32>
    %c0_80 = arith.constant 0 : index
    %c128_81 = arith.constant 128 : index
    %68 = vector.load %arg15[%c0_80, %c128_81] : memref<8x1536xf32, #tpu.memory_space<vmem>>, vector<8x1280xf32>
    tpu.vector_store %arg15[%c0_80, %c128_81], %67 {strides = array<i32>} : memref<8x1536xf32, #tpu.memory_space<vmem>>, vector<8x1280xf32>,
    %c0_82 = arith.constant 0 : index
    %c103_83 = arith.constant 103 : index
    %69 = vector.load %arg15[%c0_82, %c103_83] : memref<8x1536xf32, #tpu.memory_space<vmem>>, vector<8x1280xf32>
    %c0_84 = arith.constant 0 : index
    %c0_85 = arith.constant 0 : index
    %70 = vector.load %arg16[%c0_84, %c0_85] : memref<72x1280xf32, #tpu.memory_space<vmem>>, vector<8x1280xf32>
    tpu.vector_store %arg16[%c0_84, %c0_85], %69 {strides = array<i32>} : memref<72x1280xf32, #tpu.memory_space<vmem>>, vector<8x1280xf32>,
    %c0_86 = arith.constant 0 : index
    %c104_87 = arith.constant 104 : index
    %71 = vector.load %arg15[%c0_86, %c104_87] : memref<8x1536xf32, #tpu.memory_space<vmem>>, vector<8x1280xf32>
    %c8_88 = arith.constant 8 : index
    %c0_89 = arith.constant 0 : index
    %72 = vector.load %arg16[%c8_88, %c0_89] : memref<72x1280xf32, #tpu.memory_space<vmem>>, vector<8x1280xf32>
    tpu.vector_store %arg16[%c8_88, %c0_89], %71 {strides = array<i32>} : memref<72x1280xf32, #tpu.memory_space<vmem>>, vector<8x1280xf32>,
    %c0_90 = arith.constant 0 : index
    %c105_91 = arith.constant 105 : index
    %73 = vector.load %arg15[%c0_90, %c105_91] : memref<8x1536xf32, #tpu.memory_space<vmem>>, vector<8x1280xf32>
    %c16_92 = arith.constant 16 : index
    %c0_93 = arith.constant 0 : index
    %74 = vector.load %arg16[%c16_92, %c0_93] : memref<72x1280xf32, #tpu.memory_space<vmem>>, vector<8x1280xf32>
    tpu.vector_store %arg16[%c16_92, %c0_93], %73 {strides = array<i32>} : memref<72x1280xf32, #tpu.memory_space<vmem>>, vector<8x1280xf32>,
    %c0_94 = arith.constant 0 : index
    %c127_95 = arith.constant 127 : index
    %75 = vector.load %arg15[%c0_94, %c127_95] : memref<8x1536xf32, #tpu.memory_space<vmem>>, vector<8x1280xf32>
    %c24_96 = arith.constant 24 : index
    %c0_97 = arith.constant 0 : index
    %76 = vector.load %arg16[%c24_96, %c0_97] : memref<72x1280xf32, #tpu.memory_space<vmem>>, vector<8x1280xf32>
    tpu.vector_store %arg16[%c24_96, %c0_97], %75 {strides = array<i32>} : memref<72x1280xf32, #tpu.memory_space<vmem>>, vector<8x1280xf32>,
    %c0_98 = arith.constant 0 : index
    %c128_99 = arith.constant 128 : index
    %77 = vector.load %arg15[%c0_98, %c128_99] : memref<8x1536xf32, #tpu.memory_space<vmem>>, vector<8x1280xf32>
    %c32_100 = arith.constant 32 : index
    %c0_101 = arith.constant 0 : index
    %78 = vector.load %arg16[%c32_100, %c0_101] : memref<72x1280xf32, #tpu.memory_space<vmem>>, vector<8x1280xf32>
    tpu.vector_store %arg16[%c32_100, %c0_101], %77 {strides = array<i32>} : memref<72x1280xf32, #tpu.memory_space<vmem>>, vector<8x1280xf32>,
    %c0_102 = arith.constant 0 : index
    %c129_103 = arith.constant 129 : index
    %79 = vector.load %arg15[%c0_102, %c129_103] : memref<8x1536xf32, #tpu.memory_space<vmem>>, vector<8x1280xf32>
    %c40_104 = arith.constant 40 : index
    %c0_105 = arith.constant 0 : index
    %80 = vector.load %arg16[%c40_104, %c0_105] : memref<72x1280xf32, #tpu.memory_space<vmem>>, vector<8x1280xf32>
    tpu.vector_store %arg16[%c40_104, %c0_105], %79 {strides = array<i32>} : memref<72x1280xf32, #tpu.memory_space<vmem>>, vector<8x1280xf32>,
    %c0_106 = arith.constant 0 : index
    %c151_107 = arith.constant 151 : index
    %81 = vector.load %arg15[%c0_106, %c151_107] : memref<8x1536xf32, #tpu.memory_space<vmem>>, vector<8x1280xf32>
    %c48_108 = arith.constant 48 : index
    %c0_109 = arith.constant 0 : index
    %82 = vector.load %arg16[%c48_108, %c0_109] : memref<72x1280xf32, #tpu.memory_space<vmem>>, vector<8x1280xf32>
    tpu.vector_store %arg16[%c48_108, %c0_109], %81 {strides = array<i32>} : memref<72x1280xf32, #tpu.memory_space<vmem>>, vector<8x1280xf32>,
    %c0_110 = arith.constant 0 : index
    %c152_111 = arith.constant 152 : index
    %83 = vector.load %arg15[%c0_110, %c152_111] : memref<8x1536xf32, #tpu.memory_space<vmem>>, vector<8x1280xf32>
    %c56_112 = arith.constant 56 : index
    %c0_113 = arith.constant 0 : index
    %84 = vector.load %arg16[%c56_112, %c0_113] : memref<72x1280xf32, #tpu.memory_space<vmem>>, vector<8x1280xf32>
    tpu.vector_store %arg16[%c56_112, %c0_113], %83 {strides = array<i32>} : memref<72x1280xf32, #tpu.memory_space<vmem>>, vector<8x1280xf32>,
    %c0_114 = arith.constant 0 : index
    %c153_115 = arith.constant 153 : index
    %85 = vector.load %arg15[%c0_114, %c153_115] : memref<8x1536xf32, #tpu.memory_space<vmem>>, vector<8x1280xf32>
    %c64_116 = arith.constant 64 : index
    %c0_117 = arith.constant 0 : index
    %86 = vector.load %arg16[%c64_116, %c0_117] : memref<72x1280xf32, #tpu.memory_space<vmem>>, vector<8x1280xf32>
    tpu.vector_store %arg16[%c64_116, %c0_117], %85 {strides = array<i32>} : memref<72x1280xf32, #tpu.memory_space<vmem>>, vector<8x1280xf32>,
    %87 = vector.extract_strided_slice %2 {offsets = [0, 2, 0, 0], sizes = [1, 1, 8, 72], strides = [1, 1, 1, 1]} : vector<2x3x8x72xf32> to vector<1x1x8x72xf32>
    %88 = vector.shape_cast %87 : vector<1x1x8x72xf32> to vector<8x72xf32>
    %c0_118 = arith.constant 0 : index
    %c0_119 = arith.constant 0 : index
    %89 = vector.load %arg16[%c0_118, %c0_119] : memref<72x1280xf32, #tpu.memory_space<vmem>>, vector<72x1280xf32>
    %cst_120 = arith.constant dense<0.000000e+00> : vector<8x1280xf32>
    %90 = tpu.matmul %88, %89, %cst_120 {dimension_numbers = #tpu.dot_dimension_numbers<[1], [0], [0], [1], [0, 0, 1, 1], [], []>} : vector<8x72xf32>, vector<72x1280xf32>, vector<8x1280xf32> -> vector<8x1280xf32>
    %91 = vector.extract_strided_slice %3 {offsets = [0, 2, 0, 0], sizes = [1, 1, 8, 1], strides = [1, 1, 1, 1]} : vector<2x3x8x1xf32> to vector<1x1x8x1xf32>
    %92 = vector.shape_cast %91 : vector<1x1x8x1xf32> to vector<8x1xf32>
    %93 = vector.broadcast %92 : vector<8x1xf32> to vector<8x1280xf32>
    %94 = arith.addf %90, %93 : vector<8x1280xf32>
    %cst_121 = arith.constant 0.000000e+00 : f32
    %95 = vector.broadcast %cst_121 : f32 to vector<8x1280xf32>
    %96 = arith.maximumf %94, %95 : vector<8x1280xf32>
    %97 = vector.broadcast %1 : vector<1x1280xf32> to vector<8x1280xf32>
    %98 = arith.mulf %96, %97 : vector<8x1280xf32>
    %c0_122 = arith.constant 0 : index
    %c0_123 = arith.constant 0 : index
    %99 = vector.load %arg17[%c0_122, %c0_123] : memref<8x1280xf32, #tpu.memory_space<vmem>>, vector<8x1280xf32>
    tpu.vector_store %arg17[%c0_122, %c0_123], %98 {strides = array<i32>} : memref<8x1280xf32, #tpu.memory_space<vmem>>, vector<8x1280xf32>,
    %c0_124 = arith.constant 0 : index
    %c0_125 = arith.constant 0 : index
    %100 = vector.load %arg17[%c0_124, %c0_125] : memref<8x1280xf32, #tpu.memory_space<vmem>>, vector<8x1280xf32>
    %c0_126 = arith.constant 0 : index
    %c128_127 = arith.constant 128 : index
    %101 = vector.load %arg15[%c0_126, %c128_127] : memref<8x1536xf32, #tpu.memory_space<vmem>>, vector<8x1280xf32>
    tpu.vector_store %arg15[%c0_126, %c128_127], %0 {strides = array<i32>} : memref<8x1536xf32, #tpu.memory_space<vmem>>, vector<8x1280xf32>,
    %c0_128 = arith.constant 0 : index
    %c78 = arith.constant 78 : index
    %102 = vector.load %arg15[%c0_128, %c78] : memref<8x1536xf32, #tpu.memory_space<vmem>>, vector<8x1280xf32>
    %c0_129 = arith.constant 0 : index
    %c0_130 = arith.constant 0 : index
    %103 = vector.load %arg16[%c0_129, %c0_130] : memref<72x1280xf32, #tpu.memory_space<vmem>>, vector<8x1280xf32>
    tpu.vector_store %arg16[%c0_129, %c0_130], %102 {strides = array<i32>} : memref<72x1280xf32, #tpu.memory_space<vmem>>, vector<8x1280xf32>,
    %c0_131 = arith.constant 0 : index
    %c80 = arith.constant 80 : index
    %104 = vector.load %arg15[%c0_131, %c80] : memref<8x1536xf32, #tpu.memory_space<vmem>>, vector<8x1280xf32>
    %c8_132 = arith.constant 8 : index
    %c0_133 = arith.constant 0 : index
    %105 = vector.load %arg16[%c8_132, %c0_133] : memref<72x1280xf32, #tpu.memory_space<vmem>>, vector<8x1280xf32>
    tpu.vector_store %arg16[%c8_132, %c0_133], %104 {strides = array<i32>} : memref<72x1280xf32, #tpu.memory_space<vmem>>, vector<8x1280xf32>,
    %c0_134 = arith.constant 0 : index
    %c82 = arith.constant 82 : index
    %106 = vector.load %arg15[%c0_134, %c82] : memref<8x1536xf32, #tpu.memory_space<vmem>>, vector<8x1280xf32>
    %c16_135 = arith.constant 16 : index
    %c0_136 = arith.constant 0 : index
    %107 = vector.load %arg16[%c16_135, %c0_136] : memref<72x1280xf32, #tpu.memory_space<vmem>>, vector<8x1280xf32>
    tpu.vector_store %arg16[%c16_135, %c0_136], %106 {strides = array<i32>} : memref<72x1280xf32, #tpu.memory_space<vmem>>, vector<8x1280xf32>,
    %c0_137 = arith.constant 0 : index
    %c126 = arith.constant 126 : index
    %108 = vector.load %arg15[%c0_137, %c126] : memref<8x1536xf32, #tpu.memory_space<vmem>>, vector<8x1280xf32>
    %c24_138 = arith.constant 24 : index
    %c0_139 = arith.constant 0 : index
    %109 = vector.load %arg16[%c24_138, %c0_139] : memref<72x1280xf32, #tpu.memory_space<vmem>>, vector<8x1280xf32>
    tpu.vector_store %arg16[%c24_138, %c0_139], %108 {strides = array<i32>} : memref<72x1280xf32, #tpu.memory_space<vmem>>, vector<8x1280xf32>,
    %c0_140 = arith.constant 0 : index
    %c128_141 = arith.constant 128 : index
    %110 = vector.load %arg15[%c0_140, %c128_141] : memref<8x1536xf32, #tpu.memory_space<vmem>>, vector<8x1280xf32>
    %c32_142 = arith.constant 32 : index
    %c0_143 = arith.constant 0 : index
    %111 = vector.load %arg16[%c32_142, %c0_143] : memref<72x1280xf32, #tpu.memory_space<vmem>>, vector<8x1280xf32>
    tpu.vector_store %arg16[%c32_142, %c0_143], %110 {strides = array<i32>} : memref<72x1280xf32, #tpu.memory_space<vmem>>, vector<8x1280xf32>,
    %c0_144 = arith.constant 0 : index
    %c130 = arith.constant 130 : index
    %112 = vector.load %arg15[%c0_144, %c130] : memref<8x1536xf32, #tpu.memory_space<vmem>>, vector<8x1280xf32>
    %c40_145 = arith.constant 40 : index
    %c0_146 = arith.constant 0 : index
    %113 = vector.load %arg16[%c40_145, %c0_146] : memref<72x1280xf32, #tpu.memory_space<vmem>>, vector<8x1280xf32>
    tpu.vector_store %arg16[%c40_145, %c0_146], %112 {strides = array<i32>} : memref<72x1280xf32, #tpu.memory_space<vmem>>, vector<8x1280xf32>,
    %c0_147 = arith.constant 0 : index
    %c174 = arith.constant 174 : index
    %114 = vector.load %arg15[%c0_147, %c174] : memref<8x1536xf32, #tpu.memory_space<vmem>>, vector<8x1280xf32>
    %c48_148 = arith.constant 48 : index
    %c0_149 = arith.constant 0 : index
    %115 = vector.load %arg16[%c48_148, %c0_149] : memref<72x1280xf32, #tpu.memory_space<vmem>>, vector<8x1280xf32>
    tpu.vector_store %arg16[%c48_148, %c0_149], %114 {strides = array<i32>} : memref<72x1280xf32, #tpu.memory_space<vmem>>, vector<8x1280xf32>,
    %c0_150 = arith.constant 0 : index
    %c176 = arith.constant 176 : index
    %116 = vector.load %arg15[%c0_150, %c176] : memref<8x1536xf32, #tpu.memory_space<vmem>>, vector<8x1280xf32>
    %c56_151 = arith.constant 56 : index
    %c0_152 = arith.constant 0 : index
    %117 = vector.load %arg16[%c56_151, %c0_152] : memref<72x1280xf32, #tpu.memory_space<vmem>>, vector<8x1280xf32>
    tpu.vector_store %arg16[%c56_151, %c0_152], %116 {strides = array<i32>} : memref<72x1280xf32, #tpu.memory_space<vmem>>, vector<8x1280xf32>,
    %c0_153 = arith.constant 0 : index
    %c178 = arith.constant 178 : index
    %118 = vector.load %arg15[%c0_153, %c178] : memref<8x1536xf32, #tpu.memory_space<vmem>>, vector<8x1280xf32>
    %c64_154 = arith.constant 64 : index
    %c0_155 = arith.constant 0 : index
    %119 = vector.load %arg16[%c64_154, %c0_155] : memref<72x1280xf32, #tpu.memory_space<vmem>>, vector<8x1280xf32>
    tpu.vector_store %arg16[%c64_154, %c0_155], %118 {strides = array<i32>} : memref<72x1280xf32, #tpu.memory_space<vmem>>, vector<8x1280xf32>,
    %120 = vector.extract_strided_slice %2 {offsets = [1, 0, 0, 0], sizes = [1, 1, 8, 72], strides = [1, 1, 1, 1]} : vector<2x3x8x72xf32> to vector<1x1x8x72xf32>
    %121 = vector.shape_cast %120 : vector<1x1x8x72xf32> to vector<8x72xf32>
    %c0_156 = arith.constant 0 : index
    %c0_157 = arith.constant 0 : index
    %122 = vector.load %arg16[%c0_156, %c0_157] : memref<72x1280xf32, #tpu.memory_space<vmem>>, vector<72x1280xf32>
    %cst_158 = arith.constant dense<0.000000e+00> : vector<8x1280xf32>
    %123 = tpu.matmul %121, %122, %cst_158 {dimension_numbers = #tpu.dot_dimension_numbers<[1], [0], [0], [1], [0, 0, 1, 1], [], []>} : vector<8x72xf32>, vector<72x1280xf32>, vector<8x1280xf32> -> vector<8x1280xf32>
    %124 = vector.extract_strided_slice %3 {offsets = [1, 0, 0, 0], sizes = [1, 1, 8, 1], strides = [1, 1, 1, 1]} : vector<2x3x8x1xf32> to vector<1x1x8x1xf32>
    %125 = vector.shape_cast %124 : vector<1x1x8x1xf32> to vector<8x1xf32>
    %126 = vector.broadcast %125 : vector<8x1xf32> to vector<8x1280xf32>
    %127 = arith.addf %123, %126 : vector<8x1280xf32>
    %cst_159 = arith.constant 0.000000e+00 : f32
    %128 = vector.broadcast %cst_159 : f32 to vector<8x1280xf32>
    %129 = arith.maximumf %127, %128 : vector<8x1280xf32>
    %130 = vector.broadcast %1 : vector<1x1280xf32> to vector<8x1280xf32>
    %131 = arith.mulf %129, %130 : vector<8x1280xf32>
    %c0_160 = arith.constant 0 : index
    %c128_161 = arith.constant 128 : index
    %132 = vector.load %arg15[%c0_160, %c128_161] : memref<8x1536xf32, #tpu.memory_space<vmem>>, vector<8x1280xf32>
    tpu.vector_store %arg15[%c0_160, %c128_161], %131 {strides = array<i32>} : memref<8x1536xf32, #tpu.memory_space<vmem>>, vector<8x1280xf32>,
    %c0_162 = arith.constant 0 : index
    %c28 = arith.constant 28 : index
    %133 = vector.load %arg15[%c0_162, %c28] : memref<8x1536xf32, #tpu.memory_space<vmem>>, vector<8x1280xf32>
    %c0_163 = arith.constant 0 : index
    %c0_164 = arith.constant 0 : index
    %134 = vector.load %arg16[%c0_163, %c0_164] : memref<72x1280xf32, #tpu.memory_space<vmem>>, vector<8x1280xf32>
    tpu.vector_store %arg16[%c0_163, %c0_164], %133 {strides = array<i32>} : memref<72x1280xf32, #tpu.memory_space<vmem>>, vector<8x1280xf32>,
    %c0_165 = arith.constant 0 : index
    %c32_166 = arith.constant 32 : index
    %135 = vector.load %arg15[%c0_165, %c32_166] : memref<8x1536xf32, #tpu.memory_space<vmem>>, vector<8x1280xf32>
    %c8_167 = arith.constant 8 : index
    %c0_168 = arith.constant 0 : index
    %136 = vector.load %arg16[%c8_167, %c0_168] : memref<72x1280xf32, #tpu.memory_space<vmem>>, vector<8x1280xf32>
    tpu.vector_store %arg16[%c8_167, %c0_168], %135 {strides = array<i32>} : memref<72x1280xf32, #tpu.memory_space<vmem>>, vector<8x1280xf32>,
    %c0_169 = arith.constant 0 : index
    %c36 = arith.constant 36 : index
    %137 = vector.load %arg15[%c0_169, %c36] : memref<8x1536xf32, #tpu.memory_space<vmem>>, vector<8x1280xf32>
    %c16_170 = arith.constant 16 : index
    %c0_171 = arith.constant 0 : index
    %138 = vector.load %arg16[%c16_170, %c0_171] : memref<72x1280xf32, #tpu.memory_space<vmem>>, vector<8x1280xf32>
    tpu.vector_store %arg16[%c16_170, %c0_171], %137 {strides = array<i32>} : memref<72x1280xf32, #tpu.memory_space<vmem>>, vector<8x1280xf32>,
    %c0_172 = arith.constant 0 : index
    %c124 = arith.constant 124 : index
    %139 = vector.load %arg15[%c0_172, %c124] : memref<8x1536xf32, #tpu.memory_space<vmem>>, vector<8x1280xf32>
    %c24_173 = arith.constant 24 : index
    %c0_174 = arith.constant 0 : index
    %140 = vector.load %arg16[%c24_173, %c0_174] : memref<72x1280xf32, #tpu.memory_space<vmem>>, vector<8x1280xf32>
    tpu.vector_store %arg16[%c24_173, %c0_174], %139 {strides = array<i32>} : memref<72x1280xf32, #tpu.memory_space<vmem>>, vector<8x1280xf32>,
    %c0_175 = arith.constant 0 : index
    %c128_176 = arith.constant 128 : index
    %141 = vector.load %arg15[%c0_175, %c128_176] : memref<8x1536xf32, #tpu.memory_space<vmem>>, vector<8x1280xf32>
    %c32_177 = arith.constant 32 : index
    %c0_178 = arith.constant 0 : index
    %142 = vector.load %arg16[%c32_177, %c0_178] : memref<72x1280xf32, #tpu.memory_space<vmem>>, vector<8x1280xf32>
    tpu.vector_store %arg16[%c32_177, %c0_178], %141 {strides = array<i32>} : memref<72x1280xf32, #tpu.memory_space<vmem>>, vector<8x1280xf32>,
    %c0_179 = arith.constant 0 : index
    %c132 = arith.constant 132 : index
    %143 = vector.load %arg15[%c0_179, %c132] : memref<8x1536xf32, #tpu.memory_space<vmem>>, vector<8x1280xf32>
    %c40_180 = arith.constant 40 : index
    %c0_181 = arith.constant 0 : index
    %144 = vector.load %arg16[%c40_180, %c0_181] : memref<72x1280xf32, #tpu.memory_space<vmem>>, vector<8x1280xf32>
    tpu.vector_store %arg16[%c40_180, %c0_181], %143 {strides = array<i32>} : memref<72x1280xf32, #tpu.memory_space<vmem>>, vector<8x1280xf32>,
    %c0_182 = arith.constant 0 : index
    %c220 = arith.constant 220 : index
    %145 = vector.load %arg15[%c0_182, %c220] : memref<8x1536xf32, #tpu.memory_space<vmem>>, vector<8x1280xf32>
    %c48_183 = arith.constant 48 : index
    %c0_184 = arith.constant 0 : index
    %146 = vector.load %arg16[%c48_183, %c0_184] : memref<72x1280xf32, #tpu.memory_space<vmem>>, vector<8x1280xf32>
    tpu.vector_store %arg16[%c48_183, %c0_184], %145 {strides = array<i32>} : memref<72x1280xf32, #tpu.memory_space<vmem>>, vector<8x1280xf32>,
    %c0_185 = arith.constant 0 : index
    %c224 = arith.constant 224 : index
    %147 = vector.load %arg15[%c0_185, %c224] : memref<8x1536xf32, #tpu.memory_space<vmem>>, vector<8x1280xf32>
    %c56_186 = arith.constant 56 : index
    %c0_187 = arith.constant 0 : index
    %148 = vector.load %arg16[%c56_186, %c0_187] : memref<72x1280xf32, #tpu.memory_space<vmem>>, vector<8x1280xf32>
    tpu.vector_store %arg16[%c56_186, %c0_187], %147 {strides = array<i32>} : memref<72x1280xf32, #tpu.memory_space<vmem>>, vector<8x1280xf32>,
    %c0_188 = arith.constant 0 : index
    %c228 = arith.constant 228 : index
    %149 = vector.load %arg15[%c0_188, %c228] : memref<8x1536xf32, #tpu.memory_space<vmem>>, vector<8x1280xf32>
    %c64_189 = arith.constant 64 : index
    %c0_190 = arith.constant 0 : index
    %150 = vector.load %arg16[%c64_189, %c0_190] : memref<72x1280xf32, #tpu.memory_space<vmem>>, vector<8x1280xf32>
    tpu.vector_store %arg16[%c64_189, %c0_190], %149 {strides = array<i32>} : memref<72x1280xf32, #tpu.memory_space<vmem>>, vector<8x1280xf32>,
    %151 = vector.extract_strided_slice %2 {offsets = [1, 1, 0, 0], sizes = [1, 1, 8, 72], strides = [1, 1, 1, 1]} : vector<2x3x8x72xf32> to vector<1x1x8x72xf32>
    %152 = vector.shape_cast %151 : vector<1x1x8x72xf32> to vector<8x72xf32>
    %c0_191 = arith.constant 0 : index
    %c0_192 = arith.constant 0 : index
    %153 = vector.load %arg16[%c0_191, %c0_192] : memref<72x1280xf32, #tpu.memory_space<vmem>>, vector<72x1280xf32>
    %cst_193 = arith.constant dense<0.000000e+00> : vector<8x1280xf32>
    %154 = tpu.matmul %152, %153, %cst_193 {dimension_numbers = #tpu.dot_dimension_numbers<[1], [0], [0], [1], [0, 0, 1, 1], [], []>} : vector<8x72xf32>, vector<72x1280xf32>, vector<8x1280xf32> -> vector<8x1280xf32>
    %155 = vector.extract_strided_slice %3 {offsets = [1, 1, 0, 0], sizes = [1, 1, 8, 1], strides = [1, 1, 1, 1]} : vector<2x3x8x1xf32> to vector<1x1x8x1xf32>
    %156 = vector.shape_cast %155 : vector<1x1x8x1xf32> to vector<8x1xf32>
    %157 = vector.broadcast %156 : vector<8x1xf32> to vector<8x1280xf32>
    %158 = arith.addf %154, %157 : vector<8x1280xf32>
    %cst_194 = arith.constant 0.000000e+00 : f32
    %159 = vector.broadcast %cst_194 : f32 to vector<8x1280xf32>
    %160 = arith.maximumf %158, %159 : vector<8x1280xf32>
    %161 = vector.broadcast %1 : vector<1x1280xf32> to vector<8x1280xf32>
    %162 = arith.mulf %160, %161 : vector<8x1280xf32>
    %c0_195 = arith.constant 0 : index
    %c128_196 = arith.constant 128 : index
    %163 = vector.load %arg15[%c0_195, %c128_196] : memref<8x1536xf32, #tpu.memory_space<vmem>>, vector<8x1280xf32>
    tpu.vector_store %arg15[%c0_195, %c128_196], %162 {strides = array<i32>} : memref<8x1536xf32, #tpu.memory_space<vmem>>, vector<8x1280xf32>,
    %c0_197 = arith.constant 0 : index
    %c78_198 = arith.constant 78 : index
    %164 = vector.load %arg15[%c0_197, %c78_198] : memref<8x1536xf32, #tpu.memory_space<vmem>>, vector<8x1280xf32>
    %c0_199 = arith.constant 0 : index
    %c0_200 = arith.constant 0 : index
    %165 = vector.load %arg16[%c0_199, %c0_200] : memref<72x1280xf32, #tpu.memory_space<vmem>>, vector<8x1280xf32>
    tpu.vector_store %arg16[%c0_199, %c0_200], %164 {strides = array<i32>} : memref<72x1280xf32, #tpu.memory_space<vmem>>, vector<8x1280xf32>,
    %c0_201 = arith.constant 0 : index
    %c80_202 = arith.constant 80 : index
    %166 = vector.load %arg15[%c0_201, %c80_202] : memref<8x1536xf32, #tpu.memory_space<vmem>>, vector<8x1280xf32>
    %c8_203 = arith.constant 8 : index
    %c0_204 = arith.constant 0 : index
    %167 = vector.load %arg16[%c8_203, %c0_204] : memref<72x1280xf32, #tpu.memory_space<vmem>>, vector<8x1280xf32>
    tpu.vector_store %arg16[%c8_203, %c0_204], %166 {strides = array<i32>} : memref<72x1280xf32, #tpu.memory_space<vmem>>, vector<8x1280xf32>,
    %c0_205 = arith.constant 0 : index
    %c82_206 = arith.constant 82 : index
    %168 = vector.load %arg15[%c0_205, %c82_206] : memref<8x1536xf32, #tpu.memory_space<vmem>>, vector<8x1280xf32>
    %c16_207 = arith.constant 16 : index
    %c0_208 = arith.constant 0 : index
    %169 = vector.load %arg16[%c16_207, %c0_208] : memref<72x1280xf32, #tpu.memory_space<vmem>>, vector<8x1280xf32>
    tpu.vector_store %arg16[%c16_207, %c0_208], %168 {strides = array<i32>} : memref<72x1280xf32, #tpu.memory_space<vmem>>, vector<8x1280xf32>,
    %c0_209 = arith.constant 0 : index
    %c126_210 = arith.constant 126 : index
    %170 = vector.load %arg15[%c0_209, %c126_210] : memref<8x1536xf32, #tpu.memory_space<vmem>>, vector<8x1280xf32>
    %c24_211 = arith.constant 24 : index
    %c0_212 = arith.constant 0 : index
    %171 = vector.load %arg16[%c24_211, %c0_212] : memref<72x1280xf32, #tpu.memory_space<vmem>>, vector<8x1280xf32>
    tpu.vector_store %arg16[%c24_211, %c0_212], %170 {strides = array<i32>} : memref<72x1280xf32, #tpu.memory_space<vmem>>, vector<8x1280xf32>,
    %c0_213 = arith.constant 0 : index
    %c128_214 = arith.constant 128 : index
    %172 = vector.load %arg15[%c0_213, %c128_214] : memref<8x1536xf32, #tpu.memory_space<vmem>>, vector<8x1280xf32>
    %c32_215 = arith.constant 32 : index
    %c0_216 = arith.constant 0 : index
    %173 = vector.load %arg16[%c32_215, %c0_216] : memref<72x1280xf32, #tpu.memory_space<vmem>>, vector<8x1280xf32>
    tpu.vector_store %arg16[%c32_215, %c0_216], %172 {strides = array<i32>} : memref<72x1280xf32, #tpu.memory_space<vmem>>, vector<8x1280xf32>,
    %c0_217 = arith.constant 0 : index
    %c130_218 = arith.constant 130 : index
    %174 = vector.load %arg15[%c0_217, %c130_218] : memref<8x1536xf32, #tpu.memory_space<vmem>>, vector<8x1280xf32>
    %c40_219 = arith.constant 40 : index
    %c0_220 = arith.constant 0 : index
    %175 = vector.load %arg16[%c40_219, %c0_220] : memref<72x1280xf32, #tpu.memory_space<vmem>>, vector<8x1280xf32>
    tpu.vector_store %arg16[%c40_219, %c0_220], %174 {strides = array<i32>} : memref<72x1280xf32, #tpu.memory_space<vmem>>, vector<8x1280xf32>,
    %c0_221 = arith.constant 0 : index
    %c174_222 = arith.constant 174 : index
    %176 = vector.load %arg15[%c0_221, %c174_222] : memref<8x1536xf32, #tpu.memory_space<vmem>>, vector<8x1280xf32>
    %c48_223 = arith.constant 48 : index
    %c0_224 = arith.constant 0 : index
    %177 = vector.load %arg16[%c48_223, %c0_224] : memref<72x1280xf32, #tpu.memory_space<vmem>>, vector<8x1280xf32>
    tpu.vector_store %arg16[%c48_223, %c0_224], %176 {strides = array<i32>} : memref<72x1280xf32, #tpu.memory_space<vmem>>, vector<8x1280xf32>,
    %c0_225 = arith.constant 0 : index
    %c176_226 = arith.constant 176 : index
    %178 = vector.load %arg15[%c0_225, %c176_226] : memref<8x1536xf32, #tpu.memory_space<vmem>>, vector<8x1280xf32>
    %c56_227 = arith.constant 56 : index
    %c0_228 = arith.constant 0 : index
    %179 = vector.load %arg16[%c56_227, %c0_228] : memref<72x1280xf32, #tpu.memory_space<vmem>>, vector<8x1280xf32>
    tpu.vector_store %arg16[%c56_227, %c0_228], %178 {strides = array<i32>} : memref<72x1280xf32, #tpu.memory_space<vmem>>, vector<8x1280xf32>,
    %c0_229 = arith.constant 0 : index
    %c178_230 = arith.constant 178 : index
    %180 = vector.load %arg15[%c0_229, %c178_230] : memref<8x1536xf32, #tpu.memory_space<vmem>>, vector<8x1280xf32>
    %c64_231 = arith.constant 64 : index
    %c0_232 = arith.constant 0 : index
    %181 = vector.load %arg16[%c64_231, %c0_232] : memref<72x1280xf32, #tpu.memory_space<vmem>>, vector<8x1280xf32>
    tpu.vector_store %arg16[%c64_231, %c0_232], %180 {strides = array<i32>} : memref<72x1280xf32, #tpu.memory_space<vmem>>, vector<8x1280xf32>,
    %182 = vector.extract_strided_slice %2 {offsets = [1, 2, 0, 0], sizes = [1, 1, 8, 72], strides = [1, 1, 1, 1]} : vector<2x3x8x72xf32> to vector<1x1x8x72xf32>
    %183 = vector.shape_cast %182 : vector<1x1x8x72xf32> to vector<8x72xf32>
    %c0_233 = arith.constant 0 : index
    %c0_234 = arith.constant 0 : index
    %184 = vector.load %arg16[%c0_233, %c0_234] : memref<72x1280xf32, #tpu.memory_space<vmem>>, vector<72x1280xf32>
    %cst_235 = arith.constant dense<0.000000e+00> : vector<8x1280xf32>
    %185 = tpu.matmul %183, %184, %cst_235 {dimension_numbers = #tpu.dot_dimension_numbers<[1], [0], [0], [1], [0, 0, 1, 1], [], []>} : vector<8x72xf32>, vector<72x1280xf32>, vector<8x1280xf32> -> vector<8x1280xf32>
    %186 = vector.extract_strided_slice %3 {offsets = [1, 2, 0, 0], sizes = [1, 1, 8, 1], strides = [1, 1, 1, 1]} : vector<2x3x8x1xf32> to vector<1x1x8x1xf32>
    %187 = vector.shape_cast %186 : vector<1x1x8x1xf32> to vector<8x1xf32>
    %188 = vector.broadcast %187 : vector<8x1xf32> to vector<8x1280xf32>
    %189 = arith.addf %185, %188 : vector<8x1280xf32>
    %cst_236 = arith.constant 0.000000e+00 : f32
    %190 = vector.broadcast %cst_236 : f32 to vector<8x1280xf32>
    %191 = arith.maximumf %189, %190 : vector<8x1280xf32>
    %192 = vector.broadcast %1 : vector<1x1280xf32> to vector<8x1280xf32>
    %193 = arith.mulf %191, %192 : vector<8x1280xf32>
    %194 = arith.addf %100, %193 : vector<8x1280xf32>
    %c0_237 = arith.constant 0 : index
    %c0_238 = arith.constant 0 : index
    %195 = vector.load %arg17[%c0_237, %c0_238] : memref<8x1280xf32, #tpu.memory_space<vmem>>, vector<8x1280xf32>
    tpu.vector_store %arg17[%c0_237, %c0_238], %194 {strides = array<i32>} : memref<8x1280xf32, #tpu.memory_space<vmem>>, vector<8x1280xf32>,
    %c0_239 = arith.constant 0 : index
    %c100 = arith.constant 100 : index
    %196 = vector.load %arg17[%c0_239, %c100] : memref<8x1280xf32, #tpu.memory_space<vmem>>, vector<4x16xf32>
    %197 = vector.shape_cast %196 : vector<4x16xf32> to vector<4x1x16xf32>
    %c0_240 = arith.constant 0 : index
    %c0_241 = arith.constant 0 : index
    %c0_242 = arith.constant 0 : index
    %198 = vector.load %arg18[%c0_240, %c0_241, %c0_242] : memref<8x16x16xf32, #tpu.memory_space<vmem>>, vector<4x1x16xf32>
    tpu.vector_store %arg18[%c0_240, %c0_241, %c0_242], %197 {strides = array<i32>} : memref<8x16x16xf32, #tpu.memory_space<vmem>>, vector<4x1x16xf32>,
    %c0_243 = arith.constant 0 : index
    %c124_244 = arith.constant 124 : index
    %199 = vector.load %arg17[%c0_243, %c124_244] : memref<8x1280xf32, #tpu.memory_space<vmem>>, vector<4x16xf32>
    %200 = vector.shape_cast %199 : vector<4x16xf32> to vector<4x1x16xf32>
    %c0_245 = arith.constant 0 : index
    %c1 = arith.constant 1 : index
    %c0_246 = arith.constant 0 : index
    %201 = vector.load %arg18[%c0_245, %c1, %c0_246] : memref<8x16x16xf32, #tpu.memory_space<vmem>>, vector<4x1x16xf32>
    tpu.vector_store %arg18[%c0_245, %c1, %c0_246], %200 {strides = array<i32>} : memref<8x16x16xf32, #tpu.memory_space<vmem>>, vector<4x1x16xf32>,
    %c0_247 = arith.constant 0 : index
    %c148 = arith.constant 148 : index
    %202 = vector.load %arg17[%c0_247, %c148] : memref<8x1280xf32, #tpu.memory_space<vmem>>, vector<4x16xf32>
    %203 = vector.shape_cast %202 : vector<4x16xf32> to vector<4x1x16xf32>
    %c0_248 = arith.constant 0 : index
    %c2 = arith.constant 2 : index
    %c0_249 = arith.constant 0 : index
    %204 = vector.load %arg18[%c0_248, %c2, %c0_249] : memref<8x16x16xf32, #tpu.memory_space<vmem>>, vector<4x1x16xf32>
    tpu.vector_store %arg18[%c0_248, %c2, %c0_249], %203 {strides = array<i32>} : memref<8x16x16xf32, #tpu.memory_space<vmem>>, vector<4x1x16xf32>,
    %c0_250 = arith.constant 0 : index
    %c172 = arith.constant 172 : index
    %205 = vector.load %arg17[%c0_250, %c172] : memref<8x1280xf32, #tpu.memory_space<vmem>>, vector<4x16xf32>
    %206 = vector.shape_cast %205 : vector<4x16xf32> to vector<4x1x16xf32>
    %c0_251 = arith.constant 0 : index
    %c3 = arith.constant 3 : index
    %c0_252 = arith.constant 0 : index
    %207 = vector.load %arg18[%c0_251, %c3, %c0_252] : memref<8x16x16xf32, #tpu.memory_space<vmem>>, vector<4x1x16xf32>
    tpu.vector_store %arg18[%c0_251, %c3, %c0_252], %206 {strides = array<i32>} : memref<8x16x16xf32, #tpu.memory_space<vmem>>, vector<4x1x16xf32>,
    %c0_253 = arith.constant 0 : index
    %c196 = arith.constant 196 : index
    %208 = vector.load %arg17[%c0_253, %c196] : memref<8x1280xf32, #tpu.memory_space<vmem>>, vector<4x16xf32>
    %209 = vector.shape_cast %208 : vector<4x16xf32> to vector<4x1x16xf32>
    %c0_254 = arith.constant 0 : index
    %c4 = arith.constant 4 : index
    %c0_255 = arith.constant 0 : index
    %210 = vector.load %arg18[%c0_254, %c4, %c0_255] : memref<8x16x16xf32, #tpu.memory_space<vmem>>, vector<4x1x16xf32>
    tpu.vector_store %arg18[%c0_254, %c4, %c0_255], %209 {strides = array<i32>} : memref<8x16x16xf32, #tpu.memory_space<vmem>>, vector<4x1x16xf32>,
    %c0_256 = arith.constant 0 : index
    %c220_257 = arith.constant 220 : index
    %211 = vector.load %arg17[%c0_256, %c220_257] : memref<8x1280xf32, #tpu.memory_space<vmem>>, vector<4x16xf32>
    %212 = vector.shape_cast %211 : vector<4x16xf32> to vector<4x1x16xf32>
    %c0_258 = arith.constant 0 : index
    %c5 = arith.constant 5 : index
    %c0_259 = arith.constant 0 : index
    %213 = vector.load %arg18[%c0_258, %c5, %c0_259] : memref<8x16x16xf32, #tpu.memory_space<vmem>>, vector<4x1x16xf32>
    tpu.vector_store %arg18[%c0_258, %c5, %c0_259], %212 {strides = array<i32>} : memref<8x16x16xf32, #tpu.memory_space<vmem>>, vector<4x1x16xf32>,
    %c0_260 = arith.constant 0 : index
    %c244 = arith.constant 244 : index
    %214 = vector.load %arg17[%c0_260, %c244] : memref<8x1280xf32, #tpu.memory_space<vmem>>, vector<4x16xf32>
    %215 = vector.shape_cast %214 : vector<4x16xf32> to vector<4x1x16xf32>
    %c0_261 = arith.constant 0 : index
    %c6 = arith.constant 6 : index
    %c0_262 = arith.constant 0 : index
    %216 = vector.load %arg18[%c0_261, %c6, %c0_262] : memref<8x16x16xf32, #tpu.memory_space<vmem>>, vector<4x1x16xf32>
    tpu.vector_store %arg18[%c0_261, %c6, %c0_262], %215 {strides = array<i32>} : memref<8x16x16xf32, #tpu.memory_space<vmem>>, vector<4x1x16xf32>,
    %c0_263 = arith.constant 0 : index
    %c268 = arith.constant 268 : index
    %217 = vector.load %arg17[%c0_263, %c268] : memref<8x1280xf32, #tpu.memory_space<vmem>>, vector<4x16xf32>
    %218 = vector.shape_cast %217 : vector<4x16xf32> to vector<4x1x16xf32>
    %c0_264 = arith.constant 0 : index
    %c7 = arith.constant 7 : index
    %c0_265 = arith.constant 0 : index
    %219 = vector.load %arg18[%c0_264, %c7, %c0_265] : memref<8x16x16xf32, #tpu.memory_space<vmem>>, vector<4x1x16xf32>
    tpu.vector_store %arg18[%c0_264, %c7, %c0_265], %218 {strides = array<i32>} : memref<8x16x16xf32, #tpu.memory_space<vmem>>, vector<4x1x16xf32>,
    %c0_266 = arith.constant 0 : index
    %c292 = arith.constant 292 : index
    %220 = vector.load %arg17[%c0_266, %c292] : memref<8x1280xf32, #tpu.memory_space<vmem>>, vector<4x16xf32>
    %221 = vector.shape_cast %220 : vector<4x16xf32> to vector<4x1x16xf32>
    %c0_267 = arith.constant 0 : index
    %c8_268 = arith.constant 8 : index
    %c0_269 = arith.constant 0 : index
    %222 = vector.load %arg18[%c0_267, %c8_268, %c0_269] : memref<8x16x16xf32, #tpu.memory_space<vmem>>, vector<4x1x16xf32>
    tpu.vector_store %arg18[%c0_267, %c8_268, %c0_269], %221 {strides = array<i32>} : memref<8x16x16xf32, #tpu.memory_space<vmem>>, vector<4x1x16xf32>,
    %c0_270 = arith.constant 0 : index
    %c316 = arith.constant 316 : index
    %223 = vector.load %arg17[%c0_270, %c316] : memref<8x1280xf32, #tpu.memory_space<vmem>>, vector<4x16xf32>
    %224 = vector.shape_cast %223 : vector<4x16xf32> to vector<4x1x16xf32>
    %c0_271 = arith.constant 0 : index
    %c9 = arith.constant 9 : index
    %c0_272 = arith.constant 0 : index
    %225 = vector.load %arg18[%c0_271, %c9, %c0_272] : memref<8x16x16xf32, #tpu.memory_space<vmem>>, vector<4x1x16xf32>
    tpu.vector_store %arg18[%c0_271, %c9, %c0_272], %224 {strides = array<i32>} : memref<8x16x16xf32, #tpu.memory_space<vmem>>, vector<4x1x16xf32>,
    %c0_273 = arith.constant 0 : index
    %c340 = arith.constant 340 : index
    %226 = vector.load %arg17[%c0_273, %c340] : memref<8x1280xf32, #tpu.memory_space<vmem>>, vector<4x16xf32>
    %227 = vector.shape_cast %226 : vector<4x16xf32> to vector<4x1x16xf32>
    %c0_274 = arith.constant 0 : index
    %c10 = arith.constant 10 : index
    %c0_275 = arith.constant 0 : index
    %228 = vector.load %arg18[%c0_274, %c10, %c0_275] : memref<8x16x16xf32, #tpu.memory_space<vmem>>, vector<4x1x16xf32>
    tpu.vector_store %arg18[%c0_274, %c10, %c0_275], %227 {strides = array<i32>} : memref<8x16x16xf32, #tpu.memory_space<vmem>>, vector<4x1x16xf32>,
    %c0_276 = arith.constant 0 : index
    %c364 = arith.constant 364 : index
    %229 = vector.load %arg17[%c0_276, %c364] : memref<8x1280xf32, #tpu.memory_space<vmem>>, vector<4x16xf32>
    %230 = vector.shape_cast %229 : vector<4x16xf32> to vector<4x1x16xf32>
    %c0_277 = arith.constant 0 : index
    %c11 = arith.constant 11 : index
    %c0_278 = arith.constant 0 : index
    %231 = vector.load %arg18[%c0_277, %c11, %c0_278] : memref<8x16x16xf32, #tpu.memory_space<vmem>>, vector<4x1x16xf32>
    tpu.vector_store %arg18[%c0_277, %c11, %c0_278], %230 {strides = array<i32>} : memref<8x16x16xf32, #tpu.memory_space<vmem>>, vector<4x1x16xf32>,
    %c0_279 = arith.constant 0 : index
    %c388 = arith.constant 388 : index
    %232 = vector.load %arg17[%c0_279, %c388] : memref<8x1280xf32, #tpu.memory_space<vmem>>, vector<4x16xf32>
    %233 = vector.shape_cast %232 : vector<4x16xf32> to vector<4x1x16xf32>
    %c0_280 = arith.constant 0 : index
    %c12 = arith.constant 12 : index
    %c0_281 = arith.constant 0 : index
    %234 = vector.load %arg18[%c0_280, %c12, %c0_281] : memref<8x16x16xf32, #tpu.memory_space<vmem>>, vector<4x1x16xf32>
    tpu.vector_store %arg18[%c0_280, %c12, %c0_281], %233 {strides = array<i32>} : memref<8x16x16xf32, #tpu.memory_space<vmem>>, vector<4x1x16xf32>,
    %c0_282 = arith.constant 0 : index
    %c412 = arith.constant 412 : index
    %235 = vector.load %arg17[%c0_282, %c412] : memref<8x1280xf32, #tpu.memory_space<vmem>>, vector<4x16xf32>
    %236 = vector.shape_cast %235 : vector<4x16xf32> to vector<4x1x16xf32>
    %c0_283 = arith.constant 0 : index
    %c13 = arith.constant 13 : index
    %c0_284 = arith.constant 0 : index
    %237 = vector.load %arg18[%c0_283, %c13, %c0_284] : memref<8x16x16xf32, #tpu.memory_space<vmem>>, vector<4x1x16xf32>
    tpu.vector_store %arg18[%c0_283, %c13, %c0_284], %236 {strides = array<i32>} : memref<8x16x16xf32, #tpu.memory_space<vmem>>, vector<4x1x16xf32>,
    %c0_285 = arith.constant 0 : index
    %c436 = arith.constant 436 : index
    %238 = vector.load %arg17[%c0_285, %c436] : memref<8x1280xf32, #tpu.memory_space<vmem>>, vector<4x16xf32>
    %239 = vector.shape_cast %238 : vector<4x16xf32> to vector<4x1x16xf32>
    %c0_286 = arith.constant 0 : index
    %c14 = arith.constant 14 : index
    %c0_287 = arith.constant 0 : index
    %240 = vector.load %arg18[%c0_286, %c14, %c0_287] : memref<8x16x16xf32, #tpu.memory_space<vmem>>, vector<4x1x16xf32>
    tpu.vector_store %arg18[%c0_286, %c14, %c0_287], %239 {strides = array<i32>} : memref<8x16x16xf32, #tpu.memory_space<vmem>>, vector<4x1x16xf32>,
    %c0_288 = arith.constant 0 : index
    %c460 = arith.constant 460 : index
    %241 = vector.load %arg17[%c0_288, %c460] : memref<8x1280xf32, #tpu.memory_space<vmem>>, vector<4x16xf32>
    %242 = vector.shape_cast %241 : vector<4x16xf32> to vector<4x1x16xf32>
    %c0_289 = arith.constant 0 : index
    %c15 = arith.constant 15 : index
    %c0_290 = arith.constant 0 : index
    %243 = vector.load %arg18[%c0_289, %c15, %c0_290] : memref<8x16x16xf32, #tpu.memory_space<vmem>>, vector<4x1x16xf32>
    tpu.vector_store %arg18[%c0_289, %c15, %c0_290], %242 {strides = array<i32>} : memref<8x16x16xf32, #tpu.memory_space<vmem>>, vector<4x1x16xf32>,
    %c0_291 = arith.constant 0 : index
    %c740 = arith.constant 740 : index
    %244 = vector.load %arg17[%c0_291, %c740] : memref<8x1280xf32, #tpu.memory_space<vmem>>, vector<4x16xf32>
    %245 = vector.shape_cast %244 : vector<4x16xf32> to vector<4x1x16xf32>
    %c4_292 = arith.constant 4 : index
    %c0_293 = arith.constant 0 : index
    %c0_294 = arith.constant 0 : index
    %246 = vector.load %arg18[%c4_292, %c0_293, %c0_294] : memref<8x16x16xf32, #tpu.memory_space<vmem>>, vector<4x1x16xf32>
    tpu.vector_store %arg18[%c4_292, %c0_293, %c0_294], %245 {strides = array<i32>} : memref<8x16x16xf32, #tpu.memory_space<vmem>>, vector<4x1x16xf32>,
    %c0_295 = arith.constant 0 : index
    %c764 = arith.constant 764 : index
    %247 = vector.load %arg17[%c0_295, %c764] : memref<8x1280xf32, #tpu.memory_space<vmem>>, vector<4x16xf32>
    %248 = vector.shape_cast %247 : vector<4x16xf32> to vector<4x1x16xf32>
    %c4_296 = arith.constant 4 : index
    %c1_297 = arith.constant 1 : index
    %c0_298 = arith.constant 0 : index
    %249 = vector.load %arg18[%c4_296, %c1_297, %c0_298] : memref<8x16x16xf32, #tpu.memory_space<vmem>>, vector<4x1x16xf32>
    tpu.vector_store %arg18[%c4_296, %c1_297, %c0_298], %248 {strides = array<i32>} : memref<8x16x16xf32, #tpu.memory_space<vmem>>, vector<4x1x16xf32>,
    %c0_299 = arith.constant 0 : index
    %c788 = arith.constant 788 : index
    %250 = vector.load %arg17[%c0_299, %c788] : memref<8x1280xf32, #tpu.memory_space<vmem>>, vector<4x16xf32>
    %251 = vector.shape_cast %250 : vector<4x16xf32> to vector<4x1x16xf32>
    %c4_300 = arith.constant 4 : index
    %c2_301 = arith.constant 2 : index
    %c0_302 = arith.constant 0 : index
    %252 = vector.load %arg18[%c4_300, %c2_301, %c0_302] : memref<8x16x16xf32, #tpu.memory_space<vmem>>, vector<4x1x16xf32>
    tpu.vector_store %arg18[%c4_300, %c2_301, %c0_302], %251 {strides = array<i32>} : memref<8x16x16xf32, #tpu.memory_space<vmem>>, vector<4x1x16xf32>,
    %c0_303 = arith.constant 0 : index
    %c812 = arith.constant 812 : index
    %253 = vector.load %arg17[%c0_303, %c812] : memref<8x1280xf32, #tpu.memory_space<vmem>>, vector<4x16xf32>
    %254 = vector.shape_cast %253 : vector<4x16xf32> to vector<4x1x16xf32>
    %c4_304 = arith.constant 4 : index
    %c3_305 = arith.constant 3 : index
    %c0_306 = arith.constant 0 : index
    %255 = vector.load %arg18[%c4_304, %c3_305, %c0_306] : memref<8x16x16xf32, #tpu.memory_space<vmem>>, vector<4x1x16xf32>
    tpu.vector_store %arg18[%c4_304, %c3_305, %c0_306], %254 {strides = array<i32>} : memref<8x16x16xf32, #tpu.memory_space<vmem>>, vector<4x1x16xf32>,
    %c0_307 = arith.constant 0 : index
    %c836 = arith.constant 836 : index
    %256 = vector.load %arg17[%c0_307, %c836] : memref<8x1280xf32, #tpu.memory_space<vmem>>, vector<4x16xf32>
    %257 = vector.shape_cast %256 : vector<4x16xf32> to vector<4x1x16xf32>
    %c4_308 = arith.constant 4 : index
    %c4_309 = arith.constant 4 : index
    %c0_310 = arith.constant 0 : index
    %258 = vector.load %arg18[%c4_308, %c4_309, %c0_310] : memref<8x16x16xf32, #tpu.memory_space<vmem>>, vector<4x1x16xf32>
    tpu.vector_store %arg18[%c4_308, %c4_309, %c0_310], %257 {strides = array<i32>} : memref<8x16x16xf32, #tpu.memory_space<vmem>>, vector<4x1x16xf32>,
    %c0_311 = arith.constant 0 : index
    %c860 = arith.constant 860 : index
    %259 = vector.load %arg17[%c0_311, %c860] : memref<8x1280xf32, #tpu.memory_space<vmem>>, vector<4x16xf32>
    %260 = vector.shape_cast %259 : vector<4x16xf32> to vector<4x1x16xf32>
    %c4_312 = arith.constant 4 : index
    %c5_313 = arith.constant 5 : index
    %c0_314 = arith.constant 0 : index
    %261 = vector.load %arg18[%c4_312, %c5_313, %c0_314] : memref<8x16x16xf32, #tpu.memory_space<vmem>>, vector<4x1x16xf32>
    tpu.vector_store %arg18[%c4_312, %c5_313, %c0_314], %260 {strides = array<i32>} : memref<8x16x16xf32, #tpu.memory_space<vmem>>, vector<4x1x16xf32>,
    %c0_315 = arith.constant 0 : index
    %c884 = arith.constant 884 : index
    %262 = vector.load %arg17[%c0_315, %c884] : memref<8x1280xf32, #tpu.memory_space<vmem>>, vector<4x16xf32>
    %263 = vector.shape_cast %262 : vector<4x16xf32> to vector<4x1x16xf32>
    %c4_316 = arith.constant 4 : index
    %c6_317 = arith.constant 6 : index
    %c0_318 = arith.constant 0 : index
    %264 = vector.load %arg18[%c4_316, %c6_317, %c0_318] : memref<8x16x16xf32, #tpu.memory_space<vmem>>, vector<4x1x16xf32>
    tpu.vector_store %arg18[%c4_316, %c6_317, %c0_318], %263 {strides = array<i32>} : memref<8x16x16xf32, #tpu.memory_space<vmem>>, vector<4x1x16xf32>,
    %c0_319 = arith.constant 0 : index
    %c908 = arith.constant 908 : index
    %265 = vector.load %arg17[%c0_319, %c908] : memref<8x1280xf32, #tpu.memory_space<vmem>>, vector<4x16xf32>
    %266 = vector.shape_cast %265 : vector<4x16xf32> to vector<4x1x16xf32>
    %c4_320 = arith.constant 4 : index
    %c7_321 = arith.constant 7 : index
    %c0_322 = arith.constant 0 : index
    %267 = vector.load %arg18[%c4_320, %c7_321, %c0_322] : memref<8x16x16xf32, #tpu.memory_space<vmem>>, vector<4x1x16xf32>
    tpu.vector_store %arg18[%c4_320, %c7_321, %c0_322], %266 {strides = array<i32>} : memref<8x16x16xf32, #tpu.memory_space<vmem>>, vector<4x1x16xf32>,
    %c0_323 = arith.constant 0 : index
    %c932 = arith.constant 932 : index
    %268 = vector.load %arg17[%c0_323, %c932] : memref<8x1280xf32, #tpu.memory_space<vmem>>, vector<4x16xf32>
    %269 = vector.shape_cast %268 : vector<4x16xf32> to vector<4x1x16xf32>
    %c4_324 = arith.constant 4 : index
    %c8_325 = arith.constant 8 : index
    %c0_326 = arith.constant 0 : index
    %270 = vector.load %arg18[%c4_324, %c8_325, %c0_326] : memref<8x16x16xf32, #tpu.memory_space<vmem>>, vector<4x1x16xf32>
    tpu.vector_store %arg18[%c4_324, %c8_325, %c0_326], %269 {strides = array<i32>} : memref<8x16x16xf32, #tpu.memory_space<vmem>>, vector<4x1x16xf32>,
    %c0_327 = arith.constant 0 : index
    %c956 = arith.constant 956 : index
    %271 = vector.load %arg17[%c0_327, %c956] : memref<8x1280xf32, #tpu.memory_space<vmem>>, vector<4x16xf32>
    %272 = vector.shape_cast %271 : vector<4x16xf32> to vector<4x1x16xf32>
    %c4_328 = arith.constant 4 : index
    %c9_329 = arith.constant 9 : index
    %c0_330 = arith.constant 0 : index
    %273 = vector.load %arg18[%c4_328, %c9_329, %c0_330] : memref<8x16x16xf32, #tpu.memory_space<vmem>>, vector<4x1x16xf32>
    tpu.vector_store %arg18[%c4_328, %c9_329, %c0_330], %272 {strides = array<i32>} : memref<8x16x16xf32, #tpu.memory_space<vmem>>, vector<4x1x16xf32>,
    %c0_331 = arith.constant 0 : index
    %c980 = arith.constant 980 : index
    %274 = vector.load %arg17[%c0_331, %c980] : memref<8x1280xf32, #tpu.memory_space<vmem>>, vector<4x16xf32>
    %275 = vector.shape_cast %274 : vector<4x16xf32> to vector<4x1x16xf32>
    %c4_332 = arith.constant 4 : index
    %c10_333 = arith.constant 10 : index
    %c0_334 = arith.constant 0 : index
    %276 = vector.load %arg18[%c4_332, %c10_333, %c0_334] : memref<8x16x16xf32, #tpu.memory_space<vmem>>, vector<4x1x16xf32>
    tpu.vector_store %arg18[%c4_332, %c10_333, %c0_334], %275 {strides = array<i32>} : memref<8x16x16xf32, #tpu.memory_space<vmem>>, vector<4x1x16xf32>,
    %c0_335 = arith.constant 0 : index
    %c1004 = arith.constant 1004 : index
    %277 = vector.load %arg17[%c0_335, %c1004] : memref<8x1280xf32, #tpu.memory_space<vmem>>, vector<4x16xf32>
    %278 = vector.shape_cast %277 : vector<4x16xf32> to vector<4x1x16xf32>
    %c4_336 = arith.constant 4 : index
    %c11_337 = arith.constant 11 : index
    %c0_338 = arith.constant 0 : index
    %279 = vector.load %arg18[%c4_336, %c11_337, %c0_338] : memref<8x16x16xf32, #tpu.memory_space<vmem>>, vector<4x1x16xf32>
    tpu.vector_store %arg18[%c4_336, %c11_337, %c0_338], %278 {strides = array<i32>} : memref<8x16x16xf32, #tpu.memory_space<vmem>>, vector<4x1x16xf32>,
    %c0_339 = arith.constant 0 : index
    %c1028 = arith.constant 1028 : index
    %280 = vector.load %arg17[%c0_339, %c1028] : memref<8x1280xf32, #tpu.memory_space<vmem>>, vector<4x16xf32>
    %281 = vector.shape_cast %280 : vector<4x16xf32> to vector<4x1x16xf32>
    %c4_340 = arith.constant 4 : index
    %c12_341 = arith.constant 12 : index
    %c0_342 = arith.constant 0 : index
    %282 = vector.load %arg18[%c4_340, %c12_341, %c0_342] : memref<8x16x16xf32, #tpu.memory_space<vmem>>, vector<4x1x16xf32>
    tpu.vector_store %arg18[%c4_340, %c12_341, %c0_342], %281 {strides = array<i32>} : memref<8x16x16xf32, #tpu.memory_space<vmem>>, vector<4x1x16xf32>,
    %c0_343 = arith.constant 0 : index
    %c1052 = arith.constant 1052 : index
    %283 = vector.load %arg17[%c0_343, %c1052] : memref<8x1280xf32, #tpu.memory_space<vmem>>, vector<4x16xf32>
    %284 = vector.shape_cast %283 : vector<4x16xf32> to vector<4x1x16xf32>
    %c4_344 = arith.constant 4 : index
    %c13_345 = arith.constant 13 : index
    %c0_346 = arith.constant 0 : index
    %285 = vector.load %arg18[%c4_344, %c13_345, %c0_346] : memref<8x16x16xf32, #tpu.memory_space<vmem>>, vector<4x1x16xf32>
    tpu.vector_store %arg18[%c4_344, %c13_345, %c0_346], %284 {strides = array<i32>} : memref<8x16x16xf32, #tpu.memory_space<vmem>>, vector<4x1x16xf32>,
    %c0_347 = arith.constant 0 : index
    %c1076 = arith.constant 1076 : index
    %286 = vector.load %arg17[%c0_347, %c1076] : memref<8x1280xf32, #tpu.memory_space<vmem>>, vector<4x16xf32>
    %287 = vector.shape_cast %286 : vector<4x16xf32> to vector<4x1x16xf32>
    %c4_348 = arith.constant 4 : index
    %c14_349 = arith.constant 14 : index
    %c0_350 = arith.constant 0 : index
    %288 = vector.load %arg18[%c4_348, %c14_349, %c0_350] : memref<8x16x16xf32, #tpu.memory_space<vmem>>, vector<4x1x16xf32>
    tpu.vector_store %arg18[%c4_348, %c14_349, %c0_350], %287 {strides = array<i32>} : memref<8x16x16xf32, #tpu.memory_space<vmem>>, vector<4x1x16xf32>,
    %c0_351 = arith.constant 0 : index
    %c1100 = arith.constant 1100 : index
    %289 = vector.load %arg17[%c0_351, %c1100] : memref<8x1280xf32, #tpu.memory_space<vmem>>, vector<4x16xf32>
    %290 = vector.shape_cast %289 : vector<4x16xf32> to vector<4x1x16xf32>
    %c4_352 = arith.constant 4 : index
    %c15_353 = arith.constant 15 : index
    %c0_354 = arith.constant 0 : index
    %291 = vector.load %arg18[%c4_352, %c15_353, %c0_354] : memref<8x16x16xf32, #tpu.memory_space<vmem>>, vector<4x1x16xf32>
    tpu.vector_store %arg18[%c4_352, %c15_353, %c0_354], %290 {strides = array<i32>} : memref<8x16x16xf32, #tpu.memory_space<vmem>>, vector<4x1x16xf32>,
    %c0_355 = arith.constant 0 : index
    %c0_356 = arith.constant 0 : index
    %292 = vector.load %arg2[%c0_355, %c0_356] : memref<8x256xf32, #tpu.memory_space<vmem>>, vector<8x256xf32>
    %c0_357 = arith.constant 0 : index
    %c0_358 = arith.constant 0 : index
    %293 = vector.load %arg6[%c0_357, %c0_358] : memref<4x8xf32, #tpu.memory_space<vmem>>, vector<4x8xf32>
    %cst_359 = arith.constant dense<0.000000e+00> : vector<4x256xf32>
    %294 = tpu.matmul %293, %292, %cst_359 {dimension_numbers = #tpu.dot_dimension_numbers<[1], [0], [0], [1], [0, 0, 1, 1], [], []>} : vector<4x8xf32>, vector<8x256xf32>, vector<4x256xf32> -> vector<4x256xf32>
    %295 = vector.extract_strided_slice %294 {offsets = [0, 0], sizes = [2, 256], strides = [1, 1]} : vector<4x256xf32> to vector<2x256xf32>
    %c0_360 = arith.constant 0 : index
    %c0_361 = arith.constant 0 : index
    %296 = vector.load %arg7[%c0_360, %c0_361] : memref<256x16xf32, #tpu.memory_space<vmem>>, vector<256x16xf32>
    %cst_362 = arith.constant dense<0.000000e+00> : vector<2x16xf32>
    %297 = tpu.matmul %295, %296, %cst_362 {dimension_numbers = #tpu.dot_dimension_numbers<[1], [0], [0], [1], [0, 0, 1, 1], [], []>} : vector<2x256xf32>, vector<256x16xf32>, vector<2x16xf32> -> vector<2x16xf32>
    %c0_363 = arith.constant 0 : index
    %c0_364 = arith.constant 0 : index
    %298 = vector.load %arg9[%c0_363, %c0_364] : memref<1x16xf32, #tpu.memory_space<vmem>>, vector<1x16xf32>
    %299 = vector.broadcast %298 : vector<1x16xf32> to vector<2x16xf32>
    %300 = arith.addf %297, %299 : vector<2x16xf32>
    %301 = vector.extract_strided_slice %294 {offsets = [2, 0], sizes = [2, 256], strides = [1, 1]} : vector<4x256xf32> to vector<2x256xf32>
    %c0_365 = arith.constant 0 : index
    %c0_366 = arith.constant 0 : index
    %302 = vector.load %arg8[%c0_365, %c0_366] : memref<256x16xf32, #tpu.memory_space<vmem>>, vector<256x16xf32>
    %cst_367 = arith.constant dense<0.000000e+00> : vector<2x16xf32>
    %303 = tpu.matmul %301, %302, %cst_367 {dimension_numbers = #tpu.dot_dimension_numbers<[1], [0], [0], [1], [0, 0, 1, 1], [], []>} : vector<2x256xf32>, vector<256x16xf32>, vector<2x16xf32> -> vector<2x16xf32>
    %c0_368 = arith.constant 0 : index
    %c0_369 = arith.constant 0 : index
    %304 = vector.load %arg10[%c0_368, %c0_369] : memref<1x16xf32, #tpu.memory_space<vmem>>, vector<1x16xf32>
    %305 = vector.broadcast %304 : vector<1x16xf32> to vector<2x16xf32>
    %306 = arith.addf %303, %305 : vector<2x16xf32>
    %c0_370 = arith.constant 0 : index
    %c0_371 = arith.constant 0 : index
    %c0_372 = arith.constant 0 : index
    %307 = vector.load %arg11[%c0_370, %c0_371, %c0_372] : memref<4x1x1xf32, #tpu.memory_space<vmem>>, vector<4x1x1xf32>
    %c0_373 = arith.constant 0 : index
    %c0_374 = arith.constant 0 : index
    %c0_375 = arith.constant 0 : index
    %308 = vector.load %arg12[%c0_373, %c0_374, %c0_375] : memref<4x1x1xf32, #tpu.memory_space<vmem>>, vector<4x1x1xf32>
    %c0_376 = arith.constant 0 : index
    %309 = memref.load %arg13[%c0_376] : memref<1xf32, #tpu.memory_space<smem>>
    %310 = vector.extract_strided_slice %300 {offsets = [0, 0], sizes = [1, 16], strides = [1, 1]} : vector<2x16xf32> to vector<1x16xf32>
    %311 = vector.extract_strided_slice %306 {offsets = [0, 0], sizes = [1, 16], strides = [1, 1]} : vector<2x16xf32> to vector<1x16xf32>
    %312 = vector.shape_cast %310 : vector<1x16xf32> to vector<1x16x1xf32>
    %313 = vector.shape_cast %311 : vector<1x16xf32> to vector<1x1x16xf32>
    %314 = vector.broadcast %312 : vector<1x16x1xf32> to vector<1x16x16xf32>
    %315 = vector.broadcast %313 : vector<1x1x16xf32> to vector<1x16x16xf32>
    %316 = arith.mulf %314, %315 : vector<1x16x16xf32>
    %317 = vector.broadcast %307 : vector<4x1x1xf32> to vector<4x16x16xf32>
    %318 = vector.broadcast %316 : vector<1x16x16xf32> to vector<4x16x16xf32>
    %319 = arith.mulf %317, %318 : vector<4x16x16xf32>
    %320 = vector.broadcast %308 : vector<4x1x1xf32> to vector<4x16x16xf32>
    %321 = arith.addf %319, %320 : vector<4x16x16xf32>
    %cst_377 = arith.constant dense<0xFF800000> : vector<4x16xf32>
    %322 = vector.multi_reduction <maximumf>, %321, %cst_377 [2] : vector<4x16x16xf32> to vector<4x16xf32>
    %323 = vector.shape_cast %322 : vector<4x16xf32> to vector<4x16x1xf32>
    %324 = vector.broadcast %323 : vector<4x16x1xf32> to vector<4x16x16xf32>
    %325 = arith.subf %321, %324 : vector<4x16x16xf32>
    %326 = math.exp %325 : vector<4x16x16xf32>
    %cst_378 = arith.constant dense<0.000000e+00> : vector<4x16xf32>
    %327 = vector.multi_reduction <add>, %326, %cst_378 [2] : vector<4x16x16xf32> to vector<4x16xf32>
    %328 = vector.shape_cast %327 : vector<4x16xf32> to vector<4x16x1xf32>
    %329 = vector.broadcast %328 : vector<4x16x1xf32> to vector<4x16x16xf32>
    %330 = arith.divf %326, %329 : vector<4x16x16xf32>
    %c0_379 = arith.constant 0 : index
    %c0_380 = arith.constant 0 : index
    %c0_381 = arith.constant 0 : index
    %331 = vector.load %arg18[%c0_379, %c0_380, %c0_381] : memref<8x16x16xf32, #tpu.memory_space<vmem>>, vector<4x16x16xf32>
    "tpu.trace_start"() <{level = 10 : i32, message = "cij,cjw->ciw"}> : () -> ()
    %cst_382 = arith.constant dense<0.000000e+00> : vector<4x16x16xf32>
    %332 = tpu.matmul %330, %331, %cst_382 {dimension_numbers = #tpu.dot_dimension_numbers<[2], [1], [1], [2], [0, 0, 0, 1, 1, 2], [0], [0]>} : vector<4x16x16xf32>, vector<4x16x16xf32>, vector<4x16x16xf32> -> vector<4x16x16xf32>
    "tpu.trace_stop"() : () -> ()
    %333 = vector.broadcast %309 : f32 to vector<4x16x16xf32>
    %334 = arith.mulf %333, %332 : vector<4x16x16xf32>
    %335 = arith.addf %334, %331 : vector<4x16x16xf32>
    %c0_383 = arith.constant 0 : index
    %c0_384 = arith.constant 0 : index
    %c0_385 = arith.constant 0 : index
    %336 = vector.load %arg3[%c0_383, %c0_384, %c0_385] : memref<8x16x16xf32, #tpu.memory_space<vmem>>, vector<4x16x16xf32>
    %337 = arith.addf %335, %336 : vector<4x16x16xf32>
    %c0_386 = arith.constant 0 : index
    %c0_387 = arith.constant 0 : index
    %c0_388 = arith.constant 0 : index
    %338 = vector.load %arg14[%c0_386, %c0_387, %c0_388] : memref<8x16x16xf32, #tpu.memory_space<vmem>>, vector<4x16x16xf32>
    tpu.vector_store %arg14[%c0_386, %c0_387, %c0_388], %337 {strides = array<i32>} : memref<8x16x16xf32, #tpu.memory_space<vmem>>, vector<4x16x16xf32>,
    %339 = vector.extract_strided_slice %300 {offsets = [1, 0], sizes = [1, 16], strides = [1, 1]} : vector<2x16xf32> to vector<1x16xf32>
    %340 = vector.extract_strided_slice %306 {offsets = [1, 0], sizes = [1, 16], strides = [1, 1]} : vector<2x16xf32> to vector<1x16xf32>
    %341 = vector.shape_cast %339 : vector<1x16xf32> to vector<1x16x1xf32>
    %342 = vector.shape_cast %340 : vector<1x16xf32> to vector<1x1x16xf32>
    %343 = vector.broadcast %341 : vector<1x16x1xf32> to vector<1x16x16xf32>
    %344 = vector.broadcast %342 : vector<1x1x16xf32> to vector<1x16x16xf32>
    %345 = arith.mulf %343, %344 : vector<1x16x16xf32>
    %346 = vector.broadcast %307 : vector<4x1x1xf32> to vector<4x16x16xf32>
    %347 = vector.broadcast %345 : vector<1x16x16xf32> to vector<4x16x16xf32>
    %348 = arith.mulf %346, %347 : vector<4x16x16xf32>
    %349 = vector.broadcast %308 : vector<4x1x1xf32> to vector<4x16x16xf32>
    %350 = arith.addf %348, %349 : vector<4x16x16xf32>
    %cst_389 = arith.constant dense<0xFF800000> : vector<4x16xf32>
    %351 = vector.multi_reduction <maximumf>, %350, %cst_389 [2] : vector<4x16x16xf32> to vector<4x16xf32>
    %352 = vector.shape_cast %351 : vector<4x16xf32> to vector<4x16x1xf32>
    %353 = vector.broadcast %352 : vector<4x16x1xf32> to vector<4x16x16xf32>
    %354 = arith.subf %350, %353 : vector<4x16x16xf32>
    %355 = math.exp %354 : vector<4x16x16xf32>
    %cst_390 = arith.constant dense<0.000000e+00> : vector<4x16xf32>
    %356 = vector.multi_reduction <add>, %355, %cst_390 [2] : vector<4x16x16xf32> to vector<4x16xf32>
    %357 = vector.shape_cast %356 : vector<4x16xf32> to vector<4x16x1xf32>
    %358 = vector.broadcast %357 : vector<4x16x1xf32> to vector<4x16x16xf32>
    %359 = arith.divf %355, %358 : vector<4x16x16xf32>
    %c4_391 = arith.constant 4 : index
    %c0_392 = arith.constant 0 : index
    %c0_393 = arith.constant 0 : index
    %360 = vector.load %arg18[%c4_391, %c0_392, %c0_393] : memref<8x16x16xf32, #tpu.memory_space<vmem>>, vector<4x16x16xf32>
    "tpu.trace_start"() <{level = 10 : i32, message = "cij,cjw->ciw"}> : () -> ()
    %cst_394 = arith.constant dense<0.000000e+00> : vector<4x16x16xf32>
    %361 = tpu.matmul %359, %360, %cst_394 {dimension_numbers = #tpu.dot_dimension_numbers<[2], [1], [1], [2], [0, 0, 0, 1, 1, 2], [0], [0]>} : vector<4x16x16xf32>, vector<4x16x16xf32>, vector<4x16x16xf32> -> vector<4x16x16xf32>
    "tpu.trace_stop"() : () -> ()
    %362 = vector.broadcast %309 : f32 to vector<4x16x16xf32>
    %363 = arith.mulf %362, %361 : vector<4x16x16xf32>
    %364 = arith.addf %363, %360 : vector<4x16x16xf32>
    %c4_395 = arith.constant 4 : index
    %c0_396 = arith.constant 0 : index
    %c0_397 = arith.constant 0 : index
    %365 = vector.load %arg3[%c4_395, %c0_396, %c0_397] : memref<8x16x16xf32, #tpu.memory_space<vmem>>, vector<4x16x16xf32>
    %366 = arith.addf %364, %365 : vector<4x16x16xf32>
    %c4_398 = arith.constant 4 : index
    %c0_399 = arith.constant 0 : index
    %c0_400 = arith.constant 0 : index
    %367 = vector.load %arg14[%c4_398, %c0_399, %c0_400] : memref<8x16x16xf32, #tpu.memory_space<vmem>>, vector<4x16x16xf32>
    tpu.vector_store %arg14[%c4_398, %c0_399, %c0_400], %366 {strides = array<i32>} : memref<8x16x16xf32, #tpu.memory_space<vmem>>, vector<4x16x16xf32>,
    return
  }
}

</mosaic_0001>

<llo_original>
// kernel: _lambda_.1
$region0: #{_lambda_.1}
  #allocation0 [shape = 'u32[]', space=smem, size = 0x4, offset = 0x4, fixed_abs, tag = 'smem constant byte address 0x4 - core index']
  #allocation1 [shape = 'u32[144,128]{1,0:T(1,128)}', space=vmem, size = 0x12000, scoped, tag = 'internal scratch']
  #allocation2 [shape = 'f32[8,1536]{1,0:T(8,128)}', space=vmem, size = 0xc000, scoped, tag = 'scratch operand']
  #allocation3 [shape = 'f32[72,1280]{1,0:T(8,128)}', space=vmem, size = 0x5a000, scoped, tag = 'scratch operand']
  #allocation4 [shape = 'f32[8,1280]{1,0:T(8,128)}', space=vmem, size = 0xa000, scoped, tag = 'scratch operand']
  #allocation5 [shape = 'f32[8,16,16]{2,1,0:T(8,128)}', space=vmem, size = 0x10000, scoped, tag = 'scratch operand']
  #allocation6 [shape = 'f32[1]{0:T(128)S(6)}', space=smem, size = 0x200, scoped, tag = 'scoped memory for _lambda_.1']
  %s0 = inlined_call_operand.vmem [shape: f32[1,1280], index: 0, kind: input, shape index: {}]
  %s1 = inlined_call_operand.vmem [shape: f32[8,1280], index: 1, kind: input, shape index: {}]
  %s2 = inlined_call_operand.vmem [shape: f32[8,256], index: 2, kind: input, shape index: {}]
  %s3 = inlined_call_operand.vmem [shape: f32[8,16,16], index: 3, kind: input, shape index: {}]
  %s4 = inlined_call_operand.vmem [shape: f32[2,3,8,72], index: 4, kind: input, shape index: {}]
  %s5 = inlined_call_operand.vmem [shape: f32[2,3,8,1], index: 5, kind: input, shape index: {}]
  %s6 = inlined_call_operand.vmem [shape: f32[4,8], index: 6, kind: input, shape index: {}]
  %s7 = inlined_call_operand.vmem [shape: f32[256,16], index: 7, kind: input, shape index: {}]
  %s8 = inlined_call_operand.vmem [shape: f32[256,16], index: 8, kind: input, shape index: {}]
  %s9 = inlined_call_operand.vmem [shape: f32[1,16], index: 9, kind: input, shape index: {}]
  %s10 = inlined_call_operand.vmem [shape: f32[1,16], index: 10, kind: input, shape index: {}]
  %s11 = inlined_call_operand.vmem [shape: f32[4,1,1], index: 11, kind: input, shape index: {}]
  %s12 = inlined_call_operand.vmem [shape: f32[4,1,1], index: 12, kind: input, shape index: {}]
  %s13 = inlined_call_operand.<no memory space> [shape: f32[1], index: 13, kind: input, shape index: {}]
  %s14 = inlined_call_operand.hbm [shape: f32[8,16,16], index: 14, kind: output, shape index: {}]
  %s15 = sld [smem:[#allocation0]]
  $region66: #{_lambda_.1} parent=0
    _
  %s17 = ssub.s32 1, %s15
  %s18 = scalar_select 0, %s17, %s15
  %19 = sst [smem:[#allocation6]] %s13
  $region1: #{_lambda_.1} parent=0
    #allocation7 [shape = 'u8[65536]{0}', space=vmem, size = 0x10000, scoped, tag = 'output window, operand 0, single buffered']
    #allocation8 [shape = 's32[1]{0}', space=sflag, size = 0x4, scoped, tag = 'scoped memory for _lambda_.1']
    %20 = vsyncpa [#allocation8], 0
    // Predicated region
    $region2: #{_lambda_.1} parent=1 // pred_check
      _
    $region3: #{_lambda_.1} parent=1 // pred_check_branch
      %22 = sbr.rel (0) target = $region5
    $region4: #{_lambda_.1} parent=1 // pred_region
      _
    $region5: #{_lambda_.1} parent=1 // pred_fallthru
      _
    // Predicated region
    $region6: #{_lambda_.1} parent=1 // pred_check
      _
    $region7: #{_lambda_.1} parent=1 // pred_check_branch
      %24 = sbr.rel (0) target = $region9
    $region8: #{_lambda_.1} parent=1 // pred_region
      _
    $region9: #{_lambda_.1} parent=1 // pred_fallthru
      _
    // Predicated region
    $region10: #{_lambda_.1} parent=1 // pred_check
      _
    $region11: #{_lambda_.1} parent=1 // pred_check_branch
      %26 = sbr.rel (0) target = $region13
    $region12: #{_lambda_.1} parent=1 // pred_region
      _
    $region13: #{_lambda_.1} parent=1 // pred_fallthru
      _
    // Predicated region
    $region14: #{_lambda_.1} parent=1 // pred_check
      _
    $region15: #{_lambda_.1} parent=1 // pred_check_branch
      %28 = sbr.rel (0) target = $region17
    $region16: #{_lambda_.1} parent=1 // pred_region
      _
    $region17: #{_lambda_.1} parent=1 // pred_fallthru
      _
    // Predicated region
    $region18: #{_lambda_.1} parent=1 // pred_check
      _
    $region19: #{_lambda_.1} parent=1 // pred_check_branch
      %30 = sbr.rel (0) target = $region21
    $region20: #{_lambda_.1} parent=1 // pred_region
      _
    $region21: #{_lambda_.1} parent=1 // pred_fallthru
      _
    // Predicated region
    $region22: #{_lambda_.1} parent=1 // pred_check
      _
    $region23: #{_lambda_.1} parent=1 // pred_check_branch
      %32 = sbr.rel (0) target = $region25
    $region24: #{_lambda_.1} parent=1 // pred_region
      _
    $region25: #{_lambda_.1} parent=1 // pred_fallthru
      _
    // Predicated region
    $region26: #{_lambda_.1} parent=1 // pred_check
      _
    $region27: #{_lambda_.1} parent=1 // pred_check_branch
      %34 = sbr.rel (0) target = $region29
    $region28: #{_lambda_.1} parent=1 // pred_region
      _
    $region29: #{_lambda_.1} parent=1 // pred_fallthru
      _
    // Predicated region
    $region30: #{_lambda_.1} parent=1 // pred_check
      _
    $region31: #{_lambda_.1} parent=1 // pred_check_branch
      %36 = sbr.rel (0) target = $region33
    $region32: #{_lambda_.1} parent=1 // pred_region
      _
    $region33: #{_lambda_.1} parent=1 // pred_fallthru
      _
    // Predicated region
    $region34: #{_lambda_.1} parent=1 // pred_check
      _
    $region35: #{_lambda_.1} parent=1 // pred_check_branch
      %38 = sbr.rel (0) target = $region37
    $region36: #{_lambda_.1} parent=1 // pred_region
      _
    $region37: #{_lambda_.1} parent=1 // pred_fallthru
      _
    // Predicated region
    $region38: #{_lambda_.1} parent=1 // pred_check
      _
    $region39: #{_lambda_.1} parent=1 // pred_check_branch
      %40 = sbr.rel (0) target = $region41
    $region40: #{_lambda_.1} parent=1 // pred_region
      _
    $region41: #{_lambda_.1} parent=1 // pred_fallthru
      _
    // Predicated region
    $region42: #{_lambda_.1} parent=1 // pred_check
      _
    $region43: #{_lambda_.1} parent=1 // pred_check_branch
      %42 = sbr.rel (0) target = $region45
    $region44: #{_lambda_.1} parent=1 // pred_region
      _
    $region45: #{_lambda_.1} parent=1 // pred_fallthru
      _
    // Predicated region
    $region46: #{_lambda_.1} parent=1 // pred_check
      _
    $region47: #{_lambda_.1} parent=1 // pred_check_branch
      %44 = sbr.rel (0) target = $region49
    $region48: #{_lambda_.1} parent=1 // pred_region
      _
    $region49: #{_lambda_.1} parent=1 // pred_fallthru
      _
    // Predicated region
    $region50: #{_lambda_.1} parent=1 // pred_check
      _
    $region51: #{_lambda_.1} parent=1 // pred_check_branch
      %46 = sbr.rel (0) target = $region53
    $region52: #{_lambda_.1} parent=1 // pred_region
      _
    $region53: #{_lambda_.1} parent=1 // pred_fallthru
      _
    // Predicated region
    $region54: #{_lambda_.1} parent=1 // pred_check
      _
    $region55: #{_lambda_.1} parent=1 // pred_check_branch
      %48 = sbr.rel (0) target = $region57
    $region56: #{_lambda_.1} parent=1 // pred_region
      _
    $region57: #{_lambda_.1} parent=1 // pred_fallthru
      _
    %v49 = vld [vmem:[%s1] sm:$0xff]
    %v50 = vld [vmem:[%s1 + $0x8] sm:$0xff]
    %v51 = vld [vmem:[%s1 + $0x10] sm:$0xff]
    %v52 = vld [vmem:[%s1 + $0x18] sm:$0xff]
    %v53 = vld [vmem:[%s1 + $0x20] sm:$0xff]
    %v54 = vld [vmem:[%s1 + $0x28] sm:$0xff]
    %v55 = vld [vmem:[%s1 + $0x30] sm:$0xff]
    %v56 = vld [vmem:[%s1 + $0x38] sm:$0xff]
    %v57 = vld [vmem:[%s1 + $0x40] sm:$0xff]
    %v58 = vld [vmem:[%s1 + $0x48] sm:$0xff]
    %v59 = vld [vmem:[%s0] sm:$0xff]
    %v60 = vld [vmem:[%s0 + $0x8] sm:$0x3]
    %v61 = vld [vmem:[%s4] sm:$0xff]
    %v62 = vld [vmem:[%s4 + $0x8] sm:$0xff]
    %v63 = vld [vmem:[%s4 + $0x10] sm:$0xff]
    %v64 = vld [vmem:[%s4 + $0x18] sm:$0xff]
    %v65 = vld [vmem:[%s4 + $0x20] sm:$0xff]
    %v66 = vld [vmem:[%s4 + $0x28] sm:$0xff]
    %v67 = vld [vmem:[%s5] sm:$0xff]
    %v68 = vld [vmem:[%s5 + $0x8] sm:$0xff]
    %v69 = vld [vmem:[%s5 + $0x10] sm:$0xff]
    %v70 = vld [vmem:[%s5 + $0x18] sm:$0xff]
    %v71 = vld [vmem:[%s5 + $0x20] sm:$0xff]
    %v72 = vld [vmem:[%s5 + $0x28] sm:$0xff]
    %73 = vst [vmem:[#allocation2] sm:$0xff] 0.0
    %74 = vst [vmem:[#allocation2 + $0x8] sm:$0xff] 0.0
    %75 = vst [vmem:[#allocation2 + $0x10] sm:$0xff] 0.0
    %76 = vst [vmem:[#allocation2 + $0x18] sm:$0xff] 0.0
    %77 = vst [vmem:[#allocation2 + $0x20] sm:$0xff] 0.0
    %78 = vst [vmem:[#allocation2 + $0x28] sm:$0xff] 0.0
    %79 = vst [vmem:[#allocation2 + $0x30] sm:$0xff] 0.0
    %80 = vst [vmem:[#allocation2 + $0x38] sm:$0xff] 0.0
    %81 = vst [vmem:[#allocation2 + $0x40] sm:$0xff] 0.0
    %82 = vst [vmem:[#allocation2 + $0x48] sm:$0xff] 0.0
    %83 = vst [vmem:[#allocation2 + $0x50] sm:$0xff] 0.0
    %84 = vst [vmem:[#allocation2 + $0x58] sm:$0xff] 0.0
    %85 = vst [vmem:[#allocation2 + $0x8] sm:$0xff] %v49
    %86 = vst [vmem:[#allocation2 + $0x10] sm:$0xff] %v50
    %87 = vst [vmem:[#allocation2 + $0x18] sm:$0xff] %v51
    %88 = vst [vmem:[#allocation2 + $0x20] sm:$0xff] %v52
    %89 = vst [vmem:[#allocation2 + $0x28] sm:$0xff] %v53
    %90 = vst [vmem:[#allocation2 + $0x30] sm:$0xff] %v54
    %91 = vst [vmem:[#allocation2 + $0x38] sm:$0xff] %v55
    %92 = vst [vmem:[#allocation2 + $0x40] sm:$0xff] %v56
    %93 = vst [vmem:[#allocation2 + $0x48] sm:$0xff] %v57
    %94 = vst [vmem:[#allocation2 + $0x50] sm:$0xff] %v58
    %v95 = vld [vmem:[#allocation2] sm:$0xff]
    %v96 = vld [vmem:[#allocation2 + $0x8] sm:$0xff]
    %v97 = vld [vmem:[#allocation2 + $0x10] sm:$0xff]
    %v98 = vld [vmem:[#allocation2 + $0x18] sm:$0xff]
    %v99 = vld [vmem:[#allocation2 + $0x20] sm:$0xff]
    %v100 = vld [vmem:[#allocation2 + $0x28] sm:$0xff]
    %v101 = vld [vmem:[#allocation2 + $0x30] sm:$0xff]
    %v102 = vld [vmem:[#allocation2 + $0x38] sm:$0xff]
    %v103 = vld [vmem:[#allocation2 + $0x40] sm:$0xff]
    %v104 = vld [vmem:[#allocation2 + $0x48] sm:$0xff]
    %v105 = vld [vmem:[#allocation2 + $0x50] sm:$0xff]
    %117 = vrot.lane.b32.xlu0 %v95, 25
    %v118 = vpop.permute.xlu0 %117
    %119 = vrot.lane.b32.xlu0 %v96, 25
    %v120 = vpop.permute.xlu0 %119
    %121 = vrot.lane.b32.xlu0 %v97, 25
    %v122 = vpop.permute.xlu0 %121
    %123 = vrot.lane.b32.xlu0 %v98, 25
    %v124 = vpop.permute.xlu0 %123
    %125 = vrot.lane.b32.xlu0 %v99, 25
    %v126 = vpop.permute.xlu0 %125
    %127 = vrot.lane.b32.xlu0 %v100, 25
    %v128 = vpop.permute.xlu0 %127
    %129 = vrot.lane.b32.xlu0 %v101, 25
    %v130 = vpop.permute.xlu0 %129
    %131 = vrot.lane.b32.xlu0 %v102, 25
    %v132 = vpop.permute.xlu0 %131
    %133 = vrot.lane.b32.xlu0 %v103, 25
    %v134 = vpop.permute.xlu0 %133
    %135 = vrot.lane.b32.xlu0 %v104, 25
    %v136 = vpop.permute.xlu0 %135
    %137 = vrot.lane.b32.xlu0 %v105, 25
    %v138 = vpop.permute.xlu0 %137
    %vm139 = vcmask 203776
    %v140 = vsel %vm139, %v118, %v120
    %v141 = vsel %vm139, %v120, %v122
    %v142 = vsel %vm139, %v122, %v124
    %v143 = vsel %vm139, %v124, %v126
    %v144 = vsel %vm139, %v126, %v128
    %v145 = vsel %vm139, %v128, %v130
    %v146 = vsel %vm139, %v130, %v132
    %v147 = vsel %vm139, %v132, %v134
    %v148 = vsel %vm139, %v134, %v136
    %v149 = vsel %vm139, %v136, %v138
    %160 = vst [vmem:[#allocation3] sm:$0xff] %v140
    %161 = vst [vmem:[#allocation3 + $0x8] sm:$0xff] %v141
    %162 = vst [vmem:[#allocation3 + $0x10] sm:$0xff] %v142
    %163 = vst [vmem:[#allocation3 + $0x18] sm:$0xff] %v143
    %164 = vst [vmem:[#allocation3 + $0x20] sm:$0xff] %v144
    %165 = vst [vmem:[#allocation3 + $0x28] sm:$0xff] %v145
    %166 = vst [vmem:[#allocation3 + $0x30] sm:$0xff] %v146
    %167 = vst [vmem:[#allocation3 + $0x38] sm:$0xff] %v147
    %168 = vst [vmem:[#allocation3 + $0x40] sm:$0xff] %v148
    %169 = vst [vmem:[#allocation3 + $0x48] sm:$0xff] %v149
    %v170 = vld [vmem:[#allocation2] sm:$0xff]
    %v171 = vld [vmem:[#allocation2 + $0x8] sm:$0xff]
    %v172 = vld [vmem:[#allocation2 + $0x10] sm:$0xff]
    %v173 = vld [vmem:[#allocation2 + $0x18] sm:$0xff]
    %v174 = vld [vmem:[#allocation2 + $0x20] sm:$0xff]
    %v175 = vld [vmem:[#allocation2 + $0x28] sm:$0xff]
    %v176 = vld [vmem:[#allocation2 + $0x30] sm:$0xff]
    %v177 = vld [vmem:[#allocation2 + $0x38] sm:$0xff]
    %v178 = vld [vmem:[#allocation2 + $0x40] sm:$0xff]
    %v179 = vld [vmem:[#allocation2 + $0x48] sm:$0xff]
    %v180 = vld [vmem:[#allocation2 + $0x50] sm:$0xff]
    %192 = vrot.lane.b32.xlu0 %v170, 24
    %v193 = vpop.permute.xlu0 %192
    %194 = vrot.lane.b32.xlu0 %v171, 24
    %v195 = vpop.permute.xlu0 %194
    %196 = vrot.lane.b32.xlu0 %v172, 24
    %v197 = vpop.permute.xlu0 %196
    %198 = vrot.lane.b32.xlu0 %v173, 24
    %v199 = vpop.permute.xlu0 %198
    %200 = vrot.lane.b32.xlu0 %v174, 24
    %v201 = vpop.permute.xlu0 %200
    %202 = vrot.lane.b32.xlu0 %v175, 24
    %v203 = vpop.permute.xlu0 %202
    %204 = vrot.lane.b32.xlu0 %v176, 24
    %v205 = vpop.permute.xlu0 %204
    %206 = vrot.lane.b32.xlu0 %v177, 24
    %v207 = vpop.permute.xlu0 %206
    %208 = vrot.lane.b32.xlu0 %v178, 24
    %v209 = vpop.permute.xlu0 %208
    %210 = vrot.lane.b32.xlu0 %v179, 24
    %v211 = vpop.permute.xlu0 %210
    %212 = vrot.lane.b32.xlu0 %v180, 24
    %v213 = vpop.permute.xlu0 %212
    %vm214 = vcmask 195584
    %v215 = vsel %vm214, %v193, %v195
    %v216 = vsel %vm214, %v195, %v197
    %v217 = vsel %vm214, %v197, %v199
    %v218 = vsel %vm214, %v199, %v201
    %v219 = vsel %vm214, %v201, %v203
    %v220 = vsel %vm214, %v203, %v205
    %v221 = vsel %vm214, %v205, %v207
    %v222 = vsel %vm214, %v207, %v209
    %v223 = vsel %vm214, %v209, %v211
    %v224 = vsel %vm214, %v211, %v213
    %235 = vst [vmem:[#allocation3 + $0x50] sm:$0xff] %v215
    %236 = vst [vmem:[#allocation3 + $0x58] sm:$0xff] %v216
    %237 = vst [vmem:[#allocation3 + $0x60] sm:$0xff] %v217
    %238 = vst [vmem:[#allocation3 + $0x68] sm:$0xff] %v218
    %239 = vst [vmem:[#allocation3 + $0x70] sm:$0xff] %v219
    %240 = vst [vmem:[#allocation3 + $0x78] sm:$0xff] %v220
    %241 = vst [vmem:[#allocation3 + $0x80] sm:$0xff] %v221
    %242 = vst [vmem:[#allocation3 + $0x88] sm:$0xff] %v222
    %243 = vst [vmem:[#allocation3 + $0x90] sm:$0xff] %v223
    %244 = vst [vmem:[#allocation3 + $0x98] sm:$0xff] %v224
    %v245 = vld [vmem:[#allocation2] sm:$0xff]
    %v246 = vld [vmem:[#allocation2 + $0x8] sm:$0xff]
    %v247 = vld [vmem:[#allocation2 + $0x10] sm:$0xff]
    %v248 = vld [vmem:[#allocation2 + $0x18] sm:$0xff]
    %v249 = vld [vmem:[#allocation2 + $0x20] sm:$0xff]
    %v250 = vld [vmem:[#allocation2 + $0x28] sm:$0xff]
    %v251 = vld [vmem:[#allocation2 + $0x30] sm:$0xff]
    %v252 = vld [vmem:[#allocation2 + $0x38] sm:$0xff]
    %v253 = vld [vmem:[#allocation2 + $0x40] sm:$0xff]
    %v254 = vld [vmem:[#allocation2 + $0x48] sm:$0xff]
    %v255 = vld [vmem:[#allocation2 + $0x50] sm:$0xff]
    %267 = vrot.lane.b32.xlu0 %v245, 23
    %v268 = vpop.permute.xlu0 %267
    %269 = vrot.lane.b32.xlu0 %v246, 23
    %v270 = vpop.permute.xlu0 %269
    %271 = vrot.lane.b32.xlu0 %v247, 23
    %v272 = vpop.permute.xlu0 %271
    %273 = vrot.lane.b32.xlu0 %v248, 23
    %v274 = vpop.permute.xlu0 %273
    %275 = vrot.lane.b32.xlu0 %v249, 23
    %v276 = vpop.permute.xlu0 %275
    %277 = vrot.lane.b32.xlu0 %v250, 23
    %v278 = vpop.permute.xlu0 %277
    %279 = vrot.lane.b32.xlu0 %v251, 23
    %v280 = vpop.permute.xlu0 %279
    %281 = vrot.lane.b32.xlu0 %v252, 23
    %v282 = vpop.permute.xlu0 %281
    %283 = vrot.lane.b32.xlu0 %v253, 23
    %v284 = vpop.permute.xlu0 %283
    %285 = vrot.lane.b32.xlu0 %v254, 23
    %v286 = vpop.permute.xlu0 %285
    %287 = vrot.lane.b32.xlu0 %v255, 23
    %v288 = vpop.permute.xlu0 %287
    %vm289 = vcmask 187392
    %v290 = vsel %vm289, %v268, %v270
    %v291 = vsel %vm289, %v270, %v272
    %v292 = vsel %vm289, %v272, %v274
    %v293 = vsel %vm289, %v274, %v276
    %v294 = vsel %vm289, %v276, %v278
    %v295 = vsel %vm289, %v278, %v280
    %v296 = vsel %vm289, %v280, %v282
    %v297 = vsel %vm289, %v282, %v284
    %v298 = vsel %vm289, %v284, %v286
    %v299 = vsel %vm289, %v286, %v288
    %310 = vst [vmem:[#allocation3 + $0xa0] sm:$0xff] %v290
    %311 = vst [vmem:[#allocation3 + $0xa8] sm:$0xff] %v291
    %312 = vst [vmem:[#allocation3 + $0xb0] sm:$0xff] %v292
    %313 = vst [vmem:[#allocation3 + $0xb8] sm:$0xff] %v293
    %314 = vst [vmem:[#allocation3 + $0xc0] sm:$0xff] %v294
    %315 = vst [vmem:[#allocation3 + $0xc8] sm:$0xff] %v295
    %316 = vst [vmem:[#allocation3 + $0xd0] sm:$0xff] %v296
    %317 = vst [vmem:[#allocation3 + $0xd8] sm:$0xff] %v297
    %318 = vst [vmem:[#allocation3 + $0xe0] sm:$0xff] %v298
    %319 = vst [vmem:[#allocation3 + $0xe8] sm:$0xff] %v299
    %v320 = vld [vmem:[#allocation2] sm:$0xff]
    %v321 = vld [vmem:[#allocation2 + $0x8] sm:$0xff]
    %v322 = vld [vmem:[#allocation2 + $0x10] sm:$0xff]
    %v323 = vld [vmem:[#allocation2 + $0x18] sm:$0xff]
    %v324 = vld [vmem:[#allocation2 + $0x20] sm:$0xff]
    %v325 = vld [vmem:[#allocation2 + $0x28] sm:$0xff]
    %v326 = vld [vmem:[#allocation2 + $0x30] sm:$0xff]
    %v327 = vld [vmem:[#allocation2 + $0x38] sm:$0xff]
    %v328 = vld [vmem:[#allocation2 + $0x40] sm:$0xff]
    %v329 = vld [vmem:[#allocation2 + $0x48] sm:$0xff]
    %v330 = vld [vmem:[#allocation2 + $0x50] sm:$0xff]
    %342 = vrot.lane.b32.xlu0 %v320, 1
    %v343 = vpop.permute.xlu0 %342
    %344 = vrot.lane.b32.xlu0 %v321, 1
    %v345 = vpop.permute.xlu0 %344
    %346 = vrot.lane.b32.xlu0 %v322, 1
    %v347 = vpop.permute.xlu0 %346
    %348 = vrot.lane.b32.xlu0 %v323, 1
    %v349 = vpop.permute.xlu0 %348
    %350 = vrot.lane.b32.xlu0 %v324, 1
    %v351 = vpop.permute.xlu0 %350
    %352 = vrot.lane.b32.xlu0 %v325, 1
    %v353 = vpop.permute.xlu0 %352
    %354 = vrot.lane.b32.xlu0 %v326, 1
    %v355 = vpop.permute.xlu0 %354
    %356 = vrot.lane.b32.xlu0 %v327, 1
    %v357 = vpop.permute.xlu0 %356
    %358 = vrot.lane.b32.xlu0 %v328, 1
    %v359 = vpop.permute.xlu0 %358
    %360 = vrot.lane.b32.xlu0 %v329, 1
    %v361 = vpop.permute.xlu0 %360
    %362 = vrot.lane.b32.xlu0 %v330, 1
    %v363 = vpop.permute.xlu0 %362
    %vm364 = vcmask 7168
    %v365 = vsel %vm364, %v343, %v345
    %v366 = vsel %vm364, %v345, %v347
    %v367 = vsel %vm364, %v347, %v349
    %v368 = vsel %vm364, %v349, %v351
    %v369 = vsel %vm364, %v351, %v353
    %v370 = vsel %vm364, %v353, %v355
    %v371 = vsel %vm364, %v355, %v357
    %v372 = vsel %vm364, %v357, %v359
    %v373 = vsel %vm364, %v359, %v361
    %v374 = vsel %vm364, %v361, %v363
    %385 = vst [vmem:[#allocation3 + $0xf0] sm:$0xff] %v365
    %386 = vst [vmem:[#allocation3 + $0xf8] sm:$0xff] %v366
    %387 = vst [vmem:[#allocation3 + $0x100] sm:$0xff] %v367
    %388 = vst [vmem:[#allocation3 + $0x108] sm:$0xff] %v368
    %389 = vst [vmem:[#allocation3 + $0x110] sm:$0xff] %v369
    %390 = vst [vmem:[#allocation3 + $0x118] sm:$0xff] %v370
    %391 = vst [vmem:[#allocation3 + $0x120] sm:$0xff] %v371
    %392 = vst [vmem:[#allocation3 + $0x128] sm:$0xff] %v372
    %393 = vst [vmem:[#allocation3 + $0x130] sm:$0xff] %v373
    %394 = vst [vmem:[#allocation3 + $0x138] sm:$0xff] %v374
    %v395 = vld [vmem:[#allocation2 + $0x8] sm:$0xff]
    %v396 = vld [vmem:[#allocation2 + $0x10] sm:$0xff]
    %v397 = vld [vmem:[#allocation2 + $0x18] sm:$0xff]
    %v398 = vld [vmem:[#allocation2 + $0x20] sm:$0xff]
    %v399 = vld [vmem:[#allocation2 + $0x28] sm:$0xff]
    %v400 = vld [vmem:[#allocation2 + $0x30] sm:$0xff]
    %v401 = vld [vmem:[#allocation2 + $0x38] sm:$0xff]
    %v402 = vld [vmem:[#allocation2 + $0x40] sm:$0xff]
    %v403 = vld [vmem:[#allocation2 + $0x48] sm:$0xff]
    %v404 = vld [vmem:[#allocation2 + $0x50] sm:$0xff]
    %405 = vst [vmem:[#allocation3 + $0x140] sm:$0xff] %v395
    %406 = vst [vmem:[#allocation3 + $0x148] sm:$0xff] %v396
    %407 = vst [vmem:[#allocation3 + $0x150] sm:$0xff] %v397
    %408 = vst [vmem:[#allocation3 + $0x158] sm:$0xff] %v398
    %409 = vst [vmem:[#allocation3 + $0x160] sm:$0xff] %v399
    %410 = vst [vmem:[#allocation3 + $0x168] sm:$0xff] %v400
    %411 = vst [vmem:[#allocation3 + $0x170] sm:$0xff] %v401
    %412 = vst [vmem:[#allocation3 + $0x178] sm:$0xff] %v402
    %413 = vst [vmem:[#allocation3 + $0x180] sm:$0xff] %v403
    %414 = vst [vmem:[#allocation3 + $0x188] sm:$0xff] %v404
    %v415 = vld [vmem:[#allocation2 + $0x8] sm:$0xff]
    %v416 = vld [vmem:[#allocation2 + $0x10] sm:$0xff]
    %v417 = vld [vmem:[#allocation2 + $0x18] sm:$0xff]
    %v418 = vld [vmem:[#allocation2 + $0x20] sm:$0xff]
    %v419 = vld [vmem:[#allocation2 + $0x28] sm:$0xff]
    %v420 = vld [vmem:[#allocation2 + $0x30] sm:$0xff]
    %v421 = vld [vmem:[#allocation2 + $0x38] sm:$0xff]
    %v422 = vld [vmem:[#allocation2 + $0x40] sm:$0xff]
    %v423 = vld [vmem:[#allocation2 + $0x48] sm:$0xff]
    %v424 = vld [vmem:[#allocation2 + $0x50] sm:$0xff]
    %v425 = vld [vmem:[#allocation2 + $0x58] sm:$0xff]
    %437 = vrot.lane.b32.xlu0 %v415, 127
    %v438 = vpop.permute.xlu0 %437
    %439 = vrot.lane.b32.xlu0 %v416, 127
    %v440 = vpop.permute.xlu0 %439
    %441 = vrot.lane.b32.xlu0 %v417, 127
    %v442 = vpop.permute.xlu0 %441
    %443 = vrot.lane.b32.xlu0 %v418, 127
    %v444 = vpop.permute.xlu0 %443
    %445 = vrot.lane.b32.xlu0 %v419, 127
    %v446 = vpop.permute.xlu0 %445
    %447 = vrot.lane.b32.xlu0 %v420, 127
    %v448 = vpop.permute.xlu0 %447
    %449 = vrot.lane.b32.xlu0 %v421, 127
    %v450 = vpop.permute.xlu0 %449
    %451 = vrot.lane.b32.xlu0 %v422, 127
    %v452 = vpop.permute.xlu0 %451
    %453 = vrot.lane.b32.xlu0 %v423, 127
    %v454 = vpop.permute.xlu0 %453
    %455 = vrot.lane.b32.xlu0 %v424, 127
    %v456 = vpop.permute.xlu0 %455
    %457 = vrot.lane.b32.xlu0 %v425, 127
    %v458 = vpop.permute.xlu0 %457
    %vm459 = vcmask 1039360
    %v460 = vsel %vm459, %v438, %v440
    %v461 = vsel %vm459, %v440, %v442
    %v462 = vsel %vm459, %v442, %v444
    %v463 = vsel %vm459, %v444, %v446
    %v464 = vsel %vm459, %v446, %v448
    %v465 = vsel %vm459, %v448, %v450
    %v466 = vsel %vm459, %v450, %v452
    %v467 = vsel %vm459, %v452, %v454
    %v468 = vsel %vm459, %v454, %v456
    %v469 = vsel %vm459, %v456, %v458
    %480 = vst [vmem:[#allocation3 + $0x190] sm:$0xff] %v460
    %481 = vst [vmem:[#allocation3 + $0x198] sm:$0xff] %v461
    %482 = vst [vmem:[#allocation3 + $0x1a0] sm:$0xff] %v462
    %483 = vst [vmem:[#allocation3 + $0x1a8] sm:$0xff] %v463
    %484 = vst [vmem:[#allocation3 + $0x1b0] sm:$0xff] %v464
    %485 = vst [vmem:[#allocation3 + $0x1b8] sm:$0xff] %v465
    %486 = vst [vmem:[#allocation3 + $0x1c0] sm:$0xff] %v466
    %487 = vst [vmem:[#allocation3 + $0x1c8] sm:$0xff] %v467
    %488 = vst [vmem:[#allocation3 + $0x1d0] sm:$0xff] %v468
    %489 = vst [vmem:[#allocation3 + $0x1d8] sm:$0xff] %v469
    %v490 = vld [vmem:[#allocation2 + $0x8] sm:$0xff]
    %v491 = vld [vmem:[#allocation2 + $0x10] sm:$0xff]
    %v492 = vld [vmem:[#allocation2 + $0x18] sm:$0xff]
    %v493 = vld [vmem:[#allocation2 + $0x20] sm:$0xff]
    %v494 = vld [vmem:[#allocation2 + $0x28] sm:$0xff]
    %v495 = vld [vmem:[#allocation2 + $0x30] sm:$0xff]
    %v496 = vld [vmem:[#allocation2 + $0x38] sm:$0xff]
    %v497 = vld [vmem:[#allocation2 + $0x40] sm:$0xff]
    %v498 = vld [vmem:[#allocation2 + $0x48] sm:$0xff]
    %v499 = vld [vmem:[#allocation2 + $0x50] sm:$0xff]
    %v500 = vld [vmem:[#allocation2 + $0x58] sm:$0xff]
    %512 = vrot.lane.b32.xlu0 %v490, 105
    %v513 = vpop.permute.xlu0 %512
    %514 = vrot.lane.b32.xlu0 %v491, 105
    %v515 = vpop.permute.xlu0 %514
    %516 = vrot.lane.b32.xlu0 %v492, 105
    %v517 = vpop.permute.xlu0 %516
    %518 = vrot.lane.b32.xlu0 %v493, 105
    %v519 = vpop.permute.xlu0 %518
    %520 = vrot.lane.b32.xlu0 %v494, 105
    %v521 = vpop.permute.xlu0 %520
    %522 = vrot.lane.b32.xlu0 %v495, 105
    %v523 = vpop.permute.xlu0 %522
    %524 = vrot.lane.b32.xlu0 %v496, 105
    %v525 = vpop.permute.xlu0 %524
    %526 = vrot.lane.b32.xlu0 %v497, 105
    %v527 = vpop.permute.xlu0 %526
    %528 = vrot.lane.b32.xlu0 %v498, 105
    %v529 = vpop.permute.xlu0 %528
    %530 = vrot.lane.b32.xlu0 %v499, 105
    %v531 = vpop.permute.xlu0 %530
    %532 = vrot.lane.b32.xlu0 %v500, 105
    %v533 = vpop.permute.xlu0 %532
    %vm534 = vcmask 859136
    %v535 = vsel %vm534, %v513, %v515
    %v536 = vsel %vm534, %v515, %v517
    %v537 = vsel %vm534, %v517, %v519
    %v538 = vsel %vm534, %v519, %v521
    %v539 = vsel %vm534, %v521, %v523
    %v540 = vsel %vm534, %v523, %v525
    %v541 = vsel %vm534, %v525, %v527
    %v542 = vsel %vm534, %v527, %v529
    %v543 = vsel %vm534, %v529, %v531
    %v544 = vsel %vm534, %v531, %v533
    %555 = vst [vmem:[#allocation3 + $0x1e0] sm:$0xff] %v535
    %556 = vst [vmem:[#allocation3 + $0x1e8] sm:$0xff] %v536
    %557 = vst [vmem:[#allocation3 + $0x1f0] sm:$0xff] %v537
    %558 = vst [vmem:[#allocation3 + $0x1f8] sm:$0xff] %v538
    %559 = vst [vmem:[#allocation3 + $0x200] sm:$0xff] %v539
    %560 = vst [vmem:[#allocation3 + $0x208] sm:$0xff] %v540
    %561 = vst [vmem:[#allocation3 + $0x210] sm:$0xff] %v541
    %562 = vst [vmem:[#allocation3 + $0x218] sm:$0xff] %v542
    %563 = vst [vmem:[#allocation3 + $0x220] sm:$0xff] %v543
    %564 = vst [vmem:[#allocation3 + $0x228] sm:$0xff] %v544
    %v565 = vld [vmem:[#allocation2 + $0x8] sm:$0xff]
    %v566 = vld [vmem:[#allocation2 + $0x10] sm:$0xff]
    %v567 = vld [vmem:[#allocation2 + $0x18] sm:$0xff]
    %v568 = vld [vmem:[#allocation2 + $0x20] sm:$0xff]
    %v569 = vld [vmem:[#allocation2 + $0x28] sm:$0xff]
    %v570 = vld [vmem:[#allocation2 + $0x30] sm:$0xff]
    %v571 = vld [vmem:[#allocation2 + $0x38] sm:$0xff]
    %v572 = vld [vmem:[#allocation2 + $0x40] sm:$0xff]
    %v573 = vld [vmem:[#allocation2 + $0x48] sm:$0xff]
    %v574 = vld [vmem:[#allocation2 + $0x50] sm:$0xff]
    %v575 = vld [vmem:[#allocation2 + $0x58] sm:$0xff]
    %587 = vrot.lane.b32.xlu0 %v565, 104
    %v588 = vpop.permute.xlu0 %587
    %589 = vrot.lane.b32.xlu0 %v566, 104
    %v590 = vpop.permute.xlu0 %589
    %591 = vrot.lane.b32.xlu0 %v567, 104
    %v592 = vpop.permute.xlu0 %591
    %593 = vrot.lane.b32.xlu0 %v568, 104
    %v594 = vpop.permute.xlu0 %593
    %595 = vrot.lane.b32.xlu0 %v569, 104
    %v596 = vpop.permute.xlu0 %595
    %597 = vrot.lane.b32.xlu0 %v570, 104
    %v598 = vpop.permute.xlu0 %597
    %599 = vrot.lane.b32.xlu0 %v571, 104
    %v600 = vpop.permute.xlu0 %599
    %601 = vrot.lane.b32.xlu0 %v572, 104
    %v602 = vpop.permute.xlu0 %601
    %603 = vrot.lane.b32.xlu0 %v573, 104
    %v604 = vpop.permute.xlu0 %603
    %605 = vrot.lane.b32.xlu0 %v574, 104
    %v606 = vpop.permute.xlu0 %605
    %607 = vrot.lane.b32.xlu0 %v575, 104
    %v608 = vpop.permute.xlu0 %607
    %vm609 = vcmask 850944
    %v610 = vsel %vm609, %v588, %v590
    %v611 = vsel %vm609, %v590, %v592
    %v612 = vsel %vm609, %v592, %v594
    %v613 = vsel %vm609, %v594, %v596
    %v614 = vsel %vm609, %v596, %v598
    %v615 = vsel %vm609, %v598, %v600
    %v616 = vsel %vm609, %v600, %v602
    %v617 = vsel %vm609, %v602, %v604
    %v618 = vsel %vm609, %v604, %v606
    %v619 = vsel %vm609, %v606, %v608
    %630 = vst [vmem:[#allocation3 + $0x230] sm:$0xff] %v610
    %631 = vst [vmem:[#allocation3 + $0x238] sm:$0xff] %v611
    %632 = vst [vmem:[#allocation3 + $0x240] sm:$0xff] %v612
    %633 = vst [vmem:[#allocation3 + $0x248] sm:$0xff] %v613
    %634 = vst [vmem:[#allocation3 + $0x250] sm:$0xff] %v614
    %635 = vst [vmem:[#allocation3 + $0x258] sm:$0xff] %v615
    %636 = vst [vmem:[#allocation3 + $0x260] sm:$0xff] %v616
    %637 = vst [vmem:[#allocation3 + $0x268] sm:$0xff] %v617
    %638 = vst [vmem:[#allocation3 + $0x270] sm:$0xff] %v618
    %639 = vst [vmem:[#allocation3 + $0x278] sm:$0xff] %v619
    %v640 = vld [vmem:[#allocation2 + $0x8] sm:$0xff]
    %v641 = vld [vmem:[#allocation2 + $0x10] sm:$0xff]
    %v642 = vld [vmem:[#allocation2 + $0x18] sm:$0xff]
    %v643 = vld [vmem:[#allocation2 + $0x20] sm:$0xff]
    %v644 = vld [vmem:[#allocation2 + $0x28] sm:$0xff]
    %v645 = vld [vmem:[#allocation2 + $0x30] sm:$0xff]
    %v646 = vld [vmem:[#allocation2 + $0x38] sm:$0xff]
    %v647 = vld [vmem:[#allocation2 + $0x40] sm:$0xff]
    %v648 = vld [vmem:[#allocation2 + $0x48] sm:$0xff]
    %v649 = vld [vmem:[#allocation2 + $0x50] sm:$0xff]
    %v650 = vld [vmem:[#allocation2 + $0x58] sm:$0xff]
    %662 = vrot.lane.b32.xlu0 %v640, 103
    %v663 = vpop.permute.xlu0 %662
    %664 = vrot.lane.b32.xlu0 %v641, 103
    %v665 = vpop.permute.xlu0 %664
    %666 = vrot.lane.b32.xlu0 %v642, 103
    %v667 = vpop.permute.xlu0 %666
    %668 = vrot.lane.b32.xlu0 %v643, 103
    %v669 = vpop.permute.xlu0 %668
    %670 = vrot.lane.b32.xlu0 %v644, 103
    %v671 = vpop.permute.xlu0 %670
    %672 = vrot.lane.b32.xlu0 %v645, 103
    %v673 = vpop.permute.xlu0 %672
    %674 = vrot.lane.b32.xlu0 %v646, 103
    %v675 = vpop.permute.xlu0 %674
    %676 = vrot.lane.b32.xlu0 %v647, 103
    %v677 = vpop.permute.xlu0 %676
    %678 = vrot.lane.b32.xlu0 %v648, 103
    %v679 = vpop.permute.xlu0 %678
    %680 = vrot.lane.b32.xlu0 %v649, 103
    %v681 = vpop.permute.xlu0 %680
    %682 = vrot.lane.b32.xlu0 %v650, 103
    %v683 = vpop.permute.xlu0 %682
    %vm684 = vcmask 842752
    %v685 = vsel %vm684, %v663, %v665
    %v686 = vsel %vm684, %v665, %v667
    %v687 = vsel %vm684, %v667, %v669
    %v688 = vsel %vm684, %v669, %v671
    %v689 = vsel %vm684, %v671, %v673
    %v690 = vsel %vm684, %v673, %v675
    %v691 = vsel %vm684, %v675, %v677
    %v692 = vsel %vm684, %v677, %v679
    %v693 = vsel %vm684, %v679, %v681
    %v694 = vsel %vm684, %v681, %v683
    %705 = vst [vmem:[#allocation3 + $0x280] sm:$0xff] %v685
    %706 = vst [vmem:[#allocation3 + $0x288] sm:$0xff] %v686
    %707 = vst [vmem:[#allocation3 + $0x290] sm:$0xff] %v687
    %708 = vst [vmem:[#allocation3 + $0x298] sm:$0xff] %v688
    %709 = vst [vmem:[#allocation3 + $0x2a0] sm:$0xff] %v689
    %710 = vst [vmem:[#allocation3 + $0x2a8] sm:$0xff] %v690
    %711 = vst [vmem:[#allocation3 + $0x2b0] sm:$0xff] %v691
    %712 = vst [vmem:[#allocation3 + $0x2b8] sm:$0xff] %v692
    %713 = vst [vmem:[#allocation3 + $0x2c0] sm:$0xff] %v693
    %714 = vst [vmem:[#allocation3 + $0x2c8] sm:$0xff] %v694
    %v715 = vld [vmem:[#allocation3] sm:$0xff]
    %v716 = vld [vmem:[#allocation3 + $0x8] sm:$0xff]
    %v717 = vld [vmem:[#allocation3 + $0x10] sm:$0xff]
    %v718 = vld [vmem:[#allocation3 + $0x18] sm:$0xff]
    %v719 = vld [vmem:[#allocation3 + $0x20] sm:$0xff]
    %v720 = vld [vmem:[#allocation3 + $0x28] sm:$0xff]
    %v721 = vld [vmem:[#allocation3 + $0x30] sm:$0xff]
    %v722 = vld [vmem:[#allocation3 + $0x38] sm:$0xff]
    %v723 = vld [vmem:[#allocation3 + $0x40] sm:$0xff]
    %v724 = vld [vmem:[#allocation3 + $0x48] sm:$0xff]
    %v725 = vld [vmem:[#allocation3 + $0x50] sm:$0xff]
    %v726 = vld [vmem:[#allocation3 + $0x58] sm:$0xff]
    %v727 = vld [vmem:[#allocation3 + $0x60] sm:$0xff]
    %v728 = vld [vmem:[#allocation3 + $0x68] sm:$0xff]
    %v729 = vld [vmem:[#allocation3 + $0x70] sm:$0xff]
    %v730 = vld [vmem:[#allocation3 + $0x78] sm:$0xff]
    %v731 = vld [vmem:[#allocation3 + $0x80] sm:$0xff]
    %v732 = vld [vmem:[#allocation3 + $0x88] sm:$0xff]
    %v733 = vld [vmem:[#allocation3 + $0x90] sm:$0xff]
    %v734 = vld [vmem:[#allocation3 + $0x98] sm:$0xff]
    %v735 = vld [vmem:[#allocation3 + $0xa0] sm:$0xff]
    %v736 = vld [vmem:[#allocation3 + $0xa8] sm:$0xff]
    %v737 = vld [vmem:[#allocation3 + $0xb0] sm:$0xff]
    %v738 = vld [vmem:[#allocation3 + $0xb8] sm:$0xff]
    %v739 = vld [vmem:[#allocation3 + $0xc0] sm:$0xff]
    %v740 = vld [vmem:[#allocation3 + $0xc8] sm:$0xff]
    %v741 = vld [vmem:[#allocation3 + $0xd0] sm:$0xff]
    %v742 = vld [vmem:[#allocation3 + $0xd8] sm:$0xff]
    %v743 = vld [vmem:[#allocation3 + $0xe0] sm:$0xff]
    %v744 = vld [vmem:[#allocation3 + $0xe8] sm:$0xff]
    %v745 = vld [vmem:[#allocation3 + $0xf0] sm:$0xff]
    %v746 = vld [vmem:[#allocation3 + $0xf8] sm:$0xff]
    %v747 = vld [vmem:[#allocation3 + $0x100] sm:$0xff]
    %v748 = vld [vmem:[#allocation3 + $0x108] sm:$0xff]
    %v749 = vld [vmem:[#allocation3 + $0x110] sm:$0xff]
    %v750 = vld [vmem:[#allocation3 + $0x118] sm:$0xff]
    %v751 = vld [vmem:[#allocation3 + $0x120] sm:$0xff]
    %v752 = vld [vmem:[#allocation3 + $0x128] sm:$0xff]
    %v753 = vld [vmem:[#allocation3 + $0x130] sm:$0xff]
    %v754 = vld [vmem:[#allocation3 + $0x138] sm:$0xff]
    %v755 = vld [vmem:[#allocation3 + $0x140] sm:$0xff]
    %v756 = vld [vmem:[#allocation3 + $0x148] sm:$0xff]
    %v757 = vld [vmem:[#allocation3 + $0x150] sm:$0xff]
    %v758 = vld [vmem:[#allocation3 + $0x158] sm:$0xff]
    %v759 = vld [vmem:[#allocation3 + $0x160] sm:$0xff]
    %v760 = vld [vmem:[#allocation3 + $0x168] sm:$0xff]
    %v761 = vld [vmem:[#allocation3 + $0x170] sm:$0xff]
    %v762 = vld [vmem:[#allocation3 + $0x178] sm:$0xff]
    %v763 = vld [vmem:[#allocation3 + $0x180] sm:$0xff]
    %v764 = vld [vmem:[#allocation3 + $0x188] sm:$0xff]
    %v765 = vld [vmem:[#allocation3 + $0x190] sm:$0xff]
    %v766 = vld [vmem:[#allocation3 + $0x198] sm:$0xff]
    %v767 = vld [vmem:[#allocation3 + $0x1a0] sm:$0xff]
    %v768 = vld [vmem:[#allocation3 + $0x1a8] sm:$0xff]
    %v769 = vld [vmem:[#allocation3 + $0x1b0] sm:$0xff]
    %v770 = vld [vmem:[#allocation3 + $0x1b8] sm:$0xff]
    %v771 = vld [vmem:[#allocation3 + $0x1c0] sm:$0xff]
    %v772 = vld [vmem:[#allocation3 + $0x1c8] sm:$0xff]
    %v773 = vld [vmem:[#allocation3 + $0x1d0] sm:$0xff]
    %v774 = vld [vmem:[#allocation3 + $0x1d8] sm:$0xff]
    %v775 = vld [vmem:[#allocation3 + $0x1e0] sm:$0xff]
    %v776 = vld [vmem:[#allocation3 + $0x1e8] sm:$0xff]
    %v777 = vld [vmem:[#allocation3 + $0x1f0] sm:$0xff]
    %v778 = vld [vmem:[#allocation3 + $0x1f8] sm:$0xff]
    %v779 = vld [vmem:[#allocation3 + $0x200] sm:$0xff]
    %v780 = vld [vmem:[#allocation3 + $0x208] sm:$0xff]
    %v781 = vld [vmem:[#allocation3 + $0x210] sm:$0xff]
    %v782 = vld [vmem:[#allocation3 + $0x218] sm:$0xff]
    %v783 = vld [vmem:[#allocation3 + $0x220] sm:$0xff]
    %v784 = vld [vmem:[#allocation3 + $0x228] sm:$0xff]
    %v785 = vld [vmem:[#allocation3 + $0x230] sm:$0xff]
    %v786 = vld [vmem:[#allocation3 + $0x238] sm:$0xff]
    %v787 = vld [vmem:[#allocation3 + $0x240] sm:$0xff]
    %v788 = vld [vmem:[#allocation3 + $0x248] sm:$0xff]
    %v789 = vld [vmem:[#allocation3 + $0x250] sm:$0xff]
    %v790 = vld [vmem:[#allocation3 + $0x258] sm:$0xff]
    %v791 = vld [vmem:[#allocation3 + $0x260] sm:$0xff]
    %v792 = vld [vmem:[#allocation3 + $0x268] sm:$0xff]
    %v793 = vld [vmem:[#allocation3 + $0x270] sm:$0xff]
    %v794 = vld [vmem:[#allocation3 + $0x278] sm:$0xff]
    %v795 = vld [vmem:[#allocation3 + $0x280] sm:$0xff]
    %v796 = vld [vmem:[#allocation3 + $0x288] sm:$0xff]
    %v797 = vld [vmem:[#allocation3 + $0x290] sm:$0xff]
    %v798 = vld [vmem:[#allocation3 + $0x298] sm:$0xff]
    %v799 = vld [vmem:[#allocation3 + $0x2a0] sm:$0xff]
    %v800 = vld [vmem:[#allocation3 + $0x2a8] sm:$0xff]
    %v801 = vld [vmem:[#allocation3 + $0x2b0] sm:$0xff]
    %v802 = vld [vmem:[#allocation3 + $0x2b8] sm:$0xff]
    %v803 = vld [vmem:[#allocation3 + $0x2c0] sm:$0xff]
    %v804 = vld [vmem:[#allocation3 + $0x2c8] sm:$0xff]
    %806 = vset.pattern.permute.xlu0 0
    %807 = vperm.xlu0 %806, %v67
    %v808 = vpop.permute.xlu0 %807
    %vm810 = vcmask 588800
    %v812 = vsel %vm810, %v61, 0
    %814 = vmatprep.subr.mxu0 %v716
    %815 = vmatpush1.msra.mxu0 %v715
    %816 = vmatprep.subr.mxu0 %v726
    %817 = vmatpush1.msra.mxu0 %v725
    %818 = vmatprep.subr.mxu0 %v736
    %819 = vmatpush1.msra.mxu0 %v735
    %820 = vmatprep.subr.mxu0 %v746
    %821 = vmatpush1.msra.mxu0 %v745
    %822 = vmatprep.subr.mxu0 %v756
    %823 = vmatpush1.msra.mxu0 %v755
    %824 = vmatprep.subr.mxu0 %v766
    %825 = vmatpush1.msra.mxu0 %v765
    %826 = vmatprep.subr.mxu0 %v776
    %827 = vmatpush1.msra.mxu0 %v775
    %828 = vmatprep.subr.mxu0 %v786
    %829 = vmatpush1.msra.mxu0 %v785
    %830 = vmatprep.subr.mxu0 %v796
    %831 = vmatpush1.msra.mxu0 %v795
    %832 = vmatprep.subr.mxu0 0.0
    %833 = vmatpush1.msra.mxu0 0.0
    %834 = vmatprep.subr.mxu0 0.0
    %835 = vmatpush1.msra.mxu0 0.0
    %836 = vmatprep.subr.mxu0 0.0
    %837 = vmatpush1.msra.mxu0 0.0
    %838 = vmatprep.subr.mxu0 0.0
    %839 = vmatpush1.msra.mxu0 0.0
    %840 = vmatprep.subr.mxu0 0.0
    %841 = vmatpush1.msra.mxu0 0.0
    %842 = vmatprep.subr.mxu0 0.0
    %843 = vmatpush1.msra.mxu0 0.0
    %844 = vmatprep.subr.mxu0 0.0
    %845 = vmatpush1.msra.mxu0 0.0
    %846 = vmatprep.subr.mxu0 0.0
    %847 = vmatpush1.msra.mxu0 0.0
    %848 = vmatprep.subr.mxu0 0.0
    %849 = vmatpush1.msra.mxu0 0.0
    %850 = vmatprep.subr.mxu0 0.0
    %851 = vmatpush1.msra.mxu0 0.0
    %852 = vmatprep.subr.mxu0 0.0
    %853 = vmatpush1.msra.mxu0 0.0
    %854 = vmatprep.subr.mxu0 0.0
    %855 = vmatpush1.msra.mxu0 0.0
    %856 = vmatprep.subr.mxu0 0.0
    %857 = vmatpush1.msra.mxu0 0.0
    %858 = vmatprep.subr.mxu0 0.0
    %859 = vmatpush1.msra.mxu0 0.0
    %860 = vmatprep.subr.mxu0 0.0
    %861 = vmatpush1.msra.mxu0 0.0
    %862 = vmatprep.subr.mxu0 0.0
    %863 = vmatpush1.msra.mxu0 0.0
    %864 = vmatprep.subr.mxu0 0.0
    %865 = vmatpush1.msra.mxu0 0.0
    %866 = vmatprep.subr.mxu0 0.0
    %867 = vmatpush1.msra.mxu0 0.0
    %868 = vmatprep.subr.mxu0 0.0
    %869 = vmatpush1.msra.mxu0 0.0
    %870 = vmatprep.subr.mxu0 0.0
    %871 = vmatpush1.msra.mxu0 0.0
    %872 = vmatprep.subr.mxu0 0.0
    %873 = vmatpush1.msra.mxu0 0.0
    %874 = vmatprep.subr.mxu0 0.0
    %875 = vmatpush1.msra.mxu0 0.0
    %876 = vmatprep.subr.mxu0 0.0
    %877 = vmatpush1.msra.mxu0 0.0
    %878 = vmatprep.mubr.f32.mxu0 0.0
    %879 = vmatmul.mubr.f32.gmra.mrb[0].mxu0 %v812
    %v880 = vpop.f32.mrb[0].mxu0
    %v881 = vadd.f32 %v808, %v880
    %v882 = vpop.f32.mrb[0].mxu0
    %v883 = vadd.f32 %v808, %v882
    %884 = vdwg.mxu0
    %885 = vmatprep.subr.mxu0 %v718
    %886 = vmatpush1.msra.mxu0 %v717
    %887 = vmatprep.subr.mxu0 %v728
    %888 = vmatpush1.msra.mxu0 %v727
    %889 = vmatprep.subr.mxu0 %v738
    %890 = vmatpush1.msra.mxu0 %v737
    %891 = vmatprep.subr.mxu0 %v748
    %892 = vmatpush1.msra.mxu0 %v747
    %893 = vmatprep.subr.mxu0 %v758
    %894 = vmatpush1.msra.mxu0 %v757
    %895 = vmatprep.subr.mxu0 %v768
    %896 = vmatpush1.msra.mxu0 %v767
    %897 = vmatprep.subr.mxu0 %v778
    %898 = vmatpush1.msra.mxu0 %v777
    %899 = vmatprep.subr.mxu0 %v788
    %900 = vmatpush1.msra.mxu0 %v787
    %901 = vmatprep.subr.mxu0 %v798
    %902 = vmatpush1.msra.mxu0 %v797
    %903 = vmatprep.subr.mxu0 0.0
    %904 = vmatpush1.msra.mxu0 0.0
    %905 = vmatprep.subr.mxu0 0.0
    %906 = vmatpush1.msra.mxu0 0.0
    %907 = vmatprep.subr.mxu0 0.0
    %908 = vmatpush1.msra.mxu0 0.0
    %909 = vmatprep.subr.mxu0 0.0
    %910 = vmatpush1.msra.mxu0 0.0
    %911 = vmatprep.subr.mxu0 0.0
    %912 = vmatpush1.msra.mxu0 0.0
    %913 = vmatprep.subr.mxu0 0.0
    %914 = vmatpush1.msra.mxu0 0.0
    %915 = vmatprep.subr.mxu0 0.0
    %916 = vmatpush1.msra.mxu0 0.0
    %917 = vmatprep.subr.mxu0 0.0
    %918 = vmatpush1.msra.mxu0 0.0
    %919 = vmatprep.subr.mxu0 0.0
    %920 = vmatpush1.msra.mxu0 0.0
    %921 = vmatprep.subr.mxu0 0.0
    %922 = vmatpush1.msra.mxu0 0.0
    %923 = vmatprep.subr.mxu0 0.0
    %924 = vmatpush1.msra.mxu0 0.0
    %925 = vmatprep.subr.mxu0 0.0
    %926 = vmatpush1.msra.mxu0 0.0
    %927 = vmatprep.subr.mxu0 0.0
    %928 = vmatpush1.msra.mxu0 0.0
    %929 = vmatprep.subr.mxu0 0.0
    %930 = vmatpush1.msra.mxu0 0.0
    %931 = vmatprep.subr.mxu0 0.0
    %932 = vmatpush1.msra.mxu0 0.0
    %933 = vmatprep.subr.mxu0 0.0
    %934 = vmatpush1.msra.mxu0 0.0
    %935 = vmatprep.subr.mxu0 0.0
    %936 = vmatpush1.msra.mxu0 0.0
    %937 = vmatprep.subr.mxu0 0.0
    %938 = vmatpush1.msra.mxu0 0.0
    %939 = vmatprep.subr.mxu0 0.0
    %940 = vmatpush1.msra.mxu0 0.0
    %941 = vmatprep.subr.mxu0 0.0
    %942 = vmatpush1.msra.mxu0 0.0
    %943 = vmatprep.subr.mxu0 0.0
    %944 = vmatpush1.msra.mxu0 0.0
    %945 = vmatprep.subr.mxu0 0.0
    %946 = vmatpush1.msra.mxu0 0.0
    %947 = vmatprep.subr.mxu0 0.0
    %948 = vmatpush1.msra.mxu0 0.0
    %949 = vmatprep.mubr.f32.mxu0 0.0
    %950 = vmatmul.mubr.f32.gmra.mrb[0].mxu0 %v812
    %v951 = vpop.f32.mrb[0].mxu0
    %v952 = vadd.f32 %v808, %v951
    %v953 = vpop.f32.mrb[0].mxu0
    %v954 = vadd.f32 %v808, %v953
    %955 = vdwg.mxu0
    %956 = vmatprep.subr.mxu0 %v720
    %957 = vmatpush1.msra.mxu0 %v719
    %958 = vmatprep.subr.mxu0 %v730
    %959 = vmatpush1.msra.mxu0 %v729
    %960 = vmatprep.subr.mxu0 %v740
    %961 = vmatpush1.msra.mxu0 %v739
    %962 = vmatprep.subr.mxu0 %v750
    %963 = vmatpush1.msra.mxu0 %v749
    %964 = vmatprep.subr.mxu0 %v760
    %965 = vmatpush1.msra.mxu0 %v759
    %966 = vmatprep.subr.mxu0 %v770
    %967 = vmatpush1.msra.mxu0 %v769
    %968 = vmatprep.subr.mxu0 %v780
    %969 = vmatpush1.msra.mxu0 %v779
    %970 = vmatprep.subr.mxu0 %v790
    %971 = vmatpush1.msra.mxu0 %v789
    %972 = vmatprep.subr.mxu0 %v800
    %973 = vmatpush1.msra.mxu0 %v799
    %974 = vmatprep.subr.mxu0 0.0
    %975 = vmatpush1.msra.mxu0 0.0
    %976 = vmatprep.subr.mxu0 0.0
    %977 = vmatpush1.msra.mxu0 0.0
    %978 = vmatprep.subr.mxu0 0.0
    %979 = vmatpush1.msra.mxu0 0.0
    %980 = vmatprep.subr.mxu0 0.0
    %981 = vmatpush1.msra.mxu0 0.0
    %982 = vmatprep.subr.mxu0 0.0
    %983 = vmatpush1.msra.mxu0 0.0
    %984 = vmatprep.subr.mxu0 0.0
    %985 = vmatpush1.msra.mxu0 0.0
    %986 = vmatprep.subr.mxu0 0.0
    %987 = vmatpush1.msra.mxu0 0.0
    %988 = vmatprep.subr.mxu0 0.0
    %989 = vmatpush1.msra.mxu0 0.0
    %990 = vmatprep.subr.mxu0 0.0
    %991 = vmatpush1.msra.mxu0 0.0
    %992 = vmatprep.subr.mxu0 0.0
    %993 = vmatpush1.msra.mxu0 0.0
    %994 = vmatprep.subr.mxu0 0.0
    %995 = vmatpush1.msra.mxu0 0.0
    %996 = vmatprep.subr.mxu0 0.0
    %997 = vmatpush1.msra.mxu0 0.0
    %998 = vmatprep.subr.mxu0 0.0
    %999 = vmatpush1.msra.mxu0 0.0
    %1000 = vmatprep.subr.mxu0 0.0
    %1001 = vmatpush1.msra.mxu0 0.0
    %1002 = vmatprep.subr.mxu0 0.0
    %1003 = vmatpush1.msra.mxu0 0.0
    %1004 = vmatprep.subr.mxu0 0.0
    %1005 = vmatpush1.msra.mxu0 0.0
    %1006 = vmatprep.subr.mxu0 0.0
    %1007 = vmatpush1.msra.mxu0 0.0
    %1008 = vmatprep.subr.mxu0 0.0
    %1009 = vmatpush1.msra.mxu0 0.0
    %1010 = vmatprep.subr.mxu0 0.0
    %1011 = vmatpush1.msra.mxu0 0.0
    %1012 = vmatprep.subr.mxu0 0.0
    %1013 = vmatpush1.msra.mxu0 0.0
    %1014 = vmatprep.subr.mxu0 0.0
    %1015 = vmatpush1.msra.mxu0 0.0
    %1016 = vmatprep.subr.mxu0 0.0
    %1017 = vmatpush1.msra.mxu0 0.0
    %1018 = vmatprep.subr.mxu0 0.0
    %1019 = vmatpush1.msra.mxu0 0.0
    %1020 = vmatprep.mubr.f32.mxu0 0.0
    %1021 = vmatmul.mubr.f32.gmra.mrb[0].mxu0 %v812
    %v1022 = vpop.f32.mrb[0].mxu0
    %v1023 = vadd.f32 %v808, %v1022
    %v1024 = vpop.f32.mrb[0].mxu0
    %v1025 = vadd.f32 %v808, %v1024
    %1026 = vdwg.mxu0
    %1027 = vmatprep.subr.mxu0 %v722
    %1028 = vmatpush1.msra.mxu0 %v721
    %1029 = vmatprep.subr.mxu0 %v732
    %1030 = vmatpush1.msra.mxu0 %v731
    %1031 = vmatprep.subr.mxu0 %v742
    %1032 = vmatpush1.msra.mxu0 %v741
    %1033 = vmatprep.subr.mxu0 %v752
    %1034 = vmatpush1.msra.mxu0 %v751
    %1035 = vmatprep.subr.mxu0 %v762
    %1036 = vmatpush1.msra.mxu0 %v761
    %1037 = vmatprep.subr.mxu0 %v772
    %1038 = vmatpush1.msra.mxu0 %v771
    %1039 = vmatprep.subr.mxu0 %v782
    %1040 = vmatpush1.msra.mxu0 %v781
    %1041 = vmatprep.subr.mxu0 %v792
    %1042 = vmatpush1.msra.mxu0 %v791
    %1043 = vmatprep.subr.mxu0 %v802
    %1044 = vmatpush1.msra.mxu0 %v801
    %1045 = vmatprep.subr.mxu0 0.0
    %1046 = vmatpush1.msra.mxu0 0.0
    %1047 = vmatprep.subr.mxu0 0.0
    %1048 = vmatpush1.msra.mxu0 0.0
    %1049 = vmatprep.subr.mxu0 0.0
    %1050 = vmatpush1.msra.mxu0 0.0
    %1051 = vmatprep.subr.mxu0 0.0
    %1052 = vmatpush1.msra.mxu0 0.0
    %1053 = vmatprep.subr.mxu0 0.0
    %1054 = vmatpush1.msra.mxu0 0.0
    %1055 = vmatprep.subr.mxu0 0.0
    %1056 = vmatpush1.msra.mxu0 0.0
    %1057 = vmatprep.subr.mxu0 0.0
    %1058 = vmatpush1.msra.mxu0 0.0
    %1059 = vmatprep.subr.mxu0 0.0
    %1060 = vmatpush1.msra.mxu0 0.0
    %1061 = vmatprep.subr.mxu0 0.0
    %1062 = vmatpush1.msra.mxu0 0.0
    %1063 = vmatprep.subr.mxu0 0.0
    %1064 = vmatpush1.msra.mxu0 0.0
    %1065 = vmatprep.subr.mxu0 0.0
    %1066 = vmatpush1.msra.mxu0 0.0
    %1067 = vmatprep.subr.mxu0 0.0
    %1068 = vmatpush1.msra.mxu0 0.0
    %1069 = vmatprep.subr.mxu0 0.0
    %1070 = vmatpush1.msra.mxu0 0.0
    %1071 = vmatprep.subr.mxu0 0.0
    %1072 = vmatpush1.msra.mxu0 0.0
    %1073 = vmatprep.subr.mxu0 0.0
    %1074 = vmatpush1.msra.mxu0 0.0
    %1075 = vmatprep.subr.mxu0 0.0
    %1076 = vmatpush1.msra.mxu0 0.0
    %1077 = vmatprep.subr.mxu0 0.0
    %1078 = vmatpush1.msra.mxu0 0.0
    %1079 = vmatprep.subr.mxu0 0.0
    %1080 = vmatpush1.msra.mxu0 0.0
    %1081 = vmatprep.subr.mxu0 0.0
    %1082 = vmatpush1.msra.mxu0 0.0
    %1083 = vmatprep.subr.mxu0 0.0
    %1084 = vmatpush1.msra.mxu0 0.0
    %1085 = vmatprep.subr.mxu0 0.0
    %1086 = vmatpush1.msra.mxu0 0.0
    %1087 = vmatprep.subr.mxu0 0.0
    %1088 = vmatpush1.msra.mxu0 0.0
    %1089 = vmatprep.subr.mxu0 0.0
    %1090 = vmatpush1.msra.mxu0 0.0
    %1091 = vmatprep.mubr.f32.mxu0 0.0
    %1092 = vmatmul.mubr.f32.gmra.mrb[0].mxu0 %v812
    %v1093 = vpop.f32.mrb[0].mxu0
    %v1094 = vadd.f32 %v808, %v1093
    %v1095 = vpop.f32.mrb[0].mxu0
    %v1096 = vadd.f32 %v808, %v1095
    %1097 = vdwg.mxu0
    %1098 = vmatprep.subr.mxu0 %v724
    %1099 = vmatpush1.msra.mxu0 %v723
    %1100 = vmatprep.subr.mxu0 %v734
    %1101 = vmatpush1.msra.mxu0 %v733
    %1102 = vmatprep.subr.mxu0 %v744
    %1103 = vmatpush1.msra.mxu0 %v743
    %1104 = vmatprep.subr.mxu0 %v754
    %1105 = vmatpush1.msra.mxu0 %v753
    %1106 = vmatprep.subr.mxu0 %v764
    %1107 = vmatpush1.msra.mxu0 %v763
    %1108 = vmatprep.subr.mxu0 %v774
    %1109 = vmatpush1.msra.mxu0 %v773
    %1110 = vmatprep.subr.mxu0 %v784
    %1111 = vmatpush1.msra.mxu0 %v783
    %1112 = vmatprep.subr.mxu0 %v794
    %1113 = vmatpush1.msra.mxu0 %v793
    %1114 = vmatprep.subr.mxu0 %v804
    %1115 = vmatpush1.msra.mxu0 %v803
    %1116 = vmatprep.subr.mxu0 0.0
    %1117 = vmatpush1.msra.mxu0 0.0
    %1118 = vmatprep.subr.mxu0 0.0
    %1119 = vmatpush1.msra.mxu0 0.0
    %1120 = vmatprep.subr.mxu0 0.0
    %1121 = vmatpush1.msra.mxu0 0.0
    %1122 = vmatprep.subr.mxu0 0.0
    %1123 = vmatpush1.msra.mxu0 0.0
    %1124 = vmatprep.subr.mxu0 0.0
    %1125 = vmatpush1.msra.mxu0 0.0
    %1126 = vmatprep.subr.mxu0 0.0
    %1127 = vmatpush1.msra.mxu0 0.0
    %1128 = vmatprep.subr.mxu0 0.0
    %1129 = vmatpush1.msra.mxu0 0.0
    %1130 = vmatprep.subr.mxu0 0.0
    %1131 = vmatpush1.msra.mxu0 0.0
    %1132 = vmatprep.subr.mxu0 0.0
    %1133 = vmatpush1.msra.mxu0 0.0
    %1134 = vmatprep.subr.mxu0 0.0
    %1135 = vmatpush1.msra.mxu0 0.0
    %1136 = vmatprep.subr.mxu0 0.0
    %1137 = vmatpush1.msra.mxu0 0.0
    %1138 = vmatprep.subr.mxu0 0.0
    %1139 = vmatpush1.msra.mxu0 0.0
    %1140 = vmatprep.subr.mxu0 0.0
    %1141 = vmatpush1.msra.mxu0 0.0
    %1142 = vmatprep.subr.mxu0 0.0
    %1143 = vmatpush1.msra.mxu0 0.0
    %1144 = vmatprep.subr.mxu0 0.0
    %1145 = vmatpush1.msra.mxu0 0.0
    %1146 = vmatprep.subr.mxu0 0.0
    %1147 = vmatpush1.msra.mxu0 0.0
    %1148 = vmatprep.subr.mxu0 0.0
    %1149 = vmatpush1.msra.mxu0 0.0
    %1150 = vmatprep.subr.mxu0 0.0
    %1151 = vmatpush1.msra.mxu0 0.0
    %1152 = vmatprep.subr.mxu0 0.0
    %1153 = vmatpush1.msra.mxu0 0.0
    %1154 = vmatprep.subr.mxu0 0.0
    %1155 = vmatpush1.msra.mxu0 0.0
    %1156 = vmatprep.subr.mxu0 0.0
    %1157 = vmatpush1.msra.mxu0 0.0
    %1158 = vmatprep.subr.mxu0 0.0
    %1159 = vmatpush1.msra.mxu0 0.0
    %1160 = vmatprep.subr.mxu0 0.0
    %1161 = vmatpush1.msra.mxu0 0.0
    %1162 = vmatprep.mubr.f32.mxu0 0.0
    %1163 = vmatmul.mubr.f32.gmra.mrb[0].mxu0 %v812
    %v1164 = vpop.f32.mrb[0].mxu0
    %v1165 = vadd.f32 %v808, %v1164
    %v1166 = vpop.f32.mrb[0].mxu0
    %v1167 = vadd.f32 %v808, %v1166
    %1168 = vdwg.mxu0
    %v1169 = vmax.f32 %v881, 0.0
    %v1170 = vmax.f32 %v883, 0.0
    %v1171 = vmax.f32 %v952, 0.0
    %v1172 = vmax.f32 %v954, 0.0
    %v1173 = vmax.f32 %v1023, 0.0
    %v1174 = vmax.f32 %v1025, 0.0
    %v1175 = vmax.f32 %v1094, 0.0
    %v1176 = vmax.f32 %v1096, 0.0
    %v1177 = vmax.f32 %v1165, 0.0
    %v1178 = vmax.f32 %v1167, 0.0
    %v1181 = vlaneseq
    %v1182 = vshrl.u32 %v1181, 7
    %v1183 = vsub.s32 0, %v1182
    %v1184 = vrot.slane %v59, %v1183
    %v1185 = vlaneseq
    %v1186 = vshrl.u32 %v1185, 7
    %v1187 = vsub.s32 1, %v1186
    %v1188 = vrot.slane %v59, %v1187
    %v1189 = vlaneseq
    %v1190 = vshrl.u32 %v1189, 7
    %v1191 = vsub.s32 2, %v1190
    %v1192 = vrot.slane %v59, %v1191
    %v1193 = vlaneseq
    %v1194 = vshrl.u32 %v1193, 7
    %v1195 = vsub.s32 3, %v1194
    %v1196 = vrot.slane %v59, %v1195
    %v1197 = vlaneseq
    %v1198 = vshrl.u32 %v1197, 7
    %v1199 = vsub.s32 4, %v1198
    %v1200 = vrot.slane %v59, %v1199
    %v1201 = vlaneseq
    %v1202 = vshrl.u32 %v1201, 7
    %v1203 = vsub.s32 5, %v1202
    %v1204 = vrot.slane %v59, %v1203
    %v1205 = vlaneseq
    %v1206 = vshrl.u32 %v1205, 7
    %v1207 = vsub.s32 6, %v1206
    %v1208 = vrot.slane %v59, %v1207
    %v1209 = vlaneseq
    %v1210 = vshrl.u32 %v1209, 7
    %v1211 = vsub.s32 7, %v1210
    %v1212 = vrot.slane %v59, %v1211
    %v1213 = vlaneseq
    %v1214 = vshrl.u32 %v1213, 7
    %v1215 = vsub.s32 0, %v1214
    %v1216 = vrot.slane %v60, %v1215
    %v1217 = vlaneseq
    %v1218 = vshrl.u32 %v1217, 7
    %v1219 = vsub.s32 1, %v1218
    %v1220 = vrot.slane %v60, %v1219
    %v1231 = vmul.f32 %v1169, %v1184
    %v1232 = vmul.f32 %v1170, %v1188
    %v1233 = vmul.f32 %v1171, %v1192
    %v1234 = vmul.f32 %v1172, %v1196
    %v1235 = vmul.f32 %v1173, %v1200
    %v1236 = vmul.f32 %v1174, %v1204
    %v1237 = vmul.f32 %v1175, %v1208
    %v1238 = vmul.f32 %v1176, %v1212
    %v1239 = vmul.f32 %v1177, %v1216
    %v1240 = vmul.f32 %v1178, %v1220
    %1241 = vst [vmem:[#allocation2 + $0x8] sm:$0xff] %v1231
    %1242 = vst [vmem:[#allocation2 + $0x10] sm:$0xff] %v1232
    %1243 = vst [vmem:[#allocation2 + $0x18] sm:$0xff] %v1233
    %1244 = vst [vmem:[#allocation2 + $0x20] sm:$0xff] %v1234
    %1245 = vst [vmem:[#allocation2 + $0x28] sm:$0xff] %v1235
    %1246 = vst [vmem:[#allocation2 + $0x30] sm:$0xff] %v1236
    %1247 = vst [vmem:[#allocation2 + $0x38] sm:$0xff] %v1237
    %1248 = vst [vmem:[#allocation2 + $0x40] sm:$0xff] %v1238
    %1249 = vst [vmem:[#allocation2 + $0x48] sm:$0xff] %v1239
    %1250 = vst [vmem:[#allocation2 + $0x50] sm:$0xff] %v1240
    %v1251 = vld [vmem:[#allocation2] sm:$0xff]
    %v1252 = vld [vmem:[#allocation2 + $0x8] sm:$0xff]
    %v1253 = vld [vmem:[#allocation2 + $0x10] sm:$0xff]
    %v1254 = vld [vmem:[#allocation2 + $0x18] sm:$0xff]
    %v1255 = vld [vmem:[#allocation2 + $0x20] sm:$0xff]
    %v1256 = vld [vmem:[#allocation2 + $0x28] sm:$0xff]
    %v1257 = vld [vmem:[#allocation2 + $0x30] sm:$0xff]
    %v1258 = vld [vmem:[#allocation2 + $0x38] sm:$0xff]
    %v1259 = vld [vmem:[#allocation2 + $0x40] sm:$0xff]
    %v1260 = vld [vmem:[#allocation2 + $0x48] sm:$0xff]
    %v1261 = vld [vmem:[#allocation2 + $0x50] sm:$0xff]
    %1273 = vrot.lane.b32.xlu0 %v1251, 25
    %v1274 = vpop.permute.xlu0 %1273
    %1275 = vrot.lane.b32.xlu0 %v1252, 25
    %v1276 = vpop.permute.xlu0 %1275
    %1277 = vrot.lane.b32.xlu0 %v1253, 25
    %v1278 = vpop.permute.xlu0 %1277
    %1279 = vrot.lane.b32.xlu0 %v1254, 25
    %v1280 = vpop.permute.xlu0 %1279
    %1281 = vrot.lane.b32.xlu0 %v1255, 25
    %v1282 = vpop.permute.xlu0 %1281
    %1283 = vrot.lane.b32.xlu0 %v1256, 25
    %v1284 = vpop.permute.xlu0 %1283
    %1285 = vrot.lane.b32.xlu0 %v1257, 25
    %v1286 = vpop.permute.xlu0 %1285
    %1287 = vrot.lane.b32.xlu0 %v1258, 25
    %v1288 = vpop.permute.xlu0 %1287
    %1289 = vrot.lane.b32.xlu0 %v1259, 25
    %v1290 = vpop.permute.xlu0 %1289
    %1291 = vrot.lane.b32.xlu0 %v1260, 25
    %v1292 = vpop.permute.xlu0 %1291
    %1293 = vrot.lane.b32.xlu0 %v1261, 25
    %v1294 = vpop.permute.xlu0 %1293
    %v1295 = vsel %vm139, %v1274, %v1276
    %v1296 = vsel %vm139, %v1276, %v1278
    %v1297 = vsel %vm139, %v1278, %v1280
    %v1298 = vsel %vm139, %v1280, %v1282
    %v1299 = vsel %vm139, %v1282, %v1284
    %v1300 = vsel %vm139, %v1284, %v1286
    %v1301 = vsel %vm139, %v1286, %v1288
    %v1302 = vsel %vm139, %v1288, %v1290
    %v1303 = vsel %vm139, %v1290, %v1292
    %v1304 = vsel %vm139, %v1292, %v1294
    %1315 = vst [vmem:[#allocation3] sm:$0xff] %v1295
    %1316 = vst [vmem:[#allocation3 + $0x8] sm:$0xff] %v1296
    %1317 = vst [vmem:[#allocation3 + $0x10] sm:$0xff] %v1297
    %1318 = vst [vmem:[#allocation3 + $0x18] sm:$0xff] %v1298
    %1319 = vst [vmem:[#allocation3 + $0x20] sm:$0xff] %v1299
    %1320 = vst [vmem:[#allocation3 + $0x28] sm:$0xff] %v1300
    %1321 = vst [vmem:[#allocation3 + $0x30] sm:$0xff] %v1301
    %1322 = vst [vmem:[#allocation3 + $0x38] sm:$0xff] %v1302
    %1323 = vst [vmem:[#allocation3 + $0x40] sm:$0xff] %v1303
    %1324 = vst [vmem:[#allocation3 + $0x48] sm:$0xff] %v1304
    %v1325 = vld [vmem:[#allocation2] sm:$0xff]
    %v1326 = vld [vmem:[#allocation2 + $0x8] sm:$0xff]
    %v1327 = vld [vmem:[#allocation2 + $0x10] sm:$0xff]
    %v1328 = vld [vmem:[#allocation2 + $0x18] sm:$0xff]
    %v1329 = vld [vmem:[#allocation2 + $0x20] sm:$0xff]
    %v1330 = vld [vmem:[#allocation2 + $0x28] sm:$0xff]
    %v1331 = vld [vmem:[#allocation2 + $0x30] sm:$0xff]
    %v1332 = vld [vmem:[#allocation2 + $0x38] sm:$0xff]
    %v1333 = vld [vmem:[#allocation2 + $0x40] sm:$0xff]
    %v1334 = vld [vmem:[#allocation2 + $0x48] sm:$0xff]
    %v1335 = vld [vmem:[#allocation2 + $0x50] sm:$0xff]
    %1347 = vrot.lane.b32.xlu0 %v1325, 24
    %v1348 = vpop.permute.xlu0 %1347
    %1349 = vrot.lane.b32.xlu0 %v1326, 24
    %v1350 = vpop.permute.xlu0 %1349
    %1351 = vrot.lane.b32.xlu0 %v1327, 24
    %v1352 = vpop.permute.xlu0 %1351
    %1353 = vrot.lane.b32.xlu0 %v1328, 24
    %v1354 = vpop.permute.xlu0 %1353
    %1355 = vrot.lane.b32.xlu0 %v1329, 24
    %v1356 = vpop.permute.xlu0 %1355
    %1357 = vrot.lane.b32.xlu0 %v1330, 24
    %v1358 = vpop.permute.xlu0 %1357
    %1359 = vrot.lane.b32.xlu0 %v1331, 24
    %v1360 = vpop.permute.xlu0 %1359
    %1361 = vrot.lane.b32.xlu0 %v1332, 24
    %v1362 = vpop.permute.xlu0 %1361
    %1363 = vrot.lane.b32.xlu0 %v1333, 24
    %v1364 = vpop.permute.xlu0 %1363
    %1365 = vrot.lane.b32.xlu0 %v1334, 24
    %v1366 = vpop.permute.xlu0 %1365
    %1367 = vrot.lane.b32.xlu0 %v1335, 24
    %v1368 = vpop.permute.xlu0 %1367
    %v1369 = vsel %vm214, %v1348, %v1350
    %v1370 = vsel %vm214, %v1350, %v1352
    %v1371 = vsel %vm214, %v1352, %v1354
    %v1372 = vsel %vm214, %v1354, %v1356
    %v1373 = vsel %vm214, %v1356, %v1358
    %v1374 = vsel %vm214, %v1358, %v1360
    %v1375 = vsel %vm214, %v1360, %v1362
    %v1376 = vsel %vm214, %v1362, %v1364
    %v1377 = vsel %vm214, %v1364, %v1366
    %v1378 = vsel %vm214, %v1366, %v1368
    %1389 = vst [vmem:[#allocation3 + $0x50] sm:$0xff] %v1369
    %1390 = vst [vmem:[#allocation3 + $0x58] sm:$0xff] %v1370
    %1391 = vst [vmem:[#allocation3 + $0x60] sm:$0xff] %v1371
    %1392 = vst [vmem:[#allocation3 + $0x68] sm:$0xff] %v1372
    %1393 = vst [vmem:[#allocation3 + $0x70] sm:$0xff] %v1373
    %1394 = vst [vmem:[#allocation3 + $0x78] sm:$0xff] %v1374
    %1395 = vst [vmem:[#allocation3 + $0x80] sm:$0xff] %v1375
    %1396 = vst [vmem:[#allocation3 + $0x88] sm:$0xff] %v1376
    %1397 = vst [vmem:[#allocation3 + $0x90] sm:$0xff] %v1377
    %1398 = vst [vmem:[#allocation3 + $0x98] sm:$0xff] %v1378
    %v1399 = vld [vmem:[#allocation2] sm:$0xff]
    %v1400 = vld [vmem:[#allocation2 + $0x8] sm:$0xff]
    %v1401 = vld [vmem:[#allocation2 + $0x10] sm:$0xff]
    %v1402 = vld [vmem:[#allocation2 + $0x18] sm:$0xff]
    %v1403 = vld [vmem:[#allocation2 + $0x20] sm:$0xff]
    %v1404 = vld [vmem:[#allocation2 + $0x28] sm:$0xff]
    %v1405 = vld [vmem:[#allocation2 + $0x30] sm:$0xff]
    %v1406 = vld [vmem:[#allocation2 + $0x38] sm:$0xff]
    %v1407 = vld [vmem:[#allocation2 + $0x40] sm:$0xff]
    %v1408 = vld [vmem:[#allocation2 + $0x48] sm:$0xff]
    %v1409 = vld [vmem:[#allocation2 + $0x50] sm:$0xff]
    %1421 = vrot.lane.b32.xlu0 %v1399, 23
    %v1422 = vpop.permute.xlu0 %1421
    %1423 = vrot.lane.b32.xlu0 %v1400, 23
    %v1424 = vpop.permute.xlu0 %1423
    %1425 = vrot.lane.b32.xlu0 %v1401, 23
    %v1426 = vpop.permute.xlu0 %1425
    %1427 = vrot.lane.b32.xlu0 %v1402, 23
    %v1428 = vpop.permute.xlu0 %1427
    %1429 = vrot.lane.b32.xlu0 %v1403, 23
    %v1430 = vpop.permute.xlu0 %1429
    %1431 = vrot.lane.b32.xlu0 %v1404, 23
    %v1432 = vpop.permute.xlu0 %1431
    %1433 = vrot.lane.b32.xlu0 %v1405, 23
    %v1434 = vpop.permute.xlu0 %1433
    %1435 = vrot.lane.b32.xlu0 %v1406, 23
    %v1436 = vpop.permute.xlu0 %1435
    %1437 = vrot.lane.b32.xlu0 %v1407, 23
    %v1438 = vpop.permute.xlu0 %1437
    %1439 = vrot.lane.b32.xlu0 %v1408, 23
    %v1440 = vpop.permute.xlu0 %1439
    %1441 = vrot.lane.b32.xlu0 %v1409, 23
    %v1442 = vpop.permute.xlu0 %1441
    %v1443 = vsel %vm289, %v1422, %v1424
    %v1444 = vsel %vm289, %v1424, %v1426
    %v1445 = vsel %vm289, %v1426, %v1428
    %v1446 = vsel %vm289, %v1428, %v1430
    %v1447 = vsel %vm289, %v1430, %v1432
    %v1448 = vsel %vm289, %v1432, %v1434
    %v1449 = vsel %vm289, %v1434, %v1436
    %v1450 = vsel %vm289, %v1436, %v1438
    %v1451 = vsel %vm289, %v1438, %v1440
    %v1452 = vsel %vm289, %v1440, %v1442
    %1463 = vst [vmem:[#allocation3 + $0xa0] sm:$0xff] %v1443
    %1464 = vst [vmem:[#allocation3 + $0xa8] sm:$0xff] %v1444
    %1465 = vst [vmem:[#allocation3 + $0xb0] sm:$0xff] %v1445
    %1466 = vst [vmem:[#allocation3 + $0xb8] sm:$0xff] %v1446
    %1467 = vst [vmem:[#allocation3 + $0xc0] sm:$0xff] %v1447
    %1468 = vst [vmem:[#allocation3 + $0xc8] sm:$0xff] %v1448
    %1469 = vst [vmem:[#allocation3 + $0xd0] sm:$0xff] %v1449
    %1470 = vst [vmem:[#allocation3 + $0xd8] sm:$0xff] %v1450
    %1471 = vst [vmem:[#allocation3 + $0xe0] sm:$0xff] %v1451
    %1472 = vst [vmem:[#allocation3 + $0xe8] sm:$0xff] %v1452
    %v1473 = vld [vmem:[#allocation2] sm:$0xff]
    %v1474 = vld [vmem:[#allocation2 + $0x8] sm:$0xff]
    %v1475 = vld [vmem:[#allocation2 + $0x10] sm:$0xff]
    %v1476 = vld [vmem:[#allocation2 + $0x18] sm:$0xff]
    %v1477 = vld [vmem:[#allocation2 + $0x20] sm:$0xff]
    %v1478 = vld [vmem:[#allocation2 + $0x28] sm:$0xff]
    %v1479 = vld [vmem:[#allocation2 + $0x30] sm:$0xff]
    %v1480 = vld [vmem:[#allocation2 + $0x38] sm:$0xff]
    %v1481 = vld [vmem:[#allocation2 + $0x40] sm:$0xff]
    %v1482 = vld [vmem:[#allocation2 + $0x48] sm:$0xff]
    %v1483 = vld [vmem:[#allocation2 + $0x50] sm:$0xff]
    %1495 = vrot.lane.b32.xlu0 %v1473, 1
    %v1496 = vpop.permute.xlu0 %1495
    %1497 = vrot.lane.b32.xlu0 %v1474, 1
    %v1498 = vpop.permute.xlu0 %1497
    %1499 = vrot.lane.b32.xlu0 %v1475, 1
    %v1500 = vpop.permute.xlu0 %1499
    %1501 = vrot.lane.b32.xlu0 %v1476, 1
    %v1502 = vpop.permute.xlu0 %1501
    %1503 = vrot.lane.b32.xlu0 %v1477, 1
    %v1504 = vpop.permute.xlu0 %1503
    %1505 = vrot.lane.b32.xlu0 %v1478, 1
    %v1506 = vpop.permute.xlu0 %1505
    %1507 = vrot.lane.b32.xlu0 %v1479, 1
    %v1508 = vpop.permute.xlu0 %1507
    %1509 = vrot.lane.b32.xlu0 %v1480, 1
    %v1510 = vpop.permute.xlu0 %1509
    %1511 = vrot.lane.b32.xlu0 %v1481, 1
    %v1512 = vpop.permute.xlu0 %1511
    %1513 = vrot.lane.b32.xlu0 %v1482, 1
    %v1514 = vpop.permute.xlu0 %1513
    %1515 = vrot.lane.b32.xlu0 %v1483, 1
    %v1516 = vpop.permute.xlu0 %1515
    %v1517 = vsel %vm364, %v1496, %v1498
    %v1518 = vsel %vm364, %v1498, %v1500
    %v1519 = vsel %vm364, %v1500, %v1502
    %v1520 = vsel %vm364, %v1502, %v1504
    %v1521 = vsel %vm364, %v1504, %v1506
    %v1522 = vsel %vm364, %v1506, %v1508
    %v1523 = vsel %vm364, %v1508, %v1510
    %v1524 = vsel %vm364, %v1510, %v1512
    %v1525 = vsel %vm364, %v1512, %v1514
    %v1526 = vsel %vm364, %v1514, %v1516
    %1537 = vst [vmem:[#allocation3 + $0xf0] sm:$0xff] %v1517
    %1538 = vst [vmem:[#allocation3 + $0xf8] sm:$0xff] %v1518
    %1539 = vst [vmem:[#allocation3 + $0x100] sm:$0xff] %v1519
    %1540 = vst [vmem:[#allocation3 + $0x108] sm:$0xff] %v1520
    %1541 = vst [vmem:[#allocation3 + $0x110] sm:$0xff] %v1521
    %1542 = vst [vmem:[#allocation3 + $0x118] sm:$0xff] %v1522
    %1543 = vst [vmem:[#allocation3 + $0x120] sm:$0xff] %v1523
    %1544 = vst [vmem:[#allocation3 + $0x128] sm:$0xff] %v1524
    %1545 = vst [vmem:[#allocation3 + $0x130] sm:$0xff] %v1525
    %1546 = vst [vmem:[#allocation3 + $0x138] sm:$0xff] %v1526
    %v1547 = vld [vmem:[#allocation2 + $0x8] sm:$0xff]
    %v1548 = vld [vmem:[#allocation2 + $0x10] sm:$0xff]
    %v1549 = vld [vmem:[#allocation2 + $0x18] sm:$0xff]
    %v1550 = vld [vmem:[#allocation2 + $0x20] sm:$0xff]
    %v1551 = vld [vmem:[#allocation2 + $0x28] sm:$0xff]
    %v1552 = vld [vmem:[#allocation2 + $0x30] sm:$0xff]
    %v1553 = vld [vmem:[#allocation2 + $0x38] sm:$0xff]
    %v1554 = vld [vmem:[#allocation2 + $0x40] sm:$0xff]
    %v1555 = vld [vmem:[#allocation2 + $0x48] sm:$0xff]
    %v1556 = vld [vmem:[#allocation2 + $0x50] sm:$0xff]
    %1557 = vst [vmem:[#allocation3 + $0x140] sm:$0xff] %v1547
    %1558 = vst [vmem:[#allocation3 + $0x148] sm:$0xff] %v1548
    %1559 = vst [vmem:[#allocation3 + $0x150] sm:$0xff] %v1549
    %1560 = vst [vmem:[#allocation3 + $0x158] sm:$0xff] %v1550
    %1561 = vst [vmem:[#allocation3 + $0x160] sm:$0xff] %v1551
    %1562 = vst [vmem:[#allocation3 + $0x168] sm:$0xff] %v1552
    %1563 = vst [vmem:[#allocation3 + $0x170] sm:$0xff] %v1553
    %1564 = vst [vmem:[#allocation3 + $0x178] sm:$0xff] %v1554
    %1565 = vst [vmem:[#allocation3 + $0x180] sm:$0xff] %v1555
    %1566 = vst [vmem:[#allocation3 + $0x188] sm:$0xff] %v1556
    %v1567 = vld [vmem:[#allocation2 + $0x8] sm:$0xff]
    %v1568 = vld [vmem:[#allocation2 + $0x10] sm:$0xff]
    %v1569 = vld [vmem:[#allocation2 + $0x18] sm:$0xff]
    %v1570 = vld [vmem:[#allocation2 + $0x20] sm:$0xff]
    %v1571 = vld [vmem:[#allocation2 + $0x28] sm:$0xff]
    %v1572 = vld [vmem:[#allocation2 + $0x30] sm:$0xff]
    %v1573 = vld [vmem:[#allocation2 + $0x38] sm:$0xff]
    %v1574 = vld [vmem:[#allocation2 + $0x40] sm:$0xff]
    %v1575 = vld [vmem:[#allocation2 + $0x48] sm:$0xff]
    %v1576 = vld [vmem:[#allocation2 + $0x50] sm:$0xff]
    %v1577 = vld [vmem:[#allocation2 + $0x58] sm:$0xff]
    %1589 = vrot.lane.b32.xlu0 %v1567, 127
    %v1590 = vpop.permute.xlu0 %1589
    %1591 = vrot.lane.b32.xlu0 %v1568, 127
    %v1592 = vpop.permute.xlu0 %1591
    %1593 = vrot.lane.b32.xlu0 %v1569, 127
    %v1594 = vpop.permute.xlu0 %1593
    %1595 = vrot.lane.b32.xlu0 %v1570, 127
    %v1596 = vpop.permute.xlu0 %1595
    %1597 = vrot.lane.b32.xlu0 %v1571, 127
    %v1598 = vpop.permute.xlu0 %1597
    %1599 = vrot.lane.b32.xlu0 %v1572, 127
    %v1600 = vpop.permute.xlu0 %1599
    %1601 = vrot.lane.b32.xlu0 %v1573, 127
    %v1602 = vpop.permute.xlu0 %1601
    %1603 = vrot.lane.b32.xlu0 %v1574, 127
    %v1604 = vpop.permute.xlu0 %1603
    %1605 = vrot.lane.b32.xlu0 %v1575, 127
    %v1606 = vpop.permute.xlu0 %1605
    %1607 = vrot.lane.b32.xlu0 %v1576, 127
    %v1608 = vpop.permute.xlu0 %1607
    %1609 = vrot.lane.b32.xlu0 %v1577, 127
    %v1610 = vpop.permute.xlu0 %1609
    %v1611 = vsel %vm459, %v1590, %v1592
    %v1612 = vsel %vm459, %v1592, %v1594
    %v1613 = vsel %vm459, %v1594, %v1596
    %v1614 = vsel %vm459, %v1596, %v1598
    %v1615 = vsel %vm459, %v1598, %v1600
    %v1616 = vsel %vm459, %v1600, %v1602
    %v1617 = vsel %vm459, %v1602, %v1604
    %v1618 = vsel %vm459, %v1604, %v1606
    %v1619 = vsel %vm459, %v1606, %v1608
    %v1620 = vsel %vm459, %v1608, %v1610
    %1631 = vst [vmem:[#allocation3 + $0x190] sm:$0xff] %v1611
    %1632 = vst [vmem:[#allocation3 + $0x198] sm:$0xff] %v1612
    %1633 = vst [vmem:[#allocation3 + $0x1a0] sm:$0xff] %v1613
    %1634 = vst [vmem:[#allocation3 + $0x1a8] sm:$0xff] %v1614
    %1635 = vst [vmem:[#allocation3 + $0x1b0] sm:$0xff] %v1615
    %1636 = vst [vmem:[#allocation3 + $0x1b8] sm:$0xff] %v1616
    %1637 = vst [vmem:[#allocation3 + $0x1c0] sm:$0xff] %v1617
    %1638 = vst [vmem:[#allocation3 + $0x1c8] sm:$0xff] %v1618
    %1639 = vst [vmem:[#allocation3 + $0x1d0] sm:$0xff] %v1619
    %1640 = vst [vmem:[#allocation3 + $0x1d8] sm:$0xff] %v1620
    %v1641 = vld [vmem:[#allocation2 + $0x8] sm:$0xff]
    %v1642 = vld [vmem:[#allocation2 + $0x10] sm:$0xff]
    %v1643 = vld [vmem:[#allocation2 + $0x18] sm:$0xff]
    %v1644 = vld [vmem:[#allocation2 + $0x20] sm:$0xff]
    %v1645 = vld [vmem:[#allocation2 + $0x28] sm:$0xff]
    %v1646 = vld [vmem:[#allocation2 + $0x30] sm:$0xff]
    %v1647 = vld [vmem:[#allocation2 + $0x38] sm:$0xff]
    %v1648 = vld [vmem:[#allocation2 + $0x40] sm:$0xff]
    %v1649 = vld [vmem:[#allocation2 + $0x48] sm:$0xff]
    %v1650 = vld [vmem:[#allocation2 + $0x50] sm:$0xff]
    %v1651 = vld [vmem:[#allocation2 + $0x58] sm:$0xff]
    %1663 = vrot.lane.b32.xlu0 %v1641, 105
    %v1664 = vpop.permute.xlu0 %1663
    %1665 = vrot.lane.b32.xlu0 %v1642, 105
    %v1666 = vpop.permute.xlu0 %1665
    %1667 = vrot.lane.b32.xlu0 %v1643, 105
    %v1668 = vpop.permute.xlu0 %1667
    %1669 = vrot.lane.b32.xlu0 %v1644, 105
    %v1670 = vpop.permute.xlu0 %1669
    %1671 = vrot.lane.b32.xlu0 %v1645, 105
    %v1672 = vpop.permute.xlu0 %1671
    %1673 = vrot.lane.b32.xlu0 %v1646, 105
    %v1674 = vpop.permute.xlu0 %1673
    %1675 = vrot.lane.b32.xlu0 %v1647, 105
    %v1676 = vpop.permute.xlu0 %1675
    %1677 = vrot.lane.b32.xlu0 %v1648, 105
    %v1678 = vpop.permute.xlu0 %1677
    %1679 = vrot.lane.b32.xlu0 %v1649, 105
    %v1680 = vpop.permute.xlu0 %1679
    %1681 = vrot.lane.b32.xlu0 %v1650, 105
    %v1682 = vpop.permute.xlu0 %1681
    %1683 = vrot.lane.b32.xlu0 %v1651, 105
    %v1684 = vpop.permute.xlu0 %1683
    %v1685 = vsel %vm534, %v1664, %v1666
    %v1686 = vsel %vm534, %v1666, %v1668
    %v1687 = vsel %vm534, %v1668, %v1670
    %v1688 = vsel %vm534, %v1670, %v1672
    %v1689 = vsel %vm534, %v1672, %v1674
    %v1690 = vsel %vm534, %v1674, %v1676
    %v1691 = vsel %vm534, %v1676, %v1678
    %v1692 = vsel %vm534, %v1678, %v1680
    %v1693 = vsel %vm534, %v1680, %v1682
    %v1694 = vsel %vm534, %v1682, %v1684
    %1705 = vst [vmem:[#allocation3 + $0x1e0] sm:$0xff] %v1685
    %1706 = vst [vmem:[#allocation3 + $0x1e8] sm:$0xff] %v1686
    %1707 = vst [vmem:[#allocation3 + $0x1f0] sm:$0xff] %v1687
    %1708 = vst [vmem:[#allocation3 + $0x1f8] sm:$0xff] %v1688
    %1709 = vst [vmem:[#allocation3 + $0x200] sm:$0xff] %v1689
    %1710 = vst [vmem:[#allocation3 + $0x208] sm:$0xff] %v1690
    %1711 = vst [vmem:[#allocation3 + $0x210] sm:$0xff] %v1691
    %1712 = vst [vmem:[#allocation3 + $0x218] sm:$0xff] %v1692
    %1713 = vst [vmem:[#allocation3 + $0x220] sm:$0xff] %v1693
    %1714 = vst [vmem:[#allocation3 + $0x228] sm:$0xff] %v1694
    %v1715 = vld [vmem:[#allocation2 + $0x8] sm:$0xff]
    %v1716 = vld [vmem:[#allocation2 + $0x10] sm:$0xff]
    %v1717 = vld [vmem:[#allocation2 + $0x18] sm:$0xff]
    %v1718 = vld [vmem:[#allocation2 + $0x20] sm:$0xff]
    %v1719 = vld [vmem:[#allocation2 + $0x28] sm:$0xff]
    %v1720 = vld [vmem:[#allocation2 + $0x30] sm:$0xff]
    %v1721 = vld [vmem:[#allocation2 + $0x38] sm:$0xff]
    %v1722 = vld [vmem:[#allocation2 + $0x40] sm:$0xff]
    %v1723 = vld [vmem:[#allocation2 + $0x48] sm:$0xff]
    %v1724 = vld [vmem:[#allocation2 + $0x50] sm:$0xff]
    %v1725 = vld [vmem:[#allocation2 + $0x58] sm:$0xff]
    %1737 = vrot.lane.b32.xlu0 %v1715, 104
    %v1738 = vpop.permute.xlu0 %1737
    %1739 = vrot.lane.b32.xlu0 %v1716, 104
    %v1740 = vpop.permute.xlu0 %1739
    %1741 = vrot.lane.b32.xlu0 %v1717, 104
    %v1742 = vpop.permute.xlu0 %1741
    %1743 = vrot.lane.b32.xlu0 %v1718, 104
    %v1744 = vpop.permute.xlu0 %1743
    %1745 = vrot.lane.b32.xlu0 %v1719, 104
    %v1746 = vpop.permute.xlu0 %1745
    %1747 = vrot.lane.b32.xlu0 %v1720, 104
    %v1748 = vpop.permute.xlu0 %1747
    %1749 = vrot.lane.b32.xlu0 %v1721, 104
    %v1750 = vpop.permute.xlu0 %1749
    %1751 = vrot.lane.b32.xlu0 %v1722, 104
    %v1752 = vpop.permute.xlu0 %1751
    %1753 = vrot.lane.b32.xlu0 %v1723, 104
    %v1754 = vpop.permute.xlu0 %1753
    %1755 = vrot.lane.b32.xlu0 %v1724, 104
    %v1756 = vpop.permute.xlu0 %1755
    %1757 = vrot.lane.b32.xlu0 %v1725, 104
    %v1758 = vpop.permute.xlu0 %1757
    %v1759 = vsel %vm609, %v1738, %v1740
    %v1760 = vsel %vm609, %v1740, %v1742
    %v1761 = vsel %vm609, %v1742, %v1744
    %v1762 = vsel %vm609, %v1744, %v1746
    %v1763 = vsel %vm609, %v1746, %v1748
    %v1764 = vsel %vm609, %v1748, %v1750
    %v1765 = vsel %vm609, %v1750, %v1752
    %v1766 = vsel %vm609, %v1752, %v1754
    %v1767 = vsel %vm609, %v1754, %v1756
    %v1768 = vsel %vm609, %v1756, %v1758
    %1779 = vst [vmem:[#allocation3 + $0x230] sm:$0xff] %v1759
    %1780 = vst [vmem:[#allocation3 + $0x238] sm:$0xff] %v1760
    %1781 = vst [vmem:[#allocation3 + $0x240] sm:$0xff] %v1761
    %1782 = vst [vmem:[#allocation3 + $0x248] sm:$0xff] %v1762
    %1783 = vst [vmem:[#allocation3 + $0x250] sm:$0xff] %v1763
    %1784 = vst [vmem:[#allocation3 + $0x258] sm:$0xff] %v1764
    %1785 = vst [vmem:[#allocation3 + $0x260] sm:$0xff] %v1765
    %1786 = vst [vmem:[#allocation3 + $0x268] sm:$0xff] %v1766
    %1787 = vst [vmem:[#allocation3 + $0x270] sm:$0xff] %v1767
    %1788 = vst [vmem:[#allocation3 + $0x278] sm:$0xff] %v1768
    %v1789 = vld [vmem:[#allocation2 + $0x8] sm:$0xff]
    %v1790 = vld [vmem:[#allocation2 + $0x10] sm:$0xff]
    %v1791 = vld [vmem:[#allocation2 + $0x18] sm:$0xff]
    %v1792 = vld [vmem:[#allocation2 + $0x20] sm:$0xff]
    %v1793 = vld [vmem:[#allocation2 + $0x28] sm:$0xff]
    %v1794 = vld [vmem:[#allocation2 + $0x30] sm:$0xff]
    %v1795 = vld [vmem:[#allocation2 + $0x38] sm:$0xff]
    %v1796 = vld [vmem:[#allocation2 + $0x40] sm:$0xff]
    %v1797 = vld [vmem:[#allocation2 + $0x48] sm:$0xff]
    %v1798 = vld [vmem:[#allocation2 + $0x50] sm:$0xff]
    %v1799 = vld [vmem:[#allocation2 + $0x58] sm:$0xff]
    %1811 = vrot.lane.b32.xlu0 %v1789, 103
    %v1812 = vpop.permute.xlu0 %1811
    %1813 = vrot.lane.b32.xlu0 %v1790, 103
    %v1814 = vpop.permute.xlu0 %1813
    %1815 = vrot.lane.b32.xlu0 %v1791, 103
    %v1816 = vpop.permute.xlu0 %1815
    %1817 = vrot.lane.b32.xlu0 %v1792, 103
    %v1818 = vpop.permute.xlu0 %1817
    %1819 = vrot.lane.b32.xlu0 %v1793, 103
    %v1820 = vpop.permute.xlu0 %1819
    %1821 = vrot.lane.b32.xlu0 %v1794, 103
    %v1822 = vpop.permute.xlu0 %1821
    %1823 = vrot.lane.b32.xlu0 %v1795, 103
    %v1824 = vpop.permute.xlu0 %1823
    %1825 = vrot.lane.b32.xlu0 %v1796, 103
    %v1826 = vpop.permute.xlu0 %1825
    %1827 = vrot.lane.b32.xlu0 %v1797, 103
    %v1828 = vpop.permute.xlu0 %1827
    %1829 = vrot.lane.b32.xlu0 %v1798, 103
    %v1830 = vpop.permute.xlu0 %1829
    %1831 = vrot.lane.b32.xlu0 %v1799, 103
    %v1832 = vpop.permute.xlu0 %1831
    %v1833 = vsel %vm684, %v1812, %v1814
    %v1834 = vsel %vm684, %v1814, %v1816
    %v1835 = vsel %vm684, %v1816, %v1818
    %v1836 = vsel %vm684, %v1818, %v1820
    %v1837 = vsel %vm684, %v1820, %v1822
    %v1838 = vsel %vm684, %v1822, %v1824
    %v1839 = vsel %vm684, %v1824, %v1826
    %v1840 = vsel %vm684, %v1826, %v1828
    %v1841 = vsel %vm684, %v1828, %v1830
    %v1842 = vsel %vm684, %v1830, %v1832
    %1853 = vst [vmem:[#allocation3 + $0x280] sm:$0xff] %v1833
    %1854 = vst [vmem:[#allocation3 + $0x288] sm:$0xff] %v1834
    %1855 = vst [vmem:[#allocation3 + $0x290] sm:$0xff] %v1835
    %1856 = vst [vmem:[#allocation3 + $0x298] sm:$0xff] %v1836
    %1857 = vst [vmem:[#allocation3 + $0x2a0] sm:$0xff] %v1837
    %1858 = vst [vmem:[#allocation3 + $0x2a8] sm:$0xff] %v1838
    %1859 = vst [vmem:[#allocation3 + $0x2b0] sm:$0xff] %v1839
    %1860 = vst [vmem:[#allocation3 + $0x2b8] sm:$0xff] %v1840
    %1861 = vst [vmem:[#allocation3 + $0x2c0] sm:$0xff] %v1841
    %1862 = vst [vmem:[#allocation3 + $0x2c8] sm:$0xff] %v1842
    %v1863 = vld [vmem:[#allocation3] sm:$0xff]
    %v1864 = vld [vmem:[#allocation3 + $0x8] sm:$0xff]
    %v1865 = vld [vmem:[#allocation3 + $0x10] sm:$0xff]
    %v1866 = vld [vmem:[#allocation3 + $0x18] sm:$0xff]
    %v1867 = vld [vmem:[#allocation3 + $0x20] sm:$0xff]
    %v1868 = vld [vmem:[#allocation3 + $0x28] sm:$0xff]
    %v1869 = vld [vmem:[#allocation3 + $0x30] sm:$0xff]
    %v1870 = vld [vmem:[#allocation3 + $0x38] sm:$0xff]
    %v1871 = vld [vmem:[#allocation3 + $0x40] sm:$0xff]
    %v1872 = vld [vmem:[#allocation3 + $0x48] sm:$0xff]
    %v1873 = vld [vmem:[#allocation3 + $0x50] sm:$0xff]
    %v1874 = vld [vmem:[#allocation3 + $0x58] sm:$0xff]
    %v1875 = vld [vmem:[#allocation3 + $0x60] sm:$0xff]
    %v1876 = vld [vmem:[#allocation3 + $0x68] sm:$0xff]
    %v1877 = vld [vmem:[#allocation3 + $0x70] sm:$0xff]
    %v1878 = vld [vmem:[#allocation3 + $0x78] sm:$0xff]
    %v1879 = vld [vmem:[#allocation3 + $0x80] sm:$0xff]
    %v1880 = vld [vmem:[#allocation3 + $0x88] sm:$0xff]
    %v1881 = vld [vmem:[#allocation3 + $0x90] sm:$0xff]
    %v1882 = vld [vmem:[#allocation3 + $0x98] sm:$0xff]
    %v1883 = vld [vmem:[#allocation3 + $0xa0] sm:$0xff]
    %v1884 = vld [vmem:[#allocation3 + $0xa8] sm:$0xff]
    %v1885 = vld [vmem:[#allocation3 + $0xb0] sm:$0xff]
    %v1886 = vld [vmem:[#allocation3 + $0xb8] sm:$0xff]
    %v1887 = vld [vmem:[#allocation3 + $0xc0] sm:$0xff]
    %v1888 = vld [vmem:[#allocation3 + $0xc8] sm:$0xff]
    %v1889 = vld [vmem:[#allocation3 + $0xd0] sm:$0xff]
    %v1890 = vld [vmem:[#allocation3 + $0xd8] sm:$0xff]
    %v1891 = vld [vmem:[#allocation3 + $0xe0] sm:$0xff]
    %v1892 = vld [vmem:[#allocation3 + $0xe8] sm:$0xff]
    %v1893 = vld [vmem:[#allocation3 + $0xf0] sm:$0xff]
    %v1894 = vld [vmem:[#allocation3 + $0xf8] sm:$0xff]
    %v1895 = vld [vmem:[#allocation3 + $0x100] sm:$0xff]
    %v1896 = vld [vmem:[#allocation3 + $0x108] sm:$0xff]
    %v1897 = vld [vmem:[#allocation3 + $0x110] sm:$0xff]
    %v1898 = vld [vmem:[#allocation3 + $0x118] sm:$0xff]
    %v1899 = vld [vmem:[#allocation3 + $0x120] sm:$0xff]
    %v1900 = vld [vmem:[#allocation3 + $0x128] sm:$0xff]
    %v1901 = vld [vmem:[#allocation3 + $0x130] sm:$0xff]
    %v1902 = vld [vmem:[#allocation3 + $0x138] sm:$0xff]
    %v1903 = vld [vmem:[#allocation3 + $0x140] sm:$0xff]
    %v1904 = vld [vmem:[#allocation3 + $0x148] sm:$0xff]
    %v1905 = vld [vmem:[#allocation3 + $0x150] sm:$0xff]
    %v1906 = vld [vmem:[#allocation3 + $0x158] sm:$0xff]
    %v1907 = vld [vmem:[#allocation3 + $0x160] sm:$0xff]
    %v1908 = vld [vmem:[#allocation3 + $0x168] sm:$0xff]
    %v1909 = vld [vmem:[#allocation3 + $0x170] sm:$0xff]
    %v1910 = vld [vmem:[#allocation3 + $0x178] sm:$0xff]
    %v1911 = vld [vmem:[#allocation3 + $0x180] sm:$0xff]
    %v1912 = vld [vmem:[#allocation3 + $0x188] sm:$0xff]
    %v1913 = vld [vmem:[#allocation3 + $0x190] sm:$0xff]
    %v1914 = vld [vmem:[#allocation3 + $0x198] sm:$0xff]
    %v1915 = vld [vmem:[#allocation3 + $0x1a0] sm:$0xff]
    %v1916 = vld [vmem:[#allocation3 + $0x1a8] sm:$0xff]
    %v1917 = vld [vmem:[#allocation3 + $0x1b0] sm:$0xff]
    %v1918 = vld [vmem:[#allocation3 + $0x1b8] sm:$0xff]
    %v1919 = vld [vmem:[#allocation3 + $0x1c0] sm:$0xff]
    %v1920 = vld [vmem:[#allocation3 + $0x1c8] sm:$0xff]
    %v1921 = vld [vmem:[#allocation3 + $0x1d0] sm:$0xff]
    %v1922 = vld [vmem:[#allocation3 + $0x1d8] sm:$0xff]
    %v1923 = vld [vmem:[#allocation3 + $0x1e0] sm:$0xff]
    %v1924 = vld [vmem:[#allocation3 + $0x1e8] sm:$0xff]
    %v1925 = vld [vmem:[#allocation3 + $0x1f0] sm:$0xff]
    %v1926 = vld [vmem:[#allocation3 + $0x1f8] sm:$0xff]
    %v1927 = vld [vmem:[#allocation3 + $0x200] sm:$0xff]
    %v1928 = vld [vmem:[#allocation3 + $0x208] sm:$0xff]
    %v1929 = vld [vmem:[#allocation3 + $0x210] sm:$0xff]
    %v1930 = vld [vmem:[#allocation3 + $0x218] sm:$0xff]
    %v1931 = vld [vmem:[#allocation3 + $0x220] sm:$0xff]
    %v1932 = vld [vmem:[#allocation3 + $0x228] sm:$0xff]
    %v1933 = vld [vmem:[#allocation3 + $0x230] sm:$0xff]
    %v1934 = vld [vmem:[#allocation3 + $0x238] sm:$0xff]
    %v1935 = vld [vmem:[#allocation3 + $0x240] sm:$0xff]
    %v1936 = vld [vmem:[#allocation3 + $0x248] sm:$0xff]
    %v1937 = vld [vmem:[#allocation3 + $0x250] sm:$0xff]
    %v1938 = vld [vmem:[#allocation3 + $0x258] sm:$0xff]
    %v1939 = vld [vmem:[#allocation3 + $0x260] sm:$0xff]
    %v1940 = vld [vmem:[#allocation3 + $0x268] sm:$0xff]
    %v1941 = vld [vmem:[#allocation3 + $0x270] sm:$0xff]
    %v1942 = vld [vmem:[#allocation3 + $0x278] sm:$0xff]
    %v1943 = vld [vmem:[#allocation3 + $0x280] sm:$0xff]
    %v1944 = vld [vmem:[#allocation3 + $0x288] sm:$0xff]
    %v1945 = vld [vmem:[#allocation3 + $0x290] sm:$0xff]
    %v1946 = vld [vmem:[#allocation3 + $0x298] sm:$0xff]
    %v1947 = vld [vmem:[#allocation3 + $0x2a0] sm:$0xff]
    %v1948 = vld [vmem:[#allocation3 + $0x2a8] sm:$0xff]
    %v1949 = vld [vmem:[#allocation3 + $0x2b0] sm:$0xff]
    %v1950 = vld [vmem:[#allocation3 + $0x2b8] sm:$0xff]
    %v1951 = vld [vmem:[#allocation3 + $0x2c0] sm:$0xff]
    %v1952 = vld [vmem:[#allocation3 + $0x2c8] sm:$0xff]
    %1954 = vset.pattern.permute.xlu0 0
    %1955 = vperm.xlu0 %1954, %v68
    %v1956 = vpop.permute.xlu0 %1955
    %v1959 = vsel %vm810, %v62, 0
    %1961 = vmatprep.subr.mxu0 %v1864
    %1962 = vmatpush1.msra.mxu0 %v1863
    %1963 = vmatprep.subr.mxu0 %v1874
    %1964 = vmatpush1.msra.mxu0 %v1873
    %1965 = vmatprep.subr.mxu0 %v1884
    %1966 = vmatpush1.msra.mxu0 %v1883
    %1967 = vmatprep.subr.mxu0 %v1894
    %1968 = vmatpush1.msra.mxu0 %v1893
    %1969 = vmatprep.subr.mxu0 %v1904
    %1970 = vmatpush1.msra.mxu0 %v1903
    %1971 = vmatprep.subr.mxu0 %v1914
    %1972 = vmatpush1.msra.mxu0 %v1913
    %1973 = vmatprep.subr.mxu0 %v1924
    %1974 = vmatpush1.msra.mxu0 %v1923
    %1975 = vmatprep.subr.mxu0 %v1934
    %1976 = vmatpush1.msra.mxu0 %v1933
    %1977 = vmatprep.subr.mxu0 %v1944
    %1978 = vmatpush1.msra.mxu0 %v1943
    %1979 = vmatprep.subr.mxu0 0.0
    %1980 = vmatpush1.msra.mxu0 0.0
    %1981 = vmatprep.subr.mxu0 0.0
    %1982 = vmatpush1.msra.mxu0 0.0
    %1983 = vmatprep.subr.mxu0 0.0
    %1984 = vmatpush1.msra.mxu0 0.0
    %1985 = vmatprep.subr.mxu0 0.0
    %1986 = vmatpush1.msra.mxu0 0.0
    %1987 = vmatprep.subr.mxu0 0.0
    %1988 = vmatpush1.msra.mxu0 0.0
    %1989 = vmatprep.subr.mxu0 0.0
    %1990 = vmatpush1.msra.mxu0 0.0
    %1991 = vmatprep.subr.mxu0 0.0
    %1992 = vmatpush1.msra.mxu0 0.0
    %1993 = vmatprep.subr.mxu0 0.0
    %1994 = vmatpush1.msra.mxu0 0.0
    %1995 = vmatprep.subr.mxu0 0.0
    %1996 = vmatpush1.msra.mxu0 0.0
    %1997 = vmatprep.subr.mxu0 0.0
    %1998 = vmatpush1.msra.mxu0 0.0
    %1999 = vmatprep.subr.mxu0 0.0
    %2000 = vmatpush1.msra.mxu0 0.0
    %2001 = vmatprep.subr.mxu0 0.0
    %2002 = vmatpush1.msra.mxu0 0.0
    %2003 = vmatprep.subr.mxu0 0.0
    %2004 = vmatpush1.msra.mxu0 0.0
    %2005 = vmatprep.subr.mxu0 0.0
    %2006 = vmatpush1.msra.mxu0 0.0
    %2007 = vmatprep.subr.mxu0 0.0
    %2008 = vmatpush1.msra.mxu0 0.0
    %2009 = vmatprep.subr.mxu0 0.0
    %2010 = vmatpush1.msra.mxu0 0.0
    %2011 = vmatprep.subr.mxu0 0.0
    %2012 = vmatpush1.msra.mxu0 0.0
    %2013 = vmatprep.subr.mxu0 0.0
    %2014 = vmatpush1.msra.mxu0 0.0
    %2015 = vmatprep.subr.mxu0 0.0
    %2016 = vmatpush1.msra.mxu0 0.0
    %2017 = vmatprep.subr.mxu0 0.0
    %2018 = vmatpush1.msra.mxu0 0.0
    %2019 = vmatprep.subr.mxu0 0.0
    %2020 = vmatpush1.msra.mxu0 0.0
    %2021 = vmatprep.subr.mxu0 0.0
    %2022 = vmatpush1.msra.mxu0 0.0
    %2023 = vmatprep.subr.mxu0 0.0
    %2024 = vmatpush1.msra.mxu0 0.0
    %2025 = vmatprep.mubr.f32.mxu0 0.0
    %2026 = vmatmul.mubr.f32.gmra.mrb[0].mxu0 %v1959
    %v2027 = vpop.f32.mrb[0].mxu0
    %v2028 = vadd.f32 %v1956, %v2027
    %v2029 = vpop.f32.mrb[0].mxu0
    %v2030 = vadd.f32 %v1956, %v2029
    %2031 = vdwg.mxu0
    %2032 = vmatprep.subr.mxu0 %v1866
    %2033 = vmatpush1.msra.mxu0 %v1865
    %2034 = vmatprep.subr.mxu0 %v1876
    %2035 = vmatpush1.msra.mxu0 %v1875
    %2036 = vmatprep.subr.mxu0 %v1886
    %2037 = vmatpush1.msra.mxu0 %v1885
    %2038 = vmatprep.subr.mxu0 %v1896
    %2039 = vmatpush1.msra.mxu0 %v1895
    %2040 = vmatprep.subr.mxu0 %v1906
    %2041 = vmatpush1.msra.mxu0 %v1905
    %2042 = vmatprep.subr.mxu0 %v1916
    %2043 = vmatpush1.msra.mxu0 %v1915
    %2044 = vmatprep.subr.mxu0 %v1926
    %2045 = vmatpush1.msra.mxu0 %v1925
    %2046 = vmatprep.subr.mxu0 %v1936
    %2047 = vmatpush1.msra.mxu0 %v1935
    %2048 = vmatprep.subr.mxu0 %v1946
    %2049 = vmatpush1.msra.mxu0 %v1945
    %2050 = vmatprep.subr.mxu0 0.0
    %2051 = vmatpush1.msra.mxu0 0.0
    %2052 = vmatprep.subr.mxu0 0.0
    %2053 = vmatpush1.msra.mxu0 0.0
    %2054 = vmatprep.subr.mxu0 0.0
    %2055 = vmatpush1.msra.mxu0 0.0
    %2056 = vmatprep.subr.mxu0 0.0
    %2057 = vmatpush1.msra.mxu0 0.0
    %2058 = vmatprep.subr.mxu0 0.0
    %2059 = vmatpush1.msra.mxu0 0.0
    %2060 = vmatprep.subr.mxu0 0.0
    %2061 = vmatpush1.msra.mxu0 0.0
    %2062 = vmatprep.subr.mxu0 0.0
    %2063 = vmatpush1.msra.mxu0 0.0
    %2064 = vmatprep.subr.mxu0 0.0
    %2065 = vmatpush1.msra.mxu0 0.0
    %2066 = vmatprep.subr.mxu0 0.0
    %2067 = vmatpush1.msra.mxu0 0.0
    %2068 = vmatprep.subr.mxu0 0.0
    %2069 = vmatpush1.msra.mxu0 0.0
    %2070 = vmatprep.subr.mxu0 0.0
    %2071 = vmatpush1.msra.mxu0 0.0
    %2072 = vmatprep.subr.mxu0 0.0
    %2073 = vmatpush1.msra.mxu0 0.0
    %2074 = vmatprep.subr.mxu0 0.0
    %2075 = vmatpush1.msra.mxu0 0.0
    %2076 = vmatprep.subr.mxu0 0.0
    %2077 = vmatpush1.msra.mxu0 0.0
    %2078 = vmatprep.subr.mxu0 0.0
    %2079 = vmatpush1.msra.mxu0 0.0
    %2080 = vmatprep.subr.mxu0 0.0
    %2081 = vmatpush1.msra.mxu0 0.0
    %2082 = vmatprep.subr.mxu0 0.0
    %2083 = vmatpush1.msra.mxu0 0.0
    %2084 = vmatprep.subr.mxu0 0.0
    %2085 = vmatpush1.msra.mxu0 0.0
    %2086 = vmatprep.subr.mxu0 0.0
    %2087 = vmatpush1.msra.mxu0 0.0
    %2088 = vmatprep.subr.mxu0 0.0
    %2089 = vmatpush1.msra.mxu0 0.0
    %2090 = vmatprep.subr.mxu0 0.0
    %2091 = vmatpush1.msra.mxu0 0.0
    %2092 = vmatprep.subr.mxu0 0.0
    %2093 = vmatpush1.msra.mxu0 0.0
    %2094 = vmatprep.subr.mxu0 0.0
    %2095 = vmatpush1.msra.mxu0 0.0
    %2096 = vmatprep.mubr.f32.mxu0 0.0
    %2097 = vmatmul.mubr.f32.gmra.mrb[0].mxu0 %v1959
    %v2098 = vpop.f32.mrb[0].mxu0
    %v2099 = vadd.f32 %v1956, %v2098
    %v2100 = vpop.f32.mrb[0].mxu0
    %v2101 = vadd.f32 %v1956, %v2100
    %2102 = vdwg.mxu0
    %2103 = vmatprep.subr.mxu0 %v1868
    %2104 = vmatpush1.msra.mxu0 %v1867
    %2105 = vmatprep.subr.mxu0 %v1878
    %2106 = vmatpush1.msra.mxu0 %v1877
    %2107 = vmatprep.subr.mxu0 %v1888
    %2108 = vmatpush1.msra.mxu0 %v1887
    %2109 = vmatprep.subr.mxu0 %v1898
    %2110 = vmatpush1.msra.mxu0 %v1897
    %2111 = vmatprep.subr.mxu0 %v1908
    %2112 = vmatpush1.msra.mxu0 %v1907
    %2113 = vmatprep.subr.mxu0 %v1918
    %2114 = vmatpush1.msra.mxu0 %v1917
    %2115 = vmatprep.subr.mxu0 %v1928
    %2116 = vmatpush1.msra.mxu0 %v1927
    %2117 = vmatprep.subr.mxu0 %v1938
    %2118 = vmatpush1.msra.mxu0 %v1937
    %2119 = vmatprep.subr.mxu0 %v1948
    %2120 = vmatpush1.msra.mxu0 %v1947
    %2121 = vmatprep.subr.mxu0 0.0
    %2122 = vmatpush1.msra.mxu0 0.0
    %2123 = vmatprep.subr.mxu0 0.0
    %2124 = vmatpush1.msra.mxu0 0.0
    %2125 = vmatprep.subr.mxu0 0.0
    %2126 = vmatpush1.msra.mxu0 0.0
    %2127 = vmatprep.subr.mxu0 0.0
    %2128 = vmatpush1.msra.mxu0 0.0
    %2129 = vmatprep.subr.mxu0 0.0
    %2130 = vmatpush1.msra.mxu0 0.0
    %2131 = vmatprep.subr.mxu0 0.0
    %2132 = vmatpush1.msra.mxu0 0.0
    %2133 = vmatprep.subr.mxu0 0.0
    %2134 = vmatpush1.msra.mxu0 0.0
    %2135 = vmatprep.subr.mxu0 0.0
    %2136 = vmatpush1.msra.mxu0 0.0
    %2137 = vmatprep.subr.mxu0 0.0
    %2138 = vmatpush1.msra.mxu0 0.0
    %2139 = vmatprep.subr.mxu0 0.0
    %2140 = vmatpush1.msra.mxu0 0.0
    %2141 = vmatprep.subr.mxu0 0.0
    %2142 = vmatpush1.msra.mxu0 0.0
    %2143 = vmatprep.subr.mxu0 0.0
    %2144 = vmatpush1.msra.mxu0 0.0
    %2145 = vmatprep.subr.mxu0 0.0
    %2146 = vmatpush1.msra.mxu0 0.0
    %2147 = vmatprep.subr.mxu0 0.0
    %2148 = vmatpush1.msra.mxu0 0.0
    %2149 = vmatprep.subr.mxu0 0.0
    %2150 = vmatpush1.msra.mxu0 0.0
    %2151 = vmatprep.subr.mxu0 0.0
    %2152 = vmatpush1.msra.mxu0 0.0
    %2153 = vmatprep.subr.mxu0 0.0
    %2154 = vmatpush1.msra.mxu0 0.0
    %2155 = vmatprep.subr.mxu0 0.0
    %2156 = vmatpush1.msra.mxu0 0.0
    %2157 = vmatprep.subr.mxu0 0.0
    %2158 = vmatpush1.msra.mxu0 0.0
    %2159 = vmatprep.subr.mxu0 0.0
    %2160 = vmatpush1.msra.mxu0 0.0
    %2161 = vmatprep.subr.mxu0 0.0
    %2162 = vmatpush1.msra.mxu0 0.0
    %2163 = vmatprep.subr.mxu0 0.0
    %2164 = vmatpush1.msra.mxu0 0.0
    %2165 = vmatprep.subr.mxu0 0.0
    %2166 = vmatpush1.msra.mxu0 0.0
    %2167 = vmatprep.mubr.f32.mxu0 0.0
    %2168 = vmatmul.mubr.f32.gmra.mrb[0].mxu0 %v1959
    %v2169 = vpop.f32.mrb[0].mxu0
    %v2170 = vadd.f32 %v1956, %v2169
    %v2171 = vpop.f32.mrb[0].mxu0
    %v2172 = vadd.f32 %v1956, %v2171
    %2173 = vdwg.mxu0
    %2174 = vmatprep.subr.mxu0 %v1870
    %2175 = vmatpush1.msra.mxu0 %v1869
    %2176 = vmatprep.subr.mxu0 %v1880
    %2177 = vmatpush1.msra.mxu0 %v1879
    %2178 = vmatprep.subr.mxu0 %v1890
    %2179 = vmatpush1.msra.mxu0 %v1889
    %2180 = vmatprep.subr.mxu0 %v1900
    %2181 = vmatpush1.msra.mxu0 %v1899
    %2182 = vmatprep.subr.mxu0 %v1910
    %2183 = vmatpush1.msra.mxu0 %v1909
    %2184 = vmatprep.subr.mxu0 %v1920
    %2185 = vmatpush1.msra.mxu0 %v1919
    %2186 = vmatprep.subr.mxu0 %v1930
    %2187 = vmatpush1.msra.mxu0 %v1929
    %2188 = vmatprep.subr.mxu0 %v1940
    %2189 = vmatpush1.msra.mxu0 %v1939
    %2190 = vmatprep.subr.mxu0 %v1950
    %2191 = vmatpush1.msra.mxu0 %v1949
    %2192 = vmatprep.subr.mxu0 0.0
    %2193 = vmatpush1.msra.mxu0 0.0
    %2194 = vmatprep.subr.mxu0 0.0
    %2195 = vmatpush1.msra.mxu0 0.0
    %2196 = vmatprep.subr.mxu0 0.0
    %2197 = vmatpush1.msra.mxu0 0.0
    %2198 = vmatprep.subr.mxu0 0.0
    %2199 = vmatpush1.msra.mxu0 0.0
    %2200 = vmatprep.subr.mxu0 0.0
    %2201 = vmatpush1.msra.mxu0 0.0
    %2202 = vmatprep.subr.mxu0 0.0
    %2203 = vmatpush1.msra.mxu0 0.0
    %2204 = vmatprep.subr.mxu0 0.0
    %2205 = vmatpush1.msra.mxu0 0.0
    %2206 = vmatprep.subr.mxu0 0.0
    %2207 = vmatpush1.msra.mxu0 0.0
    %2208 = vmatprep.subr.mxu0 0.0
    %2209 = vmatpush1.msra.mxu0 0.0
    %2210 = vmatprep.subr.mxu0 0.0
    %2211 = vmatpush1.msra.mxu0 0.0
    %2212 = vmatprep.subr.mxu0 0.0
    %2213 = vmatpush1.msra.mxu0 0.0
    %2214 = vmatprep.subr.mxu0 0.0
    %2215 = vmatpush1.msra.mxu0 0.0
    %2216 = vmatprep.subr.mxu0 0.0
    %2217 = vmatpush1.msra.mxu0 0.0
    %2218 = vmatprep.subr.mxu0 0.0
    %2219 = vmatpush1.msra.mxu0 0.0
    %2220 = vmatprep.subr.mxu0 0.0
    %2221 = vmatpush1.msra.mxu0 0.0
    %2222 = vmatprep.subr.mxu0 0.0
    %2223 = vmatpush1.msra.mxu0 0.0
    %2224 = vmatprep.subr.mxu0 0.0
    %2225 = vmatpush1.msra.mxu0 0.0
    %2226 = vmatprep.subr.mxu0 0.0
    %2227 = vmatpush1.msra.mxu0 0.0
    %2228 = vmatprep.subr.mxu0 0.0
    %2229 = vmatpush1.msra.mxu0 0.0
    %2230 = vmatprep.subr.mxu0 0.0
    %2231 = vmatpush1.msra.mxu0 0.0
    %2232 = vmatprep.subr.mxu0 0.0
    %2233 = vmatpush1.msra.mxu0 0.0
    %2234 = vmatprep.subr.mxu0 0.0
    %2235 = vmatpush1.msra.mxu0 0.0
    %2236 = vmatprep.subr.mxu0 0.0
    %2237 = vmatpush1.msra.mxu0 0.0
    %2238 = vmatprep.mubr.f32.mxu0 0.0
    %2239 = vmatmul.mubr.f32.gmra.mrb[0].mxu0 %v1959
    %v2240 = vpop.f32.mrb[0].mxu0
    %v2241 = vadd.f32 %v1956, %v2240
    %v2242 = vpop.f32.mrb[0].mxu0
    %v2243 = vadd.f32 %v1956, %v2242
    %2244 = vdwg.mxu0
    %2245 = vmatprep.subr.mxu0 %v1872
    %2246 = vmatpush1.msra.mxu0 %v1871
    %2247 = vmatprep.subr.mxu0 %v1882
    %2248 = vmatpush1.msra.mxu0 %v1881
    %2249 = vmatprep.subr.mxu0 %v1892
    %2250 = vmatpush1.msra.mxu0 %v1891
    %2251 = vmatprep.subr.mxu0 %v1902
    %2252 = vmatpush1.msra.mxu0 %v1901
    %2253 = vmatprep.subr.mxu0 %v1912
    %2254 = vmatpush1.msra.mxu0 %v1911
    %2255 = vmatprep.subr.mxu0 %v1922
    %2256 = vmatpush1.msra.mxu0 %v1921
    %2257 = vmatprep.subr.mxu0 %v1932
    %2258 = vmatpush1.msra.mxu0 %v1931
    %2259 = vmatprep.subr.mxu0 %v1942
    %2260 = vmatpush1.msra.mxu0 %v1941
    %2261 = vmatprep.subr.mxu0 %v1952
    %2262 = vmatpush1.msra.mxu0 %v1951
    %2263 = vmatprep.subr.mxu0 0.0
    %2264 = vmatpush1.msra.mxu0 0.0
    %2265 = vmatprep.subr.mxu0 0.0
    %2266 = vmatpush1.msra.mxu0 0.0
    %2267 = vmatprep.subr.mxu0 0.0
    %2268 = vmatpush1.msra.mxu0 0.0
    %2269 = vmatprep.subr.mxu0 0.0
    %2270 = vmatpush1.msra.mxu0 0.0
    %2271 = vmatprep.subr.mxu0 0.0
    %2272 = vmatpush1.msra.mxu0 0.0
    %2273 = vmatprep.subr.mxu0 0.0
    %2274 = vmatpush1.msra.mxu0 0.0
    %2275 = vmatprep.subr.mxu0 0.0
    %2276 = vmatpush1.msra.mxu0 0.0
    %2277 = vmatprep.subr.mxu0 0.0
    %2278 = vmatpush1.msra.mxu0 0.0
    %2279 = vmatprep.subr.mxu0 0.0
    %2280 = vmatpush1.msra.mxu0 0.0
    %2281 = vmatprep.subr.mxu0 0.0
    %2282 = vmatpush1.msra.mxu0 0.0
    %2283 = vmatprep.subr.mxu0 0.0
    %2284 = vmatpush1.msra.mxu0 0.0
    %2285 = vmatprep.subr.mxu0 0.0
    %2286 = vmatpush1.msra.mxu0 0.0
    %2287 = vmatprep.subr.mxu0 0.0
    %2288 = vmatpush1.msra.mxu0 0.0
    %2289 = vmatprep.subr.mxu0 0.0
    %2290 = vmatpush1.msra.mxu0 0.0
    %2291 = vmatprep.subr.mxu0 0.0
    %2292 = vmatpush1.msra.mxu0 0.0
    %2293 = vmatprep.subr.mxu0 0.0
    %2294 = vmatpush1.msra.mxu0 0.0
    %2295 = vmatprep.subr.mxu0 0.0
    %2296 = vmatpush1.msra.mxu0 0.0
    %2297 = vmatprep.subr.mxu0 0.0
    %2298 = vmatpush1.msra.mxu0 0.0
    %2299 = vmatprep.subr.mxu0 0.0
    %2300 = vmatpush1.msra.mxu0 0.0
    %2301 = vmatprep.subr.mxu0 0.0
    %2302 = vmatpush1.msra.mxu0 0.0
    %2303 = vmatprep.subr.mxu0 0.0
    %2304 = vmatpush1.msra.mxu0 0.0
    %2305 = vmatprep.subr.mxu0 0.0
    %2306 = vmatpush1.msra.mxu0 0.0
    %2307 = vmatprep.subr.mxu0 0.0
    %2308 = vmatpush1.msra.mxu0 0.0
    %2309 = vmatprep.mubr.f32.mxu0 0.0
    %2310 = vmatmul.mubr.f32.gmra.mrb[0].mxu0 %v1959
    %v2311 = vpop.f32.mrb[0].mxu0
    %v2312 = vadd.f32 %v1956, %v2311
    %v2313 = vpop.f32.mrb[0].mxu0
    %v2314 = vadd.f32 %v1956, %v2313
    %2315 = vdwg.mxu0
    %v2316 = vmax.f32 %v2028, 0.0
    %v2317 = vmax.f32 %v2030, 0.0
    %v2318 = vmax.f32 %v2099, 0.0
    %v2319 = vmax.f32 %v2101, 0.0
    %v2320 = vmax.f32 %v2170, 0.0
    %v2321 = vmax.f32 %v2172, 0.0
    %v2322 = vmax.f32 %v2241, 0.0
    %v2323 = vmax.f32 %v2243, 0.0
    %v2324 = vmax.f32 %v2312, 0.0
    %v2325 = vmax.f32 %v2314, 0.0
    %v2326 = vmul.f32 %v2316, %v1184
    %v2327 = vmul.f32 %v2317, %v1188
    %v2328 = vmul.f32 %v2318, %v1192
    %v2329 = vmul.f32 %v2319, %v1196
    %v2330 = vmul.f32 %v2320, %v1200
    %v2331 = vmul.f32 %v2321, %v1204
    %v2332 = vmul.f32 %v2322, %v1208
    %v2333 = vmul.f32 %v2323, %v1212
    %v2334 = vmul.f32 %v2324, %v1216
    %v2335 = vmul.f32 %v2325, %v1220
    %2336 = vst [vmem:[#allocation2 + $0x8] sm:$0xff] %v2326
    %2337 = vst [vmem:[#allocation2 + $0x10] sm:$0xff] %v2327
    %2338 = vst [vmem:[#allocation2 + $0x18] sm:$0xff] %v2328
    %2339 = vst [vmem:[#allocation2 + $0x20] sm:$0xff] %v2329
    %2340 = vst [vmem:[#allocation2 + $0x28] sm:$0xff] %v2330
    %2341 = vst [vmem:[#allocation2 + $0x30] sm:$0xff] %v2331
    %2342 = vst [vmem:[#allocation2 + $0x38] sm:$0xff] %v2332
    %2343 = vst [vmem:[#allocation2 + $0x40] sm:$0xff] %v2333
    %2344 = vst [vmem:[#allocation2 + $0x48] sm:$0xff] %v2334
    %2345 = vst [vmem:[#allocation2 + $0x50] sm:$0xff] %v2335
    %v2346 = vld [vmem:[#allocation2] sm:$0xff]
    %v2347 = vld [vmem:[#allocation2 + $0x8] sm:$0xff]
    %v2348 = vld [vmem:[#allocation2 + $0x10] sm:$0xff]
    %v2349 = vld [vmem:[#allocation2 + $0x18] sm:$0xff]
    %v2350 = vld [vmem:[#allocation2 + $0x20] sm:$0xff]
    %v2351 = vld [vmem:[#allocation2 + $0x28] sm:$0xff]
    %v2352 = vld [vmem:[#allocation2 + $0x30] sm:$0xff]
    %v2353 = vld [vmem:[#allocation2 + $0x38] sm:$0xff]
    %v2354 = vld [vmem:[#allocation2 + $0x40] sm:$0xff]
    %v2355 = vld [vmem:[#allocation2 + $0x48] sm:$0xff]
    %v2356 = vld [vmem:[#allocation2 + $0x50] sm:$0xff]
    %2368 = vrot.lane.b32.xlu0 %v2346, 25
    %v2369 = vpop.permute.xlu0 %2368
    %2370 = vrot.lane.b32.xlu0 %v2347, 25
    %v2371 = vpop.permute.xlu0 %2370
    %2372 = vrot.lane.b32.xlu0 %v2348, 25
    %v2373 = vpop.permute.xlu0 %2372
    %2374 = vrot.lane.b32.xlu0 %v2349, 25
    %v2375 = vpop.permute.xlu0 %2374
    %2376 = vrot.lane.b32.xlu0 %v2350, 25
    %v2377 = vpop.permute.xlu0 %2376
    %2378 = vrot.lane.b32.xlu0 %v2351, 25
    %v2379 = vpop.permute.xlu0 %2378
    %2380 = vrot.lane.b32.xlu0 %v2352, 25
    %v2381 = vpop.permute.xlu0 %2380
    %2382 = vrot.lane.b32.xlu0 %v2353, 25
    %v2383 = vpop.permute.xlu0 %2382
    %2384 = vrot.lane.b32.xlu0 %v2354, 25
    %v2385 = vpop.permute.xlu0 %2384
    %2386 = vrot.lane.b32.xlu0 %v2355, 25
    %v2387 = vpop.permute.xlu0 %2386
    %2388 = vrot.lane.b32.xlu0 %v2356, 25
    %v2389 = vpop.permute.xlu0 %2388
    %v2390 = vsel %vm139, %v2369, %v2371
    %v2391 = vsel %vm139, %v2371, %v2373
    %v2392 = vsel %vm139, %v2373, %v2375
    %v2393 = vsel %vm139, %v2375, %v2377
    %v2394 = vsel %vm139, %v2377, %v2379
    %v2395 = vsel %vm139, %v2379, %v2381
    %v2396 = vsel %vm139, %v2381, %v2383
    %v2397 = vsel %vm139, %v2383, %v2385
    %v2398 = vsel %vm139, %v2385, %v2387
    %v2399 = vsel %vm139, %v2387, %v2389
    %2410 = vst [vmem:[#allocation3] sm:$0xff] %v2390
    %2411 = vst [vmem:[#allocation3 + $0x8] sm:$0xff] %v2391
    %2412 = vst [vmem:[#allocation3 + $0x10] sm:$0xff] %v2392
    %2413 = vst [vmem:[#allocation3 + $0x18] sm:$0xff] %v2393
    %2414 = vst [vmem:[#allocation3 + $0x20] sm:$0xff] %v2394
    %2415 = vst [vmem:[#allocation3 + $0x28] sm:$0xff] %v2395
    %2416 = vst [vmem:[#allocation3 + $0x30] sm:$0xff] %v2396
    %2417 = vst [vmem:[#allocation3 + $0x38] sm:$0xff] %v2397
    %2418 = vst [vmem:[#allocation3 + $0x40] sm:$0xff] %v2398
    %2419 = vst [vmem:[#allocation3 + $0x48] sm:$0xff] %v2399
    %v2420 = vld [vmem:[#allocation2] sm:$0xff]
    %v2421 = vld [vmem:[#allocation2 + $0x8] sm:$0xff]
    %v2422 = vld [vmem:[#allocation2 + $0x10] sm:$0xff]
    %v2423 = vld [vmem:[#allocation2 + $0x18] sm:$0xff]
    %v2424 = vld [vmem:[#allocation2 + $0x20] sm:$0xff]
    %v2425 = vld [vmem:[#allocation2 + $0x28] sm:$0xff]
    %v2426 = vld [vmem:[#allocation2 + $0x30] sm:$0xff]
    %v2427 = vld [vmem:[#allocation2 + $0x38] sm:$0xff]
    %v2428 = vld [vmem:[#allocation2 + $0x40] sm:$0xff]
    %v2429 = vld [vmem:[#allocation2 + $0x48] sm:$0xff]
    %v2430 = vld [vmem:[#allocation2 + $0x50] sm:$0xff]
    %2442 = vrot.lane.b32.xlu0 %v2420, 24
    %v2443 = vpop.permute.xlu0 %2442
    %2444 = vrot.lane.b32.xlu0 %v2421, 24
    %v2445 = vpop.permute.xlu0 %2444
    %2446 = vrot.lane.b32.xlu0 %v2422, 24
    %v2447 = vpop.permute.xlu0 %2446
    %2448 = vrot.lane.b32.xlu0 %v2423, 24
    %v2449 = vpop.permute.xlu0 %2448
    %2450 = vrot.lane.b32.xlu0 %v2424, 24
    %v2451 = vpop.permute.xlu0 %2450
    %2452 = vrot.lane.b32.xlu0 %v2425, 24
    %v2453 = vpop.permute.xlu0 %2452
    %2454 = vrot.lane.b32.xlu0 %v2426, 24
    %v2455 = vpop.permute.xlu0 %2454
    %2456 = vrot.lane.b32.xlu0 %v2427, 24
    %v2457 = vpop.permute.xlu0 %2456
    %2458 = vrot.lane.b32.xlu0 %v2428, 24
    %v2459 = vpop.permute.xlu0 %2458
    %2460 = vrot.lane.b32.xlu0 %v2429, 24
    %v2461 = vpop.permute.xlu0 %2460
    %2462 = vrot.lane.b32.xlu0 %v2430, 24
    %v2463 = vpop.permute.xlu0 %2462
    %v2464 = vsel %vm214, %v2443, %v2445
    %v2465 = vsel %vm214, %v2445, %v2447
    %v2466 = vsel %vm214, %v2447, %v2449
    %v2467 = vsel %vm214, %v2449, %v2451
    %v2468 = vsel %vm214, %v2451, %v2453
    %v2469 = vsel %vm214, %v2453, %v2455
    %v2470 = vsel %vm214, %v2455, %v2457
    %v2471 = vsel %vm214, %v2457, %v2459
    %v2472 = vsel %vm214, %v2459, %v2461
    %v2473 = vsel %vm214, %v2461, %v2463
    %2484 = vst [vmem:[#allocation3 + $0x50] sm:$0xff] %v2464
    %2485 = vst [vmem:[#allocation3 + $0x58] sm:$0xff] %v2465
    %2486 = vst [vmem:[#allocation3 + $0x60] sm:$0xff] %v2466
    %2487 = vst [vmem:[#allocation3 + $0x68] sm:$0xff] %v2467
    %2488 = vst [vmem:[#allocation3 + $0x70] sm:$0xff] %v2468
    %2489 = vst [vmem:[#allocation3 + $0x78] sm:$0xff] %v2469
    %2490 = vst [vmem:[#allocation3 + $0x80] sm:$0xff] %v2470
    %2491 = vst [vmem:[#allocation3 + $0x88] sm:$0xff] %v2471
    %2492 = vst [vmem:[#allocation3 + $0x90] sm:$0xff] %v2472
    %2493 = vst [vmem:[#allocation3 + $0x98] sm:$0xff] %v2473
    %v2494 = vld [vmem:[#allocation2] sm:$0xff]
    %v2495 = vld [vmem:[#allocation2 + $0x8] sm:$0xff]
    %v2496 = vld [vmem:[#allocation2 + $0x10] sm:$0xff]
    %v2497 = vld [vmem:[#allocation2 + $0x18] sm:$0xff]
    %v2498 = vld [vmem:[#allocation2 + $0x20] sm:$0xff]
    %v2499 = vld [vmem:[#allocation2 + $0x28] sm:$0xff]
    %v2500 = vld [vmem:[#allocation2 + $0x30] sm:$0xff]
    %v2501 = vld [vmem:[#allocation2 + $0x38] sm:$0xff]
    %v2502 = vld [vmem:[#allocation2 + $0x40] sm:$0xff]
    %v2503 = vld [vmem:[#allocation2 + $0x48] sm:$0xff]
    %v2504 = vld [vmem:[#allocation2 + $0x50] sm:$0xff]
    %2516 = vrot.lane.b32.xlu0 %v2494, 23
    %v2517 = vpop.permute.xlu0 %2516
    %2518 = vrot.lane.b32.xlu0 %v2495, 23
    %v2519 = vpop.permute.xlu0 %2518
    %2520 = vrot.lane.b32.xlu0 %v2496, 23
    %v2521 = vpop.permute.xlu0 %2520
    %2522 = vrot.lane.b32.xlu0 %v2497, 23
    %v2523 = vpop.permute.xlu0 %2522
    %2524 = vrot.lane.b32.xlu0 %v2498, 23
    %v2525 = vpop.permute.xlu0 %2524
    %2526 = vrot.lane.b32.xlu0 %v2499, 23
    %v2527 = vpop.permute.xlu0 %2526
    %2528 = vrot.lane.b32.xlu0 %v2500, 23
    %v2529 = vpop.permute.xlu0 %2528
    %2530 = vrot.lane.b32.xlu0 %v2501, 23
    %v2531 = vpop.permute.xlu0 %2530
    %2532 = vrot.lane.b32.xlu0 %v2502, 23
    %v2533 = vpop.permute.xlu0 %2532
    %2534 = vrot.lane.b32.xlu0 %v2503, 23
    %v2535 = vpop.permute.xlu0 %2534
    %2536 = vrot.lane.b32.xlu0 %v2504, 23
    %v2537 = vpop.permute.xlu0 %2536
    %v2538 = vsel %vm289, %v2517, %v2519
    %v2539 = vsel %vm289, %v2519, %v2521
    %v2540 = vsel %vm289, %v2521, %v2523
    %v2541 = vsel %vm289, %v2523, %v2525
    %v2542 = vsel %vm289, %v2525, %v2527
    %v2543 = vsel %vm289, %v2527, %v2529
    %v2544 = vsel %vm289, %v2529, %v2531
    %v2545 = vsel %vm289, %v2531, %v2533
    %v2546 = vsel %vm289, %v2533, %v2535
    %v2547 = vsel %vm289, %v2535, %v2537
    %2558 = vst [vmem:[#allocation3 + $0xa0] sm:$0xff] %v2538
    %2559 = vst [vmem:[#allocation3 + $0xa8] sm:$0xff] %v2539
    %2560 = vst [vmem:[#allocation3 + $0xb0] sm:$0xff] %v2540
    %2561 = vst [vmem:[#allocation3 + $0xb8] sm:$0xff] %v2541
    %2562 = vst [vmem:[#allocation3 + $0xc0] sm:$0xff] %v2542
    %2563 = vst [vmem:[#allocation3 + $0xc8] sm:$0xff] %v2543
    %2564 = vst [vmem:[#allocation3 + $0xd0] sm:$0xff] %v2544
    %2565 = vst [vmem:[#allocation3 + $0xd8] sm:$0xff] %v2545
    %2566 = vst [vmem:[#allocation3 + $0xe0] sm:$0xff] %v2546
    %2567 = vst [vmem:[#allocation3 + $0xe8] sm:$0xff] %v2547
    %v2568 = vld [vmem:[#allocation2] sm:$0xff]
    %v2569 = vld [vmem:[#allocation2 + $0x8] sm:$0xff]
    %v2570 = vld [vmem:[#allocation2 + $0x10] sm:$0xff]
    %v2571 = vld [vmem:[#allocation2 + $0x18] sm:$0xff]
    %v2572 = vld [vmem:[#allocation2 + $0x20] sm:$0xff]
    %v2573 = vld [vmem:[#allocation2 + $0x28] sm:$0xff]
    %v2574 = vld [vmem:[#allocation2 + $0x30] sm:$0xff]
    %v2575 = vld [vmem:[#allocation2 + $0x38] sm:$0xff]
    %v2576 = vld [vmem:[#allocation2 + $0x40] sm:$0xff]
    %v2577 = vld [vmem:[#allocation2 + $0x48] sm:$0xff]
    %v2578 = vld [vmem:[#allocation2 + $0x50] sm:$0xff]
    %2590 = vrot.lane.b32.xlu0 %v2568, 1
    %v2591 = vpop.permute.xlu0 %2590
    %2592 = vrot.lane.b32.xlu0 %v2569, 1
    %v2593 = vpop.permute.xlu0 %2592
    %2594 = vrot.lane.b32.xlu0 %v2570, 1
    %v2595 = vpop.permute.xlu0 %2594
    %2596 = vrot.lane.b32.xlu0 %v2571, 1
    %v2597 = vpop.permute.xlu0 %2596
    %2598 = vrot.lane.b32.xlu0 %v2572, 1
    %v2599 = vpop.permute.xlu0 %2598
    %2600 = vrot.lane.b32.xlu0 %v2573, 1
    %v2601 = vpop.permute.xlu0 %2600
    %2602 = vrot.lane.b32.xlu0 %v2574, 1
    %v2603 = vpop.permute.xlu0 %2602
    %2604 = vrot.lane.b32.xlu0 %v2575, 1
    %v2605 = vpop.permute.xlu0 %2604
    %2606 = vrot.lane.b32.xlu0 %v2576, 1
    %v2607 = vpop.permute.xlu0 %2606
    %2608 = vrot.lane.b32.xlu0 %v2577, 1
    %v2609 = vpop.permute.xlu0 %2608
    %2610 = vrot.lane.b32.xlu0 %v2578, 1
    %v2611 = vpop.permute.xlu0 %2610
    %v2612 = vsel %vm364, %v2591, %v2593
    %v2613 = vsel %vm364, %v2593, %v2595
    %v2614 = vsel %vm364, %v2595, %v2597
    %v2615 = vsel %vm364, %v2597, %v2599
    %v2616 = vsel %vm364, %v2599, %v2601
    %v2617 = vsel %vm364, %v2601, %v2603
    %v2618 = vsel %vm364, %v2603, %v2605
    %v2619 = vsel %vm364, %v2605, %v2607
    %v2620 = vsel %vm364, %v2607, %v2609
    %v2621 = vsel %vm364, %v2609, %v2611
    %2632 = vst [vmem:[#allocation3 + $0xf0] sm:$0xff] %v2612
    %2633 = vst [vmem:[#allocation3 + $0xf8] sm:$0xff] %v2613
    %2634 = vst [vmem:[#allocation3 + $0x100] sm:$0xff] %v2614
    %2635 = vst [vmem:[#allocation3 + $0x108] sm:$0xff] %v2615
    %2636 = vst [vmem:[#allocation3 + $0x110] sm:$0xff] %v2616
    %2637 = vst [vmem:[#allocation3 + $0x118] sm:$0xff] %v2617
    %2638 = vst [vmem:[#allocation3 + $0x120] sm:$0xff] %v2618
    %2639 = vst [vmem:[#allocation3 + $0x128] sm:$0xff] %v2619
    %2640 = vst [vmem:[#allocation3 + $0x130] sm:$0xff] %v2620
    %2641 = vst [vmem:[#allocation3 + $0x138] sm:$0xff] %v2621
    %v2642 = vld [vmem:[#allocation2 + $0x8] sm:$0xff]
    %v2643 = vld [vmem:[#allocation2 + $0x10] sm:$0xff]
    %v2644 = vld [vmem:[#allocation2 + $0x18] sm:$0xff]
    %v2645 = vld [vmem:[#allocation2 + $0x20] sm:$0xff]
    %v2646 = vld [vmem:[#allocation2 + $0x28] sm:$0xff]
    %v2647 = vld [vmem:[#allocation2 + $0x30] sm:$0xff]
    %v2648 = vld [vmem:[#allocation2 + $0x38] sm:$0xff]
    %v2649 = vld [vmem:[#allocation2 + $0x40] sm:$0xff]
    %v2650 = vld [vmem:[#allocation2 + $0x48] sm:$0xff]
    %v2651 = vld [vmem:[#allocation2 + $0x50] sm:$0xff]
    %2652 = vst [vmem:[#allocation3 + $0x140] sm:$0xff] %v2642
    %2653 = vst [vmem:[#allocation3 + $0x148] sm:$0xff] %v2643
    %2654 = vst [vmem:[#allocation3 + $0x150] sm:$0xff] %v2644
    %2655 = vst [vmem:[#allocation3 + $0x158] sm:$0xff] %v2645
    %2656 = vst [vmem:[#allocation3 + $0x160] sm:$0xff] %v2646
    %2657 = vst [vmem:[#allocation3 + $0x168] sm:$0xff] %v2647
    %2658 = vst [vmem:[#allocation3 + $0x170] sm:$0xff] %v2648
    %2659 = vst [vmem:[#allocation3 + $0x178] sm:$0xff] %v2649
    %2660 = vst [vmem:[#allocation3 + $0x180] sm:$0xff] %v2650
    %2661 = vst [vmem:[#allocation3 + $0x188] sm:$0xff] %v2651
    %v2662 = vld [vmem:[#allocation2 + $0x8] sm:$0xff]
    %v2663 = vld [vmem:[#allocation2 + $0x10] sm:$0xff]
    %v2664 = vld [vmem:[#allocation2 + $0x18] sm:$0xff]
    %v2665 = vld [vmem:[#allocation2 + $0x20] sm:$0xff]
    %v2666 = vld [vmem:[#allocation2 + $0x28] sm:$0xff]
    %v2667 = vld [vmem:[#allocation2 + $0x30] sm:$0xff]
    %v2668 = vld [vmem:[#allocation2 + $0x38] sm:$0xff]
    %v2669 = vld [vmem:[#allocation2 + $0x40] sm:$0xff]
    %v2670 = vld [vmem:[#allocation2 + $0x48] sm:$0xff]
    %v2671 = vld [vmem:[#allocation2 + $0x50] sm:$0xff]
    %v2672 = vld [vmem:[#allocation2 + $0x58] sm:$0xff]
    %2684 = vrot.lane.b32.xlu0 %v2662, 127
    %v2685 = vpop.permute.xlu0 %2684
    %2686 = vrot.lane.b32.xlu0 %v2663, 127
    %v2687 = vpop.permute.xlu0 %2686
    %2688 = vrot.lane.b32.xlu0 %v2664, 127
    %v2689 = vpop.permute.xlu0 %2688
    %2690 = vrot.lane.b32.xlu0 %v2665, 127
    %v2691 = vpop.permute.xlu0 %2690
    %2692 = vrot.lane.b32.xlu0 %v2666, 127
    %v2693 = vpop.permute.xlu0 %2692
    %2694 = vrot.lane.b32.xlu0 %v2667, 127
    %v2695 = vpop.permute.xlu0 %2694
    %2696 = vrot.lane.b32.xlu0 %v2668, 127
    %v2697 = vpop.permute.xlu0 %2696
    %2698 = vrot.lane.b32.xlu0 %v2669, 127
    %v2699 = vpop.permute.xlu0 %2698
    %2700 = vrot.lane.b32.xlu0 %v2670, 127
    %v2701 = vpop.permute.xlu0 %2700
    %2702 = vrot.lane.b32.xlu0 %v2671, 127
    %v2703 = vpop.permute.xlu0 %2702
    %2704 = vrot.lane.b32.xlu0 %v2672, 127
    %v2705 = vpop.permute.xlu0 %2704
    %v2706 = vsel %vm459, %v2685, %v2687
    %v2707 = vsel %vm459, %v2687, %v2689
    %v2708 = vsel %vm459, %v2689, %v2691
    %v2709 = vsel %vm459, %v2691, %v2693
    %v2710 = vsel %vm459, %v2693, %v2695
    %v2711 = vsel %vm459, %v2695, %v2697
    %v2712 = vsel %vm459, %v2697, %v2699
    %v2713 = vsel %vm459, %v2699, %v2701
    %v2714 = vsel %vm459, %v2701, %v2703
    %v2715 = vsel %vm459, %v2703, %v2705
    %2726 = vst [vmem:[#allocation3 + $0x190] sm:$0xff] %v2706
    %2727 = vst [vmem:[#allocation3 + $0x198] sm:$0xff] %v2707
    %2728 = vst [vmem:[#allocation3 + $0x1a0] sm:$0xff] %v2708
    %2729 = vst [vmem:[#allocation3 + $0x1a8] sm:$0xff] %v2709
    %2730 = vst [vmem:[#allocation3 + $0x1b0] sm:$0xff] %v2710
    %2731 = vst [vmem:[#allocation3 + $0x1b8] sm:$0xff] %v2711
    %2732 = vst [vmem:[#allocation3 + $0x1c0] sm:$0xff] %v2712
    %2733 = vst [vmem:[#allocation3 + $0x1c8] sm:$0xff] %v2713
    %2734 = vst [vmem:[#allocation3 + $0x1d0] sm:$0xff] %v2714
    %2735 = vst [vmem:[#allocation3 + $0x1d8] sm:$0xff] %v2715
    %v2736 = vld [vmem:[#allocation2 + $0x8] sm:$0xff]
    %v2737 = vld [vmem:[#allocation2 + $0x10] sm:$0xff]
    %v2738 = vld [vmem:[#allocation2 + $0x18] sm:$0xff]
    %v2739 = vld [vmem:[#allocation2 + $0x20] sm:$0xff]
    %v2740 = vld [vmem:[#allocation2 + $0x28] sm:$0xff]
    %v2741 = vld [vmem:[#allocation2 + $0x30] sm:$0xff]
    %v2742 = vld [vmem:[#allocation2 + $0x38] sm:$0xff]
    %v2743 = vld [vmem:[#allocation2 + $0x40] sm:$0xff]
    %v2744 = vld [vmem:[#allocation2 + $0x48] sm:$0xff]
    %v2745 = vld [vmem:[#allocation2 + $0x50] sm:$0xff]
    %v2746 = vld [vmem:[#allocation2 + $0x58] sm:$0xff]
    %2758 = vrot.lane.b32.xlu0 %v2736, 105
    %v2759 = vpop.permute.xlu0 %2758
    %2760 = vrot.lane.b32.xlu0 %v2737, 105
    %v2761 = vpop.permute.xlu0 %2760
    %2762 = vrot.lane.b32.xlu0 %v2738, 105
    %v2763 = vpop.permute.xlu0 %2762
    %2764 = vrot.lane.b32.xlu0 %v2739, 105
    %v2765 = vpop.permute.xlu0 %2764
    %2766 = vrot.lane.b32.xlu0 %v2740, 105
    %v2767 = vpop.permute.xlu0 %2766
    %2768 = vrot.lane.b32.xlu0 %v2741, 105
    %v2769 = vpop.permute.xlu0 %2768
    %2770 = vrot.lane.b32.xlu0 %v2742, 105
    %v2771 = vpop.permute.xlu0 %2770
    %2772 = vrot.lane.b32.xlu0 %v2743, 105
    %v2773 = vpop.permute.xlu0 %2772
    %2774 = vrot.lane.b32.xlu0 %v2744, 105
    %v2775 = vpop.permute.xlu0 %2774
    %2776 = vrot.lane.b32.xlu0 %v2745, 105
    %v2777 = vpop.permute.xlu0 %2776
    %2778 = vrot.lane.b32.xlu0 %v2746, 105
    %v2779 = vpop.permute.xlu0 %2778
    %v2780 = vsel %vm534, %v2759, %v2761
    %v2781 = vsel %vm534, %v2761, %v2763
    %v2782 = vsel %vm534, %v2763, %v2765
    %v2783 = vsel %vm534, %v2765, %v2767
    %v2784 = vsel %vm534, %v2767, %v2769
    %v2785 = vsel %vm534, %v2769, %v2771
    %v2786 = vsel %vm534, %v2771, %v2773
    %v2787 = vsel %vm534, %v2773, %v2775
    %v2788 = vsel %vm534, %v2775, %v2777
    %v2789 = vsel %vm534, %v2777, %v2779
    %2800 = vst [vmem:[#allocation3 + $0x1e0] sm:$0xff] %v2780
    %2801 = vst [vmem:[#allocation3 + $0x1e8] sm:$0xff] %v2781
    %2802 = vst [vmem:[#allocation3 + $0x1f0] sm:$0xff] %v2782
    %2803 = vst [vmem:[#allocation3 + $0x1f8] sm:$0xff] %v2783
    %2804 = vst [vmem:[#allocation3 + $0x200] sm:$0xff] %v2784
    %2805 = vst [vmem:[#allocation3 + $0x208] sm:$0xff] %v2785
    %2806 = vst [vmem:[#allocation3 + $0x210] sm:$0xff] %v2786
    %2807 = vst [vmem:[#allocation3 + $0x218] sm:$0xff] %v2787
    %2808 = vst [vmem:[#allocation3 + $0x220] sm:$0xff] %v2788
    %2809 = vst [vmem:[#allocation3 + $0x228] sm:$0xff] %v2789
    %v2810 = vld [vmem:[#allocation2 + $0x8] sm:$0xff]
    %v2811 = vld [vmem:[#allocation2 + $0x10] sm:$0xff]
    %v2812 = vld [vmem:[#allocation2 + $0x18] sm:$0xff]
    %v2813 = vld [vmem:[#allocation2 + $0x20] sm:$0xff]
    %v2814 = vld [vmem:[#allocation2 + $0x28] sm:$0xff]
    %v2815 = vld [vmem:[#allocation2 + $0x30] sm:$0xff]
    %v2816 = vld [vmem:[#allocation2 + $0x38] sm:$0xff]
    %v2817 = vld [vmem:[#allocation2 + $0x40] sm:$0xff]
    %v2818 = vld [vmem:[#allocation2 + $0x48] sm:$0xff]
    %v2819 = vld [vmem:[#allocation2 + $0x50] sm:$0xff]
    %v2820 = vld [vmem:[#allocation2 + $0x58] sm:$0xff]
    %2832 = vrot.lane.b32.xlu0 %v2810, 104
    %v2833 = vpop.permute.xlu0 %2832
    %2834 = vrot.lane.b32.xlu0 %v2811, 104
    %v2835 = vpop.permute.xlu0 %2834
    %2836 = vrot.lane.b32.xlu0 %v2812, 104
    %v2837 = vpop.permute.xlu0 %2836
    %2838 = vrot.lane.b32.xlu0 %v2813, 104
    %v2839 = vpop.permute.xlu0 %2838
    %2840 = vrot.lane.b32.xlu0 %v2814, 104
    %v2841 = vpop.permute.xlu0 %2840
    %2842 = vrot.lane.b32.xlu0 %v2815, 104
    %v2843 = vpop.permute.xlu0 %2842
    %2844 = vrot.lane.b32.xlu0 %v2816, 104
    %v2845 = vpop.permute.xlu0 %2844
    %2846 = vrot.lane.b32.xlu0 %v2817, 104
    %v2847 = vpop.permute.xlu0 %2846
    %2848 = vrot.lane.b32.xlu0 %v2818, 104
    %v2849 = vpop.permute.xlu0 %2848
    %2850 = vrot.lane.b32.xlu0 %v2819, 104
    %v2851 = vpop.permute.xlu0 %2850
    %2852 = vrot.lane.b32.xlu0 %v2820, 104
    %v2853 = vpop.permute.xlu0 %2852
    %v2854 = vsel %vm609, %v2833, %v2835
    %v2855 = vsel %vm609, %v2835, %v2837
    %v2856 = vsel %vm609, %v2837, %v2839
    %v2857 = vsel %vm609, %v2839, %v2841
    %v2858 = vsel %vm609, %v2841, %v2843
    %v2859 = vsel %vm609, %v2843, %v2845
    %v2860 = vsel %vm609, %v2845, %v2847
    %v2861 = vsel %vm609, %v2847, %v2849
    %v2862 = vsel %vm609, %v2849, %v2851
    %v2863 = vsel %vm609, %v2851, %v2853
    %2874 = vst [vmem:[#allocation3 + $0x230] sm:$0xff] %v2854
    %2875 = vst [vmem:[#allocation3 + $0x238] sm:$0xff] %v2855
    %2876 = vst [vmem:[#allocation3 + $0x240] sm:$0xff] %v2856
    %2877 = vst [vmem:[#allocation3 + $0x248] sm:$0xff] %v2857
    %2878 = vst [vmem:[#allocation3 + $0x250] sm:$0xff] %v2858
    %2879 = vst [vmem:[#allocation3 + $0x258] sm:$0xff] %v2859
    %2880 = vst [vmem:[#allocation3 + $0x260] sm:$0xff] %v2860
    %2881 = vst [vmem:[#allocation3 + $0x268] sm:$0xff] %v2861
    %2882 = vst [vmem:[#allocation3 + $0x270] sm:$0xff] %v2862
    %2883 = vst [vmem:[#allocation3 + $0x278] sm:$0xff] %v2863
    %v2884 = vld [vmem:[#allocation2 + $0x8] sm:$0xff]
    %v2885 = vld [vmem:[#allocation2 + $0x10] sm:$0xff]
    %v2886 = vld [vmem:[#allocation2 + $0x18] sm:$0xff]
    %v2887 = vld [vmem:[#allocation2 + $0x20] sm:$0xff]
    %v2888 = vld [vmem:[#allocation2 + $0x28] sm:$0xff]
    %v2889 = vld [vmem:[#allocation2 + $0x30] sm:$0xff]
    %v2890 = vld [vmem:[#allocation2 + $0x38] sm:$0xff]
    %v2891 = vld [vmem:[#allocation2 + $0x40] sm:$0xff]
    %v2892 = vld [vmem:[#allocation2 + $0x48] sm:$0xff]
    %v2893 = vld [vmem:[#allocation2 + $0x50] sm:$0xff]
    %v2894 = vld [vmem:[#allocation2 + $0x58] sm:$0xff]
    %2906 = vrot.lane.b32.xlu0 %v2884, 103
    %v2907 = vpop.permute.xlu0 %2906
    %2908 = vrot.lane.b32.xlu0 %v2885, 103
    %v2909 = vpop.permute.xlu0 %2908
    %2910 = vrot.lane.b32.xlu0 %v2886, 103
    %v2911 = vpop.permute.xlu0 %2910
    %2912 = vrot.lane.b32.xlu0 %v2887, 103
    %v2913 = vpop.permute.xlu0 %2912
    %2914 = vrot.lane.b32.xlu0 %v2888, 103
    %v2915 = vpop.permute.xlu0 %2914
    %2916 = vrot.lane.b32.xlu0 %v2889, 103
    %v2917 = vpop.permute.xlu0 %2916
    %2918 = vrot.lane.b32.xlu0 %v2890, 103
    %v2919 = vpop.permute.xlu0 %2918
    %2920 = vrot.lane.b32.xlu0 %v2891, 103
    %v2921 = vpop.permute.xlu0 %2920
    %2922 = vrot.lane.b32.xlu0 %v2892, 103
    %v2923 = vpop.permute.xlu0 %2922
    %2924 = vrot.lane.b32.xlu0 %v2893, 103
    %v2925 = vpop.permute.xlu0 %2924
    %2926 = vrot.lane.b32.xlu0 %v2894, 103
    %v2927 = vpop.permute.xlu0 %2926
    %v2928 = vsel %vm684, %v2907, %v2909
    %v2929 = vsel %vm684, %v2909, %v2911
    %v2930 = vsel %vm684, %v2911, %v2913
    %v2931 = vsel %vm684, %v2913, %v2915
    %v2932 = vsel %vm684, %v2915, %v2917
    %v2933 = vsel %vm684, %v2917, %v2919
    %v2934 = vsel %vm684, %v2919, %v2921
    %v2935 = vsel %vm684, %v2921, %v2923
    %v2936 = vsel %vm684, %v2923, %v2925
    %v2937 = vsel %vm684, %v2925, %v2927
    %2948 = vst [vmem:[#allocation3 + $0x280] sm:$0xff] %v2928
    %2949 = vst [vmem:[#allocation3 + $0x288] sm:$0xff] %v2929
    %2950 = vst [vmem:[#allocation3 + $0x290] sm:$0xff] %v2930
    %2951 = vst [vmem:[#allocation3 + $0x298] sm:$0xff] %v2931
    %2952 = vst [vmem:[#allocation3 + $0x2a0] sm:$0xff] %v2932
    %2953 = vst [vmem:[#allocation3 + $0x2a8] sm:$0xff] %v2933
    %2954 = vst [vmem:[#allocation3 + $0x2b0] sm:$0xff] %v2934
    %2955 = vst [vmem:[#allocation3 + $0x2b8] sm:$0xff] %v2935
    %2956 = vst [vmem:[#allocation3 + $0x2c0] sm:$0xff] %v2936
    %2957 = vst [vmem:[#allocation3 + $0x2c8] sm:$0xff] %v2937
    %v2958 = vld [vmem:[#allocation3] sm:$0xff]
    %v2959 = vld [vmem:[#allocation3 + $0x8] sm:$0xff]
    %v2960 = vld [vmem:[#allocation3 + $0x10] sm:$0xff]
    %v2961 = vld [vmem:[#allocation3 + $0x18] sm:$0xff]
    %v2962 = vld [vmem:[#allocation3 + $0x20] sm:$0xff]
    %v2963 = vld [vmem:[#allocation3 + $0x28] sm:$0xff]
    %v2964 = vld [vmem:[#allocation3 + $0x30] sm:$0xff]
    %v2965 = vld [vmem:[#allocation3 + $0x38] sm:$0xff]
    %v2966 = vld [vmem:[#allocation3 + $0x40] sm:$0xff]
    %v2967 = vld [vmem:[#allocation3 + $0x48] sm:$0xff]
    %v2968 = vld [vmem:[#allocation3 + $0x50] sm:$0xff]
    %v2969 = vld [vmem:[#allocation3 + $0x58] sm:$0xff]
    %v2970 = vld [vmem:[#allocation3 + $0x60] sm:$0xff]
    %v2971 = vld [vmem:[#allocation3 + $0x68] sm:$0xff]
    %v2972 = vld [vmem:[#allocation3 + $0x70] sm:$0xff]
    %v2973 = vld [vmem:[#allocation3 + $0x78] sm:$0xff]
    %v2974 = vld [vmem:[#allocation3 + $0x80] sm:$0xff]
    %v2975 = vld [vmem:[#allocation3 + $0x88] sm:$0xff]
    %v2976 = vld [vmem:[#allocation3 + $0x90] sm:$0xff]
    %v2977 = vld [vmem:[#allocation3 + $0x98] sm:$0xff]
    %v2978 = vld [vmem:[#allocation3 + $0xa0] sm:$0xff]
    %v2979 = vld [vmem:[#allocation3 + $0xa8] sm:$0xff]
    %v2980 = vld [vmem:[#allocation3 + $0xb0] sm:$0xff]
    %v2981 = vld [vmem:[#allocation3 + $0xb8] sm:$0xff]
    %v2982 = vld [vmem:[#allocation3 + $0xc0] sm:$0xff]
    %v2983 = vld [vmem:[#allocation3 + $0xc8] sm:$0xff]
    %v2984 = vld [vmem:[#allocation3 + $0xd0] sm:$0xff]
    %v2985 = vld [vmem:[#allocation3 + $0xd8] sm:$0xff]
    %v2986 = vld [vmem:[#allocation3 + $0xe0] sm:$0xff]
    %v2987 = vld [vmem:[#allocation3 + $0xe8] sm:$0xff]
    %v2988 = vld [vmem:[#allocation3 + $0xf0] sm:$0xff]
    %v2989 = vld [vmem:[#allocation3 + $0xf8] sm:$0xff]
    %v2990 = vld [vmem:[#allocation3 + $0x100] sm:$0xff]
    %v2991 = vld [vmem:[#allocation3 + $0x108] sm:$0xff]
    %v2992 = vld [vmem:[#allocation3 + $0x110] sm:$0xff]
    %v2993 = vld [vmem:[#allocation3 + $0x118] sm:$0xff]
    %v2994 = vld [vmem:[#allocation3 + $0x120] sm:$0xff]
    %v2995 = vld [vmem:[#allocation3 + $0x128] sm:$0xff]
    %v2996 = vld [vmem:[#allocation3 + $0x130] sm:$0xff]
    %v2997 = vld [vmem:[#allocation3 + $0x138] sm:$0xff]
    %v2998 = vld [vmem:[#allocation3 + $0x140] sm:$0xff]
    %v2999 = vld [vmem:[#allocation3 + $0x148] sm:$0xff]
    %v3000 = vld [vmem:[#allocation3 + $0x150] sm:$0xff]
    %v3001 = vld [vmem:[#allocation3 + $0x158] sm:$0xff]
    %v3002 = vld [vmem:[#allocation3 + $0x160] sm:$0xff]
    %v3003 = vld [vmem:[#allocation3 + $0x168] sm:$0xff]
    %v3004 = vld [vmem:[#allocation3 + $0x170] sm:$0xff]
    %v3005 = vld [vmem:[#allocation3 + $0x178] sm:$0xff]
    %v3006 = vld [vmem:[#allocation3 + $0x180] sm:$0xff]
    %v3007 = vld [vmem:[#allocation3 + $0x188] sm:$0xff]
    %v3008 = vld [vmem:[#allocation3 + $0x190] sm:$0xff]
    %v3009 = vld [vmem:[#allocation3 + $0x198] sm:$0xff]
    %v3010 = vld [vmem:[#allocation3 + $0x1a0] sm:$0xff]
    %v3011 = vld [vmem:[#allocation3 + $0x1a8] sm:$0xff]
    %v3012 = vld [vmem:[#allocation3 + $0x1b0] sm:$0xff]
    %v3013 = vld [vmem:[#allocation3 + $0x1b8] sm:$0xff]
    %v3014 = vld [vmem:[#allocation3 + $0x1c0] sm:$0xff]
    %v3015 = vld [vmem:[#allocation3 + $0x1c8] sm:$0xff]
    %v3016 = vld [vmem:[#allocation3 + $0x1d0] sm:$0xff]
    %v3017 = vld [vmem:[#allocation3 + $0x1d8] sm:$0xff]
    %v3018 = vld [vmem:[#allocation3 + $0x1e0] sm:$0xff]
    %v3019 = vld [vmem:[#allocation3 + $0x1e8] sm:$0xff]
    %v3020 = vld [vmem:[#allocation3 + $0x1f0] sm:$0xff]
    %v3021 = vld [vmem:[#allocation3 + $0x1f8] sm:$0xff]
    %v3022 = vld [vmem:[#allocation3 + $0x200] sm:$0xff]
    %v3023 = vld [vmem:[#allocation3 + $0x208] sm:$0xff]
    %v3024 = vld [vmem:[#allocation3 + $0x210] sm:$0xff]
    %v3025 = vld [vmem:[#allocation3 + $0x218] sm:$0xff]
    %v3026 = vld [vmem:[#allocation3 + $0x220] sm:$0xff]
    %v3027 = vld [vmem:[#allocation3 + $0x228] sm:$0xff]
    %v3028 = vld [vmem:[#allocation3 + $0x230] sm:$0xff]
    %v3029 = vld [vmem:[#allocation3 + $0x238] sm:$0xff]
    %v3030 = vld [vmem:[#allocation3 + $0x240] sm:$0xff]
    %v3031 = vld [vmem:[#allocation3 + $0x248] sm:$0xff]
    %v3032 = vld [vmem:[#allocation3 + $0x250] sm:$0xff]
    %v3033 = vld [vmem:[#allocation3 + $0x258] sm:$0xff]
    %v3034 = vld [vmem:[#allocation3 + $0x260] sm:$0xff]
    %v3035 = vld [vmem:[#allocation3 + $0x268] sm:$0xff]
    %v3036 = vld [vmem:[#allocation3 + $0x270] sm:$0xff]
    %v3037 = vld [vmem:[#allocation3 + $0x278] sm:$0xff]
    %v3038 = vld [vmem:[#allocation3 + $0x280] sm:$0xff]
    %v3039 = vld [vmem:[#allocation3 + $0x288] sm:$0xff]
    %v3040 = vld [vmem:[#allocation3 + $0x290] sm:$0xff]
    %v3041 = vld [vmem:[#allocation3 + $0x298] sm:$0xff]
    %v3042 = vld [vmem:[#allocation3 + $0x2a0] sm:$0xff]
    %v3043 = vld [vmem:[#allocation3 + $0x2a8] sm:$0xff]
    %v3044 = vld [vmem:[#allocation3 + $0x2b0] sm:$0xff]
    %v3045 = vld [vmem:[#allocation3 + $0x2b8] sm:$0xff]
    %v3046 = vld [vmem:[#allocation3 + $0x2c0] sm:$0xff]
    %v3047 = vld [vmem:[#allocation3 + $0x2c8] sm:$0xff]
    %3049 = vset.pattern.permute.xlu0 0
    %3050 = vperm.xlu0 %3049, %v69
    %v3051 = vpop.permute.xlu0 %3050
    %v3054 = vsel %vm810, %v63, 0
    %3056 = vmatprep.subr.mxu0 %v2959
    %3057 = vmatpush1.msra.mxu0 %v2958
    %3058 = vmatprep.subr.mxu0 %v2969
    %3059 = vmatpush1.msra.mxu0 %v2968
    %3060 = vmatprep.subr.mxu0 %v2979
    %3061 = vmatpush1.msra.mxu0 %v2978
    %3062 = vmatprep.subr.mxu0 %v2989
    %3063 = vmatpush1.msra.mxu0 %v2988
    %3064 = vmatprep.subr.mxu0 %v2999
    %3065 = vmatpush1.msra.mxu0 %v2998
    %3066 = vmatprep.subr.mxu0 %v3009
    %3067 = vmatpush1.msra.mxu0 %v3008
    %3068 = vmatprep.subr.mxu0 %v3019
    %3069 = vmatpush1.msra.mxu0 %v3018
    %3070 = vmatprep.subr.mxu0 %v3029
    %3071 = vmatpush1.msra.mxu0 %v3028
    %3072 = vmatprep.subr.mxu0 %v3039
    %3073 = vmatpush1.msra.mxu0 %v3038
    %3074 = vmatprep.subr.mxu0 0.0
    %3075 = vmatpush1.msra.mxu0 0.0
    %3076 = vmatprep.subr.mxu0 0.0
    %3077 = vmatpush1.msra.mxu0 0.0
    %3078 = vmatprep.subr.mxu0 0.0
    %3079 = vmatpush1.msra.mxu0 0.0
    %3080 = vmatprep.subr.mxu0 0.0
    %3081 = vmatpush1.msra.mxu0 0.0
    %3082 = vmatprep.subr.mxu0 0.0
    %3083 = vmatpush1.msra.mxu0 0.0
    %3084 = vmatprep.subr.mxu0 0.0
    %3085 = vmatpush1.msra.mxu0 0.0
    %3086 = vmatprep.subr.mxu0 0.0
    %3087 = vmatpush1.msra.mxu0 0.0
    %3088 = vmatprep.subr.mxu0 0.0
    %3089 = vmatpush1.msra.mxu0 0.0
    %3090 = vmatprep.subr.mxu0 0.0
    %3091 = vmatpush1.msra.mxu0 0.0
    %3092 = vmatprep.subr.mxu0 0.0
    %3093 = vmatpush1.msra.mxu0 0.0
    %3094 = vmatprep.subr.mxu0 0.0
    %3095 = vmatpush1.msra.mxu0 0.0
    %3096 = vmatprep.subr.mxu0 0.0
    %3097 = vmatpush1.msra.mxu0 0.0
    %3098 = vmatprep.subr.mxu0 0.0
    %3099 = vmatpush1.msra.mxu0 0.0
    %3100 = vmatprep.subr.mxu0 0.0
    %3101 = vmatpush1.msra.mxu0 0.0
    %3102 = vmatprep.subr.mxu0 0.0
    %3103 = vmatpush1.msra.mxu0 0.0
    %3104 = vmatprep.subr.mxu0 0.0
    %3105 = vmatpush1.msra.mxu0 0.0
    %3106 = vmatprep.subr.mxu0 0.0
    %3107 = vmatpush1.msra.mxu0 0.0
    %3108 = vmatprep.subr.mxu0 0.0
    %3109 = vmatpush1.msra.mxu0 0.0
    %3110 = vmatprep.subr.mxu0 0.0
    %3111 = vmatpush1.msra.mxu0 0.0
    %3112 = vmatprep.subr.mxu0 0.0
    %3113 = vmatpush1.msra.mxu0 0.0
    %3114 = vmatprep.subr.mxu0 0.0
    %3115 = vmatpush1.msra.mxu0 0.0
    %3116 = vmatprep.subr.mxu0 0.0
    %3117 = vmatpush1.msra.mxu0 0.0
    %3118 = vmatprep.subr.mxu0 0.0
    %3119 = vmatpush1.msra.mxu0 0.0
    %3120 = vmatprep.mubr.f32.mxu0 0.0
    %3121 = vmatmul.mubr.f32.gmra.mrb[0].mxu0 %v3054
    %v3122 = vpop.f32.mrb[0].mxu0
    %v3123 = vadd.f32 %v3051, %v3122
    %v3124 = vpop.f32.mrb[0].mxu0
    %v3125 = vadd.f32 %v3051, %v3124
    %3126 = vdwg.mxu0
    %3127 = vmatprep.subr.mxu0 %v2961
    %3128 = vmatpush1.msra.mxu0 %v2960
    %3129 = vmatprep.subr.mxu0 %v2971
    %3130 = vmatpush1.msra.mxu0 %v2970
    %3131 = vmatprep.subr.mxu0 %v2981
    %3132 = vmatpush1.msra.mxu0 %v2980
    %3133 = vmatprep.subr.mxu0 %v2991
    %3134 = vmatpush1.msra.mxu0 %v2990
    %3135 = vmatprep.subr.mxu0 %v3001
    %3136 = vmatpush1.msra.mxu0 %v3000
    %3137 = vmatprep.subr.mxu0 %v3011
    %3138 = vmatpush1.msra.mxu0 %v3010
    %3139 = vmatprep.subr.mxu0 %v3021
    %3140 = vmatpush1.msra.mxu0 %v3020
    %3141 = vmatprep.subr.mxu0 %v3031
    %3142 = vmatpush1.msra.mxu0 %v3030
    %3143 = vmatprep.subr.mxu0 %v3041
    %3144 = vmatpush1.msra.mxu0 %v3040
    %3145 = vmatprep.subr.mxu0 0.0
    %3146 = vmatpush1.msra.mxu0 0.0
    %3147 = vmatprep.subr.mxu0 0.0
    %3148 = vmatpush1.msra.mxu0 0.0
    %3149 = vmatprep.subr.mxu0 0.0
    %3150 = vmatpush1.msra.mxu0 0.0
    %3151 = vmatprep.subr.mxu0 0.0
    %3152 = vmatpush1.msra.mxu0 0.0
    %3153 = vmatprep.subr.mxu0 0.0
    %3154 = vmatpush1.msra.mxu0 0.0
    %3155 = vmatprep.subr.mxu0 0.0
    %3156 = vmatpush1.msra.mxu0 0.0
    %3157 = vmatprep.subr.mxu0 0.0
    %3158 = vmatpush1.msra.mxu0 0.0
    %3159 = vmatprep.subr.mxu0 0.0
    %3160 = vmatpush1.msra.mxu0 0.0
    %3161 = vmatprep.subr.mxu0 0.0
    %3162 = vmatpush1.msra.mxu0 0.0
    %3163 = vmatprep.subr.mxu0 0.0
    %3164 = vmatpush1.msra.mxu0 0.0
    %3165 = vmatprep.subr.mxu0 0.0
    %3166 = vmatpush1.msra.mxu0 0.0
    %3167 = vmatprep.subr.mxu0 0.0
    %3168 = vmatpush1.msra.mxu0 0.0
    %3169 = vmatprep.subr.mxu0 0.0
    %3170 = vmatpush1.msra.mxu0 0.0
    %3171 = vmatprep.subr.mxu0 0.0
    %3172 = vmatpush1.msra.mxu0 0.0
    %3173 = vmatprep.subr.mxu0 0.0
    %3174 = vmatpush1.msra.mxu0 0.0
    %3175 = vmatprep.subr.mxu0 0.0
    %3176 = vmatpush1.msra.mxu0 0.0
    %3177 = vmatprep.subr.mxu0 0.0
    %3178 = vmatpush1.msra.mxu0 0.0
    %3179 = vmatprep.subr.mxu0 0.0
    %3180 = vmatpush1.msra.mxu0 0.0
    %3181 = vmatprep.subr.mxu0 0.0
    %3182 = vmatpush1.msra.mxu0 0.0
    %3183 = vmatprep.subr.mxu0 0.0
    %3184 = vmatpush1.msra.mxu0 0.0
    %3185 = vmatprep.subr.mxu0 0.0
    %3186 = vmatpush1.msra.mxu0 0.0
    %3187 = vmatprep.subr.mxu0 0.0
    %3188 = vmatpush1.msra.mxu0 0.0
    %3189 = vmatprep.subr.mxu0 0.0
    %3190 = vmatpush1.msra.mxu0 0.0
    %3191 = vmatprep.mubr.f32.mxu0 0.0
    %3192 = vmatmul.mubr.f32.gmra.mrb[0].mxu0 %v3054
    %v3193 = vpop.f32.mrb[0].mxu0
    %v3194 = vadd.f32 %v3051, %v3193
    %v3195 = vpop.f32.mrb[0].mxu0
    %v3196 = vadd.f32 %v3051, %v3195
    %3197 = vdwg.mxu0
    %3198 = vmatprep.subr.mxu0 %v2963
    %3199 = vmatpush1.msra.mxu0 %v2962
    %3200 = vmatprep.subr.mxu0 %v2973
    %3201 = vmatpush1.msra.mxu0 %v2972
    %3202 = vmatprep.subr.mxu0 %v2983
    %3203 = vmatpush1.msra.mxu0 %v2982
    %3204 = vmatprep.subr.mxu0 %v2993
    %3205 = vmatpush1.msra.mxu0 %v2992
    %3206 = vmatprep.subr.mxu0 %v3003
    %3207 = vmatpush1.msra.mxu0 %v3002
    %3208 = vmatprep.subr.mxu0 %v3013
    %3209 = vmatpush1.msra.mxu0 %v3012
    %3210 = vmatprep.subr.mxu0 %v3023
    %3211 = vmatpush1.msra.mxu0 %v3022
    %3212 = vmatprep.subr.mxu0 %v3033
    %3213 = vmatpush1.msra.mxu0 %v3032
    %3214 = vmatprep.subr.mxu0 %v3043
    %3215 = vmatpush1.msra.mxu0 %v3042
    %3216 = vmatprep.subr.mxu0 0.0
    %3217 = vmatpush1.msra.mxu0 0.0
    %3218 = vmatprep.subr.mxu0 0.0
    %3219 = vmatpush1.msra.mxu0 0.0
    %3220 = vmatprep.subr.mxu0 0.0
    %3221 = vmatpush1.msra.mxu0 0.0
    %3222 = vmatprep.subr.mxu0 0.0
    %3223 = vmatpush1.msra.mxu0 0.0
    %3224 = vmatprep.subr.mxu0 0.0
    %3225 = vmatpush1.msra.mxu0 0.0
    %3226 = vmatprep.subr.mxu0 0.0
    %3227 = vmatpush1.msra.mxu0 0.0
    %3228 = vmatprep.subr.mxu0 0.0
    %3229 = vmatpush1.msra.mxu0 0.0
    %3230 = vmatprep.subr.mxu0 0.0
    %3231 = vmatpush1.msra.mxu0 0.0
    %3232 = vmatprep.subr.mxu0 0.0
    %3233 = vmatpush1.msra.mxu0 0.0
    %3234 = vmatprep.subr.mxu0 0.0
    %3235 = vmatpush1.msra.mxu0 0.0
    %3236 = vmatprep.subr.mxu0 0.0
    %3237 = vmatpush1.msra.mxu0 0.0
    %3238 = vmatprep.subr.mxu0 0.0
    %3239 = vmatpush1.msra.mxu0 0.0
    %3240 = vmatprep.subr.mxu0 0.0
    %3241 = vmatpush1.msra.mxu0 0.0
    %3242 = vmatprep.subr.mxu0 0.0
    %3243 = vmatpush1.msra.mxu0 0.0
    %3244 = vmatprep.subr.mxu0 0.0
    %3245 = vmatpush1.msra.mxu0 0.0
    %3246 = vmatprep.subr.mxu0 0.0
    %3247 = vmatpush1.msra.mxu0 0.0
    %3248 = vmatprep.subr.mxu0 0.0
    %3249 = vmatpush1.msra.mxu0 0.0
    %3250 = vmatprep.subr.mxu0 0.0
    %3251 = vmatpush1.msra.mxu0 0.0
    %3252 = vmatprep.subr.mxu0 0.0
    %3253 = vmatpush1.msra.mxu0 0.0
    %3254 = vmatprep.subr.mxu0 0.0
    %3255 = vmatpush1.msra.mxu0 0.0
    %3256 = vmatprep.subr.mxu0 0.0
    %3257 = vmatpush1.msra.mxu0 0.0
    %3258 = vmatprep.subr.mxu0 0.0
    %3259 = vmatpush1.msra.mxu0 0.0
    %3260 = vmatprep.subr.mxu0 0.0
    %3261 = vmatpush1.msra.mxu0 0.0
    %3262 = vmatprep.mubr.f32.mxu0 0.0
    %3263 = vmatmul.mubr.f32.gmra.mrb[0].mxu0 %v3054
    %v3264 = vpop.f32.mrb[0].mxu0
    %v3265 = vadd.f32 %v3051, %v3264
    %v3266 = vpop.f32.mrb[0].mxu0
    %v3267 = vadd.f32 %v3051, %v3266
    %3268 = vdwg.mxu0
    %3269 = vmatprep.subr.mxu0 %v2965
    %3270 = vmatpush1.msra.mxu0 %v2964
    %3271 = vmatprep.subr.mxu0 %v2975
    %3272 = vmatpush1.msra.mxu0 %v2974
    %3273 = vmatprep.subr.mxu0 %v2985
    %3274 = vmatpush1.msra.mxu0 %v2984
    %3275 = vmatprep.subr.mxu0 %v2995
    %3276 = vmatpush1.msra.mxu0 %v2994
    %3277 = vmatprep.subr.mxu0 %v3005
    %3278 = vmatpush1.msra.mxu0 %v3004
    %3279 = vmatprep.subr.mxu0 %v3015
    %3280 = vmatpush1.msra.mxu0 %v3014
    %3281 = vmatprep.subr.mxu0 %v3025
    %3282 = vmatpush1.msra.mxu0 %v3024
    %3283 = vmatprep.subr.mxu0 %v3035
    %3284 = vmatpush1.msra.mxu0 %v3034
    %3285 = vmatprep.subr.mxu0 %v3045
    %3286 = vmatpush1.msra.mxu0 %v3044
    %3287 = vmatprep.subr.mxu0 0.0
    %3288 = vmatpush1.msra.mxu0 0.0
    %3289 = vmatprep.subr.mxu0 0.0
    %3290 = vmatpush1.msra.mxu0 0.0
    %3291 = vmatprep.subr.mxu0 0.0
    %3292 = vmatpush1.msra.mxu0 0.0
    %3293 = vmatprep.subr.mxu0 0.0
    %3294 = vmatpush1.msra.mxu0 0.0
    %3295 = vmatprep.subr.mxu0 0.0
    %3296 = vmatpush1.msra.mxu0 0.0
    %3297 = vmatprep.subr.mxu0 0.0
    %3298 = vmatpush1.msra.mxu0 0.0
    %3299 = vmatprep.subr.mxu0 0.0
    %3300 = vmatpush1.msra.mxu0 0.0
    %3301 = vmatprep.subr.mxu0 0.0
    %3302 = vmatpush1.msra.mxu0 0.0
    %3303 = vmatprep.subr.mxu0 0.0
    %3304 = vmatpush1.msra.mxu0 0.0
    %3305 = vmatprep.subr.mxu0 0.0
    %3306 = vmatpush1.msra.mxu0 0.0
    %3307 = vmatprep.subr.mxu0 0.0
    %3308 = vmatpush1.msra.mxu0 0.0
    %3309 = vmatprep.subr.mxu0 0.0
    %3310 = vmatpush1.msra.mxu0 0.0
    %3311 = vmatprep.subr.mxu0 0.0
    %3312 = vmatpush1.msra.mxu0 0.0
    %3313 = vmatprep.subr.mxu0 0.0
    %3314 = vmatpush1.msra.mxu0 0.0
    %3315 = vmatprep.subr.mxu0 0.0
    %3316 = vmatpush1.msra.mxu0 0.0
    %3317 = vmatprep.subr.mxu0 0.0
    %3318 = vmatpush1.msra.mxu0 0.0
    %3319 = vmatprep.subr.mxu0 0.0
    %3320 = vmatpush1.msra.mxu0 0.0
    %3321 = vmatprep.subr.mxu0 0.0
    %3322 = vmatpush1.msra.mxu0 0.0
    %3323 = vmatprep.subr.mxu0 0.0
    %3324 = vmatpush1.msra.mxu0 0.0
    %3325 = vmatprep.subr.mxu0 0.0
    %3326 = vmatpush1.msra.mxu0 0.0
    %3327 = vmatprep.subr.mxu0 0.0
    %3328 = vmatpush1.msra.mxu0 0.0
    %3329 = vmatprep.subr.mxu0 0.0
    %3330 = vmatpush1.msra.mxu0 0.0
    %3331 = vmatprep.subr.mxu0 0.0
    %3332 = vmatpush1.msra.mxu0 0.0
    %3333 = vmatprep.mubr.f32.mxu0 0.0
    %3334 = vmatmul.mubr.f32.gmra.mrb[0].mxu0 %v3054
    %v3335 = vpop.f32.mrb[0].mxu0
    %v3336 = vadd.f32 %v3051, %v3335
    %v3337 = vpop.f32.mrb[0].mxu0
    %v3338 = vadd.f32 %v3051, %v3337
    %3339 = vdwg.mxu0
    %3340 = vmatprep.subr.mxu0 %v2967
    %3341 = vmatpush1.msra.mxu0 %v2966
    %3342 = vmatprep.subr.mxu0 %v2977
    %3343 = vmatpush1.msra.mxu0 %v2976
    %3344 = vmatprep.subr.mxu0 %v2987
    %3345 = vmatpush1.msra.mxu0 %v2986
    %3346 = vmatprep.subr.mxu0 %v2997
    %3347 = vmatpush1.msra.mxu0 %v2996
    %3348 = vmatprep.subr.mxu0 %v3007
    %3349 = vmatpush1.msra.mxu0 %v3006
    %3350 = vmatprep.subr.mxu0 %v3017
    %3351 = vmatpush1.msra.mxu0 %v3016
    %3352 = vmatprep.subr.mxu0 %v3027
    %3353 = vmatpush1.msra.mxu0 %v3026
    %3354 = vmatprep.subr.mxu0 %v3037
    %3355 = vmatpush1.msra.mxu0 %v3036
    %3356 = vmatprep.subr.mxu0 %v3047
    %3357 = vmatpush1.msra.mxu0 %v3046
    %3358 = vmatprep.subr.mxu0 0.0
    %3359 = vmatpush1.msra.mxu0 0.0
    %3360 = vmatprep.subr.mxu0 0.0
    %3361 = vmatpush1.msra.mxu0 0.0
    %3362 = vmatprep.subr.mxu0 0.0
    %3363 = vmatpush1.msra.mxu0 0.0
    %3364 = vmatprep.subr.mxu0 0.0
    %3365 = vmatpush1.msra.mxu0 0.0
    %3366 = vmatprep.subr.mxu0 0.0
    %3367 = vmatpush1.msra.mxu0 0.0
    %3368 = vmatprep.subr.mxu0 0.0
    %3369 = vmatpush1.msra.mxu0 0.0
    %3370 = vmatprep.subr.mxu0 0.0
    %3371 = vmatpush1.msra.mxu0 0.0
    %3372 = vmatprep.subr.mxu0 0.0
    %3373 = vmatpush1.msra.mxu0 0.0
    %3374 = vmatprep.subr.mxu0 0.0
    %3375 = vmatpush1.msra.mxu0 0.0
    %3376 = vmatprep.subr.mxu0 0.0
    %3377 = vmatpush1.msra.mxu0 0.0
    %3378 = vmatprep.subr.mxu0 0.0
    %3379 = vmatpush1.msra.mxu0 0.0
    %3380 = vmatprep.subr.mxu0 0.0
    %3381 = vmatpush1.msra.mxu0 0.0
    %3382 = vmatprep.subr.mxu0 0.0
    %3383 = vmatpush1.msra.mxu0 0.0
    %3384 = vmatprep.subr.mxu0 0.0
    %3385 = vmatpush1.msra.mxu0 0.0
    %3386 = vmatprep.subr.mxu0 0.0
    %3387 = vmatpush1.msra.mxu0 0.0
    %3388 = vmatprep.subr.mxu0 0.0
    %3389 = vmatpush1.msra.mxu0 0.0
    %3390 = vmatprep.subr.mxu0 0.0
    %3391 = vmatpush1.msra.mxu0 0.0
    %3392 = vmatprep.subr.mxu0 0.0
    %3393 = vmatpush1.msra.mxu0 0.0
    %3394 = vmatprep.subr.mxu0 0.0
    %3395 = vmatpush1.msra.mxu0 0.0
    %3396 = vmatprep.subr.mxu0 0.0
    %3397 = vmatpush1.msra.mxu0 0.0
    %3398 = vmatprep.subr.mxu0 0.0
    %3399 = vmatpush1.msra.mxu0 0.0
    %3400 = vmatprep.subr.mxu0 0.0
    %3401 = vmatpush1.msra.mxu0 0.0
    %3402 = vmatprep.subr.mxu0 0.0
    %3403 = vmatpush1.msra.mxu0 0.0
    %3404 = vmatprep.mubr.f32.mxu0 0.0
    %3405 = vmatmul.mubr.f32.gmra.mrb[0].mxu0 %v3054
    %v3406 = vpop.f32.mrb[0].mxu0
    %v3407 = vadd.f32 %v3051, %v3406
    %v3408 = vpop.f32.mrb[0].mxu0
    %v3409 = vadd.f32 %v3051, %v3408
    %3410 = vdwg.mxu0
    %v3411 = vmax.f32 %v3123, 0.0
    %v3412 = vmax.f32 %v3125, 0.0
    %v3413 = vmax.f32 %v3194, 0.0
    %v3414 = vmax.f32 %v3196, 0.0
    %v3415 = vmax.f32 %v3265, 0.0
    %v3416 = vmax.f32 %v3267, 0.0
    %v3417 = vmax.f32 %v3336, 0.0
    %v3418 = vmax.f32 %v3338, 0.0
    %v3419 = vmax.f32 %v3407, 0.0
    %v3420 = vmax.f32 %v3409, 0.0
    %v3421 = vmul.f32 %v3411, %v1184
    %v3422 = vmul.f32 %v3412, %v1188
    %v3423 = vmul.f32 %v3413, %v1192
    %v3424 = vmul.f32 %v3414, %v1196
    %v3425 = vmul.f32 %v3415, %v1200
    %v3426 = vmul.f32 %v3416, %v1204
    %v3427 = vmul.f32 %v3417, %v1208
    %v3428 = vmul.f32 %v3418, %v1212
    %v3429 = vmul.f32 %v3419, %v1216
    %v3430 = vmul.f32 %v3420, %v1220
    %3431 = vst [vmem:[#allocation4] sm:$0xff] %v3421
    %3432 = vst [vmem:[#allocation4 + $0x8] sm:$0xff] %v3422
    %3433 = vst [vmem:[#allocation4 + $0x10] sm:$0xff] %v3423
    %3434 = vst [vmem:[#allocation4 + $0x18] sm:$0xff] %v3424
    %3435 = vst [vmem:[#allocation4 + $0x20] sm:$0xff] %v3425
    %3436 = vst [vmem:[#allocation4 + $0x28] sm:$0xff] %v3426
    %3437 = vst [vmem:[#allocation4 + $0x30] sm:$0xff] %v3427
    %3438 = vst [vmem:[#allocation4 + $0x38] sm:$0xff] %v3428
    %3439 = vst [vmem:[#allocation4 + $0x40] sm:$0xff] %v3429
    %3440 = vst [vmem:[#allocation4 + $0x48] sm:$0xff] %v3430
    %v3441 = vld [vmem:[#allocation4] sm:$0xff]
    %v3442 = vld [vmem:[#allocation4 + $0x8] sm:$0xff]
    %v3443 = vld [vmem:[#allocation4 + $0x10] sm:$0xff]
    %v3444 = vld [vmem:[#allocation4 + $0x18] sm:$0xff]
    %v3445 = vld [vmem:[#allocation4 + $0x20] sm:$0xff]
    %v3446 = vld [vmem:[#allocation4 + $0x28] sm:$0xff]
    %v3447 = vld [vmem:[#allocation4 + $0x30] sm:$0xff]
    %v3448 = vld [vmem:[#allocation4 + $0x38] sm:$0xff]
    %v3449 = vld [vmem:[#allocation4 + $0x40] sm:$0xff]
    %v3450 = vld [vmem:[#allocation4 + $0x48] sm:$0xff]
    %3451 = vst [vmem:[#allocation2 + $0x8] sm:$0xff] %v49
    %3452 = vst [vmem:[#allocation2 + $0x10] sm:$0xff] %v50
    %3453 = vst [vmem:[#allocation2 + $0x18] sm:$0xff] %v51
    %3454 = vst [vmem:[#allocation2 + $0x20] sm:$0xff] %v52
    %3455 = vst [vmem:[#allocation2 + $0x28] sm:$0xff] %v53
    %3456 = vst [vmem:[#allocation2 + $0x30] sm:$0xff] %v54
    %3457 = vst [vmem:[#allocation2 + $0x38] sm:$0xff] %v55
    %3458 = vst [vmem:[#allocation2 + $0x40] sm:$0xff] %v56
    %3459 = vst [vmem:[#allocation2 + $0x48] sm:$0xff] %v57
    %3460 = vst [vmem:[#allocation2 + $0x50] sm:$0xff] %v58
    %v3461 = vld [vmem:[#allocation2] sm:$0xff]
    %v3462 = vld [vmem:[#allocation2 + $0x8] sm:$0xff]
    %v3463 = vld [vmem:[#allocation2 + $0x10] sm:$0xff]
    %v3464 = vld [vmem:[#allocation2 + $0x18] sm:$0xff]
    %v3465 = vld [vmem:[#allocation2 + $0x20] sm:$0xff]
    %v3466 = vld [vmem:[#allocation2 + $0x28] sm:$0xff]
    %v3467 = vld [vmem:[#allocation2 + $0x30] sm:$0xff]
    %v3468 = vld [vmem:[#allocation2 + $0x38] sm:$0xff]
    %v3469 = vld [vmem:[#allocation2 + $0x40] sm:$0xff]
    %v3470 = vld [vmem:[#allocation2 + $0x48] sm:$0xff]
    %v3471 = vld [vmem:[#allocation2 + $0x50] sm:$0xff]
    %3483 = vrot.lane.b32.xlu0 %v3461, 50
    %v3484 = vpop.permute.xlu0 %3483
    %3485 = vrot.lane.b32.xlu0 %v3462, 50
    %v3486 = vpop.permute.xlu0 %3485
    %3487 = vrot.lane.b32.xlu0 %v3463, 50
    %v3488 = vpop.permute.xlu0 %3487
    %3489 = vrot.lane.b32.xlu0 %v3464, 50
    %v3490 = vpop.permute.xlu0 %3489
    %3491 = vrot.lane.b32.xlu0 %v3465, 50
    %v3492 = vpop.permute.xlu0 %3491
    %3493 = vrot.lane.b32.xlu0 %v3466, 50
    %v3494 = vpop.permute.xlu0 %3493
    %3495 = vrot.lane.b32.xlu0 %v3467, 50
    %v3496 = vpop.permute.xlu0 %3495
    %3497 = vrot.lane.b32.xlu0 %v3468, 50
    %v3498 = vpop.permute.xlu0 %3497
    %3499 = vrot.lane.b32.xlu0 %v3469, 50
    %v3500 = vpop.permute.xlu0 %3499
    %3501 = vrot.lane.b32.xlu0 %v3470, 50
    %v3502 = vpop.permute.xlu0 %3501
    %3503 = vrot.lane.b32.xlu0 %v3471, 50
    %v3504 = vpop.permute.xlu0 %3503
    %vm3505 = vcmask 408576
    %v3506 = vsel %vm3505, %v3484, %v3486
    %v3507 = vsel %vm3505, %v3486, %v3488
    %v3508 = vsel %vm3505, %v3488, %v3490
    %v3509 = vsel %vm3505, %v3490, %v3492
    %v3510 = vsel %vm3505, %v3492, %v3494
    %v3511 = vsel %vm3505, %v3494, %v3496
    %v3512 = vsel %vm3505, %v3496, %v3498
    %v3513 = vsel %vm3505, %v3498, %v3500
    %v3514 = vsel %vm3505, %v3500, %v3502
    %v3515 = vsel %vm3505, %v3502, %v3504
    %3526 = vst [vmem:[#allocation3] sm:$0xff] %v3506
    %3527 = vst [vmem:[#allocation3 + $0x8] sm:$0xff] %v3507
    %3528 = vst [vmem:[#allocation3 + $0x10] sm:$0xff] %v3508
    %3529 = vst [vmem:[#allocation3 + $0x18] sm:$0xff] %v3509
    %3530 = vst [vmem:[#allocation3 + $0x20] sm:$0xff] %v3510
    %3531 = vst [vmem:[#allocation3 + $0x28] sm:$0xff] %v3511
    %3532 = vst [vmem:[#allocation3 + $0x30] sm:$0xff] %v3512
    %3533 = vst [vmem:[#allocation3 + $0x38] sm:$0xff] %v3513
    %3534 = vst [vmem:[#allocation3 + $0x40] sm:$0xff] %v3514
    %3535 = vst [vmem:[#allocation3 + $0x48] sm:$0xff] %v3515
    %v3536 = vld [vmem:[#allocation2] sm:$0xff]
    %v3537 = vld [vmem:[#allocation2 + $0x8] sm:$0xff]
    %v3538 = vld [vmem:[#allocation2 + $0x10] sm:$0xff]
    %v3539 = vld [vmem:[#allocation2 + $0x18] sm:$0xff]
    %v3540 = vld [vmem:[#allocation2 + $0x20] sm:$0xff]
    %v3541 = vld [vmem:[#allocation2 + $0x28] sm:$0xff]
    %v3542 = vld [vmem:[#allocation2 + $0x30] sm:$0xff]
    %v3543 = vld [vmem:[#allocation2 + $0x38] sm:$0xff]
    %v3544 = vld [vmem:[#allocation2 + $0x40] sm:$0xff]
    %v3545 = vld [vmem:[#allocation2 + $0x48] sm:$0xff]
    %v3546 = vld [vmem:[#allocation2 + $0x50] sm:$0xff]
    %3558 = vrot.lane.b32.xlu0 %v3536, 48
    %v3559 = vpop.permute.xlu0 %3558
    %3560 = vrot.lane.b32.xlu0 %v3537, 48
    %v3561 = vpop.permute.xlu0 %3560
    %3562 = vrot.lane.b32.xlu0 %v3538, 48
    %v3563 = vpop.permute.xlu0 %3562
    %3564 = vrot.lane.b32.xlu0 %v3539, 48
    %v3565 = vpop.permute.xlu0 %3564
    %3566 = vrot.lane.b32.xlu0 %v3540, 48
    %v3567 = vpop.permute.xlu0 %3566
    %3568 = vrot.lane.b32.xlu0 %v3541, 48
    %v3569 = vpop.permute.xlu0 %3568
    %3570 = vrot.lane.b32.xlu0 %v3542, 48
    %v3571 = vpop.permute.xlu0 %3570
    %3572 = vrot.lane.b32.xlu0 %v3543, 48
    %v3573 = vpop.permute.xlu0 %3572
    %3574 = vrot.lane.b32.xlu0 %v3544, 48
    %v3575 = vpop.permute.xlu0 %3574
    %3576 = vrot.lane.b32.xlu0 %v3545, 48
    %v3577 = vpop.permute.xlu0 %3576
    %3578 = vrot.lane.b32.xlu0 %v3546, 48
    %v3579 = vpop.permute.xlu0 %3578
    %vm3580 = vcmask 392192
    %v3581 = vsel %vm3580, %v3559, %v3561
    %v3582 = vsel %vm3580, %v3561, %v3563
    %v3583 = vsel %vm3580, %v3563, %v3565
    %v3584 = vsel %vm3580, %v3565, %v3567
    %v3585 = vsel %vm3580, %v3567, %v3569
    %v3586 = vsel %vm3580, %v3569, %v3571
    %v3587 = vsel %vm3580, %v3571, %v3573
    %v3588 = vsel %vm3580, %v3573, %v3575
    %v3589 = vsel %vm3580, %v3575, %v3577
    %v3590 = vsel %vm3580, %v3577, %v3579
    %3601 = vst [vmem:[#allocation3 + $0x50] sm:$0xff] %v3581
    %3602 = vst [vmem:[#allocation3 + $0x58] sm:$0xff] %v3582
    %3603 = vst [vmem:[#allocation3 + $0x60] sm:$0xff] %v3583
    %3604 = vst [vmem:[#allocation3 + $0x68] sm:$0xff] %v3584
    %3605 = vst [vmem:[#allocation3 + $0x70] sm:$0xff] %v3585
    %3606 = vst [vmem:[#allocation3 + $0x78] sm:$0xff] %v3586
    %3607 = vst [vmem:[#allocation3 + $0x80] sm:$0xff] %v3587
    %3608 = vst [vmem:[#allocation3 + $0x88] sm:$0xff] %v3588
    %3609 = vst [vmem:[#allocation3 + $0x90] sm:$0xff] %v3589
    %3610 = vst [vmem:[#allocation3 + $0x98] sm:$0xff] %v3590
    %v3611 = vld [vmem:[#allocation2] sm:$0xff]
    %v3612 = vld [vmem:[#allocation2 + $0x8] sm:$0xff]
    %v3613 = vld [vmem:[#allocation2 + $0x10] sm:$0xff]
    %v3614 = vld [vmem:[#allocation2 + $0x18] sm:$0xff]
    %v3615 = vld [vmem:[#allocation2 + $0x20] sm:$0xff]
    %v3616 = vld [vmem:[#allocation2 + $0x28] sm:$0xff]
    %v3617 = vld [vmem:[#allocation2 + $0x30] sm:$0xff]
    %v3618 = vld [vmem:[#allocation2 + $0x38] sm:$0xff]
    %v3619 = vld [vmem:[#allocation2 + $0x40] sm:$0xff]
    %v3620 = vld [vmem:[#allocation2 + $0x48] sm:$0xff]
    %v3621 = vld [vmem:[#allocation2 + $0x50] sm:$0xff]
    %3633 = vrot.lane.b32.xlu0 %v3611, 46
    %v3634 = vpop.permute.xlu0 %3633
    %3635 = vrot.lane.b32.xlu0 %v3612, 46
    %v3636 = vpop.permute.xlu0 %3635
    %3637 = vrot.lane.b32.xlu0 %v3613, 46
    %v3638 = vpop.permute.xlu0 %3637
    %3639 = vrot.lane.b32.xlu0 %v3614, 46
    %v3640 = vpop.permute.xlu0 %3639
    %3641 = vrot.lane.b32.xlu0 %v3615, 46
    %v3642 = vpop.permute.xlu0 %3641
    %3643 = vrot.lane.b32.xlu0 %v3616, 46
    %v3644 = vpop.permute.xlu0 %3643
    %3645 = vrot.lane.b32.xlu0 %v3617, 46
    %v3646 = vpop.permute.xlu0 %3645
    %3647 = vrot.lane.b32.xlu0 %v3618, 46
    %v3648 = vpop.permute.xlu0 %3647
    %3649 = vrot.lane.b32.xlu0 %v3619, 46
    %v3650 = vpop.permute.xlu0 %3649
    %3651 = vrot.lane.b32.xlu0 %v3620, 46
    %v3652 = vpop.permute.xlu0 %3651
    %3653 = vrot.lane.b32.xlu0 %v3621, 46
    %v3654 = vpop.permute.xlu0 %3653
    %vm3655 = vcmask 375808
    %v3656 = vsel %vm3655, %v3634, %v3636
    %v3657 = vsel %vm3655, %v3636, %v3638
    %v3658 = vsel %vm3655, %v3638, %v3640
    %v3659 = vsel %vm3655, %v3640, %v3642
    %v3660 = vsel %vm3655, %v3642, %v3644
    %v3661 = vsel %vm3655, %v3644, %v3646
    %v3662 = vsel %vm3655, %v3646, %v3648
    %v3663 = vsel %vm3655, %v3648, %v3650
    %v3664 = vsel %vm3655, %v3650, %v3652
    %v3665 = vsel %vm3655, %v3652, %v3654
    %3676 = vst [vmem:[#allocation3 + $0xa0] sm:$0xff] %v3656
    %3677 = vst [vmem:[#allocation3 + $0xa8] sm:$0xff] %v3657
    %3678 = vst [vmem:[#allocation3 + $0xb0] sm:$0xff] %v3658
    %3679 = vst [vmem:[#allocation3 + $0xb8] sm:$0xff] %v3659
    %3680 = vst [vmem:[#allocation3 + $0xc0] sm:$0xff] %v3660
    %3681 = vst [vmem:[#allocation3 + $0xc8] sm:$0xff] %v3661
    %3682 = vst [vmem:[#allocation3 + $0xd0] sm:$0xff] %v3662
    %3683 = vst [vmem:[#allocation3 + $0xd8] sm:$0xff] %v3663
    %3684 = vst [vmem:[#allocation3 + $0xe0] sm:$0xff] %v3664
    %3685 = vst [vmem:[#allocation3 + $0xe8] sm:$0xff] %v3665
    %v3686 = vld [vmem:[#allocation2] sm:$0xff]
    %v3687 = vld [vmem:[#allocation2 + $0x8] sm:$0xff]
    %v3688 = vld [vmem:[#allocation2 + $0x10] sm:$0xff]
    %v3689 = vld [vmem:[#allocation2 + $0x18] sm:$0xff]
    %v3690 = vld [vmem:[#allocation2 + $0x20] sm:$0xff]
    %v3691 = vld [vmem:[#allocation2 + $0x28] sm:$0xff]
    %v3692 = vld [vmem:[#allocation2 + $0x30] sm:$0xff]
    %v3693 = vld [vmem:[#allocation2 + $0x38] sm:$0xff]
    %v3694 = vld [vmem:[#allocation2 + $0x40] sm:$0xff]
    %v3695 = vld [vmem:[#allocation2 + $0x48] sm:$0xff]
    %v3696 = vld [vmem:[#allocation2 + $0x50] sm:$0xff]
    %3708 = vrot.lane.b32.xlu0 %v3686, 2
    %v3709 = vpop.permute.xlu0 %3708
    %3710 = vrot.lane.b32.xlu0 %v3687, 2
    %v3711 = vpop.permute.xlu0 %3710
    %3712 = vrot.lane.b32.xlu0 %v3688, 2
    %v3713 = vpop.permute.xlu0 %3712
    %3714 = vrot.lane.b32.xlu0 %v3689, 2
    %v3715 = vpop.permute.xlu0 %3714
    %3716 = vrot.lane.b32.xlu0 %v3690, 2
    %v3717 = vpop.permute.xlu0 %3716
    %3718 = vrot.lane.b32.xlu0 %v3691, 2
    %v3719 = vpop.permute.xlu0 %3718
    %3720 = vrot.lane.b32.xlu0 %v3692, 2
    %v3721 = vpop.permute.xlu0 %3720
    %3722 = vrot.lane.b32.xlu0 %v3693, 2
    %v3723 = vpop.permute.xlu0 %3722
    %3724 = vrot.lane.b32.xlu0 %v3694, 2
    %v3725 = vpop.permute.xlu0 %3724
    %3726 = vrot.lane.b32.xlu0 %v3695, 2
    %v3727 = vpop.permute.xlu0 %3726
    %3728 = vrot.lane.b32.xlu0 %v3696, 2
    %v3729 = vpop.permute.xlu0 %3728
    %vm3730 = vcmask 15360
    %v3731 = vsel %vm3730, %v3709, %v3711
    %v3732 = vsel %vm3730, %v3711, %v3713
    %v3733 = vsel %vm3730, %v3713, %v3715
    %v3734 = vsel %vm3730, %v3715, %v3717
    %v3735 = vsel %vm3730, %v3717, %v3719
    %v3736 = vsel %vm3730, %v3719, %v3721
    %v3737 = vsel %vm3730, %v3721, %v3723
    %v3738 = vsel %vm3730, %v3723, %v3725
    %v3739 = vsel %vm3730, %v3725, %v3727
    %v3740 = vsel %vm3730, %v3727, %v3729
    %3751 = vst [vmem:[#allocation3 + $0xf0] sm:$0xff] %v3731
    %3752 = vst [vmem:[#allocation3 + $0xf8] sm:$0xff] %v3732
    %3753 = vst [vmem:[#allocation3 + $0x100] sm:$0xff] %v3733
    %3754 = vst [vmem:[#allocation3 + $0x108] sm:$0xff] %v3734
    %3755 = vst [vmem:[#allocation3 + $0x110] sm:$0xff] %v3735
    %3756 = vst [vmem:[#allocation3 + $0x118] sm:$0xff] %v3736
    %3757 = vst [vmem:[#allocation3 + $0x120] sm:$0xff] %v3737
    %3758 = vst [vmem:[#allocation3 + $0x128] sm:$0xff] %v3738
    %3759 = vst [vmem:[#allocation3 + $0x130] sm:$0xff] %v3739
    %3760 = vst [vmem:[#allocation3 + $0x138] sm:$0xff] %v3740
    %v3761 = vld [vmem:[#allocation2 + $0x8] sm:$0xff]
    %v3762 = vld [vmem:[#allocation2 + $0x10] sm:$0xff]
    %v3763 = vld [vmem:[#allocation2 + $0x18] sm:$0xff]
    %v3764 = vld [vmem:[#allocation2 + $0x20] sm:$0xff]
    %v3765 = vld [vmem:[#allocation2 + $0x28] sm:$0xff]
    %v3766 = vld [vmem:[#allocation2 + $0x30] sm:$0xff]
    %v3767 = vld [vmem:[#allocation2 + $0x38] sm:$0xff]
    %v3768 = vld [vmem:[#allocation2 + $0x40] sm:$0xff]
    %v3769 = vld [vmem:[#allocation2 + $0x48] sm:$0xff]
    %v3770 = vld [vmem:[#allocation2 + $0x50] sm:$0xff]
    %3771 = vst [vmem:[#allocation3 + $0x140] sm:$0xff] %v3761
    %3772 = vst [vmem:[#allocation3 + $0x148] sm:$0xff] %v3762
    %3773 = vst [vmem:[#allocation3 + $0x150] sm:$0xff] %v3763
    %3774 = vst [vmem:[#allocation3 + $0x158] sm:$0xff] %v3764
    %3775 = vst [vmem:[#allocation3 + $0x160] sm:$0xff] %v3765
    %3776 = vst [vmem:[#allocation3 + $0x168] sm:$0xff] %v3766
    %3777 = vst [vmem:[#allocation3 + $0x170] sm:$0xff] %v3767
    %3778 = vst [vmem:[#allocation3 + $0x178] sm:$0xff] %v3768
    %3779 = vst [vmem:[#allocation3 + $0x180] sm:$0xff] %v3769
    %3780 = vst [vmem:[#allocation3 + $0x188] sm:$0xff] %v3770
    %v3781 = vld [vmem:[#allocation2 + $0x8] sm:$0xff]
    %v3782 = vld [vmem:[#allocation2 + $0x10] sm:$0xff]
    %v3783 = vld [vmem:[#allocation2 + $0x18] sm:$0xff]
    %v3784 = vld [vmem:[#allocation2 + $0x20] sm:$0xff]
    %v3785 = vld [vmem:[#allocation2 + $0x28] sm:$0xff]
    %v3786 = vld [vmem:[#allocation2 + $0x30] sm:$0xff]
    %v3787 = vld [vmem:[#allocation2 + $0x38] sm:$0xff]
    %v3788 = vld [vmem:[#allocation2 + $0x40] sm:$0xff]
    %v3789 = vld [vmem:[#allocation2 + $0x48] sm:$0xff]
    %v3790 = vld [vmem:[#allocation2 + $0x50] sm:$0xff]
    %v3791 = vld [vmem:[#allocation2 + $0x58] sm:$0xff]
    %3803 = vrot.lane.b32.xlu0 %v3781, 126
    %v3804 = vpop.permute.xlu0 %3803
    %3805 = vrot.lane.b32.xlu0 %v3782, 126
    %v3806 = vpop.permute.xlu0 %3805
    %3807 = vrot.lane.b32.xlu0 %v3783, 126
    %v3808 = vpop.permute.xlu0 %3807
    %3809 = vrot.lane.b32.xlu0 %v3784, 126
    %v3810 = vpop.permute.xlu0 %3809
    %3811 = vrot.lane.b32.xlu0 %v3785, 126
    %v3812 = vpop.permute.xlu0 %3811
    %3813 = vrot.lane.b32.xlu0 %v3786, 126
    %v3814 = vpop.permute.xlu0 %3813
    %3815 = vrot.lane.b32.xlu0 %v3787, 126
    %v3816 = vpop.permute.xlu0 %3815
    %3817 = vrot.lane.b32.xlu0 %v3788, 126
    %v3818 = vpop.permute.xlu0 %3817
    %3819 = vrot.lane.b32.xlu0 %v3789, 126
    %v3820 = vpop.permute.xlu0 %3819
    %3821 = vrot.lane.b32.xlu0 %v3790, 126
    %v3822 = vpop.permute.xlu0 %3821
    %3823 = vrot.lane.b32.xlu0 %v3791, 126
    %v3824 = vpop.permute.xlu0 %3823
    %vm3825 = vcmask 1031168
    %v3826 = vsel %vm3825, %v3804, %v3806
    %v3827 = vsel %vm3825, %v3806, %v3808
    %v3828 = vsel %vm3825, %v3808, %v3810
    %v3829 = vsel %vm3825, %v3810, %v3812
    %v3830 = vsel %vm3825, %v3812, %v3814
    %v3831 = vsel %vm3825, %v3814, %v3816
    %v3832 = vsel %vm3825, %v3816, %v3818
    %v3833 = vsel %vm3825, %v3818, %v3820
    %v3834 = vsel %vm3825, %v3820, %v3822
    %v3835 = vsel %vm3825, %v3822, %v3824
    %3846 = vst [vmem:[#allocation3 + $0x190] sm:$0xff] %v3826
    %3847 = vst [vmem:[#allocation3 + $0x198] sm:$0xff] %v3827
    %3848 = vst [vmem:[#allocation3 + $0x1a0] sm:$0xff] %v3828
    %3849 = vst [vmem:[#allocation3 + $0x1a8] sm:$0xff] %v3829
    %3850 = vst [vmem:[#allocation3 + $0x1b0] sm:$0xff] %v3830
    %3851 = vst [vmem:[#allocation3 + $0x1b8] sm:$0xff] %v3831
    %3852 = vst [vmem:[#allocation3 + $0x1c0] sm:$0xff] %v3832
    %3853 = vst [vmem:[#allocation3 + $0x1c8] sm:$0xff] %v3833
    %3854 = vst [vmem:[#allocation3 + $0x1d0] sm:$0xff] %v3834
    %3855 = vst [vmem:[#allocation3 + $0x1d8] sm:$0xff] %v3835
    %v3856 = vld [vmem:[#allocation2 + $0x8] sm:$0xff]
    %v3857 = vld [vmem:[#allocation2 + $0x10] sm:$0xff]
    %v3858 = vld [vmem:[#allocation2 + $0x18] sm:$0xff]
    %v3859 = vld [vmem:[#allocation2 + $0x20] sm:$0xff]
    %v3860 = vld [vmem:[#allocation2 + $0x28] sm:$0xff]
    %v3861 = vld [vmem:[#allocation2 + $0x30] sm:$0xff]
    %v3862 = vld [vmem:[#allocation2 + $0x38] sm:$0xff]
    %v3863 = vld [vmem:[#allocation2 + $0x40] sm:$0xff]
    %v3864 = vld [vmem:[#allocation2 + $0x48] sm:$0xff]
    %v3865 = vld [vmem:[#allocation2 + $0x50] sm:$0xff]
    %v3866 = vld [vmem:[#allocation2 + $0x58] sm:$0xff]
    %3878 = vrot.lane.b32.xlu0 %v3856, 82
    %v3879 = vpop.permute.xlu0 %3878
    %3880 = vrot.lane.b32.xlu0 %v3857, 82
    %v3881 = vpop.permute.xlu0 %3880
    %3882 = vrot.lane.b32.xlu0 %v3858, 82
    %v3883 = vpop.permute.xlu0 %3882
    %3884 = vrot.lane.b32.xlu0 %v3859, 82
    %v3885 = vpop.permute.xlu0 %3884
    %3886 = vrot.lane.b32.xlu0 %v3860, 82
    %v3887 = vpop.permute.xlu0 %3886
    %3888 = vrot.lane.b32.xlu0 %v3861, 82
    %v3889 = vpop.permute.xlu0 %3888
    %3890 = vrot.lane.b32.xlu0 %v3862, 82
    %v3891 = vpop.permute.xlu0 %3890
    %3892 = vrot.lane.b32.xlu0 %v3863, 82
    %v3893 = vpop.permute.xlu0 %3892
    %3894 = vrot.lane.b32.xlu0 %v3864, 82
    %v3895 = vpop.permute.xlu0 %3894
    %3896 = vrot.lane.b32.xlu0 %v3865, 82
    %v3897 = vpop.permute.xlu0 %3896
    %3898 = vrot.lane.b32.xlu0 %v3866, 82
    %v3899 = vpop.permute.xlu0 %3898
    %vm3900 = vcmask 670720
    %v3901 = vsel %vm3900, %v3879, %v3881
    %v3902 = vsel %vm3900, %v3881, %v3883
    %v3903 = vsel %vm3900, %v3883, %v3885
    %v3904 = vsel %vm3900, %v3885, %v3887
    %v3905 = vsel %vm3900, %v3887, %v3889
    %v3906 = vsel %vm3900, %v3889, %v3891
    %v3907 = vsel %vm3900, %v3891, %v3893
    %v3908 = vsel %vm3900, %v3893, %v3895
    %v3909 = vsel %vm3900, %v3895, %v3897
    %v3910 = vsel %vm3900, %v3897, %v3899
    %3921 = vst [vmem:[#allocation3 + $0x1e0] sm:$0xff] %v3901
    %3922 = vst [vmem:[#allocation3 + $0x1e8] sm:$0xff] %v3902
    %3923 = vst [vmem:[#allocation3 + $0x1f0] sm:$0xff] %v3903
    %3924 = vst [vmem:[#allocation3 + $0x1f8] sm:$0xff] %v3904
    %3925 = vst [vmem:[#allocation3 + $0x200] sm:$0xff] %v3905
    %3926 = vst [vmem:[#allocation3 + $0x208] sm:$0xff] %v3906
    %3927 = vst [vmem:[#allocation3 + $0x210] sm:$0xff] %v3907
    %3928 = vst [vmem:[#allocation3 + $0x218] sm:$0xff] %v3908
    %3929 = vst [vmem:[#allocation3 + $0x220] sm:$0xff] %v3909
    %3930 = vst [vmem:[#allocation3 + $0x228] sm:$0xff] %v3910
    %v3931 = vld [vmem:[#allocation2 + $0x8] sm:$0xff]
    %v3932 = vld [vmem:[#allocation2 + $0x10] sm:$0xff]
    %v3933 = vld [vmem:[#allocation2 + $0x18] sm:$0xff]
    %v3934 = vld [vmem:[#allocation2 + $0x20] sm:$0xff]
    %v3935 = vld [vmem:[#allocation2 + $0x28] sm:$0xff]
    %v3936 = vld [vmem:[#allocation2 + $0x30] sm:$0xff]
    %v3937 = vld [vmem:[#allocation2 + $0x38] sm:$0xff]
    %v3938 = vld [vmem:[#allocation2 + $0x40] sm:$0xff]
    %v3939 = vld [vmem:[#allocation2 + $0x48] sm:$0xff]
    %v3940 = vld [vmem:[#allocation2 + $0x50] sm:$0xff]
    %v3941 = vld [vmem:[#allocation2 + $0x58] sm:$0xff]
    %3953 = vrot.lane.b32.xlu0 %v3931, 80
    %v3954 = vpop.permute.xlu0 %3953
    %3955 = vrot.lane.b32.xlu0 %v3932, 80
    %v3956 = vpop.permute.xlu0 %3955
    %3957 = vrot.lane.b32.xlu0 %v3933, 80
    %v3958 = vpop.permute.xlu0 %3957
    %3959 = vrot.lane.b32.xlu0 %v3934, 80
    %v3960 = vpop.permute.xlu0 %3959
    %3961 = vrot.lane.b32.xlu0 %v3935, 80
    %v3962 = vpop.permute.xlu0 %3961
    %3963 = vrot.lane.b32.xlu0 %v3936, 80
    %v3964 = vpop.permute.xlu0 %3963
    %3965 = vrot.lane.b32.xlu0 %v3937, 80
    %v3966 = vpop.permute.xlu0 %3965
    %3967 = vrot.lane.b32.xlu0 %v3938, 80
    %v3968 = vpop.permute.xlu0 %3967
    %3969 = vrot.lane.b32.xlu0 %v3939, 80
    %v3970 = vpop.permute.xlu0 %3969
    %3971 = vrot.lane.b32.xlu0 %v3940, 80
    %v3972 = vpop.permute.xlu0 %3971
    %3973 = vrot.lane.b32.xlu0 %v3941, 80
    %v3974 = vpop.permute.xlu0 %3973
    %vm3975 = vcmask 654336
    %v3976 = vsel %vm3975, %v3954, %v3956
    %v3977 = vsel %vm3975, %v3956, %v3958
    %v3978 = vsel %vm3975, %v3958, %v3960
    %v3979 = vsel %vm3975, %v3960, %v3962
    %v3980 = vsel %vm3975, %v3962, %v3964
    %v3981 = vsel %vm3975, %v3964, %v3966
    %v3982 = vsel %vm3975, %v3966, %v3968
    %v3983 = vsel %vm3975, %v3968, %v3970
    %v3984 = vsel %vm3975, %v3970, %v3972
    %v3985 = vsel %vm3975, %v3972, %v3974
    %3996 = vst [vmem:[#allocation3 + $0x230] sm:$0xff] %v3976
    %3997 = vst [vmem:[#allocation3 + $0x238] sm:$0xff] %v3977
    %3998 = vst [vmem:[#allocation3 + $0x240] sm:$0xff] %v3978
    %3999 = vst [vmem:[#allocation3 + $0x248] sm:$0xff] %v3979
    %4000 = vst [vmem:[#allocation3 + $0x250] sm:$0xff] %v3980
    %4001 = vst [vmem:[#allocation3 + $0x258] sm:$0xff] %v3981
    %4002 = vst [vmem:[#allocation3 + $0x260] sm:$0xff] %v3982
    %4003 = vst [vmem:[#allocation3 + $0x268] sm:$0xff] %v3983
    %4004 = vst [vmem:[#allocation3 + $0x270] sm:$0xff] %v3984
    %4005 = vst [vmem:[#allocation3 + $0x278] sm:$0xff] %v3985
    %v4006 = vld [vmem:[#allocation2 + $0x8] sm:$0xff]
    %v4007 = vld [vmem:[#allocation2 + $0x10] sm:$0xff]
    %v4008 = vld [vmem:[#allocation2 + $0x18] sm:$0xff]
    %v4009 = vld [vmem:[#allocation2 + $0x20] sm:$0xff]
    %v4010 = vld [vmem:[#allocation2 + $0x28] sm:$0xff]
    %v4011 = vld [vmem:[#allocation2 + $0x30] sm:$0xff]
    %v4012 = vld [vmem:[#allocation2 + $0x38] sm:$0xff]
    %v4013 = vld [vmem:[#allocation2 + $0x40] sm:$0xff]
    %v4014 = vld [vmem:[#allocation2 + $0x48] sm:$0xff]
    %v4015 = vld [vmem:[#allocation2 + $0x50] sm:$0xff]
    %v4016 = vld [vmem:[#allocation2 + $0x58] sm:$0xff]
    %4028 = vrot.lane.b32.xlu0 %v4006, 78
    %v4029 = vpop.permute.xlu0 %4028
    %4030 = vrot.lane.b32.xlu0 %v4007, 78
    %v4031 = vpop.permute.xlu0 %4030
    %4032 = vrot.lane.b32.xlu0 %v4008, 78
    %v4033 = vpop.permute.xlu0 %4032
    %4034 = vrot.lane.b32.xlu0 %v4009, 78
    %v4035 = vpop.permute.xlu0 %4034
    %4036 = vrot.lane.b32.xlu0 %v4010, 78
    %v4037 = vpop.permute.xlu0 %4036
    %4038 = vrot.lane.b32.xlu0 %v4011, 78
    %v4039 = vpop.permute.xlu0 %4038
    %4040 = vrot.lane.b32.xlu0 %v4012, 78
    %v4041 = vpop.permute.xlu0 %4040
    %4042 = vrot.lane.b32.xlu0 %v4013, 78
    %v4043 = vpop.permute.xlu0 %4042
    %4044 = vrot.lane.b32.xlu0 %v4014, 78
    %v4045 = vpop.permute.xlu0 %4044
    %4046 = vrot.lane.b32.xlu0 %v4015, 78
    %v4047 = vpop.permute.xlu0 %4046
    %4048 = vrot.lane.b32.xlu0 %v4016, 78
    %v4049 = vpop.permute.xlu0 %4048
    %vm4050 = vcmask 637952
    %v4051 = vsel %vm4050, %v4029, %v4031
    %v4052 = vsel %vm4050, %v4031, %v4033
    %v4053 = vsel %vm4050, %v4033, %v4035
    %v4054 = vsel %vm4050, %v4035, %v4037
    %v4055 = vsel %vm4050, %v4037, %v4039
    %v4056 = vsel %vm4050, %v4039, %v4041
    %v4057 = vsel %vm4050, %v4041, %v4043
    %v4058 = vsel %vm4050, %v4043, %v4045
    %v4059 = vsel %vm4050, %v4045, %v4047
    %v4060 = vsel %vm4050, %v4047, %v4049
    %4071 = vst [vmem:[#allocation3 + $0x280] sm:$0xff] %v4051
    %4072 = vst [vmem:[#allocation3 + $0x288] sm:$0xff] %v4052
    %4073 = vst [vmem:[#allocation3 + $0x290] sm:$0xff] %v4053
    %4074 = vst [vmem:[#allocation3 + $0x298] sm:$0xff] %v4054
    %4075 = vst [vmem:[#allocation3 + $0x2a0] sm:$0xff] %v4055
    %4076 = vst [vmem:[#allocation3 + $0x2a8] sm:$0xff] %v4056
    %4077 = vst [vmem:[#allocation3 + $0x2b0] sm:$0xff] %v4057
    %4078 = vst [vmem:[#allocation3 + $0x2b8] sm:$0xff] %v4058
    %4079 = vst [vmem:[#allocation3 + $0x2c0] sm:$0xff] %v4059
    %4080 = vst [vmem:[#allocation3 + $0x2c8] sm:$0xff] %v4060
    %v4081 = vld [vmem:[#allocation3] sm:$0xff]
    %v4082 = vld [vmem:[#allocation3 + $0x8] sm:$0xff]
    %v4083 = vld [vmem:[#allocation3 + $0x10] sm:$0xff]
    %v4084 = vld [vmem:[#allocation3 + $0x18] sm:$0xff]
    %v4085 = vld [vmem:[#allocation3 + $0x20] sm:$0xff]
    %v4086 = vld [vmem:[#allocation3 + $0x28] sm:$0xff]
    %v4087 = vld [vmem:[#allocation3 + $0x30] sm:$0xff]
    %v4088 = vld [vmem:[#allocation3 + $0x38] sm:$0xff]
    %v4089 = vld [vmem:[#allocation3 + $0x40] sm:$0xff]
    %v4090 = vld [vmem:[#allocation3 + $0x48] sm:$0xff]
    %v4091 = vld [vmem:[#allocation3 + $0x50] sm:$0xff]
    %v4092 = vld [vmem:[#allocation3 + $0x58] sm:$0xff]
    %v4093 = vld [vmem:[#allocation3 + $0x60] sm:$0xff]
    %v4094 = vld [vmem:[#allocation3 + $0x68] sm:$0xff]
    %v4095 = vld [vmem:[#allocation3 + $0x70] sm:$0xff]
    %v4096 = vld [vmem:[#allocation3 + $0x78] sm:$0xff]
    %v4097 = vld [vmem:[#allocation3 + $0x80] sm:$0xff]
    %v4098 = vld [vmem:[#allocation3 + $0x88] sm:$0xff]
    %v4099 = vld [vmem:[#allocation3 + $0x90] sm:$0xff]
    %v4100 = vld [vmem:[#allocation3 + $0x98] sm:$0xff]
    %v4101 = vld [vmem:[#allocation3 + $0xa0] sm:$0xff]
    %v4102 = vld [vmem:[#allocation3 + $0xa8] sm:$0xff]
    %v4103 = vld [vmem:[#allocation3 + $0xb0] sm:$0xff]
    %v4104 = vld [vmem:[#allocation3 + $0xb8] sm:$0xff]
    %v4105 = vld [vmem:[#allocation3 + $0xc0] sm:$0xff]
    %v4106 = vld [vmem:[#allocation3 + $0xc8] sm:$0xff]
    %v4107 = vld [vmem:[#allocation3 + $0xd0] sm:$0xff]
    %v4108 = vld [vmem:[#allocation3 + $0xd8] sm:$0xff]
    %v4109 = vld [vmem:[#allocation3 + $0xe0] sm:$0xff]
    %v4110 = vld [vmem:[#allocation3 + $0xe8] sm:$0xff]
    %v4111 = vld [vmem:[#allocation3 + $0xf0] sm:$0xff]
    %v4112 = vld [vmem:[#allocation3 + $0xf8] sm:$0xff]
    %v4113 = vld [vmem:[#allocation3 + $0x100] sm:$0xff]
    %v4114 = vld [vmem:[#allocation3 + $0x108] sm:$0xff]
    %v4115 = vld [vmem:[#allocation3 + $0x110] sm:$0xff]
    %v4116 = vld [vmem:[#allocation3 + $0x118] sm:$0xff]
    %v4117 = vld [vmem:[#allocation3 + $0x120] sm:$0xff]
    %v4118 = vld [vmem:[#allocation3 + $0x128] sm:$0xff]
    %v4119 = vld [vmem:[#allocation3 + $0x130] sm:$0xff]
    %v4120 = vld [vmem:[#allocation3 + $0x138] sm:$0xff]
    %v4121 = vld [vmem:[#allocation3 + $0x140] sm:$0xff]
    %v4122 = vld [vmem:[#allocation3 + $0x148] sm:$0xff]
    %v4123 = vld [vmem:[#allocation3 + $0x150] sm:$0xff]
    %v4124 = vld [vmem:[#allocation3 + $0x158] sm:$0xff]
    %v4125 = vld [vmem:[#allocation3 + $0x160] sm:$0xff]
    %v4126 = vld [vmem:[#allocation3 + $0x168] sm:$0xff]
    %v4127 = vld [vmem:[#allocation3 + $0x170] sm:$0xff]
    %v4128 = vld [vmem:[#allocation3 + $0x178] sm:$0xff]
    %v4129 = vld [vmem:[#allocation3 + $0x180] sm:$0xff]
    %v4130 = vld [vmem:[#allocation3 + $0x188] sm:$0xff]
    %v4131 = vld [vmem:[#allocation3 + $0x190] sm:$0xff]
    %v4132 = vld [vmem:[#allocation3 + $0x198] sm:$0xff]
    %v4133 = vld [vmem:[#allocation3 + $0x1a0] sm:$0xff]
    %v4134 = vld [vmem:[#allocation3 + $0x1a8] sm:$0xff]
    %v4135 = vld [vmem:[#allocation3 + $0x1b0] sm:$0xff]
    %v4136 = vld [vmem:[#allocation3 + $0x1b8] sm:$0xff]
    %v4137 = vld [vmem:[#allocation3 + $0x1c0] sm:$0xff]
    %v4138 = vld [vmem:[#allocation3 + $0x1c8] sm:$0xff]
    %v4139 = vld [vmem:[#allocation3 + $0x1d0] sm:$0xff]
    %v4140 = vld [vmem:[#allocation3 + $0x1d8] sm:$0xff]
    %v4141 = vld [vmem:[#allocation3 + $0x1e0] sm:$0xff]
    %v4142 = vld [vmem:[#allocation3 + $0x1e8] sm:$0xff]
    %v4143 = vld [vmem:[#allocation3 + $0x1f0] sm:$0xff]
    %v4144 = vld [vmem:[#allocation3 + $0x1f8] sm:$0xff]
    %v4145 = vld [vmem:[#allocation3 + $0x200] sm:$0xff]
    %v4146 = vld [vmem:[#allocation3 + $0x208] sm:$0xff]
    %v4147 = vld [vmem:[#allocation3 + $0x210] sm:$0xff]
    %v4148 = vld [vmem:[#allocation3 + $0x218] sm:$0xff]
    %v4149 = vld [vmem:[#allocation3 + $0x220] sm:$0xff]
    %v4150 = vld [vmem:[#allocation3 + $0x228] sm:$0xff]
    %v4151 = vld [vmem:[#allocation3 + $0x230] sm:$0xff]
    %v4152 = vld [vmem:[#allocation3 + $0x238] sm:$0xff]
    %v4153 = vld [vmem:[#allocation3 + $0x240] sm:$0xff]
    %v4154 = vld [vmem:[#allocation3 + $0x248] sm:$0xff]
    %v4155 = vld [vmem:[#allocation3 + $0x250] sm:$0xff]
    %v4156 = vld [vmem:[#allocation3 + $0x258] sm:$0xff]
    %v4157 = vld [vmem:[#allocation3 + $0x260] sm:$0xff]
    %v4158 = vld [vmem:[#allocation3 + $0x268] sm:$0xff]
    %v4159 = vld [vmem:[#allocation3 + $0x270] sm:$0xff]
    %v4160 = vld [vmem:[#allocation3 + $0x278] sm:$0xff]
    %v4161 = vld [vmem:[#allocation3 + $0x280] sm:$0xff]
    %v4162 = vld [vmem:[#allocation3 + $0x288] sm:$0xff]
    %v4163 = vld [vmem:[#allocation3 + $0x290] sm:$0xff]
    %v4164 = vld [vmem:[#allocation3 + $0x298] sm:$0xff]
    %v4165 = vld [vmem:[#allocation3 + $0x2a0] sm:$0xff]
    %v4166 = vld [vmem:[#allocation3 + $0x2a8] sm:$0xff]
    %v4167 = vld [vmem:[#allocation3 + $0x2b0] sm:$0xff]
    %v4168 = vld [vmem:[#allocation3 + $0x2b8] sm:$0xff]
    %v4169 = vld [vmem:[#allocation3 + $0x2c0] sm:$0xff]
    %v4170 = vld [vmem:[#allocation3 + $0x2c8] sm:$0xff]
    %4172 = vset.pattern.permute.xlu0 0
    %4173 = vperm.xlu0 %4172, %v70
    %v4174 = vpop.permute.xlu0 %4173
    %v4177 = vsel %vm810, %v64, 0
    %4179 = vmatprep.subr.mxu0 %v4082
    %4180 = vmatpush1.msra.mxu0 %v4081
    %4181 = vmatprep.subr.mxu0 %v4092
    %4182 = vmatpush1.msra.mxu0 %v4091
    %4183 = vmatprep.subr.mxu0 %v4102
    %4184 = vmatpush1.msra.mxu0 %v4101
    %4185 = vmatprep.subr.mxu0 %v4112
    %4186 = vmatpush1.msra.mxu0 %v4111
    %4187 = vmatprep.subr.mxu0 %v4122
    %4188 = vmatpush1.msra.mxu0 %v4121
    %4189 = vmatprep.subr.mxu0 %v4132
    %4190 = vmatpush1.msra.mxu0 %v4131
    %4191 = vmatprep.subr.mxu0 %v4142
    %4192 = vmatpush1.msra.mxu0 %v4141
    %4193 = vmatprep.subr.mxu0 %v4152
    %4194 = vmatpush1.msra.mxu0 %v4151
    %4195 = vmatprep.subr.mxu0 %v4162
    %4196 = vmatpush1.msra.mxu0 %v4161
    %4197 = vmatprep.subr.mxu0 0.0
    %4198 = vmatpush1.msra.mxu0 0.0
    %4199 = vmatprep.subr.mxu0 0.0
    %4200 = vmatpush1.msra.mxu0 0.0
    %4201 = vmatprep.subr.mxu0 0.0
    %4202 = vmatpush1.msra.mxu0 0.0
    %4203 = vmatprep.subr.mxu0 0.0
    %4204 = vmatpush1.msra.mxu0 0.0
    %4205 = vmatprep.subr.mxu0 0.0
    %4206 = vmatpush1.msra.mxu0 0.0
    %4207 = vmatprep.subr.mxu0 0.0
    %4208 = vmatpush1.msra.mxu0 0.0
    %4209 = vmatprep.subr.mxu0 0.0
    %4210 = vmatpush1.msra.mxu0 0.0
    %4211 = vmatprep.subr.mxu0 0.0
    %4212 = vmatpush1.msra.mxu0 0.0
    %4213 = vmatprep.subr.mxu0 0.0
    %4214 = vmatpush1.msra.mxu0 0.0
    %4215 = vmatprep.subr.mxu0 0.0
    %4216 = vmatpush1.msra.mxu0 0.0
    %4217 = vmatprep.subr.mxu0 0.0
    %4218 = vmatpush1.msra.mxu0 0.0
    %4219 = vmatprep.subr.mxu0 0.0
    %4220 = vmatpush1.msra.mxu0 0.0
    %4221 = vmatprep.subr.mxu0 0.0
    %4222 = vmatpush1.msra.mxu0 0.0
    %4223 = vmatprep.subr.mxu0 0.0
    %4224 = vmatpush1.msra.mxu0 0.0
    %4225 = vmatprep.subr.mxu0 0.0
    %4226 = vmatpush1.msra.mxu0 0.0
    %4227 = vmatprep.subr.mxu0 0.0
    %4228 = vmatpush1.msra.mxu0 0.0
    %4229 = vmatprep.subr.mxu0 0.0
    %4230 = vmatpush1.msra.mxu0 0.0
    %4231 = vmatprep.subr.mxu0 0.0
    %4232 = vmatpush1.msra.mxu0 0.0
    %4233 = vmatprep.subr.mxu0 0.0
    %4234 = vmatpush1.msra.mxu0 0.0
    %4235 = vmatprep.subr.mxu0 0.0
    %4236 = vmatpush1.msra.mxu0 0.0
    %4237 = vmatprep.subr.mxu0 0.0
    %4238 = vmatpush1.msra.mxu0 0.0
    %4239 = vmatprep.subr.mxu0 0.0
    %4240 = vmatpush1.msra.mxu0 0.0
    %4241 = vmatprep.subr.mxu0 0.0
    %4242 = vmatpush1.msra.mxu0 0.0
    %4243 = vmatprep.mubr.f32.mxu0 0.0
    %4244 = vmatmul.mubr.f32.gmra.mrb[0].mxu0 %v4177
    %v4245 = vpop.f32.mrb[0].mxu0
    %v4246 = vadd.f32 %v4174, %v4245
    %v4247 = vpop.f32.mrb[0].mxu0
    %v4248 = vadd.f32 %v4174, %v4247
    %4249 = vdwg.mxu0
    %4250 = vmatprep.subr.mxu0 %v4084
    %4251 = vmatpush1.msra.mxu0 %v4083
    %4252 = vmatprep.subr.mxu0 %v4094
    %4253 = vmatpush1.msra.mxu0 %v4093
    %4254 = vmatprep.subr.mxu0 %v4104
    %4255 = vmatpush1.msra.mxu0 %v4103
    %4256 = vmatprep.subr.mxu0 %v4114
    %4257 = vmatpush1.msra.mxu0 %v4113
    %4258 = vmatprep.subr.mxu0 %v4124
    %4259 = vmatpush1.msra.mxu0 %v4123
    %4260 = vmatprep.subr.mxu0 %v4134
    %4261 = vmatpush1.msra.mxu0 %v4133
    %4262 = vmatprep.subr.mxu0 %v4144
    %4263 = vmatpush1.msra.mxu0 %v4143
    %4264 = vmatprep.subr.mxu0 %v4154
    %4265 = vmatpush1.msra.mxu0 %v4153
    %4266 = vmatprep.subr.mxu0 %v4164
    %4267 = vmatpush1.msra.mxu0 %v4163
    %4268 = vmatprep.subr.mxu0 0.0
    %4269 = vmatpush1.msra.mxu0 0.0
    %4270 = vmatprep.subr.mxu0 0.0
    %4271 = vmatpush1.msra.mxu0 0.0
    %4272 = vmatprep.subr.mxu0 0.0
    %4273 = vmatpush1.msra.mxu0 0.0
    %4274 = vmatprep.subr.mxu0 0.0
    %4275 = vmatpush1.msra.mxu0 0.0
    %4276 = vmatprep.subr.mxu0 0.0
    %4277 = vmatpush1.msra.mxu0 0.0
    %4278 = vmatprep.subr.mxu0 0.0
    %4279 = vmatpush1.msra.mxu0 0.0
    %4280 = vmatprep.subr.mxu0 0.0
    %4281 = vmatpush1.msra.mxu0 0.0
    %4282 = vmatprep.subr.mxu0 0.0
    %4283 = vmatpush1.msra.mxu0 0.0
    %4284 = vmatprep.subr.mxu0 0.0
    %4285 = vmatpush1.msra.mxu0 0.0
    %4286 = vmatprep.subr.mxu0 0.0
    %4287 = vmatpush1.msra.mxu0 0.0
    %4288 = vmatprep.subr.mxu0 0.0
    %4289 = vmatpush1.msra.mxu0 0.0
    %4290 = vmatprep.subr.mxu0 0.0
    %4291 = vmatpush1.msra.mxu0 0.0
    %4292 = vmatprep.subr.mxu0 0.0
    %4293 = vmatpush1.msra.mxu0 0.0
    %4294 = vmatprep.subr.mxu0 0.0
    %4295 = vmatpush1.msra.mxu0 0.0
    %4296 = vmatprep.subr.mxu0 0.0
    %4297 = vmatpush1.msra.mxu0 0.0
    %4298 = vmatprep.subr.mxu0 0.0
    %4299 = vmatpush1.msra.mxu0 0.0
    %4300 = vmatprep.subr.mxu0 0.0
    %4301 = vmatpush1.msra.mxu0 0.0
    %4302 = vmatprep.subr.mxu0 0.0
    %4303 = vmatpush1.msra.mxu0 0.0
    %4304 = vmatprep.subr.mxu0 0.0
    %4305 = vmatpush1.msra.mxu0 0.0
    %4306 = vmatprep.subr.mxu0 0.0
    %4307 = vmatpush1.msra.mxu0 0.0
    %4308 = vmatprep.subr.mxu0 0.0
    %4309 = vmatpush1.msra.mxu0 0.0
    %4310 = vmatprep.subr.mxu0 0.0
    %4311 = vmatpush1.msra.mxu0 0.0
    %4312 = vmatprep.subr.mxu0 0.0
    %4313 = vmatpush1.msra.mxu0 0.0
    %4314 = vmatprep.mubr.f32.mxu0 0.0
    %4315 = vmatmul.mubr.f32.gmra.mrb[0].mxu0 %v4177
    %v4316 = vpop.f32.mrb[0].mxu0
    %v4317 = vadd.f32 %v4174, %v4316
    %v4318 = vpop.f32.mrb[0].mxu0
    %v4319 = vadd.f32 %v4174, %v4318
    %4320 = vdwg.mxu0
    %4321 = vmatprep.subr.mxu0 %v4086
    %4322 = vmatpush1.msra.mxu0 %v4085
    %4323 = vmatprep.subr.mxu0 %v4096
    %4324 = vmatpush1.msra.mxu0 %v4095
    %4325 = vmatprep.subr.mxu0 %v4106
    %4326 = vmatpush1.msra.mxu0 %v4105
    %4327 = vmatprep.subr.mxu0 %v4116
    %4328 = vmatpush1.msra.mxu0 %v4115
    %4329 = vmatprep.subr.mxu0 %v4126
    %4330 = vmatpush1.msra.mxu0 %v4125
    %4331 = vmatprep.subr.mxu0 %v4136
    %4332 = vmatpush1.msra.mxu0 %v4135
    %4333 = vmatprep.subr.mxu0 %v4146
    %4334 = vmatpush1.msra.mxu0 %v4145
    %4335 = vmatprep.subr.mxu0 %v4156
    %4336 = vmatpush1.msra.mxu0 %v4155
    %4337 = vmatprep.subr.mxu0 %v4166
    %4338 = vmatpush1.msra.mxu0 %v4165
    %4339 = vmatprep.subr.mxu0 0.0
    %4340 = vmatpush1.msra.mxu0 0.0
    %4341 = vmatprep.subr.mxu0 0.0
    %4342 = vmatpush1.msra.mxu0 0.0
    %4343 = vmatprep.subr.mxu0 0.0
    %4344 = vmatpush1.msra.mxu0 0.0
    %4345 = vmatprep.subr.mxu0 0.0
    %4346 = vmatpush1.msra.mxu0 0.0
    %4347 = vmatprep.subr.mxu0 0.0
    %4348 = vmatpush1.msra.mxu0 0.0
    %4349 = vmatprep.subr.mxu0 0.0
    %4350 = vmatpush1.msra.mxu0 0.0
    %4351 = vmatprep.subr.mxu0 0.0
    %4352 = vmatpush1.msra.mxu0 0.0
    %4353 = vmatprep.subr.mxu0 0.0
    %4354 = vmatpush1.msra.mxu0 0.0
    %4355 = vmatprep.subr.mxu0 0.0
    %4356 = vmatpush1.msra.mxu0 0.0
    %4357 = vmatprep.subr.mxu0 0.0
    %4358 = vmatpush1.msra.mxu0 0.0
    %4359 = vmatprep.subr.mxu0 0.0
    %4360 = vmatpush1.msra.mxu0 0.0
    %4361 = vmatprep.subr.mxu0 0.0
    %4362 = vmatpush1.msra.mxu0 0.0
    %4363 = vmatprep.subr.mxu0 0.0
    %4364 = vmatpush1.msra.mxu0 0.0
    %4365 = vmatprep.subr.mxu0 0.0
    %4366 = vmatpush1.msra.mxu0 0.0
    %4367 = vmatprep.subr.mxu0 0.0
    %4368 = vmatpush1.msra.mxu0 0.0
    %4369 = vmatprep.subr.mxu0 0.0
    %4370 = vmatpush1.msra.mxu0 0.0
    %4371 = vmatprep.subr.mxu0 0.0
    %4372 = vmatpush1.msra.mxu0 0.0
    %4373 = vmatprep.subr.mxu0 0.0
    %4374 = vmatpush1.msra.mxu0 0.0
    %4375 = vmatprep.subr.mxu0 0.0
    %4376 = vmatpush1.msra.mxu0 0.0
    %4377 = vmatprep.subr.mxu0 0.0
    %4378 = vmatpush1.msra.mxu0 0.0
    %4379 = vmatprep.subr.mxu0 0.0
    %4380 = vmatpush1.msra.mxu0 0.0
    %4381 = vmatprep.subr.mxu0 0.0
    %4382 = vmatpush1.msra.mxu0 0.0
    %4383 = vmatprep.subr.mxu0 0.0
    %4384 = vmatpush1.msra.mxu0 0.0
    %4385 = vmatprep.mubr.f32.mxu0 0.0
    %4386 = vmatmul.mubr.f32.gmra.mrb[0].mxu0 %v4177
    %v4387 = vpop.f32.mrb[0].mxu0
    %v4388 = vadd.f32 %v4174, %v4387
    %v4389 = vpop.f32.mrb[0].mxu0
    %v4390 = vadd.f32 %v4174, %v4389
    %4391 = vdwg.mxu0
    %4392 = vmatprep.subr.mxu0 %v4088
    %4393 = vmatpush1.msra.mxu0 %v4087
    %4394 = vmatprep.subr.mxu0 %v4098
    %4395 = vmatpush1.msra.mxu0 %v4097
    %4396 = vmatprep.subr.mxu0 %v4108
    %4397 = vmatpush1.msra.mxu0 %v4107
    %4398 = vmatprep.subr.mxu0 %v4118
    %4399 = vmatpush1.msra.mxu0 %v4117
    %4400 = vmatprep.subr.mxu0 %v4128
    %4401 = vmatpush1.msra.mxu0 %v4127
    %4402 = vmatprep.subr.mxu0 %v4138
    %4403 = vmatpush1.msra.mxu0 %v4137
    %4404 = vmatprep.subr.mxu0 %v4148
    %4405 = vmatpush1.msra.mxu0 %v4147
    %4406 = vmatprep.subr.mxu0 %v4158
    %4407 = vmatpush1.msra.mxu0 %v4157
    %4408 = vmatprep.subr.mxu0 %v4168
    %4409 = vmatpush1.msra.mxu0 %v4167
    %4410 = vmatprep.subr.mxu0 0.0
    %4411 = vmatpush1.msra.mxu0 0.0
    %4412 = vmatprep.subr.mxu0 0.0
    %4413 = vmatpush1.msra.mxu0 0.0
    %4414 = vmatprep.subr.mxu0 0.0
    %4415 = vmatpush1.msra.mxu0 0.0
    %4416 = vmatprep.subr.mxu0 0.0
    %4417 = vmatpush1.msra.mxu0 0.0
    %4418 = vmatprep.subr.mxu0 0.0
    %4419 = vmatpush1.msra.mxu0 0.0
    %4420 = vmatprep.subr.mxu0 0.0
    %4421 = vmatpush1.msra.mxu0 0.0
    %4422 = vmatprep.subr.mxu0 0.0
    %4423 = vmatpush1.msra.mxu0 0.0
    %4424 = vmatprep.subr.mxu0 0.0
    %4425 = vmatpush1.msra.mxu0 0.0
    %4426 = vmatprep.subr.mxu0 0.0
    %4427 = vmatpush1.msra.mxu0 0.0
    %4428 = vmatprep.subr.mxu0 0.0
    %4429 = vmatpush1.msra.mxu0 0.0
    %4430 = vmatprep.subr.mxu0 0.0
    %4431 = vmatpush1.msra.mxu0 0.0
    %4432 = vmatprep.subr.mxu0 0.0
    %4433 = vmatpush1.msra.mxu0 0.0
    %4434 = vmatprep.subr.mxu0 0.0
    %4435 = vmatpush1.msra.mxu0 0.0
    %4436 = vmatprep.subr.mxu0 0.0
    %4437 = vmatpush1.msra.mxu0 0.0
    %4438 = vmatprep.subr.mxu0 0.0
    %4439 = vmatpush1.msra.mxu0 0.0
    %4440 = vmatprep.subr.mxu0 0.0
    %4441 = vmatpush1.msra.mxu0 0.0
    %4442 = vmatprep.subr.mxu0 0.0
    %4443 = vmatpush1.msra.mxu0 0.0
    %4444 = vmatprep.subr.mxu0 0.0
    %4445 = vmatpush1.msra.mxu0 0.0
    %4446 = vmatprep.subr.mxu0 0.0
    %4447 = vmatpush1.msra.mxu0 0.0
    %4448 = vmatprep.subr.mxu0 0.0
    %4449 = vmatpush1.msra.mxu0 0.0
    %4450 = vmatprep.subr.mxu0 0.0
    %4451 = vmatpush1.msra.mxu0 0.0
    %4452 = vmatprep.subr.mxu0 0.0
    %4453 = vmatpush1.msra.mxu0 0.0
    %4454 = vmatprep.subr.mxu0 0.0
    %4455 = vmatpush1.msra.mxu0 0.0
    %4456 = vmatprep.mubr.f32.mxu0 0.0
    %4457 = vmatmul.mubr.f32.gmra.mrb[0].mxu0 %v4177
    %v4458 = vpop.f32.mrb[0].mxu0
    %v4459 = vadd.f32 %v4174, %v4458
    %v4460 = vpop.f32.mrb[0].mxu0
    %v4461 = vadd.f32 %v4174, %v4460
    %4462 = vdwg.mxu0
    %4463 = vmatprep.subr.mxu0 %v4090
    %4464 = vmatpush1.msra.mxu0 %v4089
    %4465 = vmatprep.subr.mxu0 %v4100
    %4466 = vmatpush1.msra.mxu0 %v4099
    %4467 = vmatprep.subr.mxu0 %v4110
    %4468 = vmatpush1.msra.mxu0 %v4109
    %4469 = vmatprep.subr.mxu0 %v4120
    %4470 = vmatpush1.msra.mxu0 %v4119
    %4471 = vmatprep.subr.mxu0 %v4130
    %4472 = vmatpush1.msra.mxu0 %v4129
    %4473 = vmatprep.subr.mxu0 %v4140
    %4474 = vmatpush1.msra.mxu0 %v4139
    %4475 = vmatprep.subr.mxu0 %v4150
    %4476 = vmatpush1.msra.mxu0 %v4149
    %4477 = vmatprep.subr.mxu0 %v4160
    %4478 = vmatpush1.msra.mxu0 %v4159
    %4479 = vmatprep.subr.mxu0 %v4170
    %4480 = vmatpush1.msra.mxu0 %v4169
    %4481 = vmatprep.subr.mxu0 0.0
    %4482 = vmatpush1.msra.mxu0 0.0
    %4483 = vmatprep.subr.mxu0 0.0
    %4484 = vmatpush1.msra.mxu0 0.0
    %4485 = vmatprep.subr.mxu0 0.0
    %4486 = vmatpush1.msra.mxu0 0.0
    %4487 = vmatprep.subr.mxu0 0.0
    %4488 = vmatpush1.msra.mxu0 0.0
    %4489 = vmatprep.subr.mxu0 0.0
    %4490 = vmatpush1.msra.mxu0 0.0
    %4491 = vmatprep.subr.mxu0 0.0
    %4492 = vmatpush1.msra.mxu0 0.0
    %4493 = vmatprep.subr.mxu0 0.0
    %4494 = vmatpush1.msra.mxu0 0.0
    %4495 = vmatprep.subr.mxu0 0.0
    %4496 = vmatpush1.msra.mxu0 0.0
    %4497 = vmatprep.subr.mxu0 0.0
    %4498 = vmatpush1.msra.mxu0 0.0
    %4499 = vmatprep.subr.mxu0 0.0
    %4500 = vmatpush1.msra.mxu0 0.0
    %4501 = vmatprep.subr.mxu0 0.0
    %4502 = vmatpush1.msra.mxu0 0.0
    %4503 = vmatprep.subr.mxu0 0.0
    %4504 = vmatpush1.msra.mxu0 0.0
    %4505 = vmatprep.subr.mxu0 0.0
    %4506 = vmatpush1.msra.mxu0 0.0
    %4507 = vmatprep.subr.mxu0 0.0
    %4508 = vmatpush1.msra.mxu0 0.0
    %4509 = vmatprep.subr.mxu0 0.0
    %4510 = vmatpush1.msra.mxu0 0.0
    %4511 = vmatprep.subr.mxu0 0.0
    %4512 = vmatpush1.msra.mxu0 0.0
    %4513 = vmatprep.subr.mxu0 0.0
    %4514 = vmatpush1.msra.mxu0 0.0
    %4515 = vmatprep.subr.mxu0 0.0
    %4516 = vmatpush1.msra.mxu0 0.0
    %4517 = vmatprep.subr.mxu0 0.0
    %4518 = vmatpush1.msra.mxu0 0.0
    %4519 = vmatprep.subr.mxu0 0.0
    %4520 = vmatpush1.msra.mxu0 0.0
    %4521 = vmatprep.subr.mxu0 0.0
    %4522 = vmatpush1.msra.mxu0 0.0
    %4523 = vmatprep.subr.mxu0 0.0
    %4524 = vmatpush1.msra.mxu0 0.0
    %4525 = vmatprep.subr.mxu0 0.0
    %4526 = vmatpush1.msra.mxu0 0.0
    %4527 = vmatprep.mubr.f32.mxu0 0.0
    %4528 = vmatmul.mubr.f32.gmra.mrb[0].mxu0 %v4177
    %v4529 = vpop.f32.mrb[0].mxu0
    %v4530 = vadd.f32 %v4174, %v4529
    %v4531 = vpop.f32.mrb[0].mxu0
    %v4532 = vadd.f32 %v4174, %v4531
    %4533 = vdwg.mxu0
    %v4534 = vmax.f32 %v4246, 0.0
    %v4535 = vmax.f32 %v4248, 0.0
    %v4536 = vmax.f32 %v4317, 0.0
    %v4537 = vmax.f32 %v4319, 0.0
    %v4538 = vmax.f32 %v4388, 0.0
    %v4539 = vmax.f32 %v4390, 0.0
    %v4540 = vmax.f32 %v4459, 0.0
    %v4541 = vmax.f32 %v4461, 0.0
    %v4542 = vmax.f32 %v4530, 0.0
    %v4543 = vmax.f32 %v4532, 0.0
    %v4544 = vmul.f32 %v4534, %v1184
    %v4545 = vmul.f32 %v4535, %v1188
    %v4546 = vmul.f32 %v4536, %v1192
    %v4547 = vmul.f32 %v4537, %v1196
    %v4548 = vmul.f32 %v4538, %v1200
    %v4549 = vmul.f32 %v4539, %v1204
    %v4550 = vmul.f32 %v4540, %v1208
    %v4551 = vmul.f32 %v4541, %v1212
    %v4552 = vmul.f32 %v4542, %v1216
    %v4553 = vmul.f32 %v4543, %v1220
    %4554 = vst [vmem:[#allocation2 + $0x8] sm:$0xff] %v4544
    %4555 = vst [vmem:[#allocation2 + $0x10] sm:$0xff] %v4545
    %4556 = vst [vmem:[#allocation2 + $0x18] sm:$0xff] %v4546
    %4557 = vst [vmem:[#allocation2 + $0x20] sm:$0xff] %v4547
    %4558 = vst [vmem:[#allocation2 + $0x28] sm:$0xff] %v4548
    %4559 = vst [vmem:[#allocation2 + $0x30] sm:$0xff] %v4549
    %4560 = vst [vmem:[#allocation2 + $0x38] sm:$0xff] %v4550
    %4561 = vst [vmem:[#allocation2 + $0x40] sm:$0xff] %v4551
    %4562 = vst [vmem:[#allocation2 + $0x48] sm:$0xff] %v4552
    %4563 = vst [vmem:[#allocation2 + $0x50] sm:$0xff] %v4553
    %v4564 = vld [vmem:[#allocation2] sm:$0xff]
    %v4565 = vld [vmem:[#allocation2 + $0x8] sm:$0xff]
    %v4566 = vld [vmem:[#allocation2 + $0x10] sm:$0xff]
    %v4567 = vld [vmem:[#allocation2 + $0x18] sm:$0xff]
    %v4568 = vld [vmem:[#allocation2 + $0x20] sm:$0xff]
    %v4569 = vld [vmem:[#allocation2 + $0x28] sm:$0xff]
    %v4570 = vld [vmem:[#allocation2 + $0x30] sm:$0xff]
    %v4571 = vld [vmem:[#allocation2 + $0x38] sm:$0xff]
    %v4572 = vld [vmem:[#allocation2 + $0x40] sm:$0xff]
    %v4573 = vld [vmem:[#allocation2 + $0x48] sm:$0xff]
    %v4574 = vld [vmem:[#allocation2 + $0x50] sm:$0xff]
    %4586 = vrot.lane.b32.xlu0 %v4564, 100
    %v4587 = vpop.permute.xlu0 %4586
    %4588 = vrot.lane.b32.xlu0 %v4565, 100
    %v4589 = vpop.permute.xlu0 %4588
    %4590 = vrot.lane.b32.xlu0 %v4566, 100
    %v4591 = vpop.permute.xlu0 %4590
    %4592 = vrot.lane.b32.xlu0 %v4567, 100
    %v4593 = vpop.permute.xlu0 %4592
    %4594 = vrot.lane.b32.xlu0 %v4568, 100
    %v4595 = vpop.permute.xlu0 %4594
    %4596 = vrot.lane.b32.xlu0 %v4569, 100
    %v4597 = vpop.permute.xlu0 %4596
    %4598 = vrot.lane.b32.xlu0 %v4570, 100
    %v4599 = vpop.permute.xlu0 %4598
    %4600 = vrot.lane.b32.xlu0 %v4571, 100
    %v4601 = vpop.permute.xlu0 %4600
    %4602 = vrot.lane.b32.xlu0 %v4572, 100
    %v4603 = vpop.permute.xlu0 %4602
    %4604 = vrot.lane.b32.xlu0 %v4573, 100
    %v4605 = vpop.permute.xlu0 %4604
    %4606 = vrot.lane.b32.xlu0 %v4574, 100
    %v4607 = vpop.permute.xlu0 %4606
    %vm4608 = vcmask 818176
    %v4609 = vsel %vm4608, %v4587, %v4589
    %v4610 = vsel %vm4608, %v4589, %v4591
    %v4611 = vsel %vm4608, %v4591, %v4593
    %v4612 = vsel %vm4608, %v4593, %v4595
    %v4613 = vsel %vm4608, %v4595, %v4597
    %v4614 = vsel %vm4608, %v4597, %v4599
    %v4615 = vsel %vm4608, %v4599, %v4601
    %v4616 = vsel %vm4608, %v4601, %v4603
    %v4617 = vsel %vm4608, %v4603, %v4605
    %v4618 = vsel %vm4608, %v4605, %v4607
    %4629 = vst [vmem:[#allocation3] sm:$0xff] %v4609
    %4630 = vst [vmem:[#allocation3 + $0x8] sm:$0xff] %v4610
    %4631 = vst [vmem:[#allocation3 + $0x10] sm:$0xff] %v4611
    %4632 = vst [vmem:[#allocation3 + $0x18] sm:$0xff] %v4612
    %4633 = vst [vmem:[#allocation3 + $0x20] sm:$0xff] %v4613
    %4634 = vst [vmem:[#allocation3 + $0x28] sm:$0xff] %v4614
    %4635 = vst [vmem:[#allocation3 + $0x30] sm:$0xff] %v4615
    %4636 = vst [vmem:[#allocation3 + $0x38] sm:$0xff] %v4616
    %4637 = vst [vmem:[#allocation3 + $0x40] sm:$0xff] %v4617
    %4638 = vst [vmem:[#allocation3 + $0x48] sm:$0xff] %v4618
    %v4639 = vld [vmem:[#allocation2] sm:$0xff]
    %v4640 = vld [vmem:[#allocation2 + $0x8] sm:$0xff]
    %v4641 = vld [vmem:[#allocation2 + $0x10] sm:$0xff]
    %v4642 = vld [vmem:[#allocation2 + $0x18] sm:$0xff]
    %v4643 = vld [vmem:[#allocation2 + $0x20] sm:$0xff]
    %v4644 = vld [vmem:[#allocation2 + $0x28] sm:$0xff]
    %v4645 = vld [vmem:[#allocation2 + $0x30] sm:$0xff]
    %v4646 = vld [vmem:[#allocation2 + $0x38] sm:$0xff]
    %v4647 = vld [vmem:[#allocation2 + $0x40] sm:$0xff]
    %v4648 = vld [vmem:[#allocation2 + $0x48] sm:$0xff]
    %v4649 = vld [vmem:[#allocation2 + $0x50] sm:$0xff]
    %4661 = vrot.lane.b32.xlu0 %v4639, 96
    %v4662 = vpop.permute.xlu0 %4661
    %4663 = vrot.lane.b32.xlu0 %v4640, 96
    %v4664 = vpop.permute.xlu0 %4663
    %4665 = vrot.lane.b32.xlu0 %v4641, 96
    %v4666 = vpop.permute.xlu0 %4665
    %4667 = vrot.lane.b32.xlu0 %v4642, 96
    %v4668 = vpop.permute.xlu0 %4667
    %4669 = vrot.lane.b32.xlu0 %v4643, 96
    %v4670 = vpop.permute.xlu0 %4669
    %4671 = vrot.lane.b32.xlu0 %v4644, 96
    %v4672 = vpop.permute.xlu0 %4671
    %4673 = vrot.lane.b32.xlu0 %v4645, 96
    %v4674 = vpop.permute.xlu0 %4673
    %4675 = vrot.lane.b32.xlu0 %v4646, 96
    %v4676 = vpop.permute.xlu0 %4675
    %4677 = vrot.lane.b32.xlu0 %v4647, 96
    %v4678 = vpop.permute.xlu0 %4677
    %4679 = vrot.lane.b32.xlu0 %v4648, 96
    %v4680 = vpop.permute.xlu0 %4679
    %4681 = vrot.lane.b32.xlu0 %v4649, 96
    %v4682 = vpop.permute.xlu0 %4681
    %vm4683 = vcmask 785408
    %v4684 = vsel %vm4683, %v4662, %v4664
    %v4685 = vsel %vm4683, %v4664, %v4666
    %v4686 = vsel %vm4683, %v4666, %v4668
    %v4687 = vsel %vm4683, %v4668, %v4670
    %v4688 = vsel %vm4683, %v4670, %v4672
    %v4689 = vsel %vm4683, %v4672, %v4674
    %v4690 = vsel %vm4683, %v4674, %v4676
    %v4691 = vsel %vm4683, %v4676, %v4678
    %v4692 = vsel %vm4683, %v4678, %v4680
    %v4693 = vsel %vm4683, %v4680, %v4682
    %4704 = vst [vmem:[#allocation3 + $0x50] sm:$0xff] %v4684
    %4705 = vst [vmem:[#allocation3 + $0x58] sm:$0xff] %v4685
    %4706 = vst [vmem:[#allocation3 + $0x60] sm:$0xff] %v4686
    %4707 = vst [vmem:[#allocation3 + $0x68] sm:$0xff] %v4687
    %4708 = vst [vmem:[#allocation3 + $0x70] sm:$0xff] %v4688
    %4709 = vst [vmem:[#allocation3 + $0x78] sm:$0xff] %v4689
    %4710 = vst [vmem:[#allocation3 + $0x80] sm:$0xff] %v4690
    %4711 = vst [vmem:[#allocation3 + $0x88] sm:$0xff] %v4691
    %4712 = vst [vmem:[#allocation3 + $0x90] sm:$0xff] %v4692
    %4713 = vst [vmem:[#allocation3 + $0x98] sm:$0xff] %v4693
    %v4714 = vld [vmem:[#allocation2] sm:$0xff]
    %v4715 = vld [vmem:[#allocation2 + $0x8] sm:$0xff]
    %v4716 = vld [vmem:[#allocation2 + $0x10] sm:$0xff]
    %v4717 = vld [vmem:[#allocation2 + $0x18] sm:$0xff]
    %v4718 = vld [vmem:[#allocation2 + $0x20] sm:$0xff]
    %v4719 = vld [vmem:[#allocation2 + $0x28] sm:$0xff]
    %v4720 = vld [vmem:[#allocation2 + $0x30] sm:$0xff]
    %v4721 = vld [vmem:[#allocation2 + $0x38] sm:$0xff]
    %v4722 = vld [vmem:[#allocation2 + $0x40] sm:$0xff]
    %v4723 = vld [vmem:[#allocation2 + $0x48] sm:$0xff]
    %v4724 = vld [vmem:[#allocation2 + $0x50] sm:$0xff]
    %4736 = vrot.lane.b32.xlu0 %v4714, 92
    %v4737 = vpop.permute.xlu0 %4736
    %4738 = vrot.lane.b32.xlu0 %v4715, 92
    %v4739 = vpop.permute.xlu0 %4738
    %4740 = vrot.lane.b32.xlu0 %v4716, 92
    %v4741 = vpop.permute.xlu0 %4740
    %4742 = vrot.lane.b32.xlu0 %v4717, 92
    %v4743 = vpop.permute.xlu0 %4742
    %4744 = vrot.lane.b32.xlu0 %v4718, 92
    %v4745 = vpop.permute.xlu0 %4744
    %4746 = vrot.lane.b32.xlu0 %v4719, 92
    %v4747 = vpop.permute.xlu0 %4746
    %4748 = vrot.lane.b32.xlu0 %v4720, 92
    %v4749 = vpop.permute.xlu0 %4748
    %4750 = vrot.lane.b32.xlu0 %v4721, 92
    %v4751 = vpop.permute.xlu0 %4750
    %4752 = vrot.lane.b32.xlu0 %v4722, 92
    %v4753 = vpop.permute.xlu0 %4752
    %4754 = vrot.lane.b32.xlu0 %v4723, 92
    %v4755 = vpop.permute.xlu0 %4754
    %4756 = vrot.lane.b32.xlu0 %v4724, 92
    %v4757 = vpop.permute.xlu0 %4756
    %vm4758 = vcmask 752640
    %v4759 = vsel %vm4758, %v4737, %v4739
    %v4760 = vsel %vm4758, %v4739, %v4741
    %v4761 = vsel %vm4758, %v4741, %v4743
    %v4762 = vsel %vm4758, %v4743, %v4745
    %v4763 = vsel %vm4758, %v4745, %v4747
    %v4764 = vsel %vm4758, %v4747, %v4749
    %v4765 = vsel %vm4758, %v4749, %v4751
    %v4766 = vsel %vm4758, %v4751, %v4753
    %v4767 = vsel %vm4758, %v4753, %v4755
    %v4768 = vsel %vm4758, %v4755, %v4757
    %4779 = vst [vmem:[#allocation3 + $0xa0] sm:$0xff] %v4759
    %4780 = vst [vmem:[#allocation3 + $0xa8] sm:$0xff] %v4760
    %4781 = vst [vmem:[#allocation3 + $0xb0] sm:$0xff] %v4761
    %4782 = vst [vmem:[#allocation3 + $0xb8] sm:$0xff] %v4762
    %4783 = vst [vmem:[#allocation3 + $0xc0] sm:$0xff] %v4763
    %4784 = vst [vmem:[#allocation3 + $0xc8] sm:$0xff] %v4764
    %4785 = vst [vmem:[#allocation3 + $0xd0] sm:$0xff] %v4765
    %4786 = vst [vmem:[#allocation3 + $0xd8] sm:$0xff] %v4766
    %4787 = vst [vmem:[#allocation3 + $0xe0] sm:$0xff] %v4767
    %4788 = vst [vmem:[#allocation3 + $0xe8] sm:$0xff] %v4768
    %v4789 = vld [vmem:[#allocation2] sm:$0xff]
    %v4790 = vld [vmem:[#allocation2 + $0x8] sm:$0xff]
    %v4791 = vld [vmem:[#allocation2 + $0x10] sm:$0xff]
    %v4792 = vld [vmem:[#allocation2 + $0x18] sm:$0xff]
    %v4793 = vld [vmem:[#allocation2 + $0x20] sm:$0xff]
    %v4794 = vld [vmem:[#allocation2 + $0x28] sm:$0xff]
    %v4795 = vld [vmem:[#allocation2 + $0x30] sm:$0xff]
    %v4796 = vld [vmem:[#allocation2 + $0x38] sm:$0xff]
    %v4797 = vld [vmem:[#allocation2 + $0x40] sm:$0xff]
    %v4798 = vld [vmem:[#allocation2 + $0x48] sm:$0xff]
    %v4799 = vld [vmem:[#allocation2 + $0x50] sm:$0xff]
    %4811 = vrot.lane.b32.xlu0 %v4789, 4
    %v4812 = vpop.permute.xlu0 %4811
    %4813 = vrot.lane.b32.xlu0 %v4790, 4
    %v4814 = vpop.permute.xlu0 %4813
    %4815 = vrot.lane.b32.xlu0 %v4791, 4
    %v4816 = vpop.permute.xlu0 %4815
    %4817 = vrot.lane.b32.xlu0 %v4792, 4
    %v4818 = vpop.permute.xlu0 %4817
    %4819 = vrot.lane.b32.xlu0 %v4793, 4
    %v4820 = vpop.permute.xlu0 %4819
    %4821 = vrot.lane.b32.xlu0 %v4794, 4
    %v4822 = vpop.permute.xlu0 %4821
    %4823 = vrot.lane.b32.xlu0 %v4795, 4
    %v4824 = vpop.permute.xlu0 %4823
    %4825 = vrot.lane.b32.xlu0 %v4796, 4
    %v4826 = vpop.permute.xlu0 %4825
    %4827 = vrot.lane.b32.xlu0 %v4797, 4
    %v4828 = vpop.permute.xlu0 %4827
    %4829 = vrot.lane.b32.xlu0 %v4798, 4
    %v4830 = vpop.permute.xlu0 %4829
    %4831 = vrot.lane.b32.xlu0 %v4799, 4
    %v4832 = vpop.permute.xlu0 %4831
    %vm4833 = vcmask 31744
    %v4834 = vsel %vm4833, %v4812, %v4814
    %v4835 = vsel %vm4833, %v4814, %v4816
    %v4836 = vsel %vm4833, %v4816, %v4818
    %v4837 = vsel %vm4833, %v4818, %v4820
    %v4838 = vsel %vm4833, %v4820, %v4822
    %v4839 = vsel %vm4833, %v4822, %v4824
    %v4840 = vsel %vm4833, %v4824, %v4826
    %v4841 = vsel %vm4833, %v4826, %v4828
    %v4842 = vsel %vm4833, %v4828, %v4830
    %v4843 = vsel %vm4833, %v4830, %v4832
    %4854 = vst [vmem:[#allocation3 + $0xf0] sm:$0xff] %v4834
    %4855 = vst [vmem:[#allocation3 + $0xf8] sm:$0xff] %v4835
    %4856 = vst [vmem:[#allocation3 + $0x100] sm:$0xff] %v4836
    %4857 = vst [vmem:[#allocation3 + $0x108] sm:$0xff] %v4837
    %4858 = vst [vmem:[#allocation3 + $0x110] sm:$0xff] %v4838
    %4859 = vst [vmem:[#allocation3 + $0x118] sm:$0xff] %v4839
    %4860 = vst [vmem:[#allocation3 + $0x120] sm:$0xff] %v4840
    %4861 = vst [vmem:[#allocation3 + $0x128] sm:$0xff] %v4841
    %4862 = vst [vmem:[#allocation3 + $0x130] sm:$0xff] %v4842
    %4863 = vst [vmem:[#allocation3 + $0x138] sm:$0xff] %v4843
    %v4864 = vld [vmem:[#allocation2 + $0x8] sm:$0xff]
    %v4865 = vld [vmem:[#allocation2 + $0x10] sm:$0xff]
    %v4866 = vld [vmem:[#allocation2 + $0x18] sm:$0xff]
    %v4867 = vld [vmem:[#allocation2 + $0x20] sm:$0xff]
    %v4868 = vld [vmem:[#allocation2 + $0x28] sm:$0xff]
    %v4869 = vld [vmem:[#allocation2 + $0x30] sm:$0xff]
    %v4870 = vld [vmem:[#allocation2 + $0x38] sm:$0xff]
    %v4871 = vld [vmem:[#allocation2 + $0x40] sm:$0xff]
    %v4872 = vld [vmem:[#allocation2 + $0x48] sm:$0xff]
    %v4873 = vld [vmem:[#allocation2 + $0x50] sm:$0xff]
    %4874 = vst [vmem:[#allocation3 + $0x140] sm:$0xff] %v4864
    %4875 = vst [vmem:[#allocation3 + $0x148] sm:$0xff] %v4865
    %4876 = vst [vmem:[#allocation3 + $0x150] sm:$0xff] %v4866
    %4877 = vst [vmem:[#allocation3 + $0x158] sm:$0xff] %v4867
    %4878 = vst [vmem:[#allocation3 + $0x160] sm:$0xff] %v4868
    %4879 = vst [vmem:[#allocation3 + $0x168] sm:$0xff] %v4869
    %4880 = vst [vmem:[#allocation3 + $0x170] sm:$0xff] %v4870
    %4881 = vst [vmem:[#allocation3 + $0x178] sm:$0xff] %v4871
    %4882 = vst [vmem:[#allocation3 + $0x180] sm:$0xff] %v4872
    %4883 = vst [vmem:[#allocation3 + $0x188] sm:$0xff] %v4873
    %v4884 = vld [vmem:[#allocation2 + $0x8] sm:$0xff]
    %v4885 = vld [vmem:[#allocation2 + $0x10] sm:$0xff]
    %v4886 = vld [vmem:[#allocation2 + $0x18] sm:$0xff]
    %v4887 = vld [vmem:[#allocation2 + $0x20] sm:$0xff]
    %v4888 = vld [vmem:[#allocation2 + $0x28] sm:$0xff]
    %v4889 = vld [vmem:[#allocation2 + $0x30] sm:$0xff]
    %v4890 = vld [vmem:[#allocation2 + $0x38] sm:$0xff]
    %v4891 = vld [vmem:[#allocation2 + $0x40] sm:$0xff]
    %v4892 = vld [vmem:[#allocation2 + $0x48] sm:$0xff]
    %v4893 = vld [vmem:[#allocation2 + $0x50] sm:$0xff]
    %v4894 = vld [vmem:[#allocation2 + $0x58] sm:$0xff]
    %4906 = vrot.lane.b32.xlu0 %v4884, 124
    %v4907 = vpop.permute.xlu0 %4906
    %4908 = vrot.lane.b32.xlu0 %v4885, 124
    %v4909 = vpop.permute.xlu0 %4908
    %4910 = vrot.lane.b32.xlu0 %v4886, 124
    %v4911 = vpop.permute.xlu0 %4910
    %4912 = vrot.lane.b32.xlu0 %v4887, 124
    %v4913 = vpop.permute.xlu0 %4912
    %4914 = vrot.lane.b32.xlu0 %v4888, 124
    %v4915 = vpop.permute.xlu0 %4914
    %4916 = vrot.lane.b32.xlu0 %v4889, 124
    %v4917 = vpop.permute.xlu0 %4916
    %4918 = vrot.lane.b32.xlu0 %v4890, 124
    %v4919 = vpop.permute.xlu0 %4918
    %4920 = vrot.lane.b32.xlu0 %v4891, 124
    %v4921 = vpop.permute.xlu0 %4920
    %4922 = vrot.lane.b32.xlu0 %v4892, 124
    %v4923 = vpop.permute.xlu0 %4922
    %4924 = vrot.lane.b32.xlu0 %v4893, 124
    %v4925 = vpop.permute.xlu0 %4924
    %4926 = vrot.lane.b32.xlu0 %v4894, 124
    %v4927 = vpop.permute.xlu0 %4926
    %vm4928 = vcmask 1014784
    %v4929 = vsel %vm4928, %v4907, %v4909
    %v4930 = vsel %vm4928, %v4909, %v4911
    %v4931 = vsel %vm4928, %v4911, %v4913
    %v4932 = vsel %vm4928, %v4913, %v4915
    %v4933 = vsel %vm4928, %v4915, %v4917
    %v4934 = vsel %vm4928, %v4917, %v4919
    %v4935 = vsel %vm4928, %v4919, %v4921
    %v4936 = vsel %vm4928, %v4921, %v4923
    %v4937 = vsel %vm4928, %v4923, %v4925
    %v4938 = vsel %vm4928, %v4925, %v4927
    %4949 = vst [vmem:[#allocation3 + $0x190] sm:$0xff] %v4929
    %4950 = vst [vmem:[#allocation3 + $0x198] sm:$0xff] %v4930
    %4951 = vst [vmem:[#allocation3 + $0x1a0] sm:$0xff] %v4931
    %4952 = vst [vmem:[#allocation3 + $0x1a8] sm:$0xff] %v4932
    %4953 = vst [vmem:[#allocation3 + $0x1b0] sm:$0xff] %v4933
    %4954 = vst [vmem:[#allocation3 + $0x1b8] sm:$0xff] %v4934
    %4955 = vst [vmem:[#allocation3 + $0x1c0] sm:$0xff] %v4935
    %4956 = vst [vmem:[#allocation3 + $0x1c8] sm:$0xff] %v4936
    %4957 = vst [vmem:[#allocation3 + $0x1d0] sm:$0xff] %v4937
    %4958 = vst [vmem:[#allocation3 + $0x1d8] sm:$0xff] %v4938
    %v4959 = vld [vmem:[#allocation2 + $0x8] sm:$0xff]
    %v4960 = vld [vmem:[#allocation2 + $0x10] sm:$0xff]
    %v4961 = vld [vmem:[#allocation2 + $0x18] sm:$0xff]
    %v4962 = vld [vmem:[#allocation2 + $0x20] sm:$0xff]
    %v4963 = vld [vmem:[#allocation2 + $0x28] sm:$0xff]
    %v4964 = vld [vmem:[#allocation2 + $0x30] sm:$0xff]
    %v4965 = vld [vmem:[#allocation2 + $0x38] sm:$0xff]
    %v4966 = vld [vmem:[#allocation2 + $0x40] sm:$0xff]
    %v4967 = vld [vmem:[#allocation2 + $0x48] sm:$0xff]
    %v4968 = vld [vmem:[#allocation2 + $0x50] sm:$0xff]
    %v4969 = vld [vmem:[#allocation2 + $0x58] sm:$0xff]
    %4981 = vrot.lane.b32.xlu0 %v4959, 36
    %v4982 = vpop.permute.xlu0 %4981
    %4983 = vrot.lane.b32.xlu0 %v4960, 36
    %v4984 = vpop.permute.xlu0 %4983
    %4985 = vrot.lane.b32.xlu0 %v4961, 36
    %v4986 = vpop.permute.xlu0 %4985
    %4987 = vrot.lane.b32.xlu0 %v4962, 36
    %v4988 = vpop.permute.xlu0 %4987
    %4989 = vrot.lane.b32.xlu0 %v4963, 36
    %v4990 = vpop.permute.xlu0 %4989
    %4991 = vrot.lane.b32.xlu0 %v4964, 36
    %v4992 = vpop.permute.xlu0 %4991
    %4993 = vrot.lane.b32.xlu0 %v4965, 36
    %v4994 = vpop.permute.xlu0 %4993
    %4995 = vrot.lane.b32.xlu0 %v4966, 36
    %v4996 = vpop.permute.xlu0 %4995
    %4997 = vrot.lane.b32.xlu0 %v4967, 36
    %v4998 = vpop.permute.xlu0 %4997
    %4999 = vrot.lane.b32.xlu0 %v4968, 36
    %v5000 = vpop.permute.xlu0 %4999
    %5001 = vrot.lane.b32.xlu0 %v4969, 36
    %v5002 = vpop.permute.xlu0 %5001
    %vm5003 = vcmask 293888
    %v5004 = vsel %vm5003, %v4982, %v4984
    %v5005 = vsel %vm5003, %v4984, %v4986
    %v5006 = vsel %vm5003, %v4986, %v4988
    %v5007 = vsel %vm5003, %v4988, %v4990
    %v5008 = vsel %vm5003, %v4990, %v4992
    %v5009 = vsel %vm5003, %v4992, %v4994
    %v5010 = vsel %vm5003, %v4994, %v4996
    %v5011 = vsel %vm5003, %v4996, %v4998
    %v5012 = vsel %vm5003, %v4998, %v5000
    %v5013 = vsel %vm5003, %v5000, %v5002
    %5024 = vst [vmem:[#allocation3 + $0x1e0] sm:$0xff] %v5004
    %5025 = vst [vmem:[#allocation3 + $0x1e8] sm:$0xff] %v5005
    %5026 = vst [vmem:[#allocation3 + $0x1f0] sm:$0xff] %v5006
    %5027 = vst [vmem:[#allocation3 + $0x1f8] sm:$0xff] %v5007
    %5028 = vst [vmem:[#allocation3 + $0x200] sm:$0xff] %v5008
    %5029 = vst [vmem:[#allocation3 + $0x208] sm:$0xff] %v5009
    %5030 = vst [vmem:[#allocation3 + $0x210] sm:$0xff] %v5010
    %5031 = vst [vmem:[#allocation3 + $0x218] sm:$0xff] %v5011
    %5032 = vst [vmem:[#allocation3 + $0x220] sm:$0xff] %v5012
    %5033 = vst [vmem:[#allocation3 + $0x228] sm:$0xff] %v5013
    %v5034 = vld [vmem:[#allocation2 + $0x8] sm:$0xff]
    %v5035 = vld [vmem:[#allocation2 + $0x10] sm:$0xff]
    %v5036 = vld [vmem:[#allocation2 + $0x18] sm:$0xff]
    %v5037 = vld [vmem:[#allocation2 + $0x20] sm:$0xff]
    %v5038 = vld [vmem:[#allocation2 + $0x28] sm:$0xff]
    %v5039 = vld [vmem:[#allocation2 + $0x30] sm:$0xff]
    %v5040 = vld [vmem:[#allocation2 + $0x38] sm:$0xff]
    %v5041 = vld [vmem:[#allocation2 + $0x40] sm:$0xff]
    %v5042 = vld [vmem:[#allocation2 + $0x48] sm:$0xff]
    %v5043 = vld [vmem:[#allocation2 + $0x50] sm:$0xff]
    %v5044 = vld [vmem:[#allocation2 + $0x58] sm:$0xff]
    %5056 = vrot.lane.b32.xlu0 %v5034, 32
    %v5057 = vpop.permute.xlu0 %5056
    %5058 = vrot.lane.b32.xlu0 %v5035, 32
    %v5059 = vpop.permute.xlu0 %5058
    %5060 = vrot.lane.b32.xlu0 %v5036, 32
    %v5061 = vpop.permute.xlu0 %5060
    %5062 = vrot.lane.b32.xlu0 %v5037, 32
    %v5063 = vpop.permute.xlu0 %5062
    %5064 = vrot.lane.b32.xlu0 %v5038, 32
    %v5065 = vpop.permute.xlu0 %5064
    %5066 = vrot.lane.b32.xlu0 %v5039, 32
    %v5067 = vpop.permute.xlu0 %5066
    %5068 = vrot.lane.b32.xlu0 %v5040, 32
    %v5069 = vpop.permute.xlu0 %5068
    %5070 = vrot.lane.b32.xlu0 %v5041, 32
    %v5071 = vpop.permute.xlu0 %5070
    %5072 = vrot.lane.b32.xlu0 %v5042, 32
    %v5073 = vpop.permute.xlu0 %5072
    %5074 = vrot.lane.b32.xlu0 %v5043, 32
    %v5075 = vpop.permute.xlu0 %5074
    %5076 = vrot.lane.b32.xlu0 %v5044, 32
    %v5077 = vpop.permute.xlu0 %5076
    %vm5078 = vcmask 261120
    %v5079 = vsel %vm5078, %v5057, %v5059
    %v5080 = vsel %vm5078, %v5059, %v5061
    %v5081 = vsel %vm5078, %v5061, %v5063
    %v5082 = vsel %vm5078, %v5063, %v5065
    %v5083 = vsel %vm5078, %v5065, %v5067
    %v5084 = vsel %vm5078, %v5067, %v5069
    %v5085 = vsel %vm5078, %v5069, %v5071
    %v5086 = vsel %vm5078, %v5071, %v5073
    %v5087 = vsel %vm5078, %v5073, %v5075
    %v5088 = vsel %vm5078, %v5075, %v5077
    %5099 = vst [vmem:[#allocation3 + $0x230] sm:$0xff] %v5079
    %5100 = vst [vmem:[#allocation3 + $0x238] sm:$0xff] %v5080
    %5101 = vst [vmem:[#allocation3 + $0x240] sm:$0xff] %v5081
    %5102 = vst [vmem:[#allocation3 + $0x248] sm:$0xff] %v5082
    %5103 = vst [vmem:[#allocation3 + $0x250] sm:$0xff] %v5083
    %5104 = vst [vmem:[#allocation3 + $0x258] sm:$0xff] %v5084
    %5105 = vst [vmem:[#allocation3 + $0x260] sm:$0xff] %v5085
    %5106 = vst [vmem:[#allocation3 + $0x268] sm:$0xff] %v5086
    %5107 = vst [vmem:[#allocation3 + $0x270] sm:$0xff] %v5087
    %5108 = vst [vmem:[#allocation3 + $0x278] sm:$0xff] %v5088
    %v5109 = vld [vmem:[#allocation2 + $0x8] sm:$0xff]
    %v5110 = vld [vmem:[#allocation2 + $0x10] sm:$0xff]
    %v5111 = vld [vmem:[#allocation2 + $0x18] sm:$0xff]
    %v5112 = vld [vmem:[#allocation2 + $0x20] sm:$0xff]
    %v5113 = vld [vmem:[#allocation2 + $0x28] sm:$0xff]
    %v5114 = vld [vmem:[#allocation2 + $0x30] sm:$0xff]
    %v5115 = vld [vmem:[#allocation2 + $0x38] sm:$0xff]
    %v5116 = vld [vmem:[#allocation2 + $0x40] sm:$0xff]
    %v5117 = vld [vmem:[#allocation2 + $0x48] sm:$0xff]
    %v5118 = vld [vmem:[#allocation2 + $0x50] sm:$0xff]
    %v5119 = vld [vmem:[#allocation2 + $0x58] sm:$0xff]
    %5131 = vrot.lane.b32.xlu0 %v5109, 28
    %v5132 = vpop.permute.xlu0 %5131
    %5133 = vrot.lane.b32.xlu0 %v5110, 28
    %v5134 = vpop.permute.xlu0 %5133
    %5135 = vrot.lane.b32.xlu0 %v5111, 28
    %v5136 = vpop.permute.xlu0 %5135
    %5137 = vrot.lane.b32.xlu0 %v5112, 28
    %v5138 = vpop.permute.xlu0 %5137
    %5139 = vrot.lane.b32.xlu0 %v5113, 28
    %v5140 = vpop.permute.xlu0 %5139
    %5141 = vrot.lane.b32.xlu0 %v5114, 28
    %v5142 = vpop.permute.xlu0 %5141
    %5143 = vrot.lane.b32.xlu0 %v5115, 28
    %v5144 = vpop.permute.xlu0 %5143
    %5145 = vrot.lane.b32.xlu0 %v5116, 28
    %v5146 = vpop.permute.xlu0 %5145
    %5147 = vrot.lane.b32.xlu0 %v5117, 28
    %v5148 = vpop.permute.xlu0 %5147
    %5149 = vrot.lane.b32.xlu0 %v5118, 28
    %v5150 = vpop.permute.xlu0 %5149
    %5151 = vrot.lane.b32.xlu0 %v5119, 28
    %v5152 = vpop.permute.xlu0 %5151
    %vm5153 = vcmask 228352
    %v5154 = vsel %vm5153, %v5132, %v5134
    %v5155 = vsel %vm5153, %v5134, %v5136
    %v5156 = vsel %vm5153, %v5136, %v5138
    %v5157 = vsel %vm5153, %v5138, %v5140
    %v5158 = vsel %vm5153, %v5140, %v5142
    %v5159 = vsel %vm5153, %v5142, %v5144
    %v5160 = vsel %vm5153, %v5144, %v5146
    %v5161 = vsel %vm5153, %v5146, %v5148
    %v5162 = vsel %vm5153, %v5148, %v5150
    %v5163 = vsel %vm5153, %v5150, %v5152
    %5174 = vst [vmem:[#allocation3 + $0x280] sm:$0xff] %v5154
    %5175 = vst [vmem:[#allocation3 + $0x288] sm:$0xff] %v5155
    %5176 = vst [vmem:[#allocation3 + $0x290] sm:$0xff] %v5156
    %5177 = vst [vmem:[#allocation3 + $0x298] sm:$0xff] %v5157
    %5178 = vst [vmem:[#allocation3 + $0x2a0] sm:$0xff] %v5158
    %5179 = vst [vmem:[#allocation3 + $0x2a8] sm:$0xff] %v5159
    %5180 = vst [vmem:[#allocation3 + $0x2b0] sm:$0xff] %v5160
    %5181 = vst [vmem:[#allocation3 + $0x2b8] sm:$0xff] %v5161
    %5182 = vst [vmem:[#allocation3 + $0x2c0] sm:$0xff] %v5162
    %5183 = vst [vmem:[#allocation3 + $0x2c8] sm:$0xff] %v5163
    %v5184 = vld [vmem:[#allocation3] sm:$0xff]
    %v5185 = vld [vmem:[#allocation3 + $0x8] sm:$0xff]
    %v5186 = vld [vmem:[#allocation3 + $0x10] sm:$0xff]
    %v5187 = vld [vmem:[#allocation3 + $0x18] sm:$0xff]
    %v5188 = vld [vmem:[#allocation3 + $0x20] sm:$0xff]
    %v5189 = vld [vmem:[#allocation3 + $0x28] sm:$0xff]
    %v5190 = vld [vmem:[#allocation3 + $0x30] sm:$0xff]
    %v5191 = vld [vmem:[#allocation3 + $0x38] sm:$0xff]
    %v5192 = vld [vmem:[#allocation3 + $0x40] sm:$0xff]
    %v5193 = vld [vmem:[#allocation3 + $0x48] sm:$0xff]
    %v5194 = vld [vmem:[#allocation3 + $0x50] sm:$0xff]
    %v5195 = vld [vmem:[#allocation3 + $0x58] sm:$0xff]
    %v5196 = vld [vmem:[#allocation3 + $0x60] sm:$0xff]
    %v5197 = vld [vmem:[#allocation3 + $0x68] sm:$0xff]
    %v5198 = vld [vmem:[#allocation3 + $0x70] sm:$0xff]
    %v5199 = vld [vmem:[#allocation3 + $0x78] sm:$0xff]
    %v5200 = vld [vmem:[#allocation3 + $0x80] sm:$0xff]
    %v5201 = vld [vmem:[#allocation3 + $0x88] sm:$0xff]
    %v5202 = vld [vmem:[#allocation3 + $0x90] sm:$0xff]
    %v5203 = vld [vmem:[#allocation3 + $0x98] sm:$0xff]
    %v5204 = vld [vmem:[#allocation3 + $0xa0] sm:$0xff]
    %v5205 = vld [vmem:[#allocation3 + $0xa8] sm:$0xff]
    %v5206 = vld [vmem:[#allocation3 + $0xb0] sm:$0xff]
    %v5207 = vld [vmem:[#allocation3 + $0xb8] sm:$0xff]
    %v5208 = vld [vmem:[#allocation3 + $0xc0] sm:$0xff]
    %v5209 = vld [vmem:[#allocation3 + $0xc8] sm:$0xff]
    %v5210 = vld [vmem:[#allocation3 + $0xd0] sm:$0xff]
    %v5211 = vld [vmem:[#allocation3 + $0xd8] sm:$0xff]
    %v5212 = vld [vmem:[#allocation3 + $0xe0] sm:$0xff]
    %v5213 = vld [vmem:[#allocation3 + $0xe8] sm:$0xff]
    %v5214 = vld [vmem:[#allocation3 + $0xf0] sm:$0xff]
    %v5215 = vld [vmem:[#allocation3 + $0xf8] sm:$0xff]
    %v5216 = vld [vmem:[#allocation3 + $0x100] sm:$0xff]
    %v5217 = vld [vmem:[#allocation3 + $0x108] sm:$0xff]
    %v5218 = vld [vmem:[#allocation3 + $0x110] sm:$0xff]
    %v5219 = vld [vmem:[#allocation3 + $0x118] sm:$0xff]
    %v5220 = vld [vmem:[#allocation3 + $0x120] sm:$0xff]
    %v5221 = vld [vmem:[#allocation3 + $0x128] sm:$0xff]
    %v5222 = vld [vmem:[#allocation3 + $0x130] sm:$0xff]
    %v5223 = vld [vmem:[#allocation3 + $0x138] sm:$0xff]
    %v5224 = vld [vmem:[#allocation3 + $0x140] sm:$0xff]
    %v5225 = vld [vmem:[#allocation3 + $0x148] sm:$0xff]
    %v5226 = vld [vmem:[#allocation3 + $0x150] sm:$0xff]
    %v5227 = vld [vmem:[#allocation3 + $0x158] sm:$0xff]
    %v5228 = vld [vmem:[#allocation3 + $0x160] sm:$0xff]
    %v5229 = vld [vmem:[#allocation3 + $0x168] sm:$0xff]
    %v5230 = vld [vmem:[#allocation3 + $0x170] sm:$0xff]
    %v5231 = vld [vmem:[#allocation3 + $0x178] sm:$0xff]
    %v5232 = vld [vmem:[#allocation3 + $0x180] sm:$0xff]
    %v5233 = vld [vmem:[#allocation3 + $0x188] sm:$0xff]
    %v5234 = vld [vmem:[#allocation3 + $0x190] sm:$0xff]
    %v5235 = vld [vmem:[#allocation3 + $0x198] sm:$0xff]
    %v5236 = vld [vmem:[#allocation3 + $0x1a0] sm:$0xff]
    %v5237 = vld [vmem:[#allocation3 + $0x1a8] sm:$0xff]
    %v5238 = vld [vmem:[#allocation3 + $0x1b0] sm:$0xff]
    %v5239 = vld [vmem:[#allocation3 + $0x1b8] sm:$0xff]
    %v5240 = vld [vmem:[#allocation3 + $0x1c0] sm:$0xff]
    %v5241 = vld [vmem:[#allocation3 + $0x1c8] sm:$0xff]
    %v5242 = vld [vmem:[#allocation3 + $0x1d0] sm:$0xff]
    %v5243 = vld [vmem:[#allocation3 + $0x1d8] sm:$0xff]
    %v5244 = vld [vmem:[#allocation3 + $0x1e0] sm:$0xff]
    %v5245 = vld [vmem:[#allocation3 + $0x1e8] sm:$0xff]
    %v5246 = vld [vmem:[#allocation3 + $0x1f0] sm:$0xff]
    %v5247 = vld [vmem:[#allocation3 + $0x1f8] sm:$0xff]
    %v5248 = vld [vmem:[#allocation3 + $0x200] sm:$0xff]
    %v5249 = vld [vmem:[#allocation3 + $0x208] sm:$0xff]
    %v5250 = vld [vmem:[#allocation3 + $0x210] sm:$0xff]
    %v5251 = vld [vmem:[#allocation3 + $0x218] sm:$0xff]
    %v5252 = vld [vmem:[#allocation3 + $0x220] sm:$0xff]
    %v5253 = vld [vmem:[#allocation3 + $0x228] sm:$0xff]
    %v5254 = vld [vmem:[#allocation3 + $0x230] sm:$0xff]
    %v5255 = vld [vmem:[#allocation3 + $0x238] sm:$0xff]
    %v5256 = vld [vmem:[#allocation3 + $0x240] sm:$0xff]
    %v5257 = vld [vmem:[#allocation3 + $0x248] sm:$0xff]
    %v5258 = vld [vmem:[#allocation3 + $0x250] sm:$0xff]
    %v5259 = vld [vmem:[#allocation3 + $0x258] sm:$0xff]
    %v5260 = vld [vmem:[#allocation3 + $0x260] sm:$0xff]
    %v5261 = vld [vmem:[#allocation3 + $0x268] sm:$0xff]
    %v5262 = vld [vmem:[#allocation3 + $0x270] sm:$0xff]
    %v5263 = vld [vmem:[#allocation3 + $0x278] sm:$0xff]
    %v5264 = vld [vmem:[#allocation3 + $0x280] sm:$0xff]
    %v5265 = vld [vmem:[#allocation3 + $0x288] sm:$0xff]
    %v5266 = vld [vmem:[#allocation3 + $0x290] sm:$0xff]
    %v5267 = vld [vmem:[#allocation3 + $0x298] sm:$0xff]
    %v5268 = vld [vmem:[#allocation3 + $0x2a0] sm:$0xff]
    %v5269 = vld [vmem:[#allocation3 + $0x2a8] sm:$0xff]
    %v5270 = vld [vmem:[#allocation3 + $0x2b0] sm:$0xff]
    %v5271 = vld [vmem:[#allocation3 + $0x2b8] sm:$0xff]
    %v5272 = vld [vmem:[#allocation3 + $0x2c0] sm:$0xff]
    %v5273 = vld [vmem:[#allocation3 + $0x2c8] sm:$0xff]
    %5275 = vset.pattern.permute.xlu0 0
    %5276 = vperm.xlu0 %5275, %v71
    %v5277 = vpop.permute.xlu0 %5276
    %v5280 = vsel %vm810, %v65, 0
    %5282 = vmatprep.subr.mxu0 %v5185
    %5283 = vmatpush1.msra.mxu0 %v5184
    %5284 = vmatprep.subr.mxu0 %v5195
    %5285 = vmatpush1.msra.mxu0 %v5194
    %5286 = vmatprep.subr.mxu0 %v5205
    %5287 = vmatpush1.msra.mxu0 %v5204
    %5288 = vmatprep.subr.mxu0 %v5215
    %5289 = vmatpush1.msra.mxu0 %v5214
    %5290 = vmatprep.subr.mxu0 %v5225
    %5291 = vmatpush1.msra.mxu0 %v5224
    %5292 = vmatprep.subr.mxu0 %v5235
    %5293 = vmatpush1.msra.mxu0 %v5234
    %5294 = vmatprep.subr.mxu0 %v5245
    %5295 = vmatpush1.msra.mxu0 %v5244
    %5296 = vmatprep.subr.mxu0 %v5255
    %5297 = vmatpush1.msra.mxu0 %v5254
    %5298 = vmatprep.subr.mxu0 %v5265
    %5299 = vmatpush1.msra.mxu0 %v5264
    %5300 = vmatprep.subr.mxu0 0.0
    %5301 = vmatpush1.msra.mxu0 0.0
    %5302 = vmatprep.subr.mxu0 0.0
    %5303 = vmatpush1.msra.mxu0 0.0
    %5304 = vmatprep.subr.mxu0 0.0
    %5305 = vmatpush1.msra.mxu0 0.0
    %5306 = vmatprep.subr.mxu0 0.0
    %5307 = vmatpush1.msra.mxu0 0.0
    %5308 = vmatprep.subr.mxu0 0.0
    %5309 = vmatpush1.msra.mxu0 0.0
    %5310 = vmatprep.subr.mxu0 0.0
    %5311 = vmatpush1.msra.mxu0 0.0
    %5312 = vmatprep.subr.mxu0 0.0
    %5313 = vmatpush1.msra.mxu0 0.0
    %5314 = vmatprep.subr.mxu0 0.0
    %5315 = vmatpush1.msra.mxu0 0.0
    %5316 = vmatprep.subr.mxu0 0.0
    %5317 = vmatpush1.msra.mxu0 0.0
    %5318 = vmatprep.subr.mxu0 0.0
    %5319 = vmatpush1.msra.mxu0 0.0
    %5320 = vmatprep.subr.mxu0 0.0
    %5321 = vmatpush1.msra.mxu0 0.0
    %5322 = vmatprep.subr.mxu0 0.0
    %5323 = vmatpush1.msra.mxu0 0.0
    %5324 = vmatprep.subr.mxu0 0.0
    %5325 = vmatpush1.msra.mxu0 0.0
    %5326 = vmatprep.subr.mxu0 0.0
    %5327 = vmatpush1.msra.mxu0 0.0
    %5328 = vmatprep.subr.mxu0 0.0
    %5329 = vmatpush1.msra.mxu0 0.0
    %5330 = vmatprep.subr.mxu0 0.0
    %5331 = vmatpush1.msra.mxu0 0.0
    %5332 = vmatprep.subr.mxu0 0.0
    %5333 = vmatpush1.msra.mxu0 0.0
    %5334 = vmatprep.subr.mxu0 0.0
    %5335 = vmatpush1.msra.mxu0 0.0
    %5336 = vmatprep.subr.mxu0 0.0
    %5337 = vmatpush1.msra.mxu0 0.0
    %5338 = vmatprep.subr.mxu0 0.0
    %5339 = vmatpush1.msra.mxu0 0.0
    %5340 = vmatprep.subr.mxu0 0.0
    %5341 = vmatpush1.msra.mxu0 0.0
    %5342 = vmatprep.subr.mxu0 0.0
    %5343 = vmatpush1.msra.mxu0 0.0
    %5344 = vmatprep.subr.mxu0 0.0
    %5345 = vmatpush1.msra.mxu0 0.0
    %5346 = vmatprep.mubr.f32.mxu0 0.0
    %5347 = vmatmul.mubr.f32.gmra.mrb[0].mxu0 %v5280
    %v5348 = vpop.f32.mrb[0].mxu0
    %v5349 = vadd.f32 %v5277, %v5348
    %v5350 = vpop.f32.mrb[0].mxu0
    %v5351 = vadd.f32 %v5277, %v5350
    %5352 = vdwg.mxu0
    %5353 = vmatprep.subr.mxu0 %v5187
    %5354 = vmatpush1.msra.mxu0 %v5186
    %5355 = vmatprep.subr.mxu0 %v5197
    %5356 = vmatpush1.msra.mxu0 %v5196
    %5357 = vmatprep.subr.mxu0 %v5207
    %5358 = vmatpush1.msra.mxu0 %v5206
    %5359 = vmatprep.subr.mxu0 %v5217
    %5360 = vmatpush1.msra.mxu0 %v5216
    %5361 = vmatprep.subr.mxu0 %v5227
    %5362 = vmatpush1.msra.mxu0 %v5226
    %5363 = vmatprep.subr.mxu0 %v5237
    %5364 = vmatpush1.msra.mxu0 %v5236
    %5365 = vmatprep.subr.mxu0 %v5247
    %5366 = vmatpush1.msra.mxu0 %v5246
    %5367 = vmatprep.subr.mxu0 %v5257
    %5368 = vmatpush1.msra.mxu0 %v5256
    %5369 = vmatprep.subr.mxu0 %v5267
    %5370 = vmatpush1.msra.mxu0 %v5266
    %5371 = vmatprep.subr.mxu0 0.0
    %5372 = vmatpush1.msra.mxu0 0.0
    %5373 = vmatprep.subr.mxu0 0.0
    %5374 = vmatpush1.msra.mxu0 0.0
    %5375 = vmatprep.subr.mxu0 0.0
    %5376 = vmatpush1.msra.mxu0 0.0
    %5377 = vmatprep.subr.mxu0 0.0
    %5378 = vmatpush1.msra.mxu0 0.0
    %5379 = vmatprep.subr.mxu0 0.0
    %5380 = vmatpush1.msra.mxu0 0.0
    %5381 = vmatprep.subr.mxu0 0.0
    %5382 = vmatpush1.msra.mxu0 0.0
    %5383 = vmatprep.subr.mxu0 0.0
    %5384 = vmatpush1.msra.mxu0 0.0
    %5385 = vmatprep.subr.mxu0 0.0
    %5386 = vmatpush1.msra.mxu0 0.0
    %5387 = vmatprep.subr.mxu0 0.0
    %5388 = vmatpush1.msra.mxu0 0.0
    %5389 = vmatprep.subr.mxu0 0.0
    %5390 = vmatpush1.msra.mxu0 0.0
    %5391 = vmatprep.subr.mxu0 0.0
    %5392 = vmatpush1.msra.mxu0 0.0
    %5393 = vmatprep.subr.mxu0 0.0
    %5394 = vmatpush1.msra.mxu0 0.0
    %5395 = vmatprep.subr.mxu0 0.0
    %5396 = vmatpush1.msra.mxu0 0.0
    %5397 = vmatprep.subr.mxu0 0.0
    %5398 = vmatpush1.msra.mxu0 0.0
    %5399 = vmatprep.subr.mxu0 0.0
    %5400 = vmatpush1.msra.mxu0 0.0
    %5401 = vmatprep.subr.mxu0 0.0
    %5402 = vmatpush1.msra.mxu0 0.0
    %5403 = vmatprep.subr.mxu0 0.0
    %5404 = vmatpush1.msra.mxu0 0.0
    %5405 = vmatprep.subr.mxu0 0.0
    %5406 = vmatpush1.msra.mxu0 0.0
    %5407 = vmatprep.subr.mxu0 0.0
    %5408 = vmatpush1.msra.mxu0 0.0
    %5409 = vmatprep.subr.mxu0 0.0
    %5410 = vmatpush1.msra.mxu0 0.0
    %5411 = vmatprep.subr.mxu0 0.0
    %5412 = vmatpush1.msra.mxu0 0.0
    %5413 = vmatprep.subr.mxu0 0.0
    %5414 = vmatpush1.msra.mxu0 0.0
    %5415 = vmatprep.subr.mxu0 0.0
    %5416 = vmatpush1.msra.mxu0 0.0
    %5417 = vmatprep.mubr.f32.mxu0 0.0
    %5418 = vmatmul.mubr.f32.gmra.mrb[0].mxu0 %v5280
    %v5419 = vpop.f32.mrb[0].mxu0
    %v5420 = vadd.f32 %v5277, %v5419
    %v5421 = vpop.f32.mrb[0].mxu0
    %v5422 = vadd.f32 %v5277, %v5421
    %5423 = vdwg.mxu0
    %5424 = vmatprep.subr.mxu0 %v5189
    %5425 = vmatpush1.msra.mxu0 %v5188
    %5426 = vmatprep.subr.mxu0 %v5199
    %5427 = vmatpush1.msra.mxu0 %v5198
    %5428 = vmatprep.subr.mxu0 %v5209
    %5429 = vmatpush1.msra.mxu0 %v5208
    %5430 = vmatprep.subr.mxu0 %v5219
    %5431 = vmatpush1.msra.mxu0 %v5218
    %5432 = vmatprep.subr.mxu0 %v5229
    %5433 = vmatpush1.msra.mxu0 %v5228
    %5434 = vmatprep.subr.mxu0 %v5239
    %5435 = vmatpush1.msra.mxu0 %v5238
    %5436 = vmatprep.subr.mxu0 %v5249
    %5437 = vmatpush1.msra.mxu0 %v5248
    %5438 = vmatprep.subr.mxu0 %v5259
    %5439 = vmatpush1.msra.mxu0 %v5258
    %5440 = vmatprep.subr.mxu0 %v5269
    %5441 = vmatpush1.msra.mxu0 %v5268
    %5442 = vmatprep.subr.mxu0 0.0
    %5443 = vmatpush1.msra.mxu0 0.0
    %5444 = vmatprep.subr.mxu0 0.0
    %5445 = vmatpush1.msra.mxu0 0.0
    %5446 = vmatprep.subr.mxu0 0.0
    %5447 = vmatpush1.msra.mxu0 0.0
    %5448 = vmatprep.subr.mxu0 0.0
    %5449 = vmatpush1.msra.mxu0 0.0
    %5450 = vmatprep.subr.mxu0 0.0
    %5451 = vmatpush1.msra.mxu0 0.0
    %5452 = vmatprep.subr.mxu0 0.0
    %5453 = vmatpush1.msra.mxu0 0.0
    %5454 = vmatprep.subr.mxu0 0.0
    %5455 = vmatpush1.msra.mxu0 0.0
    %5456 = vmatprep.subr.mxu0 0.0
    %5457 = vmatpush1.msra.mxu0 0.0
    %5458 = vmatprep.subr.mxu0 0.0
    %5459 = vmatpush1.msra.mxu0 0.0
    %5460 = vmatprep.subr.mxu0 0.0
    %5461 = vmatpush1.msra.mxu0 0.0
    %5462 = vmatprep.subr.mxu0 0.0
    %5463 = vmatpush1.msra.mxu0 0.0
    %5464 = vmatprep.subr.mxu0 0.0
    %5465 = vmatpush1.msra.mxu0 0.0
    %5466 = vmatprep.subr.mxu0 0.0
    %5467 = vmatpush1.msra.mxu0 0.0
    %5468 = vmatprep.subr.mxu0 0.0
    %5469 = vmatpush1.msra.mxu0 0.0
    %5470 = vmatprep.subr.mxu0 0.0
    %5471 = vmatpush1.msra.mxu0 0.0
    %5472 = vmatprep.subr.mxu0 0.0
    %5473 = vmatpush1.msra.mxu0 0.0
    %5474 = vmatprep.subr.mxu0 0.0
    %5475 = vmatpush1.msra.mxu0 0.0
    %5476 = vmatprep.subr.mxu0 0.0
    %5477 = vmatpush1.msra.mxu0 0.0
    %5478 = vmatprep.subr.mxu0 0.0
    %5479 = vmatpush1.msra.mxu0 0.0
    %5480 = vmatprep.subr.mxu0 0.0
    %5481 = vmatpush1.msra.mxu0 0.0
    %5482 = vmatprep.subr.mxu0 0.0
    %5483 = vmatpush1.msra.mxu0 0.0
    %5484 = vmatprep.subr.mxu0 0.0
    %5485 = vmatpush1.msra.mxu0 0.0
    %5486 = vmatprep.subr.mxu0 0.0
    %5487 = vmatpush1.msra.mxu0 0.0
    %5488 = vmatprep.mubr.f32.mxu0 0.0
    %5489 = vmatmul.mubr.f32.gmra.mrb[0].mxu0 %v5280
    %v5490 = vpop.f32.mrb[0].mxu0
    %v5491 = vadd.f32 %v5277, %v5490
    %v5492 = vpop.f32.mrb[0].mxu0
    %v5493 = vadd.f32 %v5277, %v5492
    %5494 = vdwg.mxu0
    %5495 = vmatprep.subr.mxu0 %v5191
    %5496 = vmatpush1.msra.mxu0 %v5190
    %5497 = vmatprep.subr.mxu0 %v5201
    %5498 = vmatpush1.msra.mxu0 %v5200
    %5499 = vmatprep.subr.mxu0 %v5211
    %5500 = vmatpush1.msra.mxu0 %v5210
    %5501 = vmatprep.subr.mxu0 %v5221
    %5502 = vmatpush1.msra.mxu0 %v5220
    %5503 = vmatprep.subr.mxu0 %v5231
    %5504 = vmatpush1.msra.mxu0 %v5230
    %5505 = vmatprep.subr.mxu0 %v5241
    %5506 = vmatpush1.msra.mxu0 %v5240
    %5507 = vmatprep.subr.mxu0 %v5251
    %5508 = vmatpush1.msra.mxu0 %v5250
    %5509 = vmatprep.subr.mxu0 %v5261
    %5510 = vmatpush1.msra.mxu0 %v5260
    %5511 = vmatprep.subr.mxu0 %v5271
    %5512 = vmatpush1.msra.mxu0 %v5270
    %5513 = vmatprep.subr.mxu0 0.0
    %5514 = vmatpush1.msra.mxu0 0.0
    %5515 = vmatprep.subr.mxu0 0.0
    %5516 = vmatpush1.msra.mxu0 0.0
    %5517 = vmatprep.subr.mxu0 0.0
    %5518 = vmatpush1.msra.mxu0 0.0
    %5519 = vmatprep.subr.mxu0 0.0
    %5520 = vmatpush1.msra.mxu0 0.0
    %5521 = vmatprep.subr.mxu0 0.0
    %5522 = vmatpush1.msra.mxu0 0.0
    %5523 = vmatprep.subr.mxu0 0.0
    %5524 = vmatpush1.msra.mxu0 0.0
    %5525 = vmatprep.subr.mxu0 0.0
    %5526 = vmatpush1.msra.mxu0 0.0
    %5527 = vmatprep.subr.mxu0 0.0
    %5528 = vmatpush1.msra.mxu0 0.0
    %5529 = vmatprep.subr.mxu0 0.0
    %5530 = vmatpush1.msra.mxu0 0.0
    %5531 = vmatprep.subr.mxu0 0.0
    %5532 = vmatpush1.msra.mxu0 0.0
    %5533 = vmatprep.subr.mxu0 0.0
    %5534 = vmatpush1.msra.mxu0 0.0
    %5535 = vmatprep.subr.mxu0 0.0
    %5536 = vmatpush1.msra.mxu0 0.0
    %5537 = vmatprep.subr.mxu0 0.0
    %5538 = vmatpush1.msra.mxu0 0.0
    %5539 = vmatprep.subr.mxu0 0.0
    %5540 = vmatpush1.msra.mxu0 0.0
    %5541 = vmatprep.subr.mxu0 0.0
    %5542 = vmatpush1.msra.mxu0 0.0
    %5543 = vmatprep.subr.mxu0 0.0
    %5544 = vmatpush1.msra.mxu0 0.0
    %5545 = vmatprep.subr.mxu0 0.0
    %5546 = vmatpush1.msra.mxu0 0.0
    %5547 = vmatprep.subr.mxu0 0.0
    %5548 = vmatpush1.msra.mxu0 0.0
    %5549 = vmatprep.subr.mxu0 0.0
    %5550 = vmatpush1.msra.mxu0 0.0
    %5551 = vmatprep.subr.mxu0 0.0
    %5552 = vmatpush1.msra.mxu0 0.0
    %5553 = vmatprep.subr.mxu0 0.0
    %5554 = vmatpush1.msra.mxu0 0.0
    %5555 = vmatprep.subr.mxu0 0.0
    %5556 = vmatpush1.msra.mxu0 0.0
    %5557 = vmatprep.subr.mxu0 0.0
    %5558 = vmatpush1.msra.mxu0 0.0
    %5559 = vmatprep.mubr.f32.mxu0 0.0
    %5560 = vmatmul.mubr.f32.gmra.mrb[0].mxu0 %v5280
    %v5561 = vpop.f32.mrb[0].mxu0
    %v5562 = vadd.f32 %v5277, %v5561
    %v5563 = vpop.f32.mrb[0].mxu0
    %v5564 = vadd.f32 %v5277, %v5563
    %5565 = vdwg.mxu0
    %5566 = vmatprep.subr.mxu0 %v5193
    %5567 = vmatpush1.msra.mxu0 %v5192
    %5568 = vmatprep.subr.mxu0 %v5203
    %5569 = vmatpush1.msra.mxu0 %v5202
    %5570 = vmatprep.subr.mxu0 %v5213
    %5571 = vmatpush1.msra.mxu0 %v5212
    %5572 = vmatprep.subr.mxu0 %v5223
    %5573 = vmatpush1.msra.mxu0 %v5222
    %5574 = vmatprep.subr.mxu0 %v5233
    %5575 = vmatpush1.msra.mxu0 %v5232
    %5576 = vmatprep.subr.mxu0 %v5243
    %5577 = vmatpush1.msra.mxu0 %v5242
    %5578 = vmatprep.subr.mxu0 %v5253
    %5579 = vmatpush1.msra.mxu0 %v5252
    %5580 = vmatprep.subr.mxu0 %v5263
    %5581 = vmatpush1.msra.mxu0 %v5262
    %5582 = vmatprep.subr.mxu0 %v5273
    %5583 = vmatpush1.msra.mxu0 %v5272
    %5584 = vmatprep.subr.mxu0 0.0
    %5585 = vmatpush1.msra.mxu0 0.0
    %5586 = vmatprep.subr.mxu0 0.0
    %5587 = vmatpush1.msra.mxu0 0.0
    %5588 = vmatprep.subr.mxu0 0.0
    %5589 = vmatpush1.msra.mxu0 0.0
    %5590 = vmatprep.subr.mxu0 0.0
    %5591 = vmatpush1.msra.mxu0 0.0
    %5592 = vmatprep.subr.mxu0 0.0
    %5593 = vmatpush1.msra.mxu0 0.0
    %5594 = vmatprep.subr.mxu0 0.0
    %5595 = vmatpush1.msra.mxu0 0.0
    %5596 = vmatprep.subr.mxu0 0.0
    %5597 = vmatpush1.msra.mxu0 0.0
    %5598 = vmatprep.subr.mxu0 0.0
    %5599 = vmatpush1.msra.mxu0 0.0
    %5600 = vmatprep.subr.mxu0 0.0
    %5601 = vmatpush1.msra.mxu0 0.0
    %5602 = vmatprep.subr.mxu0 0.0
    %5603 = vmatpush1.msra.mxu0 0.0
    %5604 = vmatprep.subr.mxu0 0.0
    %5605 = vmatpush1.msra.mxu0 0.0
    %5606 = vmatprep.subr.mxu0 0.0
    %5607 = vmatpush1.msra.mxu0 0.0
    %5608 = vmatprep.subr.mxu0 0.0
    %5609 = vmatpush1.msra.mxu0 0.0
    %5610 = vmatprep.subr.mxu0 0.0
    %5611 = vmatpush1.msra.mxu0 0.0
    %5612 = vmatprep.subr.mxu0 0.0
    %5613 = vmatpush1.msra.mxu0 0.0
    %5614 = vmatprep.subr.mxu0 0.0
    %5615 = vmatpush1.msra.mxu0 0.0
    %5616 = vmatprep.subr.mxu0 0.0
    %5617 = vmatpush1.msra.mxu0 0.0
    %5618 = vmatprep.subr.mxu0 0.0
    %5619 = vmatpush1.msra.mxu0 0.0
    %5620 = vmatprep.subr.mxu0 0.0
    %5621 = vmatpush1.msra.mxu0 0.0
    %5622 = vmatprep.subr.mxu0 0.0
    %5623 = vmatpush1.msra.mxu0 0.0
    %5624 = vmatprep.subr.mxu0 0.0
    %5625 = vmatpush1.msra.mxu0 0.0
    %5626 = vmatprep.subr.mxu0 0.0
    %5627 = vmatpush1.msra.mxu0 0.0
    %5628 = vmatprep.subr.mxu0 0.0
    %5629 = vmatpush1.msra.mxu0 0.0
    %5630 = vmatprep.mubr.f32.mxu0 0.0
    %5631 = vmatmul.mubr.f32.gmra.mrb[0].mxu0 %v5280
    %v5632 = vpop.f32.mrb[0].mxu0
    %v5633 = vadd.f32 %v5277, %v5632
    %v5634 = vpop.f32.mrb[0].mxu0
    %v5635 = vadd.f32 %v5277, %v5634
    %5636 = vdwg.mxu0
    %v5637 = vmax.f32 %v5349, 0.0
    %v5638 = vmax.f32 %v5351, 0.0
    %v5639 = vmax.f32 %v5420, 0.0
    %v5640 = vmax.f32 %v5422, 0.0
    %v5641 = vmax.f32 %v5491, 0.0
    %v5642 = vmax.f32 %v5493, 0.0
    %v5643 = vmax.f32 %v5562, 0.0
    %v5644 = vmax.f32 %v5564, 0.0
    %v5645 = vmax.f32 %v5633, 0.0
    %v5646 = vmax.f32 %v5635, 0.0
    %v5647 = vmul.f32 %v5637, %v1184
    %v5648 = vmul.f32 %v5638, %v1188
    %v5649 = vmul.f32 %v5639, %v1192
    %v5650 = vmul.f32 %v5640, %v1196
    %v5651 = vmul.f32 %v5641, %v1200
    %v5652 = vmul.f32 %v5642, %v1204
    %v5653 = vmul.f32 %v5643, %v1208
    %v5654 = vmul.f32 %v5644, %v1212
    %v5655 = vmul.f32 %v5645, %v1216
    %v5656 = vmul.f32 %v5646, %v1220
    %5657 = vst [vmem:[#allocation2 + $0x8] sm:$0xff] %v5647
    %5658 = vst [vmem:[#allocation2 + $0x10] sm:$0xff] %v5648
    %5659 = vst [vmem:[#allocation2 + $0x18] sm:$0xff] %v5649
    %5660 = vst [vmem:[#allocation2 + $0x20] sm:$0xff] %v5650
    %5661 = vst [vmem:[#allocation2 + $0x28] sm:$0xff] %v5651
    %5662 = vst [vmem:[#allocation2 + $0x30] sm:$0xff] %v5652
    %5663 = vst [vmem:[#allocation2 + $0x38] sm:$0xff] %v5653
    %5664 = vst [vmem:[#allocation2 + $0x40] sm:$0xff] %v5654
    %5665 = vst [vmem:[#allocation2 + $0x48] sm:$0xff] %v5655
    %5666 = vst [vmem:[#allocation2 + $0x50] sm:$0xff] %v5656
    %v5667 = vld [vmem:[#allocation2] sm:$0xff]
    %v5668 = vld [vmem:[#allocation2 + $0x8] sm:$0xff]
    %v5669 = vld [vmem:[#allocation2 + $0x10] sm:$0xff]
    %v5670 = vld [vmem:[#allocation2 + $0x18] sm:$0xff]
    %v5671 = vld [vmem:[#allocation2 + $0x20] sm:$0xff]
    %v5672 = vld [vmem:[#allocation2 + $0x28] sm:$0xff]
    %v5673 = vld [vmem:[#allocation2 + $0x30] sm:$0xff]
    %v5674 = vld [vmem:[#allocation2 + $0x38] sm:$0xff]
    %v5675 = vld [vmem:[#allocation2 + $0x40] sm:$0xff]
    %v5676 = vld [vmem:[#allocation2 + $0x48] sm:$0xff]
    %v5677 = vld [vmem:[#allocation2 + $0x50] sm:$0xff]
    %5689 = vrot.lane.b32.xlu0 %v5667, 50
    %v5690 = vpop.permute.xlu0 %5689
    %5691 = vrot.lane.b32.xlu0 %v5668, 50
    %v5692 = vpop.permute.xlu0 %5691
    %5693 = vrot.lane.b32.xlu0 %v5669, 50
    %v5694 = vpop.permute.xlu0 %5693
    %5695 = vrot.lane.b32.xlu0 %v5670, 50
    %v5696 = vpop.permute.xlu0 %5695
    %5697 = vrot.lane.b32.xlu0 %v5671, 50
    %v5698 = vpop.permute.xlu0 %5697
    %5699 = vrot.lane.b32.xlu0 %v5672, 50
    %v5700 = vpop.permute.xlu0 %5699
    %5701 = vrot.lane.b32.xlu0 %v5673, 50
    %v5702 = vpop.permute.xlu0 %5701
    %5703 = vrot.lane.b32.xlu0 %v5674, 50
    %v5704 = vpop.permute.xlu0 %5703
    %5705 = vrot.lane.b32.xlu0 %v5675, 50
    %v5706 = vpop.permute.xlu0 %5705
    %5707 = vrot.lane.b32.xlu0 %v5676, 50
    %v5708 = vpop.permute.xlu0 %5707
    %5709 = vrot.lane.b32.xlu0 %v5677, 50
    %v5710 = vpop.permute.xlu0 %5709
    %v5711 = vsel %vm3505, %v5690, %v5692
    %v5712 = vsel %vm3505, %v5692, %v5694
    %v5713 = vsel %vm3505, %v5694, %v5696
    %v5714 = vsel %vm3505, %v5696, %v5698
    %v5715 = vsel %vm3505, %v5698, %v5700
    %v5716 = vsel %vm3505, %v5700, %v5702
    %v5717 = vsel %vm3505, %v5702, %v5704
    %v5718 = vsel %vm3505, %v5704, %v5706
    %v5719 = vsel %vm3505, %v5706, %v5708
    %v5720 = vsel %vm3505, %v5708, %v5710
    %5731 = vst [vmem:[#allocation3] sm:$0xff] %v5711
    %5732 = vst [vmem:[#allocation3 + $0x8] sm:$0xff] %v5712
    %5733 = vst [vmem:[#allocation3 + $0x10] sm:$0xff] %v5713
    %5734 = vst [vmem:[#allocation3 + $0x18] sm:$0xff] %v5714
    %5735 = vst [vmem:[#allocation3 + $0x20] sm:$0xff] %v5715
    %5736 = vst [vmem:[#allocation3 + $0x28] sm:$0xff] %v5716
    %5737 = vst [vmem:[#allocation3 + $0x30] sm:$0xff] %v5717
    %5738 = vst [vmem:[#allocation3 + $0x38] sm:$0xff] %v5718
    %5739 = vst [vmem:[#allocation3 + $0x40] sm:$0xff] %v5719
    %5740 = vst [vmem:[#allocation3 + $0x48] sm:$0xff] %v5720
    %v5741 = vld [vmem:[#allocation2] sm:$0xff]
    %v5742 = vld [vmem:[#allocation2 + $0x8] sm:$0xff]
    %v5743 = vld [vmem:[#allocation2 + $0x10] sm:$0xff]
    %v5744 = vld [vmem:[#allocation2 + $0x18] sm:$0xff]
    %v5745 = vld [vmem:[#allocation2 + $0x20] sm:$0xff]
    %v5746 = vld [vmem:[#allocation2 + $0x28] sm:$0xff]
    %v5747 = vld [vmem:[#allocation2 + $0x30] sm:$0xff]
    %v5748 = vld [vmem:[#allocation2 + $0x38] sm:$0xff]
    %v5749 = vld [vmem:[#allocation2 + $0x40] sm:$0xff]
    %v5750 = vld [vmem:[#allocation2 + $0x48] sm:$0xff]
    %v5751 = vld [vmem:[#allocation2 + $0x50] sm:$0xff]
    %5763 = vrot.lane.b32.xlu0 %v5741, 48
    %v5764 = vpop.permute.xlu0 %5763
    %5765 = vrot.lane.b32.xlu0 %v5742, 48
    %v5766 = vpop.permute.xlu0 %5765
    %5767 = vrot.lane.b32.xlu0 %v5743, 48
    %v5768 = vpop.permute.xlu0 %5767
    %5769 = vrot.lane.b32.xlu0 %v5744, 48
    %v5770 = vpop.permute.xlu0 %5769
    %5771 = vrot.lane.b32.xlu0 %v5745, 48
    %v5772 = vpop.permute.xlu0 %5771
    %5773 = vrot.lane.b32.xlu0 %v5746, 48
    %v5774 = vpop.permute.xlu0 %5773
    %5775 = vrot.lane.b32.xlu0 %v5747, 48
    %v5776 = vpop.permute.xlu0 %5775
    %5777 = vrot.lane.b32.xlu0 %v5748, 48
    %v5778 = vpop.permute.xlu0 %5777
    %5779 = vrot.lane.b32.xlu0 %v5749, 48
    %v5780 = vpop.permute.xlu0 %5779
    %5781 = vrot.lane.b32.xlu0 %v5750, 48
    %v5782 = vpop.permute.xlu0 %5781
    %5783 = vrot.lane.b32.xlu0 %v5751, 48
    %v5784 = vpop.permute.xlu0 %5783
    %v5785 = vsel %vm3580, %v5764, %v5766
    %v5786 = vsel %vm3580, %v5766, %v5768
    %v5787 = vsel %vm3580, %v5768, %v5770
    %v5788 = vsel %vm3580, %v5770, %v5772
    %v5789 = vsel %vm3580, %v5772, %v5774
    %v5790 = vsel %vm3580, %v5774, %v5776
    %v5791 = vsel %vm3580, %v5776, %v5778
    %v5792 = vsel %vm3580, %v5778, %v5780
    %v5793 = vsel %vm3580, %v5780, %v5782
    %v5794 = vsel %vm3580, %v5782, %v5784
    %5805 = vst [vmem:[#allocation3 + $0x50] sm:$0xff] %v5785
    %5806 = vst [vmem:[#allocation3 + $0x58] sm:$0xff] %v5786
    %5807 = vst [vmem:[#allocation3 + $0x60] sm:$0xff] %v5787
    %5808 = vst [vmem:[#allocation3 + $0x68] sm:$0xff] %v5788
    %5809 = vst [vmem:[#allocation3 + $0x70] sm:$0xff] %v5789
    %5810 = vst [vmem:[#allocation3 + $0x78] sm:$0xff] %v5790
    %5811 = vst [vmem:[#allocation3 + $0x80] sm:$0xff] %v5791
    %5812 = vst [vmem:[#allocation3 + $0x88] sm:$0xff] %v5792
    %5813 = vst [vmem:[#allocation3 + $0x90] sm:$0xff] %v5793
    %5814 = vst [vmem:[#allocation3 + $0x98] sm:$0xff] %v5794
    %v5815 = vld [vmem:[#allocation2] sm:$0xff]
    %v5816 = vld [vmem:[#allocation2 + $0x8] sm:$0xff]
    %v5817 = vld [vmem:[#allocation2 + $0x10] sm:$0xff]
    %v5818 = vld [vmem:[#allocation2 + $0x18] sm:$0xff]
    %v5819 = vld [vmem:[#allocation2 + $0x20] sm:$0xff]
    %v5820 = vld [vmem:[#allocation2 + $0x28] sm:$0xff]
    %v5821 = vld [vmem:[#allocation2 + $0x30] sm:$0xff]
    %v5822 = vld [vmem:[#allocation2 + $0x38] sm:$0xff]
    %v5823 = vld [vmem:[#allocation2 + $0x40] sm:$0xff]
    %v5824 = vld [vmem:[#allocation2 + $0x48] sm:$0xff]
    %v5825 = vld [vmem:[#allocation2 + $0x50] sm:$0xff]
    %5837 = vrot.lane.b32.xlu0 %v5815, 46
    %v5838 = vpop.permute.xlu0 %5837
    %5839 = vrot.lane.b32.xlu0 %v5816, 46
    %v5840 = vpop.permute.xlu0 %5839
    %5841 = vrot.lane.b32.xlu0 %v5817, 46
    %v5842 = vpop.permute.xlu0 %5841
    %5843 = vrot.lane.b32.xlu0 %v5818, 46
    %v5844 = vpop.permute.xlu0 %5843
    %5845 = vrot.lane.b32.xlu0 %v5819, 46
    %v5846 = vpop.permute.xlu0 %5845
    %5847 = vrot.lane.b32.xlu0 %v5820, 46
    %v5848 = vpop.permute.xlu0 %5847
    %5849 = vrot.lane.b32.xlu0 %v5821, 46
    %v5850 = vpop.permute.xlu0 %5849
    %5851 = vrot.lane.b32.xlu0 %v5822, 46
    %v5852 = vpop.permute.xlu0 %5851
    %5853 = vrot.lane.b32.xlu0 %v5823, 46
    %v5854 = vpop.permute.xlu0 %5853
    %5855 = vrot.lane.b32.xlu0 %v5824, 46
    %v5856 = vpop.permute.xlu0 %5855
    %5857 = vrot.lane.b32.xlu0 %v5825, 46
    %v5858 = vpop.permute.xlu0 %5857
    %v5859 = vsel %vm3655, %v5838, %v5840
    %v5860 = vsel %vm3655, %v5840, %v5842
    %v5861 = vsel %vm3655, %v5842, %v5844
    %v5862 = vsel %vm3655, %v5844, %v5846
    %v5863 = vsel %vm3655, %v5846, %v5848
    %v5864 = vsel %vm3655, %v5848, %v5850
    %v5865 = vsel %vm3655, %v5850, %v5852
    %v5866 = vsel %vm3655, %v5852, %v5854
    %v5867 = vsel %vm3655, %v5854, %v5856
    %v5868 = vsel %vm3655, %v5856, %v5858
    %5879 = vst [vmem:[#allocation3 + $0xa0] sm:$0xff] %v5859
    %5880 = vst [vmem:[#allocation3 + $0xa8] sm:$0xff] %v5860
    %5881 = vst [vmem:[#allocation3 + $0xb0] sm:$0xff] %v5861
    %5882 = vst [vmem:[#allocation3 + $0xb8] sm:$0xff] %v5862
    %5883 = vst [vmem:[#allocation3 + $0xc0] sm:$0xff] %v5863
    %5884 = vst [vmem:[#allocation3 + $0xc8] sm:$0xff] %v5864
    %5885 = vst [vmem:[#allocation3 + $0xd0] sm:$0xff] %v5865
    %5886 = vst [vmem:[#allocation3 + $0xd8] sm:$0xff] %v5866
    %5887 = vst [vmem:[#allocation3 + $0xe0] sm:$0xff] %v5867
    %5888 = vst [vmem:[#allocation3 + $0xe8] sm:$0xff] %v5868
    %v5889 = vld [vmem:[#allocation2] sm:$0xff]
    %v5890 = vld [vmem:[#allocation2 + $0x8] sm:$0xff]
    %v5891 = vld [vmem:[#allocation2 + $0x10] sm:$0xff]
    %v5892 = vld [vmem:[#allocation2 + $0x18] sm:$0xff]
    %v5893 = vld [vmem:[#allocation2 + $0x20] sm:$0xff]
    %v5894 = vld [vmem:[#allocation2 + $0x28] sm:$0xff]
    %v5895 = vld [vmem:[#allocation2 + $0x30] sm:$0xff]
    %v5896 = vld [vmem:[#allocation2 + $0x38] sm:$0xff]
    %v5897 = vld [vmem:[#allocation2 + $0x40] sm:$0xff]
    %v5898 = vld [vmem:[#allocation2 + $0x48] sm:$0xff]
    %v5899 = vld [vmem:[#allocation2 + $0x50] sm:$0xff]
    %5911 = vrot.lane.b32.xlu0 %v5889, 2
    %v5912 = vpop.permute.xlu0 %5911
    %5913 = vrot.lane.b32.xlu0 %v5890, 2
    %v5914 = vpop.permute.xlu0 %5913
    %5915 = vrot.lane.b32.xlu0 %v5891, 2
    %v5916 = vpop.permute.xlu0 %5915
    %5917 = vrot.lane.b32.xlu0 %v5892, 2
    %v5918 = vpop.permute.xlu0 %5917
    %5919 = vrot.lane.b32.xlu0 %v5893, 2
    %v5920 = vpop.permute.xlu0 %5919
    %5921 = vrot.lane.b32.xlu0 %v5894, 2
    %v5922 = vpop.permute.xlu0 %5921
    %5923 = vrot.lane.b32.xlu0 %v5895, 2
    %v5924 = vpop.permute.xlu0 %5923
    %5925 = vrot.lane.b32.xlu0 %v5896, 2
    %v5926 = vpop.permute.xlu0 %5925
    %5927 = vrot.lane.b32.xlu0 %v5897, 2
    %v5928 = vpop.permute.xlu0 %5927
    %5929 = vrot.lane.b32.xlu0 %v5898, 2
    %v5930 = vpop.permute.xlu0 %5929
    %5931 = vrot.lane.b32.xlu0 %v5899, 2
    %v5932 = vpop.permute.xlu0 %5931
    %v5933 = vsel %vm3730, %v5912, %v5914
    %v5934 = vsel %vm3730, %v5914, %v5916
    %v5935 = vsel %vm3730, %v5916, %v5918
    %v5936 = vsel %vm3730, %v5918, %v5920
    %v5937 = vsel %vm3730, %v5920, %v5922
    %v5938 = vsel %vm3730, %v5922, %v5924
    %v5939 = vsel %vm3730, %v5924, %v5926
    %v5940 = vsel %vm3730, %v5926, %v5928
    %v5941 = vsel %vm3730, %v5928, %v5930
    %v5942 = vsel %vm3730, %v5930, %v5932
    %5953 = vst [vmem:[#allocation3 + $0xf0] sm:$0xff] %v5933
    %5954 = vst [vmem:[#allocation3 + $0xf8] sm:$0xff] %v5934
    %5955 = vst [vmem:[#allocation3 + $0x100] sm:$0xff] %v5935
    %5956 = vst [vmem:[#allocation3 + $0x108] sm:$0xff] %v5936
    %5957 = vst [vmem:[#allocation3 + $0x110] sm:$0xff] %v5937
    %5958 = vst [vmem:[#allocation3 + $0x118] sm:$0xff] %v5938
    %5959 = vst [vmem:[#allocation3 + $0x120] sm:$0xff] %v5939
    %5960 = vst [vmem:[#allocation3 + $0x128] sm:$0xff] %v5940
    %5961 = vst [vmem:[#allocation3 + $0x130] sm:$0xff] %v5941
    %5962 = vst [vmem:[#allocation3 + $0x138] sm:$0xff] %v5942
    %v5963 = vld [vmem:[#allocation2 + $0x8] sm:$0xff]
    %v5964 = vld [vmem:[#allocation2 + $0x10] sm:$0xff]
    %v5965 = vld [vmem:[#allocation2 + $0x18] sm:$0xff]
    %v5966 = vld [vmem:[#allocation2 + $0x20] sm:$0xff]
    %v5967 = vld [vmem:[#allocation2 + $0x28] sm:$0xff]
    %v5968 = vld [vmem:[#allocation2 + $0x30] sm:$0xff]
    %v5969 = vld [vmem:[#allocation2 + $0x38] sm:$0xff]
    %v5970 = vld [vmem:[#allocation2 + $0x40] sm:$0xff]
    %v5971 = vld [vmem:[#allocation2 + $0x48] sm:$0xff]
    %v5972 = vld [vmem:[#allocation2 + $0x50] sm:$0xff]
    %5973 = vst [vmem:[#allocation3 + $0x140] sm:$0xff] %v5963
    %5974 = vst [vmem:[#allocation3 + $0x148] sm:$0xff] %v5964
    %5975 = vst [vmem:[#allocation3 + $0x150] sm:$0xff] %v5965
    %5976 = vst [vmem:[#allocation3 + $0x158] sm:$0xff] %v5966
    %5977 = vst [vmem:[#allocation3 + $0x160] sm:$0xff] %v5967
    %5978 = vst [vmem:[#allocation3 + $0x168] sm:$0xff] %v5968
    %5979 = vst [vmem:[#allocation3 + $0x170] sm:$0xff] %v5969
    %5980 = vst [vmem:[#allocation3 + $0x178] sm:$0xff] %v5970
    %5981 = vst [vmem:[#allocation3 + $0x180] sm:$0xff] %v5971
    %5982 = vst [vmem:[#allocation3 + $0x188] sm:$0xff] %v5972
    %v5983 = vld [vmem:[#allocation2 + $0x8] sm:$0xff]
    %v5984 = vld [vmem:[#allocation2 + $0x10] sm:$0xff]
    %v5985 = vld [vmem:[#allocation2 + $0x18] sm:$0xff]
    %v5986 = vld [vmem:[#allocation2 + $0x20] sm:$0xff]
    %v5987 = vld [vmem:[#allocation2 + $0x28] sm:$0xff]
    %v5988 = vld [vmem:[#allocation2 + $0x30] sm:$0xff]
    %v5989 = vld [vmem:[#allocation2 + $0x38] sm:$0xff]
    %v5990 = vld [vmem:[#allocation2 + $0x40] sm:$0xff]
    %v5991 = vld [vmem:[#allocation2 + $0x48] sm:$0xff]
    %v5992 = vld [vmem:[#allocation2 + $0x50] sm:$0xff]
    %v5993 = vld [vmem:[#allocation2 + $0x58] sm:$0xff]
    %6005 = vrot.lane.b32.xlu0 %v5983, 126
    %v6006 = vpop.permute.xlu0 %6005
    %6007 = vrot.lane.b32.xlu0 %v5984, 126
    %v6008 = vpop.permute.xlu0 %6007
    %6009 = vrot.lane.b32.xlu0 %v5985, 126
    %v6010 = vpop.permute.xlu0 %6009
    %6011 = vrot.lane.b32.xlu0 %v5986, 126
    %v6012 = vpop.permute.xlu0 %6011
    %6013 = vrot.lane.b32.xlu0 %v5987, 126
    %v6014 = vpop.permute.xlu0 %6013
    %6015 = vrot.lane.b32.xlu0 %v5988, 126
    %v6016 = vpop.permute.xlu0 %6015
    %6017 = vrot.lane.b32.xlu0 %v5989, 126
    %v6018 = vpop.permute.xlu0 %6017
    %6019 = vrot.lane.b32.xlu0 %v5990, 126
    %v6020 = vpop.permute.xlu0 %6019
    %6021 = vrot.lane.b32.xlu0 %v5991, 126
    %v6022 = vpop.permute.xlu0 %6021
    %6023 = vrot.lane.b32.xlu0 %v5992, 126
    %v6024 = vpop.permute.xlu0 %6023
    %6025 = vrot.lane.b32.xlu0 %v5993, 126
    %v6026 = vpop.permute.xlu0 %6025
    %v6027 = vsel %vm3825, %v6006, %v6008
    %v6028 = vsel %vm3825, %v6008, %v6010
    %v6029 = vsel %vm3825, %v6010, %v6012
    %v6030 = vsel %vm3825, %v6012, %v6014
    %v6031 = vsel %vm3825, %v6014, %v6016
    %v6032 = vsel %vm3825, %v6016, %v6018
    %v6033 = vsel %vm3825, %v6018, %v6020
    %v6034 = vsel %vm3825, %v6020, %v6022
    %v6035 = vsel %vm3825, %v6022, %v6024
    %v6036 = vsel %vm3825, %v6024, %v6026
    %6047 = vst [vmem:[#allocation3 + $0x190] sm:$0xff] %v6027
    %6048 = vst [vmem:[#allocation3 + $0x198] sm:$0xff] %v6028
    %6049 = vst [vmem:[#allocation3 + $0x1a0] sm:$0xff] %v6029
    %6050 = vst [vmem:[#allocation3 + $0x1a8] sm:$0xff] %v6030
    %6051 = vst [vmem:[#allocation3 + $0x1b0] sm:$0xff] %v6031
    %6052 = vst [vmem:[#allocation3 + $0x1b8] sm:$0xff] %v6032
    %6053 = vst [vmem:[#allocation3 + $0x1c0] sm:$0xff] %v6033
    %6054 = vst [vmem:[#allocation3 + $0x1c8] sm:$0xff] %v6034
    %6055 = vst [vmem:[#allocation3 + $0x1d0] sm:$0xff] %v6035
    %6056 = vst [vmem:[#allocation3 + $0x1d8] sm:$0xff] %v6036
    %v6057 = vld [vmem:[#allocation2 + $0x8] sm:$0xff]
    %v6058 = vld [vmem:[#allocation2 + $0x10] sm:$0xff]
    %v6059 = vld [vmem:[#allocation2 + $0x18] sm:$0xff]
    %v6060 = vld [vmem:[#allocation2 + $0x20] sm:$0xff]
    %v6061 = vld [vmem:[#allocation2 + $0x28] sm:$0xff]
    %v6062 = vld [vmem:[#allocation2 + $0x30] sm:$0xff]
    %v6063 = vld [vmem:[#allocation2 + $0x38] sm:$0xff]
    %v6064 = vld [vmem:[#allocation2 + $0x40] sm:$0xff]
    %v6065 = vld [vmem:[#allocation2 + $0x48] sm:$0xff]
    %v6066 = vld [vmem:[#allocation2 + $0x50] sm:$0xff]
    %v6067 = vld [vmem:[#allocation2 + $0x58] sm:$0xff]
    %6079 = vrot.lane.b32.xlu0 %v6057, 82
    %v6080 = vpop.permute.xlu0 %6079
    %6081 = vrot.lane.b32.xlu0 %v6058, 82
    %v6082 = vpop.permute.xlu0 %6081
    %6083 = vrot.lane.b32.xlu0 %v6059, 82
    %v6084 = vpop.permute.xlu0 %6083
    %6085 = vrot.lane.b32.xlu0 %v6060, 82
    %v6086 = vpop.permute.xlu0 %6085
    %6087 = vrot.lane.b32.xlu0 %v6061, 82
    %v6088 = vpop.permute.xlu0 %6087
    %6089 = vrot.lane.b32.xlu0 %v6062, 82
    %v6090 = vpop.permute.xlu0 %6089
    %6091 = vrot.lane.b32.xlu0 %v6063, 82
    %v6092 = vpop.permute.xlu0 %6091
    %6093 = vrot.lane.b32.xlu0 %v6064, 82
    %v6094 = vpop.permute.xlu0 %6093
    %6095 = vrot.lane.b32.xlu0 %v6065, 82
    %v6096 = vpop.permute.xlu0 %6095
    %6097 = vrot.lane.b32.xlu0 %v6066, 82
    %v6098 = vpop.permute.xlu0 %6097
    %6099 = vrot.lane.b32.xlu0 %v6067, 82
    %v6100 = vpop.permute.xlu0 %6099
    %v6101 = vsel %vm3900, %v6080, %v6082
    %v6102 = vsel %vm3900, %v6082, %v6084
    %v6103 = vsel %vm3900, %v6084, %v6086
    %v6104 = vsel %vm3900, %v6086, %v6088
    %v6105 = vsel %vm3900, %v6088, %v6090
    %v6106 = vsel %vm3900, %v6090, %v6092
    %v6107 = vsel %vm3900, %v6092, %v6094
    %v6108 = vsel %vm3900, %v6094, %v6096
    %v6109 = vsel %vm3900, %v6096, %v6098
    %v6110 = vsel %vm3900, %v6098, %v6100
    %6121 = vst [vmem:[#allocation3 + $0x1e0] sm:$0xff] %v6101
    %6122 = vst [vmem:[#allocation3 + $0x1e8] sm:$0xff] %v6102
    %6123 = vst [vmem:[#allocation3 + $0x1f0] sm:$0xff] %v6103
    %6124 = vst [vmem:[#allocation3 + $0x1f8] sm:$0xff] %v6104
    %6125 = vst [vmem:[#allocation3 + $0x200] sm:$0xff] %v6105
    %6126 = vst [vmem:[#allocation3 + $0x208] sm:$0xff] %v6106
    %6127 = vst [vmem:[#allocation3 + $0x210] sm:$0xff] %v6107
    %6128 = vst [vmem:[#allocation3 + $0x218] sm:$0xff] %v6108
    %6129 = vst [vmem:[#allocation3 + $0x220] sm:$0xff] %v6109
    %6130 = vst [vmem:[#allocation3 + $0x228] sm:$0xff] %v6110
    %v6131 = vld [vmem:[#allocation2 + $0x8] sm:$0xff]
    %v6132 = vld [vmem:[#allocation2 + $0x10] sm:$0xff]
    %v6133 = vld [vmem:[#allocation2 + $0x18] sm:$0xff]
    %v6134 = vld [vmem:[#allocation2 + $0x20] sm:$0xff]
    %v6135 = vld [vmem:[#allocation2 + $0x28] sm:$0xff]
    %v6136 = vld [vmem:[#allocation2 + $0x30] sm:$0xff]
    %v6137 = vld [vmem:[#allocation2 + $0x38] sm:$0xff]
    %v6138 = vld [vmem:[#allocation2 + $0x40] sm:$0xff]
    %v6139 = vld [vmem:[#allocation2 + $0x48] sm:$0xff]
    %v6140 = vld [vmem:[#allocation2 + $0x50] sm:$0xff]
    %v6141 = vld [vmem:[#allocation2 + $0x58] sm:$0xff]
    %6153 = vrot.lane.b32.xlu0 %v6131, 80
    %v6154 = vpop.permute.xlu0 %6153
    %6155 = vrot.lane.b32.xlu0 %v6132, 80
    %v6156 = vpop.permute.xlu0 %6155
    %6157 = vrot.lane.b32.xlu0 %v6133, 80
    %v6158 = vpop.permute.xlu0 %6157
    %6159 = vrot.lane.b32.xlu0 %v6134, 80
    %v6160 = vpop.permute.xlu0 %6159
    %6161 = vrot.lane.b32.xlu0 %v6135, 80
    %v6162 = vpop.permute.xlu0 %6161
    %6163 = vrot.lane.b32.xlu0 %v6136, 80
    %v6164 = vpop.permute.xlu0 %6163
    %6165 = vrot.lane.b32.xlu0 %v6137, 80
    %v6166 = vpop.permute.xlu0 %6165
    %6167 = vrot.lane.b32.xlu0 %v6138, 80
    %v6168 = vpop.permute.xlu0 %6167
    %6169 = vrot.lane.b32.xlu0 %v6139, 80
    %v6170 = vpop.permute.xlu0 %6169
    %6171 = vrot.lane.b32.xlu0 %v6140, 80
    %v6172 = vpop.permute.xlu0 %6171
    %6173 = vrot.lane.b32.xlu0 %v6141, 80
    %v6174 = vpop.permute.xlu0 %6173
    %v6175 = vsel %vm3975, %v6154, %v6156
    %v6176 = vsel %vm3975, %v6156, %v6158
    %v6177 = vsel %vm3975, %v6158, %v6160
    %v6178 = vsel %vm3975, %v6160, %v6162
    %v6179 = vsel %vm3975, %v6162, %v6164
    %v6180 = vsel %vm3975, %v6164, %v6166
    %v6181 = vsel %vm3975, %v6166, %v6168
    %v6182 = vsel %vm3975, %v6168, %v6170
    %v6183 = vsel %vm3975, %v6170, %v6172
    %v6184 = vsel %vm3975, %v6172, %v6174
    %6195 = vst [vmem:[#allocation3 + $0x230] sm:$0xff] %v6175
    %6196 = vst [vmem:[#allocation3 + $0x238] sm:$0xff] %v6176
    %6197 = vst [vmem:[#allocation3 + $0x240] sm:$0xff] %v6177
    %6198 = vst [vmem:[#allocation3 + $0x248] sm:$0xff] %v6178
    %6199 = vst [vmem:[#allocation3 + $0x250] sm:$0xff] %v6179
    %6200 = vst [vmem:[#allocation3 + $0x258] sm:$0xff] %v6180
    %6201 = vst [vmem:[#allocation3 + $0x260] sm:$0xff] %v6181
    %6202 = vst [vmem:[#allocation3 + $0x268] sm:$0xff] %v6182
    %6203 = vst [vmem:[#allocation3 + $0x270] sm:$0xff] %v6183
    %6204 = vst [vmem:[#allocation3 + $0x278] sm:$0xff] %v6184
    %v6205 = vld [vmem:[#allocation2 + $0x8] sm:$0xff]
    %v6206 = vld [vmem:[#allocation2 + $0x10] sm:$0xff]
    %v6207 = vld [vmem:[#allocation2 + $0x18] sm:$0xff]
    %v6208 = vld [vmem:[#allocation2 + $0x20] sm:$0xff]
    %v6209 = vld [vmem:[#allocation2 + $0x28] sm:$0xff]
    %v6210 = vld [vmem:[#allocation2 + $0x30] sm:$0xff]
    %v6211 = vld [vmem:[#allocation2 + $0x38] sm:$0xff]
    %v6212 = vld [vmem:[#allocation2 + $0x40] sm:$0xff]
    %v6213 = vld [vmem:[#allocation2 + $0x48] sm:$0xff]
    %v6214 = vld [vmem:[#allocation2 + $0x50] sm:$0xff]
    %v6215 = vld [vmem:[#allocation2 + $0x58] sm:$0xff]
    %6227 = vrot.lane.b32.xlu0 %v6205, 78
    %v6228 = vpop.permute.xlu0 %6227
    %6229 = vrot.lane.b32.xlu0 %v6206, 78
    %v6230 = vpop.permute.xlu0 %6229
    %6231 = vrot.lane.b32.xlu0 %v6207, 78
    %v6232 = vpop.permute.xlu0 %6231
    %6233 = vrot.lane.b32.xlu0 %v6208, 78
    %v6234 = vpop.permute.xlu0 %6233
    %6235 = vrot.lane.b32.xlu0 %v6209, 78
    %v6236 = vpop.permute.xlu0 %6235
    %6237 = vrot.lane.b32.xlu0 %v6210, 78
    %v6238 = vpop.permute.xlu0 %6237
    %6239 = vrot.lane.b32.xlu0 %v6211, 78
    %v6240 = vpop.permute.xlu0 %6239
    %6241 = vrot.lane.b32.xlu0 %v6212, 78
    %v6242 = vpop.permute.xlu0 %6241
    %6243 = vrot.lane.b32.xlu0 %v6213, 78
    %v6244 = vpop.permute.xlu0 %6243
    %6245 = vrot.lane.b32.xlu0 %v6214, 78
    %v6246 = vpop.permute.xlu0 %6245
    %6247 = vrot.lane.b32.xlu0 %v6215, 78
    %v6248 = vpop.permute.xlu0 %6247
    %v6249 = vsel %vm4050, %v6228, %v6230
    %v6250 = vsel %vm4050, %v6230, %v6232
    %v6251 = vsel %vm4050, %v6232, %v6234
    %v6252 = vsel %vm4050, %v6234, %v6236
    %v6253 = vsel %vm4050, %v6236, %v6238
    %v6254 = vsel %vm4050, %v6238, %v6240
    %v6255 = vsel %vm4050, %v6240, %v6242
    %v6256 = vsel %vm4050, %v6242, %v6244
    %v6257 = vsel %vm4050, %v6244, %v6246
    %v6258 = vsel %vm4050, %v6246, %v6248
    %6269 = vst [vmem:[#allocation3 + $0x280] sm:$0xff] %v6249
    %6270 = vst [vmem:[#allocation3 + $0x288] sm:$0xff] %v6250
    %6271 = vst [vmem:[#allocation3 + $0x290] sm:$0xff] %v6251
    %6272 = vst [vmem:[#allocation3 + $0x298] sm:$0xff] %v6252
    %6273 = vst [vmem:[#allocation3 + $0x2a0] sm:$0xff] %v6253
    %6274 = vst [vmem:[#allocation3 + $0x2a8] sm:$0xff] %v6254
    %6275 = vst [vmem:[#allocation3 + $0x2b0] sm:$0xff] %v6255
    %6276 = vst [vmem:[#allocation3 + $0x2b8] sm:$0xff] %v6256
    %6277 = vst [vmem:[#allocation3 + $0x2c0] sm:$0xff] %v6257
    %6278 = vst [vmem:[#allocation3 + $0x2c8] sm:$0xff] %v6258
    %v6279 = vld [vmem:[#allocation3] sm:$0xff]
    %v6280 = vld [vmem:[#allocation3 + $0x8] sm:$0xff]
    %v6281 = vld [vmem:[#allocation3 + $0x10] sm:$0xff]
    %v6282 = vld [vmem:[#allocation3 + $0x18] sm:$0xff]
    %v6283 = vld [vmem:[#allocation3 + $0x20] sm:$0xff]
    %v6284 = vld [vmem:[#allocation3 + $0x28] sm:$0xff]
    %v6285 = vld [vmem:[#allocation3 + $0x30] sm:$0xff]
    %v6286 = vld [vmem:[#allocation3 + $0x38] sm:$0xff]
    %v6287 = vld [vmem:[#allocation3 + $0x40] sm:$0xff]
    %v6288 = vld [vmem:[#allocation3 + $0x48] sm:$0xff]
    %v6289 = vld [vmem:[#allocation3 + $0x50] sm:$0xff]
    %v6290 = vld [vmem:[#allocation3 + $0x58] sm:$0xff]
    %v6291 = vld [vmem:[#allocation3 + $0x60] sm:$0xff]
    %v6292 = vld [vmem:[#allocation3 + $0x68] sm:$0xff]
    %v6293 = vld [vmem:[#allocation3 + $0x70] sm:$0xff]
    %v6294 = vld [vmem:[#allocation3 + $0x78] sm:$0xff]
    %v6295 = vld [vmem:[#allocation3 + $0x80] sm:$0xff]
    %v6296 = vld [vmem:[#allocation3 + $0x88] sm:$0xff]
    %v6297 = vld [vmem:[#allocation3 + $0x90] sm:$0xff]
    %v6298 = vld [vmem:[#allocation3 + $0x98] sm:$0xff]
    %v6299 = vld [vmem:[#allocation3 + $0xa0] sm:$0xff]
    %v6300 = vld [vmem:[#allocation3 + $0xa8] sm:$0xff]
    %v6301 = vld [vmem:[#allocation3 + $0xb0] sm:$0xff]
    %v6302 = vld [vmem:[#allocation3 + $0xb8] sm:$0xff]
    %v6303 = vld [vmem:[#allocation3 + $0xc0] sm:$0xff]
    %v6304 = vld [vmem:[#allocation3 + $0xc8] sm:$0xff]
    %v6305 = vld [vmem:[#allocation3 + $0xd0] sm:$0xff]
    %v6306 = vld [vmem:[#allocation3 + $0xd8] sm:$0xff]
    %v6307 = vld [vmem:[#allocation3 + $0xe0] sm:$0xff]
    %v6308 = vld [vmem:[#allocation3 + $0xe8] sm:$0xff]
    %v6309 = vld [vmem:[#allocation3 + $0xf0] sm:$0xff]
    %v6310 = vld [vmem:[#allocation3 + $0xf8] sm:$0xff]
    %v6311 = vld [vmem:[#allocation3 + $0x100] sm:$0xff]
    %v6312 = vld [vmem:[#allocation3 + $0x108] sm:$0xff]
    %v6313 = vld [vmem:[#allocation3 + $0x110] sm:$0xff]
    %v6314 = vld [vmem:[#allocation3 + $0x118] sm:$0xff]
    %v6315 = vld [vmem:[#allocation3 + $0x120] sm:$0xff]
    %v6316 = vld [vmem:[#allocation3 + $0x128] sm:$0xff]
    %v6317 = vld [vmem:[#allocation3 + $0x130] sm:$0xff]
    %v6318 = vld [vmem:[#allocation3 + $0x138] sm:$0xff]
    %v6319 = vld [vmem:[#allocation3 + $0x140] sm:$0xff]
    %v6320 = vld [vmem:[#allocation3 + $0x148] sm:$0xff]
    %v6321 = vld [vmem:[#allocation3 + $0x150] sm:$0xff]
    %v6322 = vld [vmem:[#allocation3 + $0x158] sm:$0xff]
    %v6323 = vld [vmem:[#allocation3 + $0x160] sm:$0xff]
    %v6324 = vld [vmem:[#allocation3 + $0x168] sm:$0xff]
    %v6325 = vld [vmem:[#allocation3 + $0x170] sm:$0xff]
    %v6326 = vld [vmem:[#allocation3 + $0x178] sm:$0xff]
    %v6327 = vld [vmem:[#allocation3 + $0x180] sm:$0xff]
    %v6328 = vld [vmem:[#allocation3 + $0x188] sm:$0xff]
    %v6329 = vld [vmem:[#allocation3 + $0x190] sm:$0xff]
    %v6330 = vld [vmem:[#allocation3 + $0x198] sm:$0xff]
    %v6331 = vld [vmem:[#allocation3 + $0x1a0] sm:$0xff]
    %v6332 = vld [vmem:[#allocation3 + $0x1a8] sm:$0xff]
    %v6333 = vld [vmem:[#allocation3 + $0x1b0] sm:$0xff]
    %v6334 = vld [vmem:[#allocation3 + $0x1b8] sm:$0xff]
    %v6335 = vld [vmem:[#allocation3 + $0x1c0] sm:$0xff]
    %v6336 = vld [vmem:[#allocation3 + $0x1c8] sm:$0xff]
    %v6337 = vld [vmem:[#allocation3 + $0x1d0] sm:$0xff]
    %v6338 = vld [vmem:[#allocation3 + $0x1d8] sm:$0xff]
    %v6339 = vld [vmem:[#allocation3 + $0x1e0] sm:$0xff]
    %v6340 = vld [vmem:[#allocation3 + $0x1e8] sm:$0xff]
    %v6341 = vld [vmem:[#allocation3 + $0x1f0] sm:$0xff]
    %v6342 = vld [vmem:[#allocation3 + $0x1f8] sm:$0xff]
    %v6343 = vld [vmem:[#allocation3 + $0x200] sm:$0xff]
    %v6344 = vld [vmem:[#allocation3 + $0x208] sm:$0xff]
    %v6345 = vld [vmem:[#allocation3 + $0x210] sm:$0xff]
    %v6346 = vld [vmem:[#allocation3 + $0x218] sm:$0xff]
    %v6347 = vld [vmem:[#allocation3 + $0x220] sm:$0xff]
    %v6348 = vld [vmem:[#allocation3 + $0x228] sm:$0xff]
    %v6349 = vld [vmem:[#allocation3 + $0x230] sm:$0xff]
    %v6350 = vld [vmem:[#allocation3 + $0x238] sm:$0xff]
    %v6351 = vld [vmem:[#allocation3 + $0x240] sm:$0xff]
    %v6352 = vld [vmem:[#allocation3 + $0x248] sm:$0xff]
    %v6353 = vld [vmem:[#allocation3 + $0x250] sm:$0xff]
    %v6354 = vld [vmem:[#allocation3 + $0x258] sm:$0xff]
    %v6355 = vld [vmem:[#allocation3 + $0x260] sm:$0xff]
    %v6356 = vld [vmem:[#allocation3 + $0x268] sm:$0xff]
    %v6357 = vld [vmem:[#allocation3 + $0x270] sm:$0xff]
    %v6358 = vld [vmem:[#allocation3 + $0x278] sm:$0xff]
    %v6359 = vld [vmem:[#allocation3 + $0x280] sm:$0xff]
    %v6360 = vld [vmem:[#allocation3 + $0x288] sm:$0xff]
    %v6361 = vld [vmem:[#allocation3 + $0x290] sm:$0xff]
    %v6362 = vld [vmem:[#allocation3 + $0x298] sm:$0xff]
    %v6363 = vld [vmem:[#allocation3 + $0x2a0] sm:$0xff]
    %v6364 = vld [vmem:[#allocation3 + $0x2a8] sm:$0xff]
    %v6365 = vld [vmem:[#allocation3 + $0x2b0] sm:$0xff]
    %v6366 = vld [vmem:[#allocation3 + $0x2b8] sm:$0xff]
    %v6367 = vld [vmem:[#allocation3 + $0x2c0] sm:$0xff]
    %v6368 = vld [vmem:[#allocation3 + $0x2c8] sm:$0xff]
    %6370 = vset.pattern.permute.xlu0 0
    %6371 = vperm.xlu0 %6370, %v72
    %v6372 = vpop.permute.xlu0 %6371
    %v6375 = vsel %vm810, %v66, 0
    %6377 = vmatprep.subr.mxu0 %v6280
    %6378 = vmatpush1.msra.mxu0 %v6279
    %6379 = vmatprep.subr.mxu0 %v6290
    %6380 = vmatpush1.msra.mxu0 %v6289
    %6381 = vmatprep.subr.mxu0 %v6300
    %6382 = vmatpush1.msra.mxu0 %v6299
    %6383 = vmatprep.subr.mxu0 %v6310
    %6384 = vmatpush1.msra.mxu0 %v6309
    %6385 = vmatprep.subr.mxu0 %v6320
    %6386 = vmatpush1.msra.mxu0 %v6319
    %6387 = vmatprep.subr.mxu0 %v6330
    %6388 = vmatpush1.msra.mxu0 %v6329
    %6389 = vmatprep.subr.mxu0 %v6340
    %6390 = vmatpush1.msra.mxu0 %v6339
    %6391 = vmatprep.subr.mxu0 %v6350
    %6392 = vmatpush1.msra.mxu0 %v6349
    %6393 = vmatprep.subr.mxu0 %v6360
    %6394 = vmatpush1.msra.mxu0 %v6359
    %6395 = vmatprep.subr.mxu0 0.0
    %6396 = vmatpush1.msra.mxu0 0.0
    %6397 = vmatprep.subr.mxu0 0.0
    %6398 = vmatpush1.msra.mxu0 0.0
    %6399 = vmatprep.subr.mxu0 0.0
    %6400 = vmatpush1.msra.mxu0 0.0
    %6401 = vmatprep.subr.mxu0 0.0
    %6402 = vmatpush1.msra.mxu0 0.0
    %6403 = vmatprep.subr.mxu0 0.0
    %6404 = vmatpush1.msra.mxu0 0.0
    %6405 = vmatprep.subr.mxu0 0.0
    %6406 = vmatpush1.msra.mxu0 0.0
    %6407 = vmatprep.subr.mxu0 0.0
    %6408 = vmatpush1.msra.mxu0 0.0
    %6409 = vmatprep.subr.mxu0 0.0
    %6410 = vmatpush1.msra.mxu0 0.0
    %6411 = vmatprep.subr.mxu0 0.0
    %6412 = vmatpush1.msra.mxu0 0.0
    %6413 = vmatprep.subr.mxu0 0.0
    %6414 = vmatpush1.msra.mxu0 0.0
    %6415 = vmatprep.subr.mxu0 0.0
    %6416 = vmatpush1.msra.mxu0 0.0
    %6417 = vmatprep.subr.mxu0 0.0
    %6418 = vmatpush1.msra.mxu0 0.0
    %6419 = vmatprep.subr.mxu0 0.0
    %6420 = vmatpush1.msra.mxu0 0.0
    %6421 = vmatprep.subr.mxu0 0.0
    %6422 = vmatpush1.msra.mxu0 0.0
    %6423 = vmatprep.subr.mxu0 0.0
    %6424 = vmatpush1.msra.mxu0 0.0
    %6425 = vmatprep.subr.mxu0 0.0
    %6426 = vmatpush1.msra.mxu0 0.0
    %6427 = vmatprep.subr.mxu0 0.0
    %6428 = vmatpush1.msra.mxu0 0.0
    %6429 = vmatprep.subr.mxu0 0.0
    %6430 = vmatpush1.msra.mxu0 0.0
    %6431 = vmatprep.subr.mxu0 0.0
    %6432 = vmatpush1.msra.mxu0 0.0
    %6433 = vmatprep.subr.mxu0 0.0
    %6434 = vmatpush1.msra.mxu0 0.0
    %6435 = vmatprep.subr.mxu0 0.0
    %6436 = vmatpush1.msra.mxu0 0.0
    %6437 = vmatprep.subr.mxu0 0.0
    %6438 = vmatpush1.msra.mxu0 0.0
    %6439 = vmatprep.subr.mxu0 0.0
    %6440 = vmatpush1.msra.mxu0 0.0
    %6441 = vmatprep.mubr.f32.mxu0 0.0
    %6442 = vmatmul.mubr.f32.gmra.mrb[0].mxu0 %v6375
    %v6443 = vpop.f32.mrb[0].mxu0
    %v6444 = vadd.f32 %v6372, %v6443
    %v6445 = vpop.f32.mrb[0].mxu0
    %v6446 = vadd.f32 %v6372, %v6445
    %6447 = vdwg.mxu0
    %6448 = vmatprep.subr.mxu0 %v6282
    %6449 = vmatpush1.msra.mxu0 %v6281
    %6450 = vmatprep.subr.mxu0 %v6292
    %6451 = vmatpush1.msra.mxu0 %v6291
    %6452 = vmatprep.subr.mxu0 %v6302
    %6453 = vmatpush1.msra.mxu0 %v6301
    %6454 = vmatprep.subr.mxu0 %v6312
    %6455 = vmatpush1.msra.mxu0 %v6311
    %6456 = vmatprep.subr.mxu0 %v6322
    %6457 = vmatpush1.msra.mxu0 %v6321
    %6458 = vmatprep.subr.mxu0 %v6332
    %6459 = vmatpush1.msra.mxu0 %v6331
    %6460 = vmatprep.subr.mxu0 %v6342
    %6461 = vmatpush1.msra.mxu0 %v6341
    %6462 = vmatprep.subr.mxu0 %v6352
    %6463 = vmatpush1.msra.mxu0 %v6351
    %6464 = vmatprep.subr.mxu0 %v6362
    %6465 = vmatpush1.msra.mxu0 %v6361
    %6466 = vmatprep.subr.mxu0 0.0
    %6467 = vmatpush1.msra.mxu0 0.0
    %6468 = vmatprep.subr.mxu0 0.0
    %6469 = vmatpush1.msra.mxu0 0.0
    %6470 = vmatprep.subr.mxu0 0.0
    %6471 = vmatpush1.msra.mxu0 0.0
    %6472 = vmatprep.subr.mxu0 0.0
    %6473 = vmatpush1.msra.mxu0 0.0
    %6474 = vmatprep.subr.mxu0 0.0
    %6475 = vmatpush1.msra.mxu0 0.0
    %6476 = vmatprep.subr.mxu0 0.0
    %6477 = vmatpush1.msra.mxu0 0.0
    %6478 = vmatprep.subr.mxu0 0.0
    %6479 = vmatpush1.msra.mxu0 0.0
    %6480 = vmatprep.subr.mxu0 0.0
    %6481 = vmatpush1.msra.mxu0 0.0
    %6482 = vmatprep.subr.mxu0 0.0
    %6483 = vmatpush1.msra.mxu0 0.0
    %6484 = vmatprep.subr.mxu0 0.0
    %6485 = vmatpush1.msra.mxu0 0.0
    %6486 = vmatprep.subr.mxu0 0.0
    %6487 = vmatpush1.msra.mxu0 0.0
    %6488 = vmatprep.subr.mxu0 0.0
    %6489 = vmatpush1.msra.mxu0 0.0
    %6490 = vmatprep.subr.mxu0 0.0
    %6491 = vmatpush1.msra.mxu0 0.0
    %6492 = vmatprep.subr.mxu0 0.0
    %6493 = vmatpush1.msra.mxu0 0.0
    %6494 = vmatprep.subr.mxu0 0.0
    %6495 = vmatpush1.msra.mxu0 0.0
    %6496 = vmatprep.subr.mxu0 0.0
    %6497 = vmatpush1.msra.mxu0 0.0
    %6498 = vmatprep.subr.mxu0 0.0
    %6499 = vmatpush1.msra.mxu0 0.0
    %6500 = vmatprep.subr.mxu0 0.0
    %6501 = vmatpush1.msra.mxu0 0.0
    %6502 = vmatprep.subr.mxu0 0.0
    %6503 = vmatpush1.msra.mxu0 0.0
    %6504 = vmatprep.subr.mxu0 0.0
    %6505 = vmatpush1.msra.mxu0 0.0
    %6506 = vmatprep.subr.mxu0 0.0
    %6507 = vmatpush1.msra.mxu0 0.0
    %6508 = vmatprep.subr.mxu0 0.0
    %6509 = vmatpush1.msra.mxu0 0.0
    %6510 = vmatprep.subr.mxu0 0.0
    %6511 = vmatpush1.msra.mxu0 0.0
    %6512 = vmatprep.mubr.f32.mxu0 0.0
    %6513 = vmatmul.mubr.f32.gmra.mrb[0].mxu0 %v6375
    %v6514 = vpop.f32.mrb[0].mxu0
    %v6515 = vadd.f32 %v6372, %v6514
    %v6516 = vpop.f32.mrb[0].mxu0
    %v6517 = vadd.f32 %v6372, %v6516
    %6518 = vdwg.mxu0
    %6519 = vmatprep.subr.mxu0 %v6284
    %6520 = vmatpush1.msra.mxu0 %v6283
    %6521 = vmatprep.subr.mxu0 %v6294
    %6522 = vmatpush1.msra.mxu0 %v6293
    %6523 = vmatprep.subr.mxu0 %v6304
    %6524 = vmatpush1.msra.mxu0 %v6303
    %6525 = vmatprep.subr.mxu0 %v6314
    %6526 = vmatpush1.msra.mxu0 %v6313
    %6527 = vmatprep.subr.mxu0 %v6324
    %6528 = vmatpush1.msra.mxu0 %v6323
    %6529 = vmatprep.subr.mxu0 %v6334
    %6530 = vmatpush1.msra.mxu0 %v6333
    %6531 = vmatprep.subr.mxu0 %v6344
    %6532 = vmatpush1.msra.mxu0 %v6343
    %6533 = vmatprep.subr.mxu0 %v6354
    %6534 = vmatpush1.msra.mxu0 %v6353
    %6535 = vmatprep.subr.mxu0 %v6364
    %6536 = vmatpush1.msra.mxu0 %v6363
    %6537 = vmatprep.subr.mxu0 0.0
    %6538 = vmatpush1.msra.mxu0 0.0
    %6539 = vmatprep.subr.mxu0 0.0
    %6540 = vmatpush1.msra.mxu0 0.0
    %6541 = vmatprep.subr.mxu0 0.0
    %6542 = vmatpush1.msra.mxu0 0.0
    %6543 = vmatprep.subr.mxu0 0.0
    %6544 = vmatpush1.msra.mxu0 0.0
    %6545 = vmatprep.subr.mxu0 0.0
    %6546 = vmatpush1.msra.mxu0 0.0
    %6547 = vmatprep.subr.mxu0 0.0
    %6548 = vmatpush1.msra.mxu0 0.0
    %6549 = vmatprep.subr.mxu0 0.0
    %6550 = vmatpush1.msra.mxu0 0.0
    %6551 = vmatprep.subr.mxu0 0.0
    %6552 = vmatpush1.msra.mxu0 0.0
    %6553 = vmatprep.subr.mxu0 0.0
    %6554 = vmatpush1.msra.mxu0 0.0
    %6555 = vmatprep.subr.mxu0 0.0
    %6556 = vmatpush1.msra.mxu0 0.0
    %6557 = vmatprep.subr.mxu0 0.0
    %6558 = vmatpush1.msra.mxu0 0.0
    %6559 = vmatprep.subr.mxu0 0.0
    %6560 = vmatpush1.msra.mxu0 0.0
    %6561 = vmatprep.subr.mxu0 0.0
    %6562 = vmatpush1.msra.mxu0 0.0
    %6563 = vmatprep.subr.mxu0 0.0
    %6564 = vmatpush1.msra.mxu0 0.0
    %6565 = vmatprep.subr.mxu0 0.0
    %6566 = vmatpush1.msra.mxu0 0.0
    %6567 = vmatprep.subr.mxu0 0.0
    %6568 = vmatpush1.msra.mxu0 0.0
    %6569 = vmatprep.subr.mxu0 0.0
    %6570 = vmatpush1.msra.mxu0 0.0
    %6571 = vmatprep.subr.mxu0 0.0
    %6572 = vmatpush1.msra.mxu0 0.0
    %6573 = vmatprep.subr.mxu0 0.0
    %6574 = vmatpush1.msra.mxu0 0.0
    %6575 = vmatprep.subr.mxu0 0.0
    %6576 = vmatpush1.msra.mxu0 0.0
    %6577 = vmatprep.subr.mxu0 0.0
    %6578 = vmatpush1.msra.mxu0 0.0
    %6579 = vmatprep.subr.mxu0 0.0
    %6580 = vmatpush1.msra.mxu0 0.0
    %6581 = vmatprep.subr.mxu0 0.0
    %6582 = vmatpush1.msra.mxu0 0.0
    %6583 = vmatprep.mubr.f32.mxu0 0.0
    %6584 = vmatmul.mubr.f32.gmra.mrb[0].mxu0 %v6375
    %v6585 = vpop.f32.mrb[0].mxu0
    %v6586 = vadd.f32 %v6372, %v6585
    %v6587 = vpop.f32.mrb[0].mxu0
    %v6588 = vadd.f32 %v6372, %v6587
    %6589 = vdwg.mxu0
    %6590 = vmatprep.subr.mxu0 %v6286
    %6591 = vmatpush1.msra.mxu0 %v6285
    %6592 = vmatprep.subr.mxu0 %v6296
    %6593 = vmatpush1.msra.mxu0 %v6295
    %6594 = vmatprep.subr.mxu0 %v6306
    %6595 = vmatpush1.msra.mxu0 %v6305
    %6596 = vmatprep.subr.mxu0 %v6316
    %6597 = vmatpush1.msra.mxu0 %v6315
    %6598 = vmatprep.subr.mxu0 %v6326
    %6599 = vmatpush1.msra.mxu0 %v6325
    %6600 = vmatprep.subr.mxu0 %v6336
    %6601 = vmatpush1.msra.mxu0 %v6335
    %6602 = vmatprep.subr.mxu0 %v6346
    %6603 = vmatpush1.msra.mxu0 %v6345
    %6604 = vmatprep.subr.mxu0 %v6356
    %6605 = vmatpush1.msra.mxu0 %v6355
    %6606 = vmatprep.subr.mxu0 %v6366
    %6607 = vmatpush1.msra.mxu0 %v6365
    %6608 = vmatprep.subr.mxu0 0.0
    %6609 = vmatpush1.msra.mxu0 0.0
    %6610 = vmatprep.subr.mxu0 0.0
    %6611 = vmatpush1.msra.mxu0 0.0
    %6612 = vmatprep.subr.mxu0 0.0
    %6613 = vmatpush1.msra.mxu0 0.0
    %6614 = vmatprep.subr.mxu0 0.0
    %6615 = vmatpush1.msra.mxu0 0.0
    %6616 = vmatprep.subr.mxu0 0.0
    %6617 = vmatpush1.msra.mxu0 0.0
    %6618 = vmatprep.subr.mxu0 0.0
    %6619 = vmatpush1.msra.mxu0 0.0
    %6620 = vmatprep.subr.mxu0 0.0
    %6621 = vmatpush1.msra.mxu0 0.0
    %6622 = vmatprep.subr.mxu0 0.0
    %6623 = vmatpush1.msra.mxu0 0.0
    %6624 = vmatprep.subr.mxu0 0.0
    %6625 = vmatpush1.msra.mxu0 0.0
    %6626 = vmatprep.subr.mxu0 0.0
    %6627 = vmatpush1.msra.mxu0 0.0
    %6628 = vmatprep.subr.mxu0 0.0
    %6629 = vmatpush1.msra.mxu0 0.0
    %6630 = vmatprep.subr.mxu0 0.0
    %6631 = vmatpush1.msra.mxu0 0.0
    %6632 = vmatprep.subr.mxu0 0.0
    %6633 = vmatpush1.msra.mxu0 0.0
    %6634 = vmatprep.subr.mxu0 0.0
    %6635 = vmatpush1.msra.mxu0 0.0
    %6636 = vmatprep.subr.mxu0 0.0
    %6637 = vmatpush1.msra.mxu0 0.0
    %6638 = vmatprep.subr.mxu0 0.0
    %6639 = vmatpush1.msra.mxu0 0.0
    %6640 = vmatprep.subr.mxu0 0.0
    %6641 = vmatpush1.msra.mxu0 0.0
    %6642 = vmatprep.subr.mxu0 0.0
    %6643 = vmatpush1.msra.mxu0 0.0
    %6644 = vmatprep.subr.mxu0 0.0
    %6645 = vmatpush1.msra.mxu0 0.0
    %6646 = vmatprep.subr.mxu0 0.0
    %6647 = vmatpush1.msra.mxu0 0.0
    %6648 = vmatprep.subr.mxu0 0.0
    %6649 = vmatpush1.msra.mxu0 0.0
    %6650 = vmatprep.subr.mxu0 0.0
    %6651 = vmatpush1.msra.mxu0 0.0
    %6652 = vmatprep.subr.mxu0 0.0
    %6653 = vmatpush1.msra.mxu0 0.0
    %6654 = vmatprep.mubr.f32.mxu0 0.0
    %6655 = vmatmul.mubr.f32.gmra.mrb[0].mxu0 %v6375
    %v6656 = vpop.f32.mrb[0].mxu0
    %v6657 = vadd.f32 %v6372, %v6656
    %v6658 = vpop.f32.mrb[0].mxu0
    %v6659 = vadd.f32 %v6372, %v6658
    %6660 = vdwg.mxu0
    %6661 = vmatprep.subr.mxu0 %v6288
    %6662 = vmatpush1.msra.mxu0 %v6287
    %6663 = vmatprep.subr.mxu0 %v6298
    %6664 = vmatpush1.msra.mxu0 %v6297
    %6665 = vmatprep.subr.mxu0 %v6308
    %6666 = vmatpush1.msra.mxu0 %v6307
    %6667 = vmatprep.subr.mxu0 %v6318
    %6668 = vmatpush1.msra.mxu0 %v6317
    %6669 = vmatprep.subr.mxu0 %v6328
    %6670 = vmatpush1.msra.mxu0 %v6327
    %6671 = vmatprep.subr.mxu0 %v6338
    %6672 = vmatpush1.msra.mxu0 %v6337
    %6673 = vmatprep.subr.mxu0 %v6348
    %6674 = vmatpush1.msra.mxu0 %v6347
    %6675 = vmatprep.subr.mxu0 %v6358
    %6676 = vmatpush1.msra.mxu0 %v6357
    %6677 = vmatprep.subr.mxu0 %v6368
    %6678 = vmatpush1.msra.mxu0 %v6367
    %6679 = vmatprep.subr.mxu0 0.0
    %6680 = vmatpush1.msra.mxu0 0.0
    %6681 = vmatprep.subr.mxu0 0.0
    %6682 = vmatpush1.msra.mxu0 0.0
    %6683 = vmatprep.subr.mxu0 0.0
    %6684 = vmatpush1.msra.mxu0 0.0
    %6685 = vmatprep.subr.mxu0 0.0
    %6686 = vmatpush1.msra.mxu0 0.0
    %6687 = vmatprep.subr.mxu0 0.0
    %6688 = vmatpush1.msra.mxu0 0.0
    %6689 = vmatprep.subr.mxu0 0.0
    %6690 = vmatpush1.msra.mxu0 0.0
    %6691 = vmatprep.subr.mxu0 0.0
    %6692 = vmatpush1.msra.mxu0 0.0
    %6693 = vmatprep.subr.mxu0 0.0
    %6694 = vmatpush1.msra.mxu0 0.0
    %6695 = vmatprep.subr.mxu0 0.0
    %6696 = vmatpush1.msra.mxu0 0.0
    %6697 = vmatprep.subr.mxu0 0.0
    %6698 = vmatpush1.msra.mxu0 0.0
    %6699 = vmatprep.subr.mxu0 0.0
    %6700 = vmatpush1.msra.mxu0 0.0
    %6701 = vmatprep.subr.mxu0 0.0
    %6702 = vmatpush1.msra.mxu0 0.0
    %6703 = vmatprep.subr.mxu0 0.0
    %6704 = vmatpush1.msra.mxu0 0.0
    %6705 = vmatprep.subr.mxu0 0.0
    %6706 = vmatpush1.msra.mxu0 0.0
    %6707 = vmatprep.subr.mxu0 0.0
    %6708 = vmatpush1.msra.mxu0 0.0
    %6709 = vmatprep.subr.mxu0 0.0
    %6710 = vmatpush1.msra.mxu0 0.0
    %6711 = vmatprep.subr.mxu0 0.0
    %6712 = vmatpush1.msra.mxu0 0.0
    %6713 = vmatprep.subr.mxu0 0.0
    %6714 = vmatpush1.msra.mxu0 0.0
    %6715 = vmatprep.subr.mxu0 0.0
    %6716 = vmatpush1.msra.mxu0 0.0
    %6717 = vmatprep.subr.mxu0 0.0
    %6718 = vmatpush1.msra.mxu0 0.0
    %6719 = vmatprep.subr.mxu0 0.0
    %6720 = vmatpush1.msra.mxu0 0.0
    %6721 = vmatprep.subr.mxu0 0.0
    %6722 = vmatpush1.msra.mxu0 0.0
    %6723 = vmatprep.subr.mxu0 0.0
    %6724 = vmatpush1.msra.mxu0 0.0
    %6725 = vmatprep.mubr.f32.mxu0 0.0
    %6726 = vmatmul.mubr.f32.gmra.mrb[0].mxu0 %v6375
    %v6727 = vpop.f32.mrb[0].mxu0
    %v6728 = vadd.f32 %v6372, %v6727
    %v6729 = vpop.f32.mrb[0].mxu0
    %v6730 = vadd.f32 %v6372, %v6729
    %6731 = vdwg.mxu0
    %v6732 = vmax.f32 %v6444, 0.0
    %v6733 = vmax.f32 %v6446, 0.0
    %v6734 = vmax.f32 %v6515, 0.0
    %v6735 = vmax.f32 %v6517, 0.0
    %v6736 = vmax.f32 %v6586, 0.0
    %v6737 = vmax.f32 %v6588, 0.0
    %v6738 = vmax.f32 %v6657, 0.0
    %v6739 = vmax.f32 %v6659, 0.0
    %v6740 = vmax.f32 %v6728, 0.0
    %v6741 = vmax.f32 %v6730, 0.0
    %v6742 = vmul.f32 %v6732, %v1184
    %v6743 = vmul.f32 %v6733, %v1188
    %v6744 = vmul.f32 %v6734, %v1192
    %v6745 = vmul.f32 %v6735, %v1196
    %v6746 = vmul.f32 %v6736, %v1200
    %v6747 = vmul.f32 %v6737, %v1204
    %v6748 = vmul.f32 %v6738, %v1208
    %v6749 = vmul.f32 %v6739, %v1212
    %v6750 = vmul.f32 %v6740, %v1216
    %v6751 = vmul.f32 %v6741, %v1220
    %v6752 = vadd.f32 %v3441, %v6742
    %v6753 = vadd.f32 %v3442, %v6743
    %v6754 = vadd.f32 %v3443, %v6744
    %v6755 = vadd.f32 %v3444, %v6745
    %v6756 = vadd.f32 %v3445, %v6746
    %v6757 = vadd.f32 %v3446, %v6747
    %v6758 = vadd.f32 %v3447, %v6748
    %v6759 = vadd.f32 %v3448, %v6749
    %v6760 = vadd.f32 %v3449, %v6750
    %v6761 = vadd.f32 %v3450, %v6751
    %6762 = vst [vmem:[#allocation4] sm:$0xff] %v6752
    %6763 = vst [vmem:[#allocation4 + $0x8] sm:$0xff] %v6753
    %6764 = vst [vmem:[#allocation4 + $0x10] sm:$0xff] %v6754
    %6765 = vst [vmem:[#allocation4 + $0x18] sm:$0xff] %v6755
    %6766 = vst [vmem:[#allocation4 + $0x20] sm:$0xff] %v6756
    %6767 = vst [vmem:[#allocation4 + $0x28] sm:$0xff] %v6757
    %6768 = vst [vmem:[#allocation4 + $0x30] sm:$0xff] %v6758
    %6769 = vst [vmem:[#allocation4 + $0x38] sm:$0xff] %v6759
    %6770 = vst [vmem:[#allocation4 + $0x40] sm:$0xff] %v6760
    %6771 = vst [vmem:[#allocation4 + $0x48] sm:$0xff] %v6761
    %v6772 = vld [vmem:[#allocation4] sm:$0xf]
    %v6775 = vunpack.c.l.s4 1966171168
    %v6776 = vunpack.c.0.s8 %v6775
    %v6777 = vlaneseq
    %v6778 = vshrl.u32 %v6777, 7
    %v6779 = vsub.s32 %v6776, %v6778
    %v6780 = vrot.slane %v6772, %v6779
    %v6781 = vcombine.high %v6780, %v6780
    %v6783 = vunpack.c.l.s4 1966171168
    %v6784 = vunpack.c.0.s8 %v6783
    %v6785 = vlaneseq
    %v6786 = vshrl.u32 %v6785, 7
    %v6787 = vsub.s32 %v6784, %v6786
    %v6788 = vrot.slane %v6780, %v6787
    %v6790 = vunpack.c.l.s4 1966171168
    %v6791 = vunpack.c.0.s8 %v6790
    %v6792 = vlaneseq
    %v6793 = vshrl.u32 %v6792, 7
    %v6794 = vsub.s32 %v6791, %v6793
    %v6795 = vrot.slane %v6781, %v6794
    %v6796 = vcombine.high %v6788, %v6788
    %v6797 = vcombine.high %v6795, %v6795
    %v6798 = vlaneseq
    %v6799 = vshrl.u32 %v6798, 7
    %v6800 = vsub.s32 0, %v6799
    %v6801 = vrot.slane %v6788, %v6800
    %v6802 = vlaneseq
    %v6803 = vshrl.u32 %v6802, 7
    %v6804 = vsub.s32 0, %v6803
    %v6805 = vrot.slane %v6795, %v6804
    %v6806 = vlaneseq
    %v6807 = vshrl.u32 %v6806, 7
    %v6808 = vsub.s32 0, %v6807
    %v6809 = vrot.slane %v6796, %v6808
    %v6810 = vlaneseq
    %v6811 = vshrl.u32 %v6810, 7
    %v6812 = vsub.s32 0, %v6811
    %v6813 = vrot.slane %v6797, %v6812
    %6814 = vrot.lane.b32.xlu0 %v6801, 28
    %v6815 = vpop.permute.xlu0 %6814
    %6816 = vrot.lane.b32.xlu0 %v6805, 28
    %v6817 = vpop.permute.xlu0 %6816
    %6818 = vrot.lane.b32.xlu0 %v6809, 28
    %v6819 = vpop.permute.xlu0 %6818
    %6820 = vrot.lane.b32.xlu0 %v6813, 28
    %v6821 = vpop.permute.xlu0 %6820
    %vm6826 = vcmask 122880
    %6827 = vst.msk [vmem:[#allocation5] sm:$0x1] %vm6826, %v6815
    %6828 = vst.msk [vmem:[#allocation5 + $0x10] sm:$0x1] %vm6826, %v6817
    %6829 = vst.msk [vmem:[#allocation5 + $0x20] sm:$0x1] %vm6826, %v6819
    %6830 = vst.msk [vmem:[#allocation5 + $0x30] sm:$0x1] %vm6826, %v6821
    %v6831 = vld [vmem:[#allocation4] sm:$0xf]
    %v6832 = vld [vmem:[#allocation4 + $0x8] sm:$0xf]
    %v6835 = vcombine.low %v6831, %v6832
    %v6837 = vunpack.c.l.s4 1966171168
    %v6838 = vunpack.c.0.s8 %v6837
    %v6839 = vlaneseq
    %v6840 = vshrl.u32 %v6839, 7
    %v6841 = vsub.s32 %v6838, %v6840
    %v6842 = vrot.slane %v6835, %v6841
    %v6843 = vcombine.high %v6842, %v6842
    %v6845 = vunpack.c.l.s4 1966171168
    %v6846 = vunpack.c.0.s8 %v6845
    %v6847 = vlaneseq
    %v6848 = vshrl.u32 %v6847, 7
    %v6849 = vsub.s32 %v6846, %v6848
    %v6850 = vrot.slane %v6842, %v6849
    %v6852 = vunpack.c.l.s4 1966171168
    %v6853 = vunpack.c.0.s8 %v6852
    %v6854 = vlaneseq
    %v6855 = vshrl.u32 %v6854, 7
    %v6856 = vsub.s32 %v6853, %v6855
    %v6857 = vrot.slane %v6843, %v6856
    %v6858 = vcombine.high %v6850, %v6850
    %v6859 = vcombine.high %v6857, %v6857
    %v6860 = vlaneseq
    %v6861 = vshrl.u32 %v6860, 7
    %v6862 = vsub.s32 0, %v6861
    %v6863 = vrot.slane %v6850, %v6862
    %v6864 = vlaneseq
    %v6865 = vshrl.u32 %v6864, 7
    %v6866 = vsub.s32 1, %v6865
    %v6867 = vrot.slane %v6850, %v6866
    %v6868 = vlaneseq
    %v6869 = vshrl.u32 %v6868, 7
    %v6870 = vsub.s32 0, %v6869
    %v6871 = vrot.slane %v6857, %v6870
    %v6872 = vlaneseq
    %v6873 = vshrl.u32 %v6872, 7
    %v6874 = vsub.s32 1, %v6873
    %v6875 = vrot.slane %v6857, %v6874
    %v6876 = vlaneseq
    %v6877 = vshrl.u32 %v6876, 7
    %v6878 = vsub.s32 0, %v6877
    %v6879 = vrot.slane %v6858, %v6878
    %v6880 = vlaneseq
    %v6881 = vshrl.u32 %v6880, 7
    %v6882 = vsub.s32 1, %v6881
    %v6883 = vrot.slane %v6858, %v6882
    %v6884 = vlaneseq
    %v6885 = vshrl.u32 %v6884, 7
    %v6886 = vsub.s32 0, %v6885
    %v6887 = vrot.slane %v6859, %v6886
    %v6888 = vlaneseq
    %v6889 = vshrl.u32 %v6888, 7
    %v6890 = vsub.s32 1, %v6889
    %v6891 = vrot.slane %v6859, %v6890
    %6892 = vrot.lane.b32.xlu0 %v6863, 4
    %v6893 = vpop.permute.xlu0 %6892
    %6894 = vrot.lane.b32.xlu0 %v6867, 4
    %v6895 = vpop.permute.xlu0 %6894
    %6896 = vrot.lane.b32.xlu0 %v6871, 4
    %v6897 = vpop.permute.xlu0 %6896
    %6898 = vrot.lane.b32.xlu0 %v6875, 4
    %v6899 = vpop.permute.xlu0 %6898
    %6900 = vrot.lane.b32.xlu0 %v6879, 4
    %v6901 = vpop.permute.xlu0 %6900
    %6902 = vrot.lane.b32.xlu0 %v6883, 4
    %v6903 = vpop.permute.xlu0 %6902
    %6904 = vrot.lane.b32.xlu0 %v6887, 4
    %v6905 = vpop.permute.xlu0 %6904
    %6906 = vrot.lane.b32.xlu0 %v6891, 4
    %v6907 = vpop.permute.xlu0 %6906
    %v6908 = vsel %vm4833, %v6893, %v6895
    %v6909 = vsel %vm4833, %v6897, %v6899
    %v6910 = vsel %vm4833, %v6901, %v6903
    %v6911 = vsel %vm4833, %v6905, %v6907
    %6916 = vst.msk [vmem:[#allocation5 + $0x1] sm:$0x1] %vm6826, %v6908
    %6917 = vst.msk [vmem:[#allocation5 + $0x11] sm:$0x1] %vm6826, %v6909
    %6918 = vst.msk [vmem:[#allocation5 + $0x21] sm:$0x1] %vm6826, %v6910
    %6919 = vst.msk [vmem:[#allocation5 + $0x31] sm:$0x1] %vm6826, %v6911
    %v6920 = vld [vmem:[#allocation4 + $0x8] sm:$0xf]
    %v6923 = vunpack.c.l.s4 1966171168
    %v6924 = vunpack.c.0.s8 %v6923
    %v6925 = vlaneseq
    %v6926 = vshrl.u32 %v6925, 7
    %v6927 = vsub.s32 %v6924, %v6926
    %v6928 = vrot.slane %v6920, %v6927
    %v6929 = vcombine.high %v6928, %v6928
    %v6931 = vunpack.c.l.s4 1966171168
    %v6932 = vunpack.c.0.s8 %v6931
    %v6933 = vlaneseq
    %v6934 = vshrl.u32 %v6933, 7
    %v6935 = vsub.s32 %v6932, %v6934
    %v6936 = vrot.slane %v6928, %v6935
    %v6938 = vunpack.c.l.s4 1966171168
    %v6939 = vunpack.c.0.s8 %v6938
    %v6940 = vlaneseq
    %v6941 = vshrl.u32 %v6940, 7
    %v6942 = vsub.s32 %v6939, %v6941
    %v6943 = vrot.slane %v6929, %v6942
    %v6944 = vcombine.high %v6936, %v6936
    %v6945 = vcombine.high %v6943, %v6943
    %v6946 = vlaneseq
    %v6947 = vshrl.u32 %v6946, 7
    %v6948 = vsub.s32 0, %v6947
    %v6949 = vrot.slane %v6936, %v6948
    %v6950 = vlaneseq
    %v6951 = vshrl.u32 %v6950, 7
    %v6952 = vsub.s32 0, %v6951
    %v6953 = vrot.slane %v6943, %v6952
    %v6954 = vlaneseq
    %v6955 = vshrl.u32 %v6954, 7
    %v6956 = vsub.s32 0, %v6955
    %v6957 = vrot.slane %v6944, %v6956
    %v6958 = vlaneseq
    %v6959 = vshrl.u32 %v6958, 7
    %v6960 = vsub.s32 0, %v6959
    %v6961 = vrot.slane %v6945, %v6960
    %6962 = vrot.lane.b32.xlu0 %v6949, 108
    %v6963 = vpop.permute.xlu0 %6962
    %6964 = vrot.lane.b32.xlu0 %v6953, 108
    %v6965 = vpop.permute.xlu0 %6964
    %6966 = vrot.lane.b32.xlu0 %v6957, 108
    %v6967 = vpop.permute.xlu0 %6966
    %6968 = vrot.lane.b32.xlu0 %v6961, 108
    %v6969 = vpop.permute.xlu0 %6968
    %6974 = vst.msk [vmem:[#allocation5 + $0x2] sm:$0x1] %vm6826, %v6963
    %6975 = vst.msk [vmem:[#allocation5 + $0x12] sm:$0x1] %vm6826, %v6965
    %6976 = vst.msk [vmem:[#allocation5 + $0x22] sm:$0x1] %vm6826, %v6967
    %6977 = vst.msk [vmem:[#allocation5 + $0x32] sm:$0x1] %vm6826, %v6969
    %v6978 = vld [vmem:[#allocation4 + $0x8] sm:$0xf]
    %v6981 = vunpack.c.l.s4 1966171168
    %v6982 = vunpack.c.0.s8 %v6981
    %v6983 = vlaneseq
    %v6984 = vshrl.u32 %v6983, 7
    %v6985 = vsub.s32 %v6982, %v6984
    %v6986 = vrot.slane %v6978, %v6985
    %v6987 = vcombine.high %v6986, %v6986
    %v6989 = vunpack.c.l.s4 1966171168
    %v6990 = vunpack.c.0.s8 %v6989
    %v6991 = vlaneseq
    %v6992 = vshrl.u32 %v6991, 7
    %v6993 = vsub.s32 %v6990, %v6992
    %v6994 = vrot.slane %v6986, %v6993
    %v6996 = vunpack.c.l.s4 1966171168
    %v6997 = vunpack.c.0.s8 %v6996
    %v6998 = vlaneseq
    %v6999 = vshrl.u32 %v6998, 7
    %v7000 = vsub.s32 %v6997, %v6999
    %v7001 = vrot.slane %v6987, %v7000
    %v7002 = vcombine.high %v6994, %v6994
    %v7003 = vcombine.high %v7001, %v7001
    %v7004 = vlaneseq
    %v7005 = vshrl.u32 %v7004, 7
    %v7006 = vsub.s32 0, %v7005
    %v7007 = vrot.slane %v6994, %v7006
    %v7008 = vlaneseq
    %v7009 = vshrl.u32 %v7008, 7
    %v7010 = vsub.s32 0, %v7009
    %v7011 = vrot.slane %v7001, %v7010
    %v7012 = vlaneseq
    %v7013 = vshrl.u32 %v7012, 7
    %v7014 = vsub.s32 0, %v7013
    %v7015 = vrot.slane %v7002, %v7014
    %v7016 = vlaneseq
    %v7017 = vshrl.u32 %v7016, 7
    %v7018 = vsub.s32 0, %v7017
    %v7019 = vrot.slane %v7003, %v7018
    %7020 = vrot.lane.b32.xlu0 %v7007, 84
    %v7021 = vpop.permute.xlu0 %7020
    %7022 = vrot.lane.b32.xlu0 %v7011, 84
    %v7023 = vpop.permute.xlu0 %7022
    %7024 = vrot.lane.b32.xlu0 %v7015, 84
    %v7025 = vpop.permute.xlu0 %7024
    %7026 = vrot.lane.b32.xlu0 %v7019, 84
    %v7027 = vpop.permute.xlu0 %7026
    %7032 = vst.msk [vmem:[#allocation5 + $0x3] sm:$0x1] %vm6826, %v7021
    %7033 = vst.msk [vmem:[#allocation5 + $0x13] sm:$0x1] %vm6826, %v7023
    %7034 = vst.msk [vmem:[#allocation5 + $0x23] sm:$0x1] %vm6826, %v7025
    %7035 = vst.msk [vmem:[#allocation5 + $0x33] sm:$0x1] %vm6826, %v7027
    %v7036 = vld [vmem:[#allocation4 + $0x8] sm:$0xf]
    %v7039 = vunpack.c.l.s4 1966171168
    %v7040 = vunpack.c.0.s8 %v7039
    %v7041 = vlaneseq
    %v7042 = vshrl.u32 %v7041, 7
    %v7043 = vsub.s32 %v7040, %v7042
    %v7044 = vrot.slane %v7036, %v7043
    %v7045 = vcombine.high %v7044, %v7044
    %v7047 = vunpack.c.l.s4 1966171168
    %v7048 = vunpack.c.0.s8 %v7047
    %v7049 = vlaneseq
    %v7050 = vshrl.u32 %v7049, 7
    %v7051 = vsub.s32 %v7048, %v7050
    %v7052 = vrot.slane %v7044, %v7051
    %v7054 = vunpack.c.l.s4 1966171168
    %v7055 = vunpack.c.0.s8 %v7054
    %v7056 = vlaneseq
    %v7057 = vshrl.u32 %v7056, 7
    %v7058 = vsub.s32 %v7055, %v7057
    %v7059 = vrot.slane %v7045, %v7058
    %v7060 = vcombine.high %v7052, %v7052
    %v7061 = vcombine.high %v7059, %v7059
    %v7062 = vlaneseq
    %v7063 = vshrl.u32 %v7062, 7
    %v7064 = vsub.s32 0, %v7063
    %v7065 = vrot.slane %v7052, %v7064
    %v7066 = vlaneseq
    %v7067 = vshrl.u32 %v7066, 7
    %v7068 = vsub.s32 0, %v7067
    %v7069 = vrot.slane %v7059, %v7068
    %v7070 = vlaneseq
    %v7071 = vshrl.u32 %v7070, 7
    %v7072 = vsub.s32 0, %v7071
    %v7073 = vrot.slane %v7060, %v7072
    %v7074 = vlaneseq
    %v7075 = vshrl.u32 %v7074, 7
    %v7076 = vsub.s32 0, %v7075
    %v7077 = vrot.slane %v7061, %v7076
    %7078 = vrot.lane.b32.xlu0 %v7065, 60
    %v7079 = vpop.permute.xlu0 %7078
    %7080 = vrot.lane.b32.xlu0 %v7069, 60
    %v7081 = vpop.permute.xlu0 %7080
    %7082 = vrot.lane.b32.xlu0 %v7073, 60
    %v7083 = vpop.permute.xlu0 %7082
    %7084 = vrot.lane.b32.xlu0 %v7077, 60
    %v7085 = vpop.permute.xlu0 %7084
    %7090 = vst.msk [vmem:[#allocation5 + $0x4] sm:$0x1] %vm6826, %v7079
    %7091 = vst.msk [vmem:[#allocation5 + $0x14] sm:$0x1] %vm6826, %v7081
    %7092 = vst.msk [vmem:[#allocation5 + $0x24] sm:$0x1] %vm6826, %v7083
    %7093 = vst.msk [vmem:[#allocation5 + $0x34] sm:$0x1] %vm6826, %v7085
    %v7094 = vld [vmem:[#allocation4 + $0x8] sm:$0xf]
    %v7097 = vunpack.c.l.s4 1966171168
    %v7098 = vunpack.c.0.s8 %v7097
    %v7099 = vlaneseq
    %v7100 = vshrl.u32 %v7099, 7
    %v7101 = vsub.s32 %v7098, %v7100
    %v7102 = vrot.slane %v7094, %v7101
    %v7103 = vcombine.high %v7102, %v7102
    %v7105 = vunpack.c.l.s4 1966171168
    %v7106 = vunpack.c.0.s8 %v7105
    %v7107 = vlaneseq
    %v7108 = vshrl.u32 %v7107, 7
    %v7109 = vsub.s32 %v7106, %v7108
    %v7110 = vrot.slane %v7102, %v7109
    %v7112 = vunpack.c.l.s4 1966171168
    %v7113 = vunpack.c.0.s8 %v7112
    %v7114 = vlaneseq
    %v7115 = vshrl.u32 %v7114, 7
    %v7116 = vsub.s32 %v7113, %v7115
    %v7117 = vrot.slane %v7103, %v7116
    %v7118 = vcombine.high %v7110, %v7110
    %v7119 = vcombine.high %v7117, %v7117
    %v7120 = vlaneseq
    %v7121 = vshrl.u32 %v7120, 7
    %v7122 = vsub.s32 0, %v7121
    %v7123 = vrot.slane %v7110, %v7122
    %v7124 = vlaneseq
    %v7125 = vshrl.u32 %v7124, 7
    %v7126 = vsub.s32 0, %v7125
    %v7127 = vrot.slane %v7117, %v7126
    %v7128 = vlaneseq
    %v7129 = vshrl.u32 %v7128, 7
    %v7130 = vsub.s32 0, %v7129
    %v7131 = vrot.slane %v7118, %v7130
    %v7132 = vlaneseq
    %v7133 = vshrl.u32 %v7132, 7
    %v7134 = vsub.s32 0, %v7133
    %v7135 = vrot.slane %v7119, %v7134
    %7136 = vrot.lane.b32.xlu0 %v7123, 36
    %v7137 = vpop.permute.xlu0 %7136
    %7138 = vrot.lane.b32.xlu0 %v7127, 36
    %v7139 = vpop.permute.xlu0 %7138
    %7140 = vrot.lane.b32.xlu0 %v7131, 36
    %v7141 = vpop.permute.xlu0 %7140
    %7142 = vrot.lane.b32.xlu0 %v7135, 36
    %v7143 = vpop.permute.xlu0 %7142
    %7148 = vst.msk [vmem:[#allocation5 + $0x5] sm:$0x1] %vm6826, %v7137
    %7149 = vst.msk [vmem:[#allocation5 + $0x15] sm:$0x1] %vm6826, %v7139
    %7150 = vst.msk [vmem:[#allocation5 + $0x25] sm:$0x1] %vm6826, %v7141
    %7151 = vst.msk [vmem:[#allocation5 + $0x35] sm:$0x1] %vm6826, %v7143
    %v7152 = vld [vmem:[#allocation4 + $0x8] sm:$0xf]
    %v7153 = vld [vmem:[#allocation4 + $0x10] sm:$0xf]
    %v7156 = vcombine.low %v7152, %v7153
    %v7158 = vunpack.c.l.s4 1966171168
    %v7159 = vunpack.c.0.s8 %v7158
    %v7160 = vlaneseq
    %v7161 = vshrl.u32 %v7160, 7
    %v7162 = vsub.s32 %v7159, %v7161
    %v7163 = vrot.slane %v7156, %v7162
    %v7164 = vcombine.high %v7163, %v7163
    %v7166 = vunpack.c.l.s4 1966171168
    %v7167 = vunpack.c.0.s8 %v7166
    %v7168 = vlaneseq
    %v7169 = vshrl.u32 %v7168, 7
    %v7170 = vsub.s32 %v7167, %v7169
    %v7171 = vrot.slane %v7163, %v7170
    %v7173 = vunpack.c.l.s4 1966171168
    %v7174 = vunpack.c.0.s8 %v7173
    %v7175 = vlaneseq
    %v7176 = vshrl.u32 %v7175, 7
    %v7177 = vsub.s32 %v7174, %v7176
    %v7178 = vrot.slane %v7164, %v7177
    %v7179 = vcombine.high %v7171, %v7171
    %v7180 = vcombine.high %v7178, %v7178
    %v7181 = vlaneseq
    %v7182 = vshrl.u32 %v7181, 7
    %v7183 = vsub.s32 0, %v7182
    %v7184 = vrot.slane %v7171, %v7183
    %v7185 = vlaneseq
    %v7186 = vshrl.u32 %v7185, 7
    %v7187 = vsub.s32 1, %v7186
    %v7188 = vrot.slane %v7171, %v7187
    %v7189 = vlaneseq
    %v7190 = vshrl.u32 %v7189, 7
    %v7191 = vsub.s32 0, %v7190
    %v7192 = vrot.slane %v7178, %v7191
    %v7193 = vlaneseq
    %v7194 = vshrl.u32 %v7193, 7
    %v7195 = vsub.s32 1, %v7194
    %v7196 = vrot.slane %v7178, %v7195
    %v7197 = vlaneseq
    %v7198 = vshrl.u32 %v7197, 7
    %v7199 = vsub.s32 0, %v7198
    %v7200 = vrot.slane %v7179, %v7199
    %v7201 = vlaneseq
    %v7202 = vshrl.u32 %v7201, 7
    %v7203 = vsub.s32 1, %v7202
    %v7204 = vrot.slane %v7179, %v7203
    %v7205 = vlaneseq
    %v7206 = vshrl.u32 %v7205, 7
    %v7207 = vsub.s32 0, %v7206
    %v7208 = vrot.slane %v7180, %v7207
    %v7209 = vlaneseq
    %v7210 = vshrl.u32 %v7209, 7
    %v7211 = vsub.s32 1, %v7210
    %v7212 = vrot.slane %v7180, %v7211
    %7213 = vrot.lane.b32.xlu0 %v7184, 12
    %v7214 = vpop.permute.xlu0 %7213
    %7215 = vrot.lane.b32.xlu0 %v7188, 12
    %v7216 = vpop.permute.xlu0 %7215
    %7217 = vrot.lane.b32.xlu0 %v7192, 12
    %v7218 = vpop.permute.xlu0 %7217
    %7219 = vrot.lane.b32.xlu0 %v7196, 12
    %v7220 = vpop.permute.xlu0 %7219
    %7221 = vrot.lane.b32.xlu0 %v7200, 12
    %v7222 = vpop.permute.xlu0 %7221
    %7223 = vrot.lane.b32.xlu0 %v7204, 12
    %v7224 = vpop.permute.xlu0 %7223
    %7225 = vrot.lane.b32.xlu0 %v7208, 12
    %v7226 = vpop.permute.xlu0 %7225
    %7227 = vrot.lane.b32.xlu0 %v7212, 12
    %v7228 = vpop.permute.xlu0 %7227
    %vm7229 = vcmask 97280
    %v7230 = vsel %vm7229, %v7214, %v7216
    %v7231 = vsel %vm7229, %v7218, %v7220
    %v7232 = vsel %vm7229, %v7222, %v7224
    %v7233 = vsel %vm7229, %v7226, %v7228
    %7238 = vst.msk [vmem:[#allocation5 + $0x6] sm:$0x1] %vm6826, %v7230
    %7239 = vst.msk [vmem:[#allocation5 + $0x16] sm:$0x1] %vm6826, %v7231
    %7240 = vst.msk [vmem:[#allocation5 + $0x26] sm:$0x1] %vm6826, %v7232
    %7241 = vst.msk [vmem:[#allocation5 + $0x36] sm:$0x1] %vm6826, %v7233
    %v7242 = vld [vmem:[#allocation4 + $0x10] sm:$0xf]
    %v7245 = vunpack.c.l.s4 1966171168
    %v7246 = vunpack.c.0.s8 %v7245
    %v7247 = vlaneseq
    %v7248 = vshrl.u32 %v7247, 7
    %v7249 = vsub.s32 %v7246, %v7248
    %v7250 = vrot.slane %v7242, %v7249
    %v7251 = vcombine.high %v7250, %v7250
    %v7253 = vunpack.c.l.s4 1966171168
    %v7254 = vunpack.c.0.s8 %v7253
    %v7255 = vlaneseq
    %v7256 = vshrl.u32 %v7255, 7
    %v7257 = vsub.s32 %v7254, %v7256
    %v7258 = vrot.slane %v7250, %v7257
    %v7260 = vunpack.c.l.s4 1966171168
    %v7261 = vunpack.c.0.s8 %v7260
    %v7262 = vlaneseq
    %v7263 = vshrl.u32 %v7262, 7
    %v7264 = vsub.s32 %v7261, %v7263
    %v7265 = vrot.slane %v7251, %v7264
    %v7266 = vcombine.high %v7258, %v7258
    %v7267 = vcombine.high %v7265, %v7265
    %v7268 = vlaneseq
    %v7269 = vshrl.u32 %v7268, 7
    %v7270 = vsub.s32 0, %v7269
    %v7271 = vrot.slane %v7258, %v7270
    %v7272 = vlaneseq
    %v7273 = vshrl.u32 %v7272, 7
    %v7274 = vsub.s32 0, %v7273
    %v7275 = vrot.slane %v7265, %v7274
    %v7276 = vlaneseq
    %v7277 = vshrl.u32 %v7276, 7
    %v7278 = vsub.s32 0, %v7277
    %v7279 = vrot.slane %v7266, %v7278
    %v7280 = vlaneseq
    %v7281 = vshrl.u32 %v7280, 7
    %v7282 = vsub.s32 0, %v7281
    %v7283 = vrot.slane %v7267, %v7282
    %7284 = vrot.lane.b32.xlu0 %v7271, 116
    %v7285 = vpop.permute.xlu0 %7284
    %7286 = vrot.lane.b32.xlu0 %v7275, 116
    %v7287 = vpop.permute.xlu0 %7286
    %7288 = vrot.lane.b32.xlu0 %v7279, 116
    %v7289 = vpop.permute.xlu0 %7288
    %7290 = vrot.lane.b32.xlu0 %v7283, 116
    %v7291 = vpop.permute.xlu0 %7290
    %7296 = vst.msk [vmem:[#allocation5 + $0x7] sm:$0x1] %vm6826, %v7285
    %7297 = vst.msk [vmem:[#allocation5 + $0x17] sm:$0x1] %vm6826, %v7287
    %7298 = vst.msk [vmem:[#allocation5 + $0x27] sm:$0x1] %vm6826, %v7289
    %7299 = vst.msk [vmem:[#allocation5 + $0x37] sm:$0x1] %vm6826, %v7291
    %v7300 = vld [vmem:[#allocation4 + $0x10] sm:$0xf]
    %v7303 = vunpack.c.l.s4 1966171168
    %v7304 = vunpack.c.0.s8 %v7303
    %v7305 = vlaneseq
    %v7306 = vshrl.u32 %v7305, 7
    %v7307 = vsub.s32 %v7304, %v7306
    %v7308 = vrot.slane %v7300, %v7307
    %v7309 = vcombine.high %v7308, %v7308
    %v7311 = vunpack.c.l.s4 1966171168
    %v7312 = vunpack.c.0.s8 %v7311
    %v7313 = vlaneseq
    %v7314 = vshrl.u32 %v7313, 7
    %v7315 = vsub.s32 %v7312, %v7314
    %v7316 = vrot.slane %v7308, %v7315
    %v7318 = vunpack.c.l.s4 1966171168
    %v7319 = vunpack.c.0.s8 %v7318
    %v7320 = vlaneseq
    %v7321 = vshrl.u32 %v7320, 7
    %v7322 = vsub.s32 %v7319, %v7321
    %v7323 = vrot.slane %v7309, %v7322
    %v7324 = vcombine.high %v7316, %v7316
    %v7325 = vcombine.high %v7323, %v7323
    %v7326 = vlaneseq
    %v7327 = vshrl.u32 %v7326, 7
    %v7328 = vsub.s32 0, %v7327
    %v7329 = vrot.slane %v7316, %v7328
    %v7330 = vlaneseq
    %v7331 = vshrl.u32 %v7330, 7
    %v7332 = vsub.s32 0, %v7331
    %v7333 = vrot.slane %v7323, %v7332
    %v7334 = vlaneseq
    %v7335 = vshrl.u32 %v7334, 7
    %v7336 = vsub.s32 0, %v7335
    %v7337 = vrot.slane %v7324, %v7336
    %v7338 = vlaneseq
    %v7339 = vshrl.u32 %v7338, 7
    %v7340 = vsub.s32 0, %v7339
    %v7341 = vrot.slane %v7325, %v7340
    %7342 = vrot.lane.b32.xlu0 %v7329, 92
    %v7343 = vpop.permute.xlu0 %7342
    %7344 = vrot.lane.b32.xlu0 %v7333, 92
    %v7345 = vpop.permute.xlu0 %7344
    %7346 = vrot.lane.b32.xlu0 %v7337, 92
    %v7347 = vpop.permute.xlu0 %7346
    %7348 = vrot.lane.b32.xlu0 %v7341, 92
    %v7349 = vpop.permute.xlu0 %7348
    %7354 = vst.msk [vmem:[#allocation5 + $0x8] sm:$0x1] %vm6826, %v7343
    %7355 = vst.msk [vmem:[#allocation5 + $0x18] sm:$0x1] %vm6826, %v7345
    %7356 = vst.msk [vmem:[#allocation5 + $0x28] sm:$0x1] %vm6826, %v7347
    %7357 = vst.msk [vmem:[#allocation5 + $0x38] sm:$0x1] %vm6826, %v7349
    %v7358 = vld [vmem:[#allocation4 + $0x10] sm:$0xf]
    %v7361 = vunpack.c.l.s4 1966171168
    %v7362 = vunpack.c.0.s8 %v7361
    %v7363 = vlaneseq
    %v7364 = vshrl.u32 %v7363, 7
    %v7365 = vsub.s32 %v7362, %v7364
    %v7366 = vrot.slane %v7358, %v7365
    %v7367 = vcombine.high %v7366, %v7366
    %v7369 = vunpack.c.l.s4 1966171168
    %v7370 = vunpack.c.0.s8 %v7369
    %v7371 = vlaneseq
    %v7372 = vshrl.u32 %v7371, 7
    %v7373 = vsub.s32 %v7370, %v7372
    %v7374 = vrot.slane %v7366, %v7373
    %v7376 = vunpack.c.l.s4 1966171168
    %v7377 = vunpack.c.0.s8 %v7376
    %v7378 = vlaneseq
    %v7379 = vshrl.u32 %v7378, 7
    %v7380 = vsub.s32 %v7377, %v7379
    %v7381 = vrot.slane %v7367, %v7380
    %v7382 = vcombine.high %v7374, %v7374
    %v7383 = vcombine.high %v7381, %v7381
    %v7384 = vlaneseq
    %v7385 = vshrl.u32 %v7384, 7
    %v7386 = vsub.s32 0, %v7385
    %v7387 = vrot.slane %v7374, %v7386
    %v7388 = vlaneseq
    %v7389 = vshrl.u32 %v7388, 7
    %v7390 = vsub.s32 0, %v7389
    %v7391 = vrot.slane %v7381, %v7390
    %v7392 = vlaneseq
    %v7393 = vshrl.u32 %v7392, 7
    %v7394 = vsub.s32 0, %v7393
    %v7395 = vrot.slane %v7382, %v7394
    %v7396 = vlaneseq
    %v7397 = vshrl.u32 %v7396, 7
    %v7398 = vsub.s32 0, %v7397
    %v7399 = vrot.slane %v7383, %v7398
    %7400 = vrot.lane.b32.xlu0 %v7387, 68
    %v7401 = vpop.permute.xlu0 %7400
    %7402 = vrot.lane.b32.xlu0 %v7391, 68
    %v7403 = vpop.permute.xlu0 %7402
    %7404 = vrot.lane.b32.xlu0 %v7395, 68
    %v7405 = vpop.permute.xlu0 %7404
    %7406 = vrot.lane.b32.xlu0 %v7399, 68
    %v7407 = vpop.permute.xlu0 %7406
    %7412 = vst.msk [vmem:[#allocation5 + $0x9] sm:$0x1] %vm6826, %v7401
    %7413 = vst.msk [vmem:[#allocation5 + $0x19] sm:$0x1] %vm6826, %v7403
    %7414 = vst.msk [vmem:[#allocation5 + $0x29] sm:$0x1] %vm6826, %v7405
    %7415 = vst.msk [vmem:[#allocation5 + $0x39] sm:$0x1] %vm6826, %v7407
    %v7416 = vld [vmem:[#allocation4 + $0x10] sm:$0xf]
    %v7419 = vunpack.c.l.s4 1966171168
    %v7420 = vunpack.c.0.s8 %v7419
    %v7421 = vlaneseq
    %v7422 = vshrl.u32 %v7421, 7
    %v7423 = vsub.s32 %v7420, %v7422
    %v7424 = vrot.slane %v7416, %v7423
    %v7425 = vcombine.high %v7424, %v7424
    %v7427 = vunpack.c.l.s4 1966171168
    %v7428 = vunpack.c.0.s8 %v7427
    %v7429 = vlaneseq
    %v7430 = vshrl.u32 %v7429, 7
    %v7431 = vsub.s32 %v7428, %v7430
    %v7432 = vrot.slane %v7424, %v7431
    %v7434 = vunpack.c.l.s4 1966171168
    %v7435 = vunpack.c.0.s8 %v7434
    %v7436 = vlaneseq
    %v7437 = vshrl.u32 %v7436, 7
    %v7438 = vsub.s32 %v7435, %v7437
    %v7439 = vrot.slane %v7425, %v7438
    %v7440 = vcombine.high %v7432, %v7432
    %v7441 = vcombine.high %v7439, %v7439
    %v7442 = vlaneseq
    %v7443 = vshrl.u32 %v7442, 7
    %v7444 = vsub.s32 0, %v7443
    %v7445 = vrot.slane %v7432, %v7444
    %v7446 = vlaneseq
    %v7447 = vshrl.u32 %v7446, 7
    %v7448 = vsub.s32 0, %v7447
    %v7449 = vrot.slane %v7439, %v7448
    %v7450 = vlaneseq
    %v7451 = vshrl.u32 %v7450, 7
    %v7452 = vsub.s32 0, %v7451
    %v7453 = vrot.slane %v7440, %v7452
    %v7454 = vlaneseq
    %v7455 = vshrl.u32 %v7454, 7
    %v7456 = vsub.s32 0, %v7455
    %v7457 = vrot.slane %v7441, %v7456
    %7458 = vrot.lane.b32.xlu0 %v7445, 44
    %v7459 = vpop.permute.xlu0 %7458
    %7460 = vrot.lane.b32.xlu0 %v7449, 44
    %v7461 = vpop.permute.xlu0 %7460
    %7462 = vrot.lane.b32.xlu0 %v7453, 44
    %v7463 = vpop.permute.xlu0 %7462
    %7464 = vrot.lane.b32.xlu0 %v7457, 44
    %v7465 = vpop.permute.xlu0 %7464
    %7470 = vst.msk [vmem:[#allocation5 + $0xa] sm:$0x1] %vm6826, %v7459
    %7471 = vst.msk [vmem:[#allocation5 + $0x1a] sm:$0x1] %vm6826, %v7461
    %7472 = vst.msk [vmem:[#allocation5 + $0x2a] sm:$0x1] %vm6826, %v7463
    %7473 = vst.msk [vmem:[#allocation5 + $0x3a] sm:$0x1] %vm6826, %v7465
    %v7474 = vld [vmem:[#allocation4 + $0x10] sm:$0xf]
    %v7477 = vunpack.c.l.s4 1966171168
    %v7478 = vunpack.c.0.s8 %v7477
    %v7479 = vlaneseq
    %v7480 = vshrl.u32 %v7479, 7
    %v7481 = vsub.s32 %v7478, %v7480
    %v7482 = vrot.slane %v7474, %v7481
    %v7483 = vcombine.high %v7482, %v7482
    %v7485 = vunpack.c.l.s4 1966171168
    %v7486 = vunpack.c.0.s8 %v7485
    %v7487 = vlaneseq
    %v7488 = vshrl.u32 %v7487, 7
    %v7489 = vsub.s32 %v7486, %v7488
    %v7490 = vrot.slane %v7482, %v7489
    %v7492 = vunpack.c.l.s4 1966171168
    %v7493 = vunpack.c.0.s8 %v7492
    %v7494 = vlaneseq
    %v7495 = vshrl.u32 %v7494, 7
    %v7496 = vsub.s32 %v7493, %v7495
    %v7497 = vrot.slane %v7483, %v7496
    %v7498 = vcombine.high %v7490, %v7490
    %v7499 = vcombine.high %v7497, %v7497
    %v7500 = vlaneseq
    %v7501 = vshrl.u32 %v7500, 7
    %v7502 = vsub.s32 0, %v7501
    %v7503 = vrot.slane %v7490, %v7502
    %v7504 = vlaneseq
    %v7505 = vshrl.u32 %v7504, 7
    %v7506 = vsub.s32 0, %v7505
    %v7507 = vrot.slane %v7497, %v7506
    %v7508 = vlaneseq
    %v7509 = vshrl.u32 %v7508, 7
    %v7510 = vsub.s32 0, %v7509
    %v7511 = vrot.slane %v7498, %v7510
    %v7512 = vlaneseq
    %v7513 = vshrl.u32 %v7512, 7
    %v7514 = vsub.s32 0, %v7513
    %v7515 = vrot.slane %v7499, %v7514
    %7516 = vrot.lane.b32.xlu0 %v7503, 20
    %v7517 = vpop.permute.xlu0 %7516
    %7518 = vrot.lane.b32.xlu0 %v7507, 20
    %v7519 = vpop.permute.xlu0 %7518
    %7520 = vrot.lane.b32.xlu0 %v7511, 20
    %v7521 = vpop.permute.xlu0 %7520
    %7522 = vrot.lane.b32.xlu0 %v7515, 20
    %v7523 = vpop.permute.xlu0 %7522
    %7528 = vst.msk [vmem:[#allocation5 + $0xb] sm:$0x1] %vm6826, %v7517
    %7529 = vst.msk [vmem:[#allocation5 + $0x1b] sm:$0x1] %vm6826, %v7519
    %7530 = vst.msk [vmem:[#allocation5 + $0x2b] sm:$0x1] %vm6826, %v7521
    %7531 = vst.msk [vmem:[#allocation5 + $0x3b] sm:$0x1] %vm6826, %v7523
    %v7532 = vld [vmem:[#allocation4 + $0x18] sm:$0xf]
    %v7535 = vunpack.c.l.s4 1966171168
    %v7536 = vunpack.c.0.s8 %v7535
    %v7537 = vlaneseq
    %v7538 = vshrl.u32 %v7537, 7
    %v7539 = vsub.s32 %v7536, %v7538
    %v7540 = vrot.slane %v7532, %v7539
    %v7541 = vcombine.high %v7540, %v7540
    %v7543 = vunpack.c.l.s4 1966171168
    %v7544 = vunpack.c.0.s8 %v7543
    %v7545 = vlaneseq
    %v7546 = vshrl.u32 %v7545, 7
    %v7547 = vsub.s32 %v7544, %v7546
    %v7548 = vrot.slane %v7540, %v7547
    %v7550 = vunpack.c.l.s4 1966171168
    %v7551 = vunpack.c.0.s8 %v7550
    %v7552 = vlaneseq
    %v7553 = vshrl.u32 %v7552, 7
    %v7554 = vsub.s32 %v7551, %v7553
    %v7555 = vrot.slane %v7541, %v7554
    %v7556 = vcombine.high %v7548, %v7548
    %v7557 = vcombine.high %v7555, %v7555
    %v7558 = vlaneseq
    %v7559 = vshrl.u32 %v7558, 7
    %v7560 = vsub.s32 0, %v7559
    %v7561 = vrot.slane %v7548, %v7560
    %v7562 = vlaneseq
    %v7563 = vshrl.u32 %v7562, 7
    %v7564 = vsub.s32 0, %v7563
    %v7565 = vrot.slane %v7555, %v7564
    %v7566 = vlaneseq
    %v7567 = vshrl.u32 %v7566, 7
    %v7568 = vsub.s32 0, %v7567
    %v7569 = vrot.slane %v7556, %v7568
    %v7570 = vlaneseq
    %v7571 = vshrl.u32 %v7570, 7
    %v7572 = vsub.s32 0, %v7571
    %v7573 = vrot.slane %v7557, %v7572
    %7574 = vrot.lane.b32.xlu0 %v7561, 124
    %v7575 = vpop.permute.xlu0 %7574
    %7576 = vrot.lane.b32.xlu0 %v7565, 124
    %v7577 = vpop.permute.xlu0 %7576
    %7578 = vrot.lane.b32.xlu0 %v7569, 124
    %v7579 = vpop.permute.xlu0 %7578
    %7580 = vrot.lane.b32.xlu0 %v7573, 124
    %v7581 = vpop.permute.xlu0 %7580
    %7586 = vst.msk [vmem:[#allocation5 + $0xc] sm:$0x1] %vm6826, %v7575
    %7587 = vst.msk [vmem:[#allocation5 + $0x1c] sm:$0x1] %vm6826, %v7577
    %7588 = vst.msk [vmem:[#allocation5 + $0x2c] sm:$0x1] %vm6826, %v7579
    %7589 = vst.msk [vmem:[#allocation5 + $0x3c] sm:$0x1] %vm6826, %v7581
    %v7590 = vld [vmem:[#allocation4 + $0x18] sm:$0xf]
    %v7593 = vunpack.c.l.s4 1966171168
    %v7594 = vunpack.c.0.s8 %v7593
    %v7595 = vlaneseq
    %v7596 = vshrl.u32 %v7595, 7
    %v7597 = vsub.s32 %v7594, %v7596
    %v7598 = vrot.slane %v7590, %v7597
    %v7599 = vcombine.high %v7598, %v7598
    %v7601 = vunpack.c.l.s4 1966171168
    %v7602 = vunpack.c.0.s8 %v7601
    %v7603 = vlaneseq
    %v7604 = vshrl.u32 %v7603, 7
    %v7605 = vsub.s32 %v7602, %v7604
    %v7606 = vrot.slane %v7598, %v7605
    %v7608 = vunpack.c.l.s4 1966171168
    %v7609 = vunpack.c.0.s8 %v7608
    %v7610 = vlaneseq
    %v7611 = vshrl.u32 %v7610, 7
    %v7612 = vsub.s32 %v7609, %v7611
    %v7613 = vrot.slane %v7599, %v7612
    %v7614 = vcombine.high %v7606, %v7606
    %v7615 = vcombine.high %v7613, %v7613
    %v7616 = vlaneseq
    %v7617 = vshrl.u32 %v7616, 7
    %v7618 = vsub.s32 0, %v7617
    %v7619 = vrot.slane %v7606, %v7618
    %v7620 = vlaneseq
    %v7621 = vshrl.u32 %v7620, 7
    %v7622 = vsub.s32 0, %v7621
    %v7623 = vrot.slane %v7613, %v7622
    %v7624 = vlaneseq
    %v7625 = vshrl.u32 %v7624, 7
    %v7626 = vsub.s32 0, %v7625
    %v7627 = vrot.slane %v7614, %v7626
    %v7628 = vlaneseq
    %v7629 = vshrl.u32 %v7628, 7
    %v7630 = vsub.s32 0, %v7629
    %v7631 = vrot.slane %v7615, %v7630
    %7632 = vrot.lane.b32.xlu0 %v7619, 100
    %v7633 = vpop.permute.xlu0 %7632
    %7634 = vrot.lane.b32.xlu0 %v7623, 100
    %v7635 = vpop.permute.xlu0 %7634
    %7636 = vrot.lane.b32.xlu0 %v7627, 100
    %v7637 = vpop.permute.xlu0 %7636
    %7638 = vrot.lane.b32.xlu0 %v7631, 100
    %v7639 = vpop.permute.xlu0 %7638
    %7644 = vst.msk [vmem:[#allocation5 + $0xd] sm:$0x1] %vm6826, %v7633
    %7645 = vst.msk [vmem:[#allocation5 + $0x1d] sm:$0x1] %vm6826, %v7635
    %7646 = vst.msk [vmem:[#allocation5 + $0x2d] sm:$0x1] %vm6826, %v7637
    %7647 = vst.msk [vmem:[#allocation5 + $0x3d] sm:$0x1] %vm6826, %v7639
    %v7648 = vld [vmem:[#allocation4 + $0x18] sm:$0xf]
    %v7651 = vunpack.c.l.s4 1966171168
    %v7652 = vunpack.c.0.s8 %v7651
    %v7653 = vlaneseq
    %v7654 = vshrl.u32 %v7653, 7
    %v7655 = vsub.s32 %v7652, %v7654
    %v7656 = vrot.slane %v7648, %v7655
    %v7657 = vcombine.high %v7656, %v7656
    %v7659 = vunpack.c.l.s4 1966171168
    %v7660 = vunpack.c.0.s8 %v7659
    %v7661 = vlaneseq
    %v7662 = vshrl.u32 %v7661, 7
    %v7663 = vsub.s32 %v7660, %v7662
    %v7664 = vrot.slane %v7656, %v7663
    %v7666 = vunpack.c.l.s4 1966171168
    %v7667 = vunpack.c.0.s8 %v7666
    %v7668 = vlaneseq
    %v7669 = vshrl.u32 %v7668, 7
    %v7670 = vsub.s32 %v7667, %v7669
    %v7671 = vrot.slane %v7657, %v7670
    %v7672 = vcombine.high %v7664, %v7664
    %v7673 = vcombine.high %v7671, %v7671
    %v7674 = vlaneseq
    %v7675 = vshrl.u32 %v7674, 7
    %v7676 = vsub.s32 0, %v7675
    %v7677 = vrot.slane %v7664, %v7676
    %v7678 = vlaneseq
    %v7679 = vshrl.u32 %v7678, 7
    %v7680 = vsub.s32 0, %v7679
    %v7681 = vrot.slane %v7671, %v7680
    %v7682 = vlaneseq
    %v7683 = vshrl.u32 %v7682, 7
    %v7684 = vsub.s32 0, %v7683
    %v7685 = vrot.slane %v7672, %v7684
    %v7686 = vlaneseq
    %v7687 = vshrl.u32 %v7686, 7
    %v7688 = vsub.s32 0, %v7687
    %v7689 = vrot.slane %v7673, %v7688
    %7690 = vrot.lane.b32.xlu0 %v7677, 76
    %v7691 = vpop.permute.xlu0 %7690
    %7692 = vrot.lane.b32.xlu0 %v7681, 76
    %v7693 = vpop.permute.xlu0 %7692
    %7694 = vrot.lane.b32.xlu0 %v7685, 76
    %v7695 = vpop.permute.xlu0 %7694
    %7696 = vrot.lane.b32.xlu0 %v7689, 76
    %v7697 = vpop.permute.xlu0 %7696
    %7702 = vst.msk [vmem:[#allocation5 + $0xe] sm:$0x1] %vm6826, %v7691
    %7703 = vst.msk [vmem:[#allocation5 + $0x1e] sm:$0x1] %vm6826, %v7693
    %7704 = vst.msk [vmem:[#allocation5 + $0x2e] sm:$0x1] %vm6826, %v7695
    %7705 = vst.msk [vmem:[#allocation5 + $0x3e] sm:$0x1] %vm6826, %v7697
    %v7706 = vld [vmem:[#allocation4 + $0x18] sm:$0xf]
    %v7709 = vunpack.c.l.s4 1966171168
    %v7710 = vunpack.c.0.s8 %v7709
    %v7711 = vlaneseq
    %v7712 = vshrl.u32 %v7711, 7
    %v7713 = vsub.s32 %v7710, %v7712
    %v7714 = vrot.slane %v7706, %v7713
    %v7715 = vcombine.high %v7714, %v7714
    %v7717 = vunpack.c.l.s4 1966171168
    %v7718 = vunpack.c.0.s8 %v7717
    %v7719 = vlaneseq
    %v7720 = vshrl.u32 %v7719, 7
    %v7721 = vsub.s32 %v7718, %v7720
    %v7722 = vrot.slane %v7714, %v7721
    %v7724 = vunpack.c.l.s4 1966171168
    %v7725 = vunpack.c.0.s8 %v7724
    %v7726 = vlaneseq
    %v7727 = vshrl.u32 %v7726, 7
    %v7728 = vsub.s32 %v7725, %v7727
    %v7729 = vrot.slane %v7715, %v7728
    %v7730 = vcombine.high %v7722, %v7722
    %v7731 = vcombine.high %v7729, %v7729
    %v7732 = vlaneseq
    %v7733 = vshrl.u32 %v7732, 7
    %v7734 = vsub.s32 0, %v7733
    %v7735 = vrot.slane %v7722, %v7734
    %v7736 = vlaneseq
    %v7737 = vshrl.u32 %v7736, 7
    %v7738 = vsub.s32 0, %v7737
    %v7739 = vrot.slane %v7729, %v7738
    %v7740 = vlaneseq
    %v7741 = vshrl.u32 %v7740, 7
    %v7742 = vsub.s32 0, %v7741
    %v7743 = vrot.slane %v7730, %v7742
    %v7744 = vlaneseq
    %v7745 = vshrl.u32 %v7744, 7
    %v7746 = vsub.s32 0, %v7745
    %v7747 = vrot.slane %v7731, %v7746
    %7748 = vrot.lane.b32.xlu0 %v7735, 52
    %v7749 = vpop.permute.xlu0 %7748
    %7750 = vrot.lane.b32.xlu0 %v7739, 52
    %v7751 = vpop.permute.xlu0 %7750
    %7752 = vrot.lane.b32.xlu0 %v7743, 52
    %v7753 = vpop.permute.xlu0 %7752
    %7754 = vrot.lane.b32.xlu0 %v7747, 52
    %v7755 = vpop.permute.xlu0 %7754
    %7760 = vst.msk [vmem:[#allocation5 + $0xf] sm:$0x1] %vm6826, %v7749
    %7761 = vst.msk [vmem:[#allocation5 + $0x1f] sm:$0x1] %vm6826, %v7751
    %7762 = vst.msk [vmem:[#allocation5 + $0x2f] sm:$0x1] %vm6826, %v7753
    %7763 = vst.msk [vmem:[#allocation5 + $0x3f] sm:$0x1] %vm6826, %v7755
    %v7764 = vld [vmem:[#allocation4 + $0x28] sm:$0xf]
    %v7767 = vunpack.c.l.s4 1966171168
    %v7768 = vunpack.c.0.s8 %v7767
    %v7769 = vlaneseq
    %v7770 = vshrl.u32 %v7769, 7
    %v7771 = vsub.s32 %v7768, %v7770
    %v7772 = vrot.slane %v7764, %v7771
    %v7773 = vcombine.high %v7772, %v7772
    %v7775 = vunpack.c.l.s4 1966171168
    %v7776 = vunpack.c.0.s8 %v7775
    %v7777 = vlaneseq
    %v7778 = vshrl.u32 %v7777, 7
    %v7779 = vsub.s32 %v7776, %v7778
    %v7780 = vrot.slane %v7772, %v7779
    %v7782 = vunpack.c.l.s4 1966171168
    %v7783 = vunpack.c.0.s8 %v7782
    %v7784 = vlaneseq
    %v7785 = vshrl.u32 %v7784, 7
    %v7786 = vsub.s32 %v7783, %v7785
    %v7787 = vrot.slane %v7773, %v7786
    %v7788 = vcombine.high %v7780, %v7780
    %v7789 = vcombine.high %v7787, %v7787
    %v7790 = vlaneseq
    %v7791 = vshrl.u32 %v7790, 7
    %v7792 = vsub.s32 0, %v7791
    %v7793 = vrot.slane %v7780, %v7792
    %v7794 = vlaneseq
    %v7795 = vshrl.u32 %v7794, 7
    %v7796 = vsub.s32 0, %v7795
    %v7797 = vrot.slane %v7787, %v7796
    %v7798 = vlaneseq
    %v7799 = vshrl.u32 %v7798, 7
    %v7800 = vsub.s32 0, %v7799
    %v7801 = vrot.slane %v7788, %v7800
    %v7802 = vlaneseq
    %v7803 = vshrl.u32 %v7802, 7
    %v7804 = vsub.s32 0, %v7803
    %v7805 = vrot.slane %v7789, %v7804
    %7806 = vrot.lane.b32.xlu0 %v7793, 28
    %v7807 = vpop.permute.xlu0 %7806
    %7808 = vrot.lane.b32.xlu0 %v7797, 28
    %v7809 = vpop.permute.xlu0 %7808
    %7810 = vrot.lane.b32.xlu0 %v7801, 28
    %v7811 = vpop.permute.xlu0 %7810
    %7812 = vrot.lane.b32.xlu0 %v7805, 28
    %v7813 = vpop.permute.xlu0 %7812
    %s7818 = scalar_lea.vmem [#allocation5], 64
    %7819 = vst.msk [vmem:[%s7818] sm:$0x1] %vm6826, %v7807
    %7820 = vst.msk [vmem:[%s7818 + $0x10] sm:$0x1] %vm6826, %v7809
    %7821 = vst.msk [vmem:[%s7818 + $0x20] sm:$0x1] %vm6826, %v7811
    %7822 = vst.msk [vmem:[%s7818 + $0x30] sm:$0x1] %vm6826, %v7813
    %v7823 = vld [vmem:[#allocation4 + $0x28] sm:$0xf]
    %v7824 = vld [vmem:[#allocation4 + $0x30] sm:$0xf]
    %v7827 = vcombine.low %v7823, %v7824
    %v7829 = vunpack.c.l.s4 1966171168
    %v7830 = vunpack.c.0.s8 %v7829
    %v7831 = vlaneseq
    %v7832 = vshrl.u32 %v7831, 7
    %v7833 = vsub.s32 %v7830, %v7832
    %v7834 = vrot.slane %v7827, %v7833
    %v7835 = vcombine.high %v7834, %v7834
    %v7837 = vunpack.c.l.s4 1966171168
    %v7838 = vunpack.c.0.s8 %v7837
    %v7839 = vlaneseq
    %v7840 = vshrl.u32 %v7839, 7
    %v7841 = vsub.s32 %v7838, %v7840
    %v7842 = vrot.slane %v7834, %v7841
    %v7844 = vunpack.c.l.s4 1966171168
    %v7845 = vunpack.c.0.s8 %v7844
    %v7846 = vlaneseq
    %v7847 = vshrl.u32 %v7846, 7
    %v7848 = vsub.s32 %v7845, %v7847
    %v7849 = vrot.slane %v7835, %v7848
    %v7850 = vcombine.high %v7842, %v7842
    %v7851 = vcombine.high %v7849, %v7849
    %v7852 = vlaneseq
    %v7853 = vshrl.u32 %v7852, 7
    %v7854 = vsub.s32 0, %v7853
    %v7855 = vrot.slane %v7842, %v7854
    %v7856 = vlaneseq
    %v7857 = vshrl.u32 %v7856, 7
    %v7858 = vsub.s32 1, %v7857
    %v7859 = vrot.slane %v7842, %v7858
    %v7860 = vlaneseq
    %v7861 = vshrl.u32 %v7860, 7
    %v7862 = vsub.s32 0, %v7861
    %v7863 = vrot.slane %v7849, %v7862
    %v7864 = vlaneseq
    %v7865 = vshrl.u32 %v7864, 7
    %v7866 = vsub.s32 1, %v7865
    %v7867 = vrot.slane %v7849, %v7866
    %v7868 = vlaneseq
    %v7869 = vshrl.u32 %v7868, 7
    %v7870 = vsub.s32 0, %v7869
    %v7871 = vrot.slane %v7850, %v7870
    %v7872 = vlaneseq
    %v7873 = vshrl.u32 %v7872, 7
    %v7874 = vsub.s32 1, %v7873
    %v7875 = vrot.slane %v7850, %v7874
    %v7876 = vlaneseq
    %v7877 = vshrl.u32 %v7876, 7
    %v7878 = vsub.s32 0, %v7877
    %v7879 = vrot.slane %v7851, %v7878
    %v7880 = vlaneseq
    %v7881 = vshrl.u32 %v7880, 7
    %v7882 = vsub.s32 1, %v7881
    %v7883 = vrot.slane %v7851, %v7882
    %7884 = vrot.lane.b32.xlu0 %v7855, 4
    %v7885 = vpop.permute.xlu0 %7884
    %7886 = vrot.lane.b32.xlu0 %v7859, 4
    %v7887 = vpop.permute.xlu0 %7886
    %7888 = vrot.lane.b32.xlu0 %v7863, 4
    %v7889 = vpop.permute.xlu0 %7888
    %7890 = vrot.lane.b32.xlu0 %v7867, 4
    %v7891 = vpop.permute.xlu0 %7890
    %7892 = vrot.lane.b32.xlu0 %v7871, 4
    %v7893 = vpop.permute.xlu0 %7892
    %7894 = vrot.lane.b32.xlu0 %v7875, 4
    %v7895 = vpop.permute.xlu0 %7894
    %7896 = vrot.lane.b32.xlu0 %v7879, 4
    %v7897 = vpop.permute.xlu0 %7896
    %7898 = vrot.lane.b32.xlu0 %v7883, 4
    %v7899 = vpop.permute.xlu0 %7898
    %v7900 = vsel %vm4833, %v7885, %v7887
    %v7901 = vsel %vm4833, %v7889, %v7891
    %v7902 = vsel %vm4833, %v7893, %v7895
    %v7903 = vsel %vm4833, %v7897, %v7899
    %7908 = vst.msk [vmem:[%s7818 + $0x1] sm:$0x1] %vm6826, %v7900
    %7909 = vst.msk [vmem:[%s7818 + $0x11] sm:$0x1] %vm6826, %v7901
    %7910 = vst.msk [vmem:[%s7818 + $0x21] sm:$0x1] %vm6826, %v7902
    %7911 = vst.msk [vmem:[%s7818 + $0x31] sm:$0x1] %vm6826, %v7903
    %v7912 = vld [vmem:[#allocation4 + $0x30] sm:$0xf]
    %v7915 = vunpack.c.l.s4 1966171168
    %v7916 = vunpack.c.0.s8 %v7915
    %v7917 = vlaneseq
    %v7918 = vshrl.u32 %v7917, 7
    %v7919 = vsub.s32 %v7916, %v7918
    %v7920 = vrot.slane %v7912, %v7919
    %v7921 = vcombine.high %v7920, %v7920
    %v7923 = vunpack.c.l.s4 1966171168
    %v7924 = vunpack.c.0.s8 %v7923
    %v7925 = vlaneseq
    %v7926 = vshrl.u32 %v7925, 7
    %v7927 = vsub.s32 %v7924, %v7926
    %v7928 = vrot.slane %v7920, %v7927
    %v7930 = vunpack.c.l.s4 1966171168
    %v7931 = vunpack.c.0.s8 %v7930
    %v7932 = vlaneseq
    %v7933 = vshrl.u32 %v7932, 7
    %v7934 = vsub.s32 %v7931, %v7933
    %v7935 = vrot.slane %v7921, %v7934
    %v7936 = vcombine.high %v7928, %v7928
    %v7937 = vcombine.high %v7935, %v7935
    %v7938 = vlaneseq
    %v7939 = vshrl.u32 %v7938, 7
    %v7940 = vsub.s32 0, %v7939
    %v7941 = vrot.slane %v7928, %v7940
    %v7942 = vlaneseq
    %v7943 = vshrl.u32 %v7942, 7
    %v7944 = vsub.s32 0, %v7943
    %v7945 = vrot.slane %v7935, %v7944
    %v7946 = vlaneseq
    %v7947 = vshrl.u32 %v7946, 7
    %v7948 = vsub.s32 0, %v7947
    %v7949 = vrot.slane %v7936, %v7948
    %v7950 = vlaneseq
    %v7951 = vshrl.u32 %v7950, 7
    %v7952 = vsub.s32 0, %v7951
    %v7953 = vrot.slane %v7937, %v7952
    %7954 = vrot.lane.b32.xlu0 %v7941, 108
    %v7955 = vpop.permute.xlu0 %7954
    %7956 = vrot.lane.b32.xlu0 %v7945, 108
    %v7957 = vpop.permute.xlu0 %7956
    %7958 = vrot.lane.b32.xlu0 %v7949, 108
    %v7959 = vpop.permute.xlu0 %7958
    %7960 = vrot.lane.b32.xlu0 %v7953, 108
    %v7961 = vpop.permute.xlu0 %7960
    %7966 = vst.msk [vmem:[%s7818 + $0x2] sm:$0x1] %vm6826, %v7955
    %7967 = vst.msk [vmem:[%s7818 + $0x12] sm:$0x1] %vm6826, %v7957
    %7968 = vst.msk [vmem:[%s7818 + $0x22] sm:$0x1] %vm6826, %v7959
    %7969 = vst.msk [vmem:[%s7818 + $0x32] sm:$0x1] %vm6826, %v7961
    %v7970 = vld [vmem:[#allocation4 + $0x30] sm:$0xf]
    %v7973 = vunpack.c.l.s4 1966171168
    %v7974 = vunpack.c.0.s8 %v7973
    %v7975 = vlaneseq
    %v7976 = vshrl.u32 %v7975, 7
    %v7977 = vsub.s32 %v7974, %v7976
    %v7978 = vrot.slane %v7970, %v7977
    %v7979 = vcombine.high %v7978, %v7978
    %v7981 = vunpack.c.l.s4 1966171168
    %v7982 = vunpack.c.0.s8 %v7981
    %v7983 = vlaneseq
    %v7984 = vshrl.u32 %v7983, 7
    %v7985 = vsub.s32 %v7982, %v7984
    %v7986 = vrot.slane %v7978, %v7985
    %v7988 = vunpack.c.l.s4 1966171168
    %v7989 = vunpack.c.0.s8 %v7988
    %v7990 = vlaneseq
    %v7991 = vshrl.u32 %v7990, 7
    %v7992 = vsub.s32 %v7989, %v7991
    %v7993 = vrot.slane %v7979, %v7992
    %v7994 = vcombine.high %v7986, %v7986
    %v7995 = vcombine.high %v7993, %v7993
    %v7996 = vlaneseq
    %v7997 = vshrl.u32 %v7996, 7
    %v7998 = vsub.s32 0, %v7997
    %v7999 = vrot.slane %v7986, %v7998
    %v8000 = vlaneseq
    %v8001 = vshrl.u32 %v8000, 7
    %v8002 = vsub.s32 0, %v8001
    %v8003 = vrot.slane %v7993, %v8002
    %v8004 = vlaneseq
    %v8005 = vshrl.u32 %v8004, 7
    %v8006 = vsub.s32 0, %v8005
    %v8007 = vrot.slane %v7994, %v8006
    %v8008 = vlaneseq
    %v8009 = vshrl.u32 %v8008, 7
    %v8010 = vsub.s32 0, %v8009
    %v8011 = vrot.slane %v7995, %v8010
    %8012 = vrot.lane.b32.xlu0 %v7999, 84
    %v8013 = vpop.permute.xlu0 %8012
    %8014 = vrot.lane.b32.xlu0 %v8003, 84
    %v8015 = vpop.permute.xlu0 %8014
    %8016 = vrot.lane.b32.xlu0 %v8007, 84
    %v8017 = vpop.permute.xlu0 %8016
    %8018 = vrot.lane.b32.xlu0 %v8011, 84
    %v8019 = vpop.permute.xlu0 %8018
    %8024 = vst.msk [vmem:[%s7818 + $0x3] sm:$0x1] %vm6826, %v8013
    %8025 = vst.msk [vmem:[%s7818 + $0x13] sm:$0x1] %vm6826, %v8015
    %8026 = vst.msk [vmem:[%s7818 + $0x23] sm:$0x1] %vm6826, %v8017
    %8027 = vst.msk [vmem:[%s7818 + $0x33] sm:$0x1] %vm6826, %v8019
    %v8028 = vld [vmem:[#allocation4 + $0x30] sm:$0xf]
    %v8031 = vunpack.c.l.s4 1966171168
    %v8032 = vunpack.c.0.s8 %v8031
    %v8033 = vlaneseq
    %v8034 = vshrl.u32 %v8033, 7
    %v8035 = vsub.s32 %v8032, %v8034
    %v8036 = vrot.slane %v8028, %v8035
    %v8037 = vcombine.high %v8036, %v8036
    %v8039 = vunpack.c.l.s4 1966171168
    %v8040 = vunpack.c.0.s8 %v8039
    %v8041 = vlaneseq
    %v8042 = vshrl.u32 %v8041, 7
    %v8043 = vsub.s32 %v8040, %v8042
    %v8044 = vrot.slane %v8036, %v8043
    %v8046 = vunpack.c.l.s4 1966171168
    %v8047 = vunpack.c.0.s8 %v8046
    %v8048 = vlaneseq
    %v8049 = vshrl.u32 %v8048, 7
    %v8050 = vsub.s32 %v8047, %v8049
    %v8051 = vrot.slane %v8037, %v8050
    %v8052 = vcombine.high %v8044, %v8044
    %v8053 = vcombine.high %v8051, %v8051
    %v8054 = vlaneseq
    %v8055 = vshrl.u32 %v8054, 7
    %v8056 = vsub.s32 0, %v8055
    %v8057 = vrot.slane %v8044, %v8056
    %v8058 = vlaneseq
    %v8059 = vshrl.u32 %v8058, 7
    %v8060 = vsub.s32 0, %v8059
    %v8061 = vrot.slane %v8051, %v8060
    %v8062 = vlaneseq
    %v8063 = vshrl.u32 %v8062, 7
    %v8064 = vsub.s32 0, %v8063
    %v8065 = vrot.slane %v8052, %v8064
    %v8066 = vlaneseq
    %v8067 = vshrl.u32 %v8066, 7
    %v8068 = vsub.s32 0, %v8067
    %v8069 = vrot.slane %v8053, %v8068
    %8070 = vrot.lane.b32.xlu0 %v8057, 60
    %v8071 = vpop.permute.xlu0 %8070
    %8072 = vrot.lane.b32.xlu0 %v8061, 60
    %v8073 = vpop.permute.xlu0 %8072
    %8074 = vrot.lane.b32.xlu0 %v8065, 60
    %v8075 = vpop.permute.xlu0 %8074
    %8076 = vrot.lane.b32.xlu0 %v8069, 60
    %v8077 = vpop.permute.xlu0 %8076
    %8082 = vst.msk [vmem:[%s7818 + $0x4] sm:$0x1] %vm6826, %v8071
    %8083 = vst.msk [vmem:[%s7818 + $0x14] sm:$0x1] %vm6826, %v8073
    %8084 = vst.msk [vmem:[%s7818 + $0x24] sm:$0x1] %vm6826, %v8075
    %8085 = vst.msk [vmem:[%s7818 + $0x34] sm:$0x1] %vm6826, %v8077
    %v8086 = vld [vmem:[#allocation4 + $0x30] sm:$0xf]
    %v8089 = vunpack.c.l.s4 1966171168
    %v8090 = vunpack.c.0.s8 %v8089
    %v8091 = vlaneseq
    %v8092 = vshrl.u32 %v8091, 7
    %v8093 = vsub.s32 %v8090, %v8092
    %v8094 = vrot.slane %v8086, %v8093
    %v8095 = vcombine.high %v8094, %v8094
    %v8097 = vunpack.c.l.s4 1966171168
    %v8098 = vunpack.c.0.s8 %v8097
    %v8099 = vlaneseq
    %v8100 = vshrl.u32 %v8099, 7
    %v8101 = vsub.s32 %v8098, %v8100
    %v8102 = vrot.slane %v8094, %v8101
    %v8104 = vunpack.c.l.s4 1966171168
    %v8105 = vunpack.c.0.s8 %v8104
    %v8106 = vlaneseq
    %v8107 = vshrl.u32 %v8106, 7
    %v8108 = vsub.s32 %v8105, %v8107
    %v8109 = vrot.slane %v8095, %v8108
    %v8110 = vcombine.high %v8102, %v8102
    %v8111 = vcombine.high %v8109, %v8109
    %v8112 = vlaneseq
    %v8113 = vshrl.u32 %v8112, 7
    %v8114 = vsub.s32 0, %v8113
    %v8115 = vrot.slane %v8102, %v8114
    %v8116 = vlaneseq
    %v8117 = vshrl.u32 %v8116, 7
    %v8118 = vsub.s32 0, %v8117
    %v8119 = vrot.slane %v8109, %v8118
    %v8120 = vlaneseq
    %v8121 = vshrl.u32 %v8120, 7
    %v8122 = vsub.s32 0, %v8121
    %v8123 = vrot.slane %v8110, %v8122
    %v8124 = vlaneseq
    %v8125 = vshrl.u32 %v8124, 7
    %v8126 = vsub.s32 0, %v8125
    %v8127 = vrot.slane %v8111, %v8126
    %8128 = vrot.lane.b32.xlu0 %v8115, 36
    %v8129 = vpop.permute.xlu0 %8128
    %8130 = vrot.lane.b32.xlu0 %v8119, 36
    %v8131 = vpop.permute.xlu0 %8130
    %8132 = vrot.lane.b32.xlu0 %v8123, 36
    %v8133 = vpop.permute.xlu0 %8132
    %8134 = vrot.lane.b32.xlu0 %v8127, 36
    %v8135 = vpop.permute.xlu0 %8134
    %8140 = vst.msk [vmem:[%s7818 + $0x5] sm:$0x1] %vm6826, %v8129
    %8141 = vst.msk [vmem:[%s7818 + $0x15] sm:$0x1] %vm6826, %v8131
    %8142 = vst.msk [vmem:[%s7818 + $0x25] sm:$0x1] %vm6826, %v8133
    %8143 = vst.msk [vmem:[%s7818 + $0x35] sm:$0x1] %vm6826, %v8135
    %v8144 = vld [vmem:[#allocation4 + $0x30] sm:$0xf]
    %v8145 = vld [vmem:[#allocation4 + $0x38] sm:$0xf]
    %v8148 = vcombine.low %v8144, %v8145
    %v8150 = vunpack.c.l.s4 1966171168
    %v8151 = vunpack.c.0.s8 %v8150
    %v8152 = vlaneseq
    %v8153 = vshrl.u32 %v8152, 7
    %v8154 = vsub.s32 %v8151, %v8153
    %v8155 = vrot.slane %v8148, %v8154
    %v8156 = vcombine.high %v8155, %v8155
    %v8158 = vunpack.c.l.s4 1966171168
    %v8159 = vunpack.c.0.s8 %v8158
    %v8160 = vlaneseq
    %v8161 = vshrl.u32 %v8160, 7
    %v8162 = vsub.s32 %v8159, %v8161
    %v8163 = vrot.slane %v8155, %v8162
    %v8165 = vunpack.c.l.s4 1966171168
    %v8166 = vunpack.c.0.s8 %v8165
    %v8167 = vlaneseq
    %v8168 = vshrl.u32 %v8167, 7
    %v8169 = vsub.s32 %v8166, %v8168
    %v8170 = vrot.slane %v8156, %v8169
    %v8171 = vcombine.high %v8163, %v8163
    %v8172 = vcombine.high %v8170, %v8170
    %v8173 = vlaneseq
    %v8174 = vshrl.u32 %v8173, 7
    %v8175 = vsub.s32 0, %v8174
    %v8176 = vrot.slane %v8163, %v8175
    %v8177 = vlaneseq
    %v8178 = vshrl.u32 %v8177, 7
    %v8179 = vsub.s32 1, %v8178
    %v8180 = vrot.slane %v8163, %v8179
    %v8181 = vlaneseq
    %v8182 = vshrl.u32 %v8181, 7
    %v8183 = vsub.s32 0, %v8182
    %v8184 = vrot.slane %v8170, %v8183
    %v8185 = vlaneseq
    %v8186 = vshrl.u32 %v8185, 7
    %v8187 = vsub.s32 1, %v8186
    %v8188 = vrot.slane %v8170, %v8187
    %v8189 = vlaneseq
    %v8190 = vshrl.u32 %v8189, 7
    %v8191 = vsub.s32 0, %v8190
    %v8192 = vrot.slane %v8171, %v8191
    %v8193 = vlaneseq
    %v8194 = vshrl.u32 %v8193, 7
    %v8195 = vsub.s32 1, %v8194
    %v8196 = vrot.slane %v8171, %v8195
    %v8197 = vlaneseq
    %v8198 = vshrl.u32 %v8197, 7
    %v8199 = vsub.s32 0, %v8198
    %v8200 = vrot.slane %v8172, %v8199
    %v8201 = vlaneseq
    %v8202 = vshrl.u32 %v8201, 7
    %v8203 = vsub.s32 1, %v8202
    %v8204 = vrot.slane %v8172, %v8203
    %8205 = vrot.lane.b32.xlu0 %v8176, 12
    %v8206 = vpop.permute.xlu0 %8205
    %8207 = vrot.lane.b32.xlu0 %v8180, 12
    %v8208 = vpop.permute.xlu0 %8207
    %8209 = vrot.lane.b32.xlu0 %v8184, 12
    %v8210 = vpop.permute.xlu0 %8209
    %8211 = vrot.lane.b32.xlu0 %v8188, 12
    %v8212 = vpop.permute.xlu0 %8211
    %8213 = vrot.lane.b32.xlu0 %v8192, 12
    %v8214 = vpop.permute.xlu0 %8213
    %8215 = vrot.lane.b32.xlu0 %v8196, 12
    %v8216 = vpop.permute.xlu0 %8215
    %8217 = vrot.lane.b32.xlu0 %v8200, 12
    %v8218 = vpop.permute.xlu0 %8217
    %8219 = vrot.lane.b32.xlu0 %v8204, 12
    %v8220 = vpop.permute.xlu0 %8219
    %v8221 = vsel %vm7229, %v8206, %v8208
    %v8222 = vsel %vm7229, %v8210, %v8212
    %v8223 = vsel %vm7229, %v8214, %v8216
    %v8224 = vsel %vm7229, %v8218, %v8220
    %8229 = vst.msk [vmem:[%s7818 + $0x6] sm:$0x1] %vm6826, %v8221
    %8230 = vst.msk [vmem:[%s7818 + $0x16] sm:$0x1] %vm6826, %v8222
    %8231 = vst.msk [vmem:[%s7818 + $0x26] sm:$0x1] %vm6826, %v8223
    %8232 = vst.msk [vmem:[%s7818 + $0x36] sm:$0x1] %vm6826, %v8224
    %v8233 = vld [vmem:[#allocation4 + $0x38] sm:$0xf]
    %v8236 = vunpack.c.l.s4 1966171168
    %v8237 = vunpack.c.0.s8 %v8236
    %v8238 = vlaneseq
    %v8239 = vshrl.u32 %v8238, 7
    %v8240 = vsub.s32 %v8237, %v8239
    %v8241 = vrot.slane %v8233, %v8240
    %v8242 = vcombine.high %v8241, %v8241
    %v8244 = vunpack.c.l.s4 1966171168
    %v8245 = vunpack.c.0.s8 %v8244
    %v8246 = vlaneseq
    %v8247 = vshrl.u32 %v8246, 7
    %v8248 = vsub.s32 %v8245, %v8247
    %v8249 = vrot.slane %v8241, %v8248
    %v8251 = vunpack.c.l.s4 1966171168
    %v8252 = vunpack.c.0.s8 %v8251
    %v8253 = vlaneseq
    %v8254 = vshrl.u32 %v8253, 7
    %v8255 = vsub.s32 %v8252, %v8254
    %v8256 = vrot.slane %v8242, %v8255
    %v8257 = vcombine.high %v8249, %v8249
    %v8258 = vcombine.high %v8256, %v8256
    %v8259 = vlaneseq
    %v8260 = vshrl.u32 %v8259, 7
    %v8261 = vsub.s32 0, %v8260
    %v8262 = vrot.slane %v8249, %v8261
    %v8263 = vlaneseq
    %v8264 = vshrl.u32 %v8263, 7
    %v8265 = vsub.s32 0, %v8264
    %v8266 = vrot.slane %v8256, %v8265
    %v8267 = vlaneseq
    %v8268 = vshrl.u32 %v8267, 7
    %v8269 = vsub.s32 0, %v8268
    %v8270 = vrot.slane %v8257, %v8269
    %v8271 = vlaneseq
    %v8272 = vshrl.u32 %v8271, 7
    %v8273 = vsub.s32 0, %v8272
    %v8274 = vrot.slane %v8258, %v8273
    %8275 = vrot.lane.b32.xlu0 %v8262, 116
    %v8276 = vpop.permute.xlu0 %8275
    %8277 = vrot.lane.b32.xlu0 %v8266, 116
    %v8278 = vpop.permute.xlu0 %8277
    %8279 = vrot.lane.b32.xlu0 %v8270, 116
    %v8280 = vpop.permute.xlu0 %8279
    %8281 = vrot.lane.b32.xlu0 %v8274, 116
    %v8282 = vpop.permute.xlu0 %8281
    %8287 = vst.msk [vmem:[%s7818 + $0x7] sm:$0x1] %vm6826, %v8276
    %8288 = vst.msk [vmem:[%s7818 + $0x17] sm:$0x1] %vm6826, %v8278
    %8289 = vst.msk [vmem:[%s7818 + $0x27] sm:$0x1] %vm6826, %v8280
    %8290 = vst.msk [vmem:[%s7818 + $0x37] sm:$0x1] %vm6826, %v8282
    %v8291 = vld [vmem:[#allocation4 + $0x38] sm:$0xf]
    %v8294 = vunpack.c.l.s4 1966171168
    %v8295 = vunpack.c.0.s8 %v8294
    %v8296 = vlaneseq
    %v8297 = vshrl.u32 %v8296, 7
    %v8298 = vsub.s32 %v8295, %v8297
    %v8299 = vrot.slane %v8291, %v8298
    %v8300 = vcombine.high %v8299, %v8299
    %v8302 = vunpack.c.l.s4 1966171168
    %v8303 = vunpack.c.0.s8 %v8302
    %v8304 = vlaneseq
    %v8305 = vshrl.u32 %v8304, 7
    %v8306 = vsub.s32 %v8303, %v8305
    %v8307 = vrot.slane %v8299, %v8306
    %v8309 = vunpack.c.l.s4 1966171168
    %v8310 = vunpack.c.0.s8 %v8309
    %v8311 = vlaneseq
    %v8312 = vshrl.u32 %v8311, 7
    %v8313 = vsub.s32 %v8310, %v8312
    %v8314 = vrot.slane %v8300, %v8313
    %v8315 = vcombine.high %v8307, %v8307
    %v8316 = vcombine.high %v8314, %v8314
    %v8317 = vlaneseq
    %v8318 = vshrl.u32 %v8317, 7
    %v8319 = vsub.s32 0, %v8318
    %v8320 = vrot.slane %v8307, %v8319
    %v8321 = vlaneseq
    %v8322 = vshrl.u32 %v8321, 7
    %v8323 = vsub.s32 0, %v8322
    %v8324 = vrot.slane %v8314, %v8323
    %v8325 = vlaneseq
    %v8326 = vshrl.u32 %v8325, 7
    %v8327 = vsub.s32 0, %v8326
    %v8328 = vrot.slane %v8315, %v8327
    %v8329 = vlaneseq
    %v8330 = vshrl.u32 %v8329, 7
    %v8331 = vsub.s32 0, %v8330
    %v8332 = vrot.slane %v8316, %v8331
    %8333 = vrot.lane.b32.xlu0 %v8320, 92
    %v8334 = vpop.permute.xlu0 %8333
    %8335 = vrot.lane.b32.xlu0 %v8324, 92
    %v8336 = vpop.permute.xlu0 %8335
    %8337 = vrot.lane.b32.xlu0 %v8328, 92
    %v8338 = vpop.permute.xlu0 %8337
    %8339 = vrot.lane.b32.xlu0 %v8332, 92
    %v8340 = vpop.permute.xlu0 %8339
    %8345 = vst.msk [vmem:[%s7818 + $0x8] sm:$0x1] %vm6826, %v8334
    %8346 = vst.msk [vmem:[%s7818 + $0x18] sm:$0x1] %vm6826, %v8336
    %8347 = vst.msk [vmem:[%s7818 + $0x28] sm:$0x1] %vm6826, %v8338
    %8348 = vst.msk [vmem:[%s7818 + $0x38] sm:$0x1] %vm6826, %v8340
    %v8349 = vld [vmem:[#allocation4 + $0x38] sm:$0xf]
    %v8352 = vunpack.c.l.s4 1966171168
    %v8353 = vunpack.c.0.s8 %v8352
    %v8354 = vlaneseq
    %v8355 = vshrl.u32 %v8354, 7
    %v8356 = vsub.s32 %v8353, %v8355
    %v8357 = vrot.slane %v8349, %v8356
    %v8358 = vcombine.high %v8357, %v8357
    %v8360 = vunpack.c.l.s4 1966171168
    %v8361 = vunpack.c.0.s8 %v8360
    %v8362 = vlaneseq
    %v8363 = vshrl.u32 %v8362, 7
    %v8364 = vsub.s32 %v8361, %v8363
    %v8365 = vrot.slane %v8357, %v8364
    %v8367 = vunpack.c.l.s4 1966171168
    %v8368 = vunpack.c.0.s8 %v8367
    %v8369 = vlaneseq
    %v8370 = vshrl.u32 %v8369, 7
    %v8371 = vsub.s32 %v8368, %v8370
    %v8372 = vrot.slane %v8358, %v8371
    %v8373 = vcombine.high %v8365, %v8365
    %v8374 = vcombine.high %v8372, %v8372
    %v8375 = vlaneseq
    %v8376 = vshrl.u32 %v8375, 7
    %v8377 = vsub.s32 0, %v8376
    %v8378 = vrot.slane %v8365, %v8377
    %v8379 = vlaneseq
    %v8380 = vshrl.u32 %v8379, 7
    %v8381 = vsub.s32 0, %v8380
    %v8382 = vrot.slane %v8372, %v8381
    %v8383 = vlaneseq
    %v8384 = vshrl.u32 %v8383, 7
    %v8385 = vsub.s32 0, %v8384
    %v8386 = vrot.slane %v8373, %v8385
    %v8387 = vlaneseq
    %v8388 = vshrl.u32 %v8387, 7
    %v8389 = vsub.s32 0, %v8388
    %v8390 = vrot.slane %v8374, %v8389
    %8391 = vrot.lane.b32.xlu0 %v8378, 68
    %v8392 = vpop.permute.xlu0 %8391
    %8393 = vrot.lane.b32.xlu0 %v8382, 68
    %v8394 = vpop.permute.xlu0 %8393
    %8395 = vrot.lane.b32.xlu0 %v8386, 68
    %v8396 = vpop.permute.xlu0 %8395
    %8397 = vrot.lane.b32.xlu0 %v8390, 68
    %v8398 = vpop.permute.xlu0 %8397
    %8403 = vst.msk [vmem:[%s7818 + $0x9] sm:$0x1] %vm6826, %v8392
    %8404 = vst.msk [vmem:[%s7818 + $0x19] sm:$0x1] %vm6826, %v8394
    %8405 = vst.msk [vmem:[%s7818 + $0x29] sm:$0x1] %vm6826, %v8396
    %8406 = vst.msk [vmem:[%s7818 + $0x39] sm:$0x1] %vm6826, %v8398
    %v8407 = vld [vmem:[#allocation4 + $0x38] sm:$0xf]
    %v8410 = vunpack.c.l.s4 1966171168
    %v8411 = vunpack.c.0.s8 %v8410
    %v8412 = vlaneseq
    %v8413 = vshrl.u32 %v8412, 7
    %v8414 = vsub.s32 %v8411, %v8413
    %v8415 = vrot.slane %v8407, %v8414
    %v8416 = vcombine.high %v8415, %v8415
    %v8418 = vunpack.c.l.s4 1966171168
    %v8419 = vunpack.c.0.s8 %v8418
    %v8420 = vlaneseq
    %v8421 = vshrl.u32 %v8420, 7
    %v8422 = vsub.s32 %v8419, %v8421
    %v8423 = vrot.slane %v8415, %v8422
    %v8425 = vunpack.c.l.s4 1966171168
    %v8426 = vunpack.c.0.s8 %v8425
    %v8427 = vlaneseq
    %v8428 = vshrl.u32 %v8427, 7
    %v8429 = vsub.s32 %v8426, %v8428
    %v8430 = vrot.slane %v8416, %v8429
    %v8431 = vcombine.high %v8423, %v8423
    %v8432 = vcombine.high %v8430, %v8430
    %v8433 = vlaneseq
    %v8434 = vshrl.u32 %v8433, 7
    %v8435 = vsub.s32 0, %v8434
    %v8436 = vrot.slane %v8423, %v8435
    %v8437 = vlaneseq
    %v8438 = vshrl.u32 %v8437, 7
    %v8439 = vsub.s32 0, %v8438
    %v8440 = vrot.slane %v8430, %v8439
    %v8441 = vlaneseq
    %v8442 = vshrl.u32 %v8441, 7
    %v8443 = vsub.s32 0, %v8442
    %v8444 = vrot.slane %v8431, %v8443
    %v8445 = vlaneseq
    %v8446 = vshrl.u32 %v8445, 7
    %v8447 = vsub.s32 0, %v8446
    %v8448 = vrot.slane %v8432, %v8447
    %8449 = vrot.lane.b32.xlu0 %v8436, 44
    %v8450 = vpop.permute.xlu0 %8449
    %8451 = vrot.lane.b32.xlu0 %v8440, 44
    %v8452 = vpop.permute.xlu0 %8451
    %8453 = vrot.lane.b32.xlu0 %v8444, 44
    %v8454 = vpop.permute.xlu0 %8453
    %8455 = vrot.lane.b32.xlu0 %v8448, 44
    %v8456 = vpop.permute.xlu0 %8455
    %8461 = vst.msk [vmem:[%s7818 + $0xa] sm:$0x1] %vm6826, %v8450
    %8462 = vst.msk [vmem:[%s7818 + $0x1a] sm:$0x1] %vm6826, %v8452
    %8463 = vst.msk [vmem:[%s7818 + $0x2a] sm:$0x1] %vm6826, %v8454
    %8464 = vst.msk [vmem:[%s7818 + $0x3a] sm:$0x1] %vm6826, %v8456
    %v8465 = vld [vmem:[#allocation4 + $0x38] sm:$0xf]
    %v8468 = vunpack.c.l.s4 1966171168
    %v8469 = vunpack.c.0.s8 %v8468
    %v8470 = vlaneseq
    %v8471 = vshrl.u32 %v8470, 7
    %v8472 = vsub.s32 %v8469, %v8471
    %v8473 = vrot.slane %v8465, %v8472
    %v8474 = vcombine.high %v8473, %v8473
    %v8476 = vunpack.c.l.s4 1966171168
    %v8477 = vunpack.c.0.s8 %v8476
    %v8478 = vlaneseq
    %v8479 = vshrl.u32 %v8478, 7
    %v8480 = vsub.s32 %v8477, %v8479
    %v8481 = vrot.slane %v8473, %v8480
    %v8483 = vunpack.c.l.s4 1966171168
    %v8484 = vunpack.c.0.s8 %v8483
    %v8485 = vlaneseq
    %v8486 = vshrl.u32 %v8485, 7
    %v8487 = vsub.s32 %v8484, %v8486
    %v8488 = vrot.slane %v8474, %v8487
    %v8489 = vcombine.high %v8481, %v8481
    %v8490 = vcombine.high %v8488, %v8488
    %v8491 = vlaneseq
    %v8492 = vshrl.u32 %v8491, 7
    %v8493 = vsub.s32 0, %v8492
    %v8494 = vrot.slane %v8481, %v8493
    %v8495 = vlaneseq
    %v8496 = vshrl.u32 %v8495, 7
    %v8497 = vsub.s32 0, %v8496
    %v8498 = vrot.slane %v8488, %v8497
    %v8499 = vlaneseq
    %v8500 = vshrl.u32 %v8499, 7
    %v8501 = vsub.s32 0, %v8500
    %v8502 = vrot.slane %v8489, %v8501
    %v8503 = vlaneseq
    %v8504 = vshrl.u32 %v8503, 7
    %v8505 = vsub.s32 0, %v8504
    %v8506 = vrot.slane %v8490, %v8505
    %8507 = vrot.lane.b32.xlu0 %v8494, 20
    %v8508 = vpop.permute.xlu0 %8507
    %8509 = vrot.lane.b32.xlu0 %v8498, 20
    %v8510 = vpop.permute.xlu0 %8509
    %8511 = vrot.lane.b32.xlu0 %v8502, 20
    %v8512 = vpop.permute.xlu0 %8511
    %8513 = vrot.lane.b32.xlu0 %v8506, 20
    %v8514 = vpop.permute.xlu0 %8513
    %8519 = vst.msk [vmem:[%s7818 + $0xb] sm:$0x1] %vm6826, %v8508
    %8520 = vst.msk [vmem:[%s7818 + $0x1b] sm:$0x1] %vm6826, %v8510
    %8521 = vst.msk [vmem:[%s7818 + $0x2b] sm:$0x1] %vm6826, %v8512
    %8522 = vst.msk [vmem:[%s7818 + $0x3b] sm:$0x1] %vm6826, %v8514
    %v8523 = vld [vmem:[#allocation4 + $0x40] sm:$0xf]
    %v8526 = vunpack.c.l.s4 1966171168
    %v8527 = vunpack.c.0.s8 %v8526
    %v8528 = vlaneseq
    %v8529 = vshrl.u32 %v8528, 7
    %v8530 = vsub.s32 %v8527, %v8529
    %v8531 = vrot.slane %v8523, %v8530
    %v8532 = vcombine.high %v8531, %v8531
    %v8534 = vunpack.c.l.s4 1966171168
    %v8535 = vunpack.c.0.s8 %v8534
    %v8536 = vlaneseq
    %v8537 = vshrl.u32 %v8536, 7
    %v8538 = vsub.s32 %v8535, %v8537
    %v8539 = vrot.slane %v8531, %v8538
    %v8541 = vunpack.c.l.s4 1966171168
    %v8542 = vunpack.c.0.s8 %v8541
    %v8543 = vlaneseq
    %v8544 = vshrl.u32 %v8543, 7
    %v8545 = vsub.s32 %v8542, %v8544
    %v8546 = vrot.slane %v8532, %v8545
    %v8547 = vcombine.high %v8539, %v8539
    %v8548 = vcombine.high %v8546, %v8546
    %v8549 = vlaneseq
    %v8550 = vshrl.u32 %v8549, 7
    %v8551 = vsub.s32 0, %v8550
    %v8552 = vrot.slane %v8539, %v8551
    %v8553 = vlaneseq
    %v8554 = vshrl.u32 %v8553, 7
    %v8555 = vsub.s32 0, %v8554
    %v8556 = vrot.slane %v8546, %v8555
    %v8557 = vlaneseq
    %v8558 = vshrl.u32 %v8557, 7
    %v8559 = vsub.s32 0, %v8558
    %v8560 = vrot.slane %v8547, %v8559
    %v8561 = vlaneseq
    %v8562 = vshrl.u32 %v8561, 7
    %v8563 = vsub.s32 0, %v8562
    %v8564 = vrot.slane %v8548, %v8563
    %8565 = vrot.lane.b32.xlu0 %v8552, 124
    %v8566 = vpop.permute.xlu0 %8565
    %8567 = vrot.lane.b32.xlu0 %v8556, 124
    %v8568 = vpop.permute.xlu0 %8567
    %8569 = vrot.lane.b32.xlu0 %v8560, 124
    %v8570 = vpop.permute.xlu0 %8569
    %8571 = vrot.lane.b32.xlu0 %v8564, 124
    %v8572 = vpop.permute.xlu0 %8571
    %8577 = vst.msk [vmem:[%s7818 + $0xc] sm:$0x1] %vm6826, %v8566
    %8578 = vst.msk [vmem:[%s7818 + $0x1c] sm:$0x1] %vm6826, %v8568
    %8579 = vst.msk [vmem:[%s7818 + $0x2c] sm:$0x1] %vm6826, %v8570
    %8580 = vst.msk [vmem:[%s7818 + $0x3c] sm:$0x1] %vm6826, %v8572
    %v8581 = vld [vmem:[#allocation4 + $0x40] sm:$0xf]
    %v8584 = vunpack.c.l.s4 1966171168
    %v8585 = vunpack.c.0.s8 %v8584
    %v8586 = vlaneseq
    %v8587 = vshrl.u32 %v8586, 7
    %v8588 = vsub.s32 %v8585, %v8587
    %v8589 = vrot.slane %v8581, %v8588
    %v8590 = vcombine.high %v8589, %v8589
    %v8592 = vunpack.c.l.s4 1966171168
    %v8593 = vunpack.c.0.s8 %v8592
    %v8594 = vlaneseq
    %v8595 = vshrl.u32 %v8594, 7
    %v8596 = vsub.s32 %v8593, %v8595
    %v8597 = vrot.slane %v8589, %v8596
    %v8599 = vunpack.c.l.s4 1966171168
    %v8600 = vunpack.c.0.s8 %v8599
    %v8601 = vlaneseq
    %v8602 = vshrl.u32 %v8601, 7
    %v8603 = vsub.s32 %v8600, %v8602
    %v8604 = vrot.slane %v8590, %v8603
    %v8605 = vcombine.high %v8597, %v8597
    %v8606 = vcombine.high %v8604, %v8604
    %v8607 = vlaneseq
    %v8608 = vshrl.u32 %v8607, 7
    %v8609 = vsub.s32 0, %v8608
    %v8610 = vrot.slane %v8597, %v8609
    %v8611 = vlaneseq
    %v8612 = vshrl.u32 %v8611, 7
    %v8613 = vsub.s32 0, %v8612
    %v8614 = vrot.slane %v8604, %v8613
    %v8615 = vlaneseq
    %v8616 = vshrl.u32 %v8615, 7
    %v8617 = vsub.s32 0, %v8616
    %v8618 = vrot.slane %v8605, %v8617
    %v8619 = vlaneseq
    %v8620 = vshrl.u32 %v8619, 7
    %v8621 = vsub.s32 0, %v8620
    %v8622 = vrot.slane %v8606, %v8621
    %8623 = vrot.lane.b32.xlu0 %v8610, 100
    %v8624 = vpop.permute.xlu0 %8623
    %8625 = vrot.lane.b32.xlu0 %v8614, 100
    %v8626 = vpop.permute.xlu0 %8625
    %8627 = vrot.lane.b32.xlu0 %v8618, 100
    %v8628 = vpop.permute.xlu0 %8627
    %8629 = vrot.lane.b32.xlu0 %v8622, 100
    %v8630 = vpop.permute.xlu0 %8629
    %8635 = vst.msk [vmem:[%s7818 + $0xd] sm:$0x1] %vm6826, %v8624
    %8636 = vst.msk [vmem:[%s7818 + $0x1d] sm:$0x1] %vm6826, %v8626
    %8637 = vst.msk [vmem:[%s7818 + $0x2d] sm:$0x1] %vm6826, %v8628
    %8638 = vst.msk [vmem:[%s7818 + $0x3d] sm:$0x1] %vm6826, %v8630
    %v8639 = vld [vmem:[#allocation4 + $0x40] sm:$0xf]
    %v8642 = vunpack.c.l.s4 1966171168
    %v8643 = vunpack.c.0.s8 %v8642
    %v8644 = vlaneseq
    %v8645 = vshrl.u32 %v8644, 7
    %v8646 = vsub.s32 %v8643, %v8645
    %v8647 = vrot.slane %v8639, %v8646
    %v8648 = vcombine.high %v8647, %v8647
    %v8650 = vunpack.c.l.s4 1966171168
    %v8651 = vunpack.c.0.s8 %v8650
    %v8652 = vlaneseq
    %v8653 = vshrl.u32 %v8652, 7
    %v8654 = vsub.s32 %v8651, %v8653
    %v8655 = vrot.slane %v8647, %v8654
    %v8657 = vunpack.c.l.s4 1966171168
    %v8658 = vunpack.c.0.s8 %v8657
    %v8659 = vlaneseq
    %v8660 = vshrl.u32 %v8659, 7
    %v8661 = vsub.s32 %v8658, %v8660
    %v8662 = vrot.slane %v8648, %v8661
    %v8663 = vcombine.high %v8655, %v8655
    %v8664 = vcombine.high %v8662, %v8662
    %v8665 = vlaneseq
    %v8666 = vshrl.u32 %v8665, 7
    %v8667 = vsub.s32 0, %v8666
    %v8668 = vrot.slane %v8655, %v8667
    %v8669 = vlaneseq
    %v8670 = vshrl.u32 %v8669, 7
    %v8671 = vsub.s32 0, %v8670
    %v8672 = vrot.slane %v8662, %v8671
    %v8673 = vlaneseq
    %v8674 = vshrl.u32 %v8673, 7
    %v8675 = vsub.s32 0, %v8674
    %v8676 = vrot.slane %v8663, %v8675
    %v8677 = vlaneseq
    %v8678 = vshrl.u32 %v8677, 7
    %v8679 = vsub.s32 0, %v8678
    %v8680 = vrot.slane %v8664, %v8679
    %8681 = vrot.lane.b32.xlu0 %v8668, 76
    %v8682 = vpop.permute.xlu0 %8681
    %8683 = vrot.lane.b32.xlu0 %v8672, 76
    %v8684 = vpop.permute.xlu0 %8683
    %8685 = vrot.lane.b32.xlu0 %v8676, 76
    %v8686 = vpop.permute.xlu0 %8685
    %8687 = vrot.lane.b32.xlu0 %v8680, 76
    %v8688 = vpop.permute.xlu0 %8687
    %8693 = vst.msk [vmem:[%s7818 + $0xe] sm:$0x1] %vm6826, %v8682
    %8694 = vst.msk [vmem:[%s7818 + $0x1e] sm:$0x1] %vm6826, %v8684
    %8695 = vst.msk [vmem:[%s7818 + $0x2e] sm:$0x1] %vm6826, %v8686
    %8696 = vst.msk [vmem:[%s7818 + $0x3e] sm:$0x1] %vm6826, %v8688
    %v8697 = vld [vmem:[#allocation4 + $0x40] sm:$0xf]
    %v8700 = vunpack.c.l.s4 1966171168
    %v8701 = vunpack.c.0.s8 %v8700
    %v8702 = vlaneseq
    %v8703 = vshrl.u32 %v8702, 7
    %v8704 = vsub.s32 %v8701, %v8703
    %v8705 = vrot.slane %v8697, %v8704
    %v8706 = vcombine.high %v8705, %v8705
    %v8708 = vunpack.c.l.s4 1966171168
    %v8709 = vunpack.c.0.s8 %v8708
    %v8710 = vlaneseq
    %v8711 = vshrl.u32 %v8710, 7
    %v8712 = vsub.s32 %v8709, %v8711
    %v8713 = vrot.slane %v8705, %v8712
    %v8715 = vunpack.c.l.s4 1966171168
    %v8716 = vunpack.c.0.s8 %v8715
    %v8717 = vlaneseq
    %v8718 = vshrl.u32 %v8717, 7
    %v8719 = vsub.s32 %v8716, %v8718
    %v8720 = vrot.slane %v8706, %v8719
    %v8721 = vcombine.high %v8713, %v8713
    %v8722 = vcombine.high %v8720, %v8720
    %v8723 = vlaneseq
    %v8724 = vshrl.u32 %v8723, 7
    %v8725 = vsub.s32 0, %v8724
    %v8726 = vrot.slane %v8713, %v8725
    %v8727 = vlaneseq
    %v8728 = vshrl.u32 %v8727, 7
    %v8729 = vsub.s32 0, %v8728
    %v8730 = vrot.slane %v8720, %v8729
    %v8731 = vlaneseq
    %v8732 = vshrl.u32 %v8731, 7
    %v8733 = vsub.s32 0, %v8732
    %v8734 = vrot.slane %v8721, %v8733
    %v8735 = vlaneseq
    %v8736 = vshrl.u32 %v8735, 7
    %v8737 = vsub.s32 0, %v8736
    %v8738 = vrot.slane %v8722, %v8737
    %8739 = vrot.lane.b32.xlu0 %v8726, 52
    %v8740 = vpop.permute.xlu0 %8739
    %8741 = vrot.lane.b32.xlu0 %v8730, 52
    %v8742 = vpop.permute.xlu0 %8741
    %8743 = vrot.lane.b32.xlu0 %v8734, 52
    %v8744 = vpop.permute.xlu0 %8743
    %8745 = vrot.lane.b32.xlu0 %v8738, 52
    %v8746 = vpop.permute.xlu0 %8745
    %8751 = vst.msk [vmem:[%s7818 + $0xf] sm:$0x1] %vm6826, %v8740
    %8752 = vst.msk [vmem:[%s7818 + $0x1f] sm:$0x1] %vm6826, %v8742
    %8753 = vst.msk [vmem:[%s7818 + $0x2f] sm:$0x1] %vm6826, %v8744
    %8754 = vst.msk [vmem:[%s7818 + $0x3f] sm:$0x1] %vm6826, %v8746
    %v8755 = vld [vmem:[%s2] sm:$0xff]
    %v8756 = vld [vmem:[%s2 + $0x8] sm:$0xff]
    %v8757 = vld [vmem:[%s6] sm:$0xf]
    %vm8758 = vcmask 64512
    %v8760 = vsel %vm8758, %v8757, 0
    %8762 = vmatprep.subr.mxu0 %v8756
    %8763 = vmatpush1.msra.mxu0 %v8755
    %8764 = vmatprep.subr.mxu0 0.0
    %8765 = vmatpush1.msra.mxu0 0.0
    %8766 = vmatprep.subr.mxu0 0.0
    %8767 = vmatpush1.msra.mxu0 0.0
    %8768 = vmatprep.subr.mxu0 0.0
    %8769 = vmatpush1.msra.mxu0 0.0
    %8770 = vmatprep.subr.mxu0 0.0
    %8771 = vmatpush1.msra.mxu0 0.0
    %8772 = vmatprep.subr.mxu0 0.0
    %8773 = vmatpush1.msra.mxu0 0.0
    %8774 = vmatprep.subr.mxu0 0.0
    %8775 = vmatpush1.msra.mxu0 0.0
    %8776 = vmatprep.subr.mxu0 0.0
    %8777 = vmatpush1.msra.mxu0 0.0
    %8778 = vmatprep.subr.mxu0 0.0
    %8779 = vmatpush1.msra.mxu0 0.0
    %8780 = vmatprep.subr.mxu0 0.0
    %8781 = vmatpush1.msra.mxu0 0.0
    %8782 = vmatprep.subr.mxu0 0.0
    %8783 = vmatpush1.msra.mxu0 0.0
    %8784 = vmatprep.subr.mxu0 0.0
    %8785 = vmatpush1.msra.mxu0 0.0
    %8786 = vmatprep.subr.mxu0 0.0
    %8787 = vmatpush1.msra.mxu0 0.0
    %8788 = vmatprep.subr.mxu0 0.0
    %8789 = vmatpush1.msra.mxu0 0.0
    %8790 = vmatprep.subr.mxu0 0.0
    %8791 = vmatpush1.msra.mxu0 0.0
    %8792 = vmatprep.subr.mxu0 0.0
    %8793 = vmatpush1.msra.mxu0 0.0
    %8794 = vmatprep.subr.mxu0 0.0
    %8795 = vmatpush1.msra.mxu0 0.0
    %8796 = vmatprep.subr.mxu0 0.0
    %8797 = vmatpush1.msra.mxu0 0.0
    %8798 = vmatprep.subr.mxu0 0.0
    %8799 = vmatpush1.msra.mxu0 0.0
    %8800 = vmatprep.subr.mxu0 0.0
    %8801 = vmatpush1.msra.mxu0 0.0
    %8802 = vmatprep.subr.mxu0 0.0
    %8803 = vmatpush1.msra.mxu0 0.0
    %8804 = vmatprep.subr.mxu0 0.0
    %8805 = vmatpush1.msra.mxu0 0.0
    %8806 = vmatprep.subr.mxu0 0.0
    %8807 = vmatpush1.msra.mxu0 0.0
    %8808 = vmatprep.subr.mxu0 0.0
    %8809 = vmatpush1.msra.mxu0 0.0
    %8810 = vmatprep.subr.mxu0 0.0
    %8811 = vmatpush1.msra.mxu0 0.0
    %8812 = vmatprep.subr.mxu0 0.0
    %8813 = vmatpush1.msra.mxu0 0.0
    %8814 = vmatprep.subr.mxu0 0.0
    %8815 = vmatpush1.msra.mxu0 0.0
    %8816 = vmatprep.subr.mxu0 0.0
    %8817 = vmatpush1.msra.mxu0 0.0
    %8818 = vmatprep.subr.mxu0 0.0
    %8819 = vmatpush1.msra.mxu0 0.0
    %8820 = vmatprep.subr.mxu0 0.0
    %8821 = vmatpush1.msra.mxu0 0.0
    %8822 = vmatprep.subr.mxu0 0.0
    %8823 = vmatpush1.msra.mxu0 0.0
    %8824 = vmatprep.subr.mxu0 0.0
    %8825 = vmatpush1.msra.mxu0 0.0
    %8826 = vmatprep.mubr.f32.mxu0 0.0
    %8827 = vmatmul.mubr.f32.gmra.mrb[0].mxu0 %v8760
    %v8828 = vpop.f32.mrb[0].mxu0
    %v8829 = vadd.f32 0.0, %v8828
    %v8830 = vpop.f32.mrb[0].mxu0
    %v8831 = vadd.f32 0.0, %v8830
    %8832 = vdwg.mxu0
    %v8833 = vld [vmem:[%s7] sm:$0xff]
    %v8834 = vld [vmem:[%s7 + $0x8] sm:$0xff]
    %v8835 = vld [vmem:[%s7 + $0x10] sm:$0xff]
    %v8836 = vld [vmem:[%s7 + $0x18] sm:$0xff]
    %v8837 = vld [vmem:[%s7 + $0x20] sm:$0xff]
    %v8838 = vld [vmem:[%s7 + $0x28] sm:$0xff]
    %v8839 = vld [vmem:[%s7 + $0x30] sm:$0xff]
    %v8840 = vld [vmem:[%s7 + $0x38] sm:$0xff]
    %v8841 = vld [vmem:[%s7 + $0x40] sm:$0xff]
    %v8842 = vld [vmem:[%s7 + $0x48] sm:$0xff]
    %v8843 = vld [vmem:[%s7 + $0x50] sm:$0xff]
    %v8844 = vld [vmem:[%s7 + $0x58] sm:$0xff]
    %v8845 = vld [vmem:[%s7 + $0x60] sm:$0xff]
    %v8846 = vld [vmem:[%s7 + $0x68] sm:$0xff]
    %v8847 = vld [vmem:[%s7 + $0x70] sm:$0xff]
    %v8848 = vld [vmem:[%s7 + $0x78] sm:$0xff]
    %v8849 = vld [vmem:[%s7 + $0x80] sm:$0xff]
    %v8850 = vld [vmem:[%s7 + $0x88] sm:$0xff]
    %v8851 = vld [vmem:[%s7 + $0x90] sm:$0xff]
    %v8852 = vld [vmem:[%s7 + $0x98] sm:$0xff]
    %v8853 = vld [vmem:[%s7 + $0xa0] sm:$0xff]
    %v8854 = vld [vmem:[%s7 + $0xa8] sm:$0xff]
    %v8855 = vld [vmem:[%s7 + $0xb0] sm:$0xff]
    %v8856 = vld [vmem:[%s7 + $0xb8] sm:$0xff]
    %v8857 = vld [vmem:[%s7 + $0xc0] sm:$0xff]
    %v8858 = vld [vmem:[%s7 + $0xc8] sm:$0xff]
    %v8859 = vld [vmem:[%s7 + $0xd0] sm:$0xff]
    %v8860 = vld [vmem:[%s7 + $0xd8] sm:$0xff]
    %v8861 = vld [vmem:[%s7 + $0xe0] sm:$0xff]
    %v8862 = vld [vmem:[%s7 + $0xe8] sm:$0xff]
    %v8863 = vld [vmem:[%s7 + $0xf0] sm:$0xff]
    %v8864 = vld [vmem:[%s7 + $0xf8] sm:$0xff]
    %v8865 = vld [vmem:[%s9] sm:$0x1]
    %v8867 = vlaneseq
    %v8868 = vshrl.u32 %v8867, 7
    %v8869 = vsub.s32 0, %v8868
    %v8870 = vrot.slane %v8865, %v8869
    %8872 = vmatprep.subr.mxu0 0.0
    %8873 = vmatpush1.msra.mxu0 %v8833
    %8874 = vmatprep.subr.mxu0 0.0
    %8875 = vmatpush1.msra.mxu0 %v8834
    %8876 = vmatprep.subr.mxu0 0.0
    %8877 = vmatpush1.msra.mxu0 %v8835
    %8878 = vmatprep.subr.mxu0 0.0
    %8879 = vmatpush1.msra.mxu0 %v8836
    %8880 = vmatprep.subr.mxu0 0.0
    %8881 = vmatpush1.msra.mxu0 %v8837
    %8882 = vmatprep.subr.mxu0 0.0
    %8883 = vmatpush1.msra.mxu0 %v8838
    %8884 = vmatprep.subr.mxu0 0.0
    %8885 = vmatpush1.msra.mxu0 %v8839
    %8886 = vmatprep.subr.mxu0 0.0
    %8887 = vmatpush1.msra.mxu0 %v8840
    %8888 = vmatprep.subr.mxu0 0.0
    %8889 = vmatpush1.msra.mxu0 %v8841
    %8890 = vmatprep.subr.mxu0 0.0
    %8891 = vmatpush1.msra.mxu0 %v8842
    %8892 = vmatprep.subr.mxu0 0.0
    %8893 = vmatpush1.msra.mxu0 %v8843
    %8894 = vmatprep.subr.mxu0 0.0
    %8895 = vmatpush1.msra.mxu0 %v8844
    %8896 = vmatprep.subr.mxu0 0.0
    %8897 = vmatpush1.msra.mxu0 %v8845
    %8898 = vmatprep.subr.mxu0 0.0
    %8899 = vmatpush1.msra.mxu0 %v8846
    %8900 = vmatprep.subr.mxu0 0.0
    %8901 = vmatpush1.msra.mxu0 %v8847
    %8902 = vmatprep.subr.mxu0 0.0
    %8903 = vmatpush1.msra.mxu0 %v8848
    %8904 = vmatprep.subr.mxu0 0.0
    %8905 = vmatpush1.msra.mxu0 %v8849
    %8906 = vmatprep.subr.mxu0 0.0
    %8907 = vmatpush1.msra.mxu0 %v8850
    %8908 = vmatprep.subr.mxu0 0.0
    %8909 = vmatpush1.msra.mxu0 %v8851
    %8910 = vmatprep.subr.mxu0 0.0
    %8911 = vmatpush1.msra.mxu0 %v8852
    %8912 = vmatprep.subr.mxu0 0.0
    %8913 = vmatpush1.msra.mxu0 %v8853
    %8914 = vmatprep.subr.mxu0 0.0
    %8915 = vmatpush1.msra.mxu0 %v8854
    %8916 = vmatprep.subr.mxu0 0.0
    %8917 = vmatpush1.msra.mxu0 %v8855
    %8918 = vmatprep.subr.mxu0 0.0
    %8919 = vmatpush1.msra.mxu0 %v8856
    %8920 = vmatprep.subr.mxu0 0.0
    %8921 = vmatpush1.msra.mxu0 %v8857
    %8922 = vmatprep.subr.mxu0 0.0
    %8923 = vmatpush1.msra.mxu0 %v8858
    %8924 = vmatprep.subr.mxu0 0.0
    %8925 = vmatpush1.msra.mxu0 %v8859
    %8926 = vmatprep.subr.mxu0 0.0
    %8927 = vmatpush1.msra.mxu0 %v8860
    %8928 = vmatprep.subr.mxu0 0.0
    %8929 = vmatpush1.msra.mxu0 %v8861
    %8930 = vmatprep.subr.mxu0 0.0
    %8931 = vmatpush1.msra.mxu0 %v8862
    %8932 = vmatprep.subr.mxu0 0.0
    %8933 = vmatpush1.msra.mxu0 %v8863
    %8934 = vmatprep.subr.mxu0 0.0
    %8935 = vmatpush1.msra.mxu0 %v8864
    %8936 = vmatprep.mubr.f32.mxu0 %v8831
    %8937 = vmatmul.mubr.f32.gmra.mrb[0].mxu0 %v8829
    %v8938 = vpop.f32.mrb[0].mxu0
    %v8939 = vadd.f32 %v8870, %v8938
    %v8940 = vpop.f32.mrb[0].mxu0
    %8941 = vdwg.mxu0
    %v8942 = vld [vmem:[%s8] sm:$0xff]
    %v8943 = vld [vmem:[%s8 + $0x8] sm:$0xff]
    %v8944 = vld [vmem:[%s8 + $0x10] sm:$0xff]
    %v8945 = vld [vmem:[%s8 + $0x18] sm:$0xff]
    %v8946 = vld [vmem:[%s8 + $0x20] sm:$0xff]
    %v8947 = vld [vmem:[%s8 + $0x28] sm:$0xff]
    %v8948 = vld [vmem:[%s8 + $0x30] sm:$0xff]
    %v8949 = vld [vmem:[%s8 + $0x38] sm:$0xff]
    %v8950 = vld [vmem:[%s8 + $0x40] sm:$0xff]
    %v8951 = vld [vmem:[%s8 + $0x48] sm:$0xff]
    %v8952 = vld [vmem:[%s8 + $0x50] sm:$0xff]
    %v8953 = vld [vmem:[%s8 + $0x58] sm:$0xff]
    %v8954 = vld [vmem:[%s8 + $0x60] sm:$0xff]
    %v8955 = vld [vmem:[%s8 + $0x68] sm:$0xff]
    %v8956 = vld [vmem:[%s8 + $0x70] sm:$0xff]
    %v8957 = vld [vmem:[%s8 + $0x78] sm:$0xff]
    %v8958 = vld [vmem:[%s8 + $0x80] sm:$0xff]
    %v8959 = vld [vmem:[%s8 + $0x88] sm:$0xff]
    %v8960 = vld [vmem:[%s8 + $0x90] sm:$0xff]
    %v8961 = vld [vmem:[%s8 + $0x98] sm:$0xff]
    %v8962 = vld [vmem:[%s8 + $0xa0] sm:$0xff]
    %v8963 = vld [vmem:[%s8 + $0xa8] sm:$0xff]
    %v8964 = vld [vmem:[%s8 + $0xb0] sm:$0xff]
    %v8965 = vld [vmem:[%s8 + $0xb8] sm:$0xff]
    %v8966 = vld [vmem:[%s8 + $0xc0] sm:$0xff]
    %v8967 = vld [vmem:[%s8 + $0xc8] sm:$0xff]
    %v8968 = vld [vmem:[%s8 + $0xd0] sm:$0xff]
    %v8969 = vld [vmem:[%s8 + $0xd8] sm:$0xff]
    %v8970 = vld [vmem:[%s8 + $0xe0] sm:$0xff]
    %v8971 = vld [vmem:[%s8 + $0xe8] sm:$0xff]
    %v8972 = vld [vmem:[%s8 + $0xf0] sm:$0xff]
    %v8973 = vld [vmem:[%s8 + $0xf8] sm:$0xff]
    %v8974 = vld [vmem:[%s10] sm:$0x1]
    %v8976 = vlaneseq
    %v8977 = vshrl.u32 %v8976, 7
    %v8978 = vsub.s32 0, %v8977
    %v8979 = vrot.slane %v8974, %v8978
    %v8983 = vrot.slane %v8829, 2
    %v8984 = vrot.slane %v8831, 2
    %8987 = vmatprep.subr.mxu0 0.0
    %8988 = vmatpush1.msra.mxu0 %v8942
    %8989 = vmatprep.subr.mxu0 0.0
    %8990 = vmatpush1.msra.mxu0 %v8943
    %8991 = vmatprep.subr.mxu0 0.0
    %8992 = vmatpush1.msra.mxu0 %v8944
    %8993 = vmatprep.subr.mxu0 0.0
    %8994 = vmatpush1.msra.mxu0 %v8945
    %8995 = vmatprep.subr.mxu0 0.0
    %8996 = vmatpush1.msra.mxu0 %v8946
    %8997 = vmatprep.subr.mxu0 0.0
    %8998 = vmatpush1.msra.mxu0 %v8947
    %8999 = vmatprep.subr.mxu0 0.0
    %9000 = vmatpush1.msra.mxu0 %v8948
    %9001 = vmatprep.subr.mxu0 0.0
    %9002 = vmatpush1.msra.mxu0 %v8949
    %9003 = vmatprep.subr.mxu0 0.0
    %9004 = vmatpush1.msra.mxu0 %v8950
    %9005 = vmatprep.subr.mxu0 0.0
    %9006 = vmatpush1.msra.mxu0 %v8951
    %9007 = vmatprep.subr.mxu0 0.0
    %9008 = vmatpush1.msra.mxu0 %v8952
    %9009 = vmatprep.subr.mxu0 0.0
    %9010 = vmatpush1.msra.mxu0 %v8953
    %9011 = vmatprep.subr.mxu0 0.0
    %9012 = vmatpush1.msra.mxu0 %v8954
    %9013 = vmatprep.subr.mxu0 0.0
    %9014 = vmatpush1.msra.mxu0 %v8955
    %9015 = vmatprep.subr.mxu0 0.0
    %9016 = vmatpush1.msra.mxu0 %v8956
    %9017 = vmatprep.subr.mxu0 0.0
    %9018 = vmatpush1.msra.mxu0 %v8957
    %9019 = vmatprep.subr.mxu0 0.0
    %9020 = vmatpush1.msra.mxu0 %v8958
    %9021 = vmatprep.subr.mxu0 0.0
    %9022 = vmatpush1.msra.mxu0 %v8959
    %9023 = vmatprep.subr.mxu0 0.0
    %9024 = vmatpush1.msra.mxu0 %v8960
    %9025 = vmatprep.subr.mxu0 0.0
    %9026 = vmatpush1.msra.mxu0 %v8961
    %9027 = vmatprep.subr.mxu0 0.0
    %9028 = vmatpush1.msra.mxu0 %v8962
    %9029 = vmatprep.subr.mxu0 0.0
    %9030 = vmatpush1.msra.mxu0 %v8963
    %9031 = vmatprep.subr.mxu0 0.0
    %9032 = vmatpush1.msra.mxu0 %v8964
    %9033 = vmatprep.subr.mxu0 0.0
    %9034 = vmatpush1.msra.mxu0 %v8965
    %9035 = vmatprep.subr.mxu0 0.0
    %9036 = vmatpush1.msra.mxu0 %v8966
    %9037 = vmatprep.subr.mxu0 0.0
    %9038 = vmatpush1.msra.mxu0 %v8967
    %9039 = vmatprep.subr.mxu0 0.0
    %9040 = vmatpush1.msra.mxu0 %v8968
    %9041 = vmatprep.subr.mxu0 0.0
    %9042 = vmatpush1.msra.mxu0 %v8969
    %9043 = vmatprep.subr.mxu0 0.0
    %9044 = vmatpush1.msra.mxu0 %v8970
    %9045 = vmatprep.subr.mxu0 0.0
    %9046 = vmatpush1.msra.mxu0 %v8971
    %9047 = vmatprep.subr.mxu0 0.0
    %9048 = vmatpush1.msra.mxu0 %v8972
    %9049 = vmatprep.subr.mxu0 0.0
    %9050 = vmatpush1.msra.mxu0 %v8973
    %9051 = vmatprep.mubr.f32.mxu0 %v8984
    %9052 = vmatmul.mubr.f32.gmra.mrb[0].mxu0 %v8983
    %v9053 = vpop.f32.mrb[0].mxu0
    %v9054 = vadd.f32 %v8979, %v9053
    %v9055 = vpop.f32.mrb[0].mxu0
    %9056 = vdwg.mxu0
    %v9057 = vld [vmem:[%s11] sm:$0x1]
    %v9058 = vld [vmem:[%s11 + $0x1] sm:$0x1]
    %v9059 = vld [vmem:[%s11 + $0x2] sm:$0x1]
    %v9060 = vld [vmem:[%s11 + $0x3] sm:$0x1]
    %v9061 = vld [vmem:[%s12] sm:$0x1]
    %v9062 = vld [vmem:[%s12 + $0x1] sm:$0x1]
    %v9063 = vld [vmem:[%s12 + $0x2] sm:$0x1]
    %v9064 = vld [vmem:[%s12 + $0x3] sm:$0x1]
    %s9065 = sld [smem:[#allocation6]]
    %v9066 = vlaneseq
    %v9067 = vshrl.u32 %v9066, 7
    %v9068 = vsub.s32 0, %v9067
    %v9069 = vrot.slane %v8939, %v9068
    %9071 = vbcast.lane.b32.xlu0 %v9069, 256
    %v9072 = vpop.permute.xlu0 %9071
    %s9074 = sor.u32 256, 8
    %9075 = vbcast.lane.b32.xlu0 %v9069, %s9074
    %v9076 = vpop.permute.xlu0 %9075
    %v9077 = vlaneseq
    %v9078 = vshrl.u32 %v9077, 7
    %v9079 = vsub.s32 0, %v9078
    %v9080 = vrot.slane %v9054, %v9079
    %v9081 = vmul.f32 %v9072, %v9080
    %v9082 = vmul.f32 %v9076, %v9080
    %v9087 = vlaneseq
    %v9088 = vshrl.u32 %v9087, 7
    %v9089 = vsub.s32 0, %v9088
    %v9090 = vrot.slane %v9057, %v9089
    %v9091 = vlaneseq
    %v9092 = vshrl.u32 %v9091, 7
    %v9093 = vsub.s32 0, %v9092
    %v9094 = vrot.slane %v9058, %v9093
    %v9095 = vlaneseq
    %v9096 = vshrl.u32 %v9095, 7
    %v9097 = vsub.s32 0, %v9096
    %v9098 = vrot.slane %v9059, %v9097
    %v9099 = vlaneseq
    %v9100 = vshrl.u32 %v9099, 7
    %v9101 = vsub.s32 0, %v9100
    %v9102 = vrot.slane %v9060, %v9101
    %9103 = vset.pattern.permute.xlu0 0
    %9104 = vperm.xlu0 %9103, %v9090
    %v9105 = vpop.permute.xlu0 %9104
    %9107 = vset.pattern.permute.xlu0 0
    %9108 = vperm.xlu0 %9107, %v9094
    %v9109 = vpop.permute.xlu0 %9108
    %9111 = vset.pattern.permute.xlu0 0
    %9112 = vperm.xlu0 %9111, %v9098
    %v9113 = vpop.permute.xlu0 %9112
    %9115 = vset.pattern.permute.xlu0 0
    %9116 = vperm.xlu0 %9115, %v9102
    %v9117 = vpop.permute.xlu0 %9116
    %v9119 = vmul.f32 %v9105, %v9081
    %v9120 = vmul.f32 %v9105, %v9082
    %v9121 = vmul.f32 %v9109, %v9081
    %v9122 = vmul.f32 %v9109, %v9082
    %v9123 = vmul.f32 %v9113, %v9081
    %v9124 = vmul.f32 %v9113, %v9082
    %v9125 = vmul.f32 %v9117, %v9081
    %v9126 = vmul.f32 %v9117, %v9082
    %v9131 = vlaneseq
    %v9132 = vshrl.u32 %v9131, 7
    %v9133 = vsub.s32 0, %v9132
    %v9134 = vrot.slane %v9061, %v9133
    %v9135 = vlaneseq
    %v9136 = vshrl.u32 %v9135, 7
    %v9137 = vsub.s32 0, %v9136
    %v9138 = vrot.slane %v9062, %v9137
    %v9139 = vlaneseq
    %v9140 = vshrl.u32 %v9139, 7
    %v9141 = vsub.s32 0, %v9140
    %v9142 = vrot.slane %v9063, %v9141
    %v9143 = vlaneseq
    %v9144 = vshrl.u32 %v9143, 7
    %v9145 = vsub.s32 0, %v9144
    %v9146 = vrot.slane %v9064, %v9145
    %9147 = vset.pattern.permute.xlu0 0
    %9148 = vperm.xlu0 %9147, %v9134
    %v9149 = vpop.permute.xlu0 %9148
    %9151 = vset.pattern.permute.xlu0 0
    %9152 = vperm.xlu0 %9151, %v9138
    %v9153 = vpop.permute.xlu0 %9152
    %9155 = vset.pattern.permute.xlu0 0
    %9156 = vperm.xlu0 %9155, %v9142
    %v9157 = vpop.permute.xlu0 %9156
    %9159 = vset.pattern.permute.xlu0 0
    %9160 = vperm.xlu0 %9159, %v9146
    %v9161 = vpop.permute.xlu0 %9160
    %v9163 = vadd.f32 %v9119, %v9149
    %v9164 = vadd.f32 %v9120, %v9149
    %v9165 = vadd.f32 %v9121, %v9153
    %v9166 = vadd.f32 %v9122, %v9153
    %v9167 = vadd.f32 %v9123, %v9157
    %v9168 = vadd.f32 %v9124, %v9157
    %v9169 = vadd.f32 %v9125, %v9161
    %v9170 = vadd.f32 %v9126, %v9161
    %vm9171 = vcmask 130048
    %v9172 = vsel %vm9171, %v9163, -inf
    %9173 = vmax.xlane.f32.xlu0 %v9172
    %v9174 = vpop.xlane.xlu0 %9173
    %v9175 = vsel %vm9171, %v9164, -inf
    %9176 = vmax.xlane.f32.xlu0 %v9175
    %v9177 = vpop.xlane.xlu0 %9176
    %v9178 = vsel %vm9171, %v9165, -inf
    %9179 = vmax.xlane.f32.xlu0 %v9178
    %v9180 = vpop.xlane.xlu0 %9179
    %v9181 = vsel %vm9171, %v9166, -inf
    %9182 = vmax.xlane.f32.xlu0 %v9181
    %v9183 = vpop.xlane.xlu0 %9182
    %v9184 = vsel %vm9171, %v9167, -inf
    %9185 = vmax.xlane.f32.xlu0 %v9184
    %v9186 = vpop.xlane.xlu0 %9185
    %v9187 = vsel %vm9171, %v9168, -inf
    %9188 = vmax.xlane.f32.xlu0 %v9187
    %v9189 = vpop.xlane.xlu0 %9188
    %v9190 = vsel %vm9171, %v9169, -inf
    %9191 = vmax.xlane.f32.xlu0 %v9190
    %v9192 = vpop.xlane.xlu0 %9191
    %v9193 = vsel %vm9171, %v9170, -inf
    %9194 = vmax.xlane.f32.xlu0 %v9193
    %v9195 = vpop.xlane.xlu0 %9194
    %v9196 = vsub.f32 %v9163, %v9174
    %v9197 = vsub.f32 %v9164, %v9177
    %v9198 = vsub.f32 %v9165, %v9180
    %v9199 = vsub.f32 %v9166, %v9183
    %v9200 = vsub.f32 %v9167, %v9186
    %v9201 = vsub.f32 %v9168, %v9189
    %v9202 = vsub.f32 %v9169, %v9192
    %v9203 = vsub.f32 %v9170, %v9195
    %v9204 = vmul.f32 %v9196, 1.442695
    %v9205 = vpow.pop %v9204
    %v9206 = vmul.f32 %v9197, 1.442695
    %v9207 = vpow.pop %v9206
    %v9208 = vmul.f32 %v9198, 1.442695
    %v9209 = vpow.pop %v9208
    %v9210 = vmul.f32 %v9199, 1.442695
    %v9211 = vpow.pop %v9210
    %v9212 = vmul.f32 %v9200, 1.442695
    %v9213 = vpow.pop %v9212
    %v9214 = vmul.f32 %v9201, 1.442695
    %v9215 = vpow.pop %v9214
    %v9216 = vmul.f32 %v9202, 1.442695
    %v9217 = vpow.pop %v9216
    %v9218 = vmul.f32 %v9203, 1.442695
    %v9219 = vpow.pop %v9218
    %v9220 = vsel %vm9171, %v9205, 0.0
    %9221 = vadd.xlane.f32.xlu0 %v9220
    %v9222 = vpop.xlane.xlu0 %9221
    %v9223 = vsel %vm9171, %v9207, 0.0
    %9224 = vadd.xlane.f32.xlu0 %v9223
    %v9225 = vpop.xlane.xlu0 %9224
    %v9226 = vsel %vm9171, %v9209, 0.0
    %9227 = vadd.xlane.f32.xlu0 %v9226
    %v9228 = vpop.xlane.xlu0 %9227
    %v9229 = vsel %vm9171, %v9211, 0.0
    %9230 = vadd.xlane.f32.xlu0 %v9229
    %v9231 = vpop.xlane.xlu0 %9230
    %v9232 = vsel %vm9171, %v9213, 0.0
    %9233 = vadd.xlane.f32.xlu0 %v9232
    %v9234 = vpop.xlane.xlu0 %9233
    %v9235 = vsel %vm9171, %v9215, 0.0
    %9236 = vadd.xlane.f32.xlu0 %v9235
    %v9237 = vpop.xlane.xlu0 %9236
    %v9238 = vsel %vm9171, %v9217, 0.0
    %9239 = vadd.xlane.f32.xlu0 %v9238
    %v9240 = vpop.xlane.xlu0 %9239
    %v9241 = vsel %vm9171, %v9219, 0.0
    %9242 = vadd.xlane.f32.xlu0 %v9241
    %v9243 = vpop.xlane.xlu0 %9242
    %v9244 = vrcp.pop %v9222
    %v9245 = vmul.f32 %v9205, %v9244
    %v9246 = vrcp.pop %v9225
    %v9247 = vmul.f32 %v9207, %v9246
    %v9248 = vrcp.pop %v9228
    %v9249 = vmul.f32 %v9209, %v9248
    %v9250 = vrcp.pop %v9231
    %v9251 = vmul.f32 %v9211, %v9250
    %v9252 = vrcp.pop %v9234
    %v9253 = vmul.f32 %v9213, %v9252
    %v9254 = vrcp.pop %v9237
    %v9255 = vmul.f32 %v9215, %v9254
    %v9256 = vrcp.pop %v9240
    %v9257 = vmul.f32 %v9217, %v9256
    %v9258 = vrcp.pop %v9243
    %v9259 = vmul.f32 %v9219, %v9258
    %v9260 = vld [vmem:[#allocation5] sm:$0xff]
    %v9261 = vld [vmem:[#allocation5 + $0x8] sm:$0xff]
    %v9262 = vld [vmem:[#allocation5 + $0x10] sm:$0xff]
    %v9263 = vld [vmem:[#allocation5 + $0x18] sm:$0xff]
    %v9264 = vld [vmem:[#allocation5 + $0x20] sm:$0xff]
    %v9265 = vld [vmem:[#allocation5 + $0x28] sm:$0xff]
    %v9266 = vld [vmem:[#allocation5 + $0x30] sm:$0xff]
    %v9267 = vld [vmem:[#allocation5 + $0x38] sm:$0xff]
    %v9269 = vsel %vm9171, %v9245, 0
    %v9272 = vsel %vm9171, %v9247, 0
    %9274 = vmatprep.subr.mxu0 0.0
    %9275 = vmatpush1.msra.mxu0 %v9260
    %9276 = vmatprep.subr.mxu0 0.0
    %9277 = vmatpush1.msra.mxu0 %v9261
    %9278 = vmatprep.subr.mxu0 0.0
    %9279 = vmatpush1.msra.mxu0 0.0
    %9280 = vmatprep.subr.mxu0 0.0
    %9281 = vmatpush1.msra.mxu0 0.0
    %9282 = vmatprep.subr.mxu0 0.0
    %9283 = vmatpush1.msra.mxu0 0.0
    %9284 = vmatprep.subr.mxu0 0.0
    %9285 = vmatpush1.msra.mxu0 0.0
    %9286 = vmatprep.subr.mxu0 0.0
    %9287 = vmatpush1.msra.mxu0 0.0
    %9288 = vmatprep.subr.mxu0 0.0
    %9289 = vmatpush1.msra.mxu0 0.0
    %9290 = vmatprep.subr.mxu0 0.0
    %9291 = vmatpush1.msra.mxu0 0.0
    %9292 = vmatprep.subr.mxu0 0.0
    %9293 = vmatpush1.msra.mxu0 0.0
    %9294 = vmatprep.subr.mxu0 0.0
    %9295 = vmatpush1.msra.mxu0 0.0
    %9296 = vmatprep.subr.mxu0 0.0
    %9297 = vmatpush1.msra.mxu0 0.0
    %9298 = vmatprep.subr.mxu0 0.0
    %9299 = vmatpush1.msra.mxu0 0.0
    %9300 = vmatprep.subr.mxu0 0.0
    %9301 = vmatpush1.msra.mxu0 0.0
    %9302 = vmatprep.subr.mxu0 0.0
    %9303 = vmatpush1.msra.mxu0 0.0
    %9304 = vmatprep.subr.mxu0 0.0
    %9305 = vmatpush1.msra.mxu0 0.0
    %9306 = vmatprep.subr.mxu0 0.0
    %9307 = vmatpush1.msra.mxu0 0.0
    %9308 = vmatprep.subr.mxu0 0.0
    %9309 = vmatpush1.msra.mxu0 0.0
    %9310 = vmatprep.subr.mxu0 0.0
    %9311 = vmatpush1.msra.mxu0 0.0
    %9312 = vmatprep.subr.mxu0 0.0
    %9313 = vmatpush1.msra.mxu0 0.0
    %9314 = vmatprep.subr.mxu0 0.0
    %9315 = vmatpush1.msra.mxu0 0.0
    %9316 = vmatprep.subr.mxu0 0.0
    %9317 = vmatpush1.msra.mxu0 0.0
    %9318 = vmatprep.subr.mxu0 0.0
    %9319 = vmatpush1.msra.mxu0 0.0
    %9320 = vmatprep.subr.mxu0 0.0
    %9321 = vmatpush1.msra.mxu0 0.0
    %9322 = vmatprep.subr.mxu0 0.0
    %9323 = vmatpush1.msra.mxu0 0.0
    %9324 = vmatprep.subr.mxu0 0.0
    %9325 = vmatpush1.msra.mxu0 0.0
    %9326 = vmatprep.subr.mxu0 0.0
    %9327 = vmatpush1.msra.mxu0 0.0
    %9328 = vmatprep.subr.mxu0 0.0
    %9329 = vmatpush1.msra.mxu0 0.0
    %9330 = vmatprep.subr.mxu0 0.0
    %9331 = vmatpush1.msra.mxu0 0.0
    %9332 = vmatprep.subr.mxu0 0.0
    %9333 = vmatpush1.msra.mxu0 0.0
    %9334 = vmatprep.subr.mxu0 0.0
    %9335 = vmatpush1.msra.mxu0 0.0
    %9336 = vmatprep.subr.mxu0 0.0
    %9337 = vmatpush1.msra.mxu0 0.0
    %9338 = vmatprep.mubr.f32.mxu0 0.0
    %9339 = vmatmul.mubr.f32.gmra.mrb[0].mxu0 %v9269
    %v9340 = vpop.f32.mrb[0].mxu0
    %v9341 = vadd.f32 0.0, %v9340
    %v9342 = vpop.f32.mrb[0].mxu0
    %9343 = vmatprep.mubr.f32.mxu0 0.0
    %9344 = vmatmul.mubr.f32.gmra.mrb[0].mxu0 %v9272
    %v9345 = vpop.f32.mrb[0].mxu0
    %v9346 = vadd.f32 0.0, %v9345
    %v9347 = vpop.f32.mrb[0].mxu0
    %9348 = vdwg.mxu0
    %v9350 = vsel %vm9171, %v9249, 0
    %v9353 = vsel %vm9171, %v9251, 0
    %9355 = vmatprep.subr.mxu0 0.0
    %9356 = vmatpush1.msra.mxu0 %v9262
    %9357 = vmatprep.subr.mxu0 0.0
    %9358 = vmatpush1.msra.mxu0 %v9263
    %9359 = vmatprep.subr.mxu0 0.0
    %9360 = vmatpush1.msra.mxu0 0.0
    %9361 = vmatprep.subr.mxu0 0.0
    %9362 = vmatpush1.msra.mxu0 0.0
    %9363 = vmatprep.subr.mxu0 0.0
    %9364 = vmatpush1.msra.mxu0 0.0
    %9365 = vmatprep.subr.mxu0 0.0
    %9366 = vmatpush1.msra.mxu0 0.0
    %9367 = vmatprep.subr.mxu0 0.0
    %9368 = vmatpush1.msra.mxu0 0.0
    %9369 = vmatprep.subr.mxu0 0.0
    %9370 = vmatpush1.msra.mxu0 0.0
    %9371 = vmatprep.subr.mxu0 0.0
    %9372 = vmatpush1.msra.mxu0 0.0
    %9373 = vmatprep.subr.mxu0 0.0
    %9374 = vmatpush1.msra.mxu0 0.0
    %9375 = vmatprep.subr.mxu0 0.0
    %9376 = vmatpush1.msra.mxu0 0.0
    %9377 = vmatprep.subr.mxu0 0.0
    %9378 = vmatpush1.msra.mxu0 0.0
    %9379 = vmatprep.subr.mxu0 0.0
    %9380 = vmatpush1.msra.mxu0 0.0
    %9381 = vmatprep.subr.mxu0 0.0
    %9382 = vmatpush1.msra.mxu0 0.0
    %9383 = vmatprep.subr.mxu0 0.0
    %9384 = vmatpush1.msra.mxu0 0.0
    %9385 = vmatprep.subr.mxu0 0.0
    %9386 = vmatpush1.msra.mxu0 0.0
    %9387 = vmatprep.subr.mxu0 0.0
    %9388 = vmatpush1.msra.mxu0 0.0
    %9389 = vmatprep.subr.mxu0 0.0
    %9390 = vmatpush1.msra.mxu0 0.0
    %9391 = vmatprep.subr.mxu0 0.0
    %9392 = vmatpush1.msra.mxu0 0.0
    %9393 = vmatprep.subr.mxu0 0.0
    %9394 = vmatpush1.msra.mxu0 0.0
    %9395 = vmatprep.subr.mxu0 0.0
    %9396 = vmatpush1.msra.mxu0 0.0
    %9397 = vmatprep.subr.mxu0 0.0
    %9398 = vmatpush1.msra.mxu0 0.0
    %9399 = vmatprep.subr.mxu0 0.0
    %9400 = vmatpush1.msra.mxu0 0.0
    %9401 = vmatprep.subr.mxu0 0.0
    %9402 = vmatpush1.msra.mxu0 0.0
    %9403 = vmatprep.subr.mxu0 0.0
    %9404 = vmatpush1.msra.mxu0 0.0
    %9405 = vmatprep.subr.mxu0 0.0
    %9406 = vmatpush1.msra.mxu0 0.0
    %9407 = vmatprep.subr.mxu0 0.0
    %9408 = vmatpush1.msra.mxu0 0.0
    %9409 = vmatprep.subr.mxu0 0.0
    %9410 = vmatpush1.msra.mxu0 0.0
    %9411 = vmatprep.subr.mxu0 0.0
    %9412 = vmatpush1.msra.mxu0 0.0
    %9413 = vmatprep.subr.mxu0 0.0
    %9414 = vmatpush1.msra.mxu0 0.0
    %9415 = vmatprep.subr.mxu0 0.0
    %9416 = vmatpush1.msra.mxu0 0.0
    %9417 = vmatprep.subr.mxu0 0.0
    %9418 = vmatpush1.msra.mxu0 0.0
    %9419 = vmatprep.mubr.f32.mxu0 0.0
    %9420 = vmatmul.mubr.f32.gmra.mrb[0].mxu0 %v9350
    %v9421 = vpop.f32.mrb[0].mxu0
    %v9422 = vadd.f32 0.0, %v9421
    %v9423 = vpop.f32.mrb[0].mxu0
    %9424 = vmatprep.mubr.f32.mxu0 0.0
    %9425 = vmatmul.mubr.f32.gmra.mrb[0].mxu0 %v9353
    %v9426 = vpop.f32.mrb[0].mxu0
    %v9427 = vadd.f32 0.0, %v9426
    %v9428 = vpop.f32.mrb[0].mxu0
    %9429 = vdwg.mxu0
    %v9431 = vsel %vm9171, %v9253, 0
    %v9434 = vsel %vm9171, %v9255, 0
    %9436 = vmatprep.subr.mxu0 0.0
    %9437 = vmatpush1.msra.mxu0 %v9264
    %9438 = vmatprep.subr.mxu0 0.0
    %9439 = vmatpush1.msra.mxu0 %v9265
    %9440 = vmatprep.subr.mxu0 0.0
    %9441 = vmatpush1.msra.mxu0 0.0
    %9442 = vmatprep.subr.mxu0 0.0
    %9443 = vmatpush1.msra.mxu0 0.0
    %9444 = vmatprep.subr.mxu0 0.0
    %9445 = vmatpush1.msra.mxu0 0.0
    %9446 = vmatprep.subr.mxu0 0.0
    %9447 = vmatpush1.msra.mxu0 0.0
    %9448 = vmatprep.subr.mxu0 0.0
    %9449 = vmatpush1.msra.mxu0 0.0
    %9450 = vmatprep.subr.mxu0 0.0
    %9451 = vmatpush1.msra.mxu0 0.0
    %9452 = vmatprep.subr.mxu0 0.0
    %9453 = vmatpush1.msra.mxu0 0.0
    %9454 = vmatprep.subr.mxu0 0.0
    %9455 = vmatpush1.msra.mxu0 0.0
    %9456 = vmatprep.subr.mxu0 0.0
    %9457 = vmatpush1.msra.mxu0 0.0
    %9458 = vmatprep.subr.mxu0 0.0
    %9459 = vmatpush1.msra.mxu0 0.0
    %9460 = vmatprep.subr.mxu0 0.0
    %9461 = vmatpush1.msra.mxu0 0.0
    %9462 = vmatprep.subr.mxu0 0.0
    %9463 = vmatpush1.msra.mxu0 0.0
    %9464 = vmatprep.subr.mxu0 0.0
    %9465 = vmatpush1.msra.mxu0 0.0
    %9466 = vmatprep.subr.mxu0 0.0
    %9467 = vmatpush1.msra.mxu0 0.0
    %9468 = vmatprep.subr.mxu0 0.0
    %9469 = vmatpush1.msra.mxu0 0.0
    %9470 = vmatprep.subr.mxu0 0.0
    %9471 = vmatpush1.msra.mxu0 0.0
    %9472 = vmatprep.subr.mxu0 0.0
    %9473 = vmatpush1.msra.mxu0 0.0
    %9474 = vmatprep.subr.mxu0 0.0
    %9475 = vmatpush1.msra.mxu0 0.0
    %9476 = vmatprep.subr.mxu0 0.0
    %9477 = vmatpush1.msra.mxu0 0.0
    %9478 = vmatprep.subr.mxu0 0.0
    %9479 = vmatpush1.msra.mxu0 0.0
    %9480 = vmatprep.subr.mxu0 0.0
    %9481 = vmatpush1.msra.mxu0 0.0
    %9482 = vmatprep.subr.mxu0 0.0
    %9483 = vmatpush1.msra.mxu0 0.0
    %9484 = vmatprep.subr.mxu0 0.0
    %9485 = vmatpush1.msra.mxu0 0.0
    %9486 = vmatprep.subr.mxu0 0.0
    %9487 = vmatpush1.msra.mxu0 0.0
    %9488 = vmatprep.subr.mxu0 0.0
    %9489 = vmatpush1.msra.mxu0 0.0
    %9490 = vmatprep.subr.mxu0 0.0
    %9491 = vmatpush1.msra.mxu0 0.0
    %9492 = vmatprep.subr.mxu0 0.0
    %9493 = vmatpush1.msra.mxu0 0.0
    %9494 = vmatprep.subr.mxu0 0.0
    %9495 = vmatpush1.msra.mxu0 0.0
    %9496 = vmatprep.subr.mxu0 0.0
    %9497 = vmatpush1.msra.mxu0 0.0
    %9498 = vmatprep.subr.mxu0 0.0
    %9499 = vmatpush1.msra.mxu0 0.0
    %9500 = vmatprep.mubr.f32.mxu0 0.0
    %9501 = vmatmul.mubr.f32.gmra.mrb[0].mxu0 %v9431
    %v9502 = vpop.f32.mrb[0].mxu0
    %v9503 = vadd.f32 0.0, %v9502
    %v9504 = vpop.f32.mrb[0].mxu0
    %9505 = vmatprep.mubr.f32.mxu0 0.0
    %9506 = vmatmul.mubr.f32.gmra.mrb[0].mxu0 %v9434
    %v9507 = vpop.f32.mrb[0].mxu0
    %v9508 = vadd.f32 0.0, %v9507
    %v9509 = vpop.f32.mrb[0].mxu0
    %9510 = vdwg.mxu0
    %v9512 = vsel %vm9171, %v9257, 0
    %v9515 = vsel %vm9171, %v9259, 0
    %9517 = vmatprep.subr.mxu0 0.0
    %9518 = vmatpush1.msra.mxu0 %v9266
    %9519 = vmatprep.subr.mxu0 0.0
    %9520 = vmatpush1.msra.mxu0 %v9267
    %9521 = vmatprep.subr.mxu0 0.0
    %9522 = vmatpush1.msra.mxu0 0.0
    %9523 = vmatprep.subr.mxu0 0.0
    %9524 = vmatpush1.msra.mxu0 0.0
    %9525 = vmatprep.subr.mxu0 0.0
    %9526 = vmatpush1.msra.mxu0 0.0
    %9527 = vmatprep.subr.mxu0 0.0
    %9528 = vmatpush1.msra.mxu0 0.0
    %9529 = vmatprep.subr.mxu0 0.0
    %9530 = vmatpush1.msra.mxu0 0.0
    %9531 = vmatprep.subr.mxu0 0.0
    %9532 = vmatpush1.msra.mxu0 0.0
    %9533 = vmatprep.subr.mxu0 0.0
    %9534 = vmatpush1.msra.mxu0 0.0
    %9535 = vmatprep.subr.mxu0 0.0
    %9536 = vmatpush1.msra.mxu0 0.0
    %9537 = vmatprep.subr.mxu0 0.0
    %9538 = vmatpush1.msra.mxu0 0.0
    %9539 = vmatprep.subr.mxu0 0.0
    %9540 = vmatpush1.msra.mxu0 0.0
    %9541 = vmatprep.subr.mxu0 0.0
    %9542 = vmatpush1.msra.mxu0 0.0
    %9543 = vmatprep.subr.mxu0 0.0
    %9544 = vmatpush1.msra.mxu0 0.0
    %9545 = vmatprep.subr.mxu0 0.0
    %9546 = vmatpush1.msra.mxu0 0.0
    %9547 = vmatprep.subr.mxu0 0.0
    %9548 = vmatpush1.msra.mxu0 0.0
    %9549 = vmatprep.subr.mxu0 0.0
    %9550 = vmatpush1.msra.mxu0 0.0
    %9551 = vmatprep.subr.mxu0 0.0
    %9552 = vmatpush1.msra.mxu0 0.0
    %9553 = vmatprep.subr.mxu0 0.0
    %9554 = vmatpush1.msra.mxu0 0.0
    %9555 = vmatprep.subr.mxu0 0.0
    %9556 = vmatpush1.msra.mxu0 0.0
    %9557 = vmatprep.subr.mxu0 0.0
    %9558 = vmatpush1.msra.mxu0 0.0
    %9559 = vmatprep.subr.mxu0 0.0
    %9560 = vmatpush1.msra.mxu0 0.0
    %9561 = vmatprep.subr.mxu0 0.0
    %9562 = vmatpush1.msra.mxu0 0.0
    %9563 = vmatprep.subr.mxu0 0.0
    %9564 = vmatpush1.msra.mxu0 0.0
    %9565 = vmatprep.subr.mxu0 0.0
    %9566 = vmatpush1.msra.mxu0 0.0
    %9567 = vmatprep.subr.mxu0 0.0
    %9568 = vmatpush1.msra.mxu0 0.0
    %9569 = vmatprep.subr.mxu0 0.0
    %9570 = vmatpush1.msra.mxu0 0.0
    %9571 = vmatprep.subr.mxu0 0.0
    %9572 = vmatpush1.msra.mxu0 0.0
    %9573 = vmatprep.subr.mxu0 0.0
    %9574 = vmatpush1.msra.mxu0 0.0
    %9575 = vmatprep.subr.mxu0 0.0
    %9576 = vmatpush1.msra.mxu0 0.0
    %9577 = vmatprep.subr.mxu0 0.0
    %9578 = vmatpush1.msra.mxu0 0.0
    %9579 = vmatprep.subr.mxu0 0.0
    %9580 = vmatpush1.msra.mxu0 0.0
    %9581 = vmatprep.mubr.f32.mxu0 0.0
    %9582 = vmatmul.mubr.f32.gmra.mrb[0].mxu0 %v9512
    %v9583 = vpop.f32.mrb[0].mxu0
    %v9584 = vadd.f32 0.0, %v9583
    %v9585 = vpop.f32.mrb[0].mxu0
    %9586 = vmatprep.mubr.f32.mxu0 0.0
    %9587 = vmatmul.mubr.f32.gmra.mrb[0].mxu0 %v9515
    %v9588 = vpop.f32.mrb[0].mxu0
    %v9589 = vadd.f32 0.0, %v9588
    %v9590 = vpop.f32.mrb[0].mxu0
    %9591 = vdwg.mxu0
    %v9592 = vstv %s9065
    %v9593 = vmul.f32 %v9592, %v9341
    %v9594 = vmul.f32 %v9592, %v9346
    %v9595 = vmul.f32 %v9592, %v9422
    %v9596 = vmul.f32 %v9592, %v9427
    %v9597 = vmul.f32 %v9592, %v9503
    %v9598 = vmul.f32 %v9592, %v9508
    %v9599 = vmul.f32 %v9592, %v9584
    %v9600 = vmul.f32 %v9592, %v9589
    %v9601 = vadd.f32 %v9593, %v9260
    %v9602 = vadd.f32 %v9594, %v9261
    %v9603 = vadd.f32 %v9595, %v9262
    %v9604 = vadd.f32 %v9596, %v9263
    %v9605 = vadd.f32 %v9597, %v9264
    %v9606 = vadd.f32 %v9598, %v9265
    %v9607 = vadd.f32 %v9599, %v9266
    %v9608 = vadd.f32 %v9600, %v9267
    %v9609 = vld [vmem:[%s3] sm:$0xff]
    %v9610 = vld [vmem:[%s3 + $0x8] sm:$0xff]
    %v9611 = vld [vmem:[%s3 + $0x10] sm:$0xff]
    %v9612 = vld [vmem:[%s3 + $0x18] sm:$0xff]
    %v9613 = vld [vmem:[%s3 + $0x20] sm:$0xff]
    %v9614 = vld [vmem:[%s3 + $0x28] sm:$0xff]
    %v9615 = vld [vmem:[%s3 + $0x30] sm:$0xff]
    %v9616 = vld [vmem:[%s3 + $0x38] sm:$0xff]
    %v9617 = vadd.f32 %v9601, %v9609
    %v9618 = vadd.f32 %v9602, %v9610
    %v9619 = vadd.f32 %v9603, %v9611
    %v9620 = vadd.f32 %v9604, %v9612
    %v9621 = vadd.f32 %v9605, %v9613
    %v9622 = vadd.f32 %v9606, %v9614
    %v9623 = vadd.f32 %v9607, %v9615
    %v9624 = vadd.f32 %v9608, %v9616
    %9625 = vst.msk [vmem:[#allocation7] sm:$0xff] %vm9171, %v9617
    %9626 = vst.msk [vmem:[#allocation7 + $0x8] sm:$0xff] %vm9171, %v9618
    %9627 = vst.msk [vmem:[#allocation7 + $0x10] sm:$0xff] %vm9171, %v9619
    %9628 = vst.msk [vmem:[#allocation7 + $0x18] sm:$0xff] %vm9171, %v9620
    %9629 = vst.msk [vmem:[#allocation7 + $0x20] sm:$0xff] %vm9171, %v9621
    %9630 = vst.msk [vmem:[#allocation7 + $0x28] sm:$0xff] %vm9171, %v9622
    %9631 = vst.msk [vmem:[#allocation7 + $0x30] sm:$0xff] %vm9171, %v9623
    %9632 = vst.msk [vmem:[#allocation7 + $0x38] sm:$0xff] %vm9171, %v9624
    %v9633 = vlaneseq
    %v9634 = vshrl.u32 %v9633, 7
    %v9635 = vsub.s32 1, %v9634
    %v9636 = vrot.slane %v8939, %v9635
    %9638 = vbcast.lane.b32.xlu0 %v9636, 256
    %v9639 = vpop.permute.xlu0 %9638
    %s9641 = sor.u32 256, 8
    %9642 = vbcast.lane.b32.xlu0 %v9636, %s9641
    %v9643 = vpop.permute.xlu0 %9642
    %v9644 = vlaneseq
    %v9645 = vshrl.u32 %v9644, 7
    %v9646 = vsub.s32 1, %v9645
    %v9647 = vrot.slane %v9054, %v9646
    %v9648 = vmul.f32 %v9639, %v9647
    %v9649 = vmul.f32 %v9643, %v9647
    %v9650 = vmul.f32 %v9105, %v9648
    %v9651 = vmul.f32 %v9105, %v9649
    %v9652 = vmul.f32 %v9109, %v9648
    %v9653 = vmul.f32 %v9109, %v9649
    %v9654 = vmul.f32 %v9113, %v9648
    %v9655 = vmul.f32 %v9113, %v9649
    %v9656 = vmul.f32 %v9117, %v9648
    %v9657 = vmul.f32 %v9117, %v9649
    %v9658 = vadd.f32 %v9650, %v9149
    %v9659 = vadd.f32 %v9651, %v9149
    %v9660 = vadd.f32 %v9652, %v9153
    %v9661 = vadd.f32 %v9653, %v9153
    %v9662 = vadd.f32 %v9654, %v9157
    %v9663 = vadd.f32 %v9655, %v9157
    %v9664 = vadd.f32 %v9656, %v9161
    %v9665 = vadd.f32 %v9657, %v9161
    %v9666 = vsel %vm9171, %v9658, -inf
    %9667 = vmax.xlane.f32.xlu0 %v9666
    %v9668 = vpop.xlane.xlu0 %9667
    %v9669 = vsel %vm9171, %v9659, -inf
    %9670 = vmax.xlane.f32.xlu0 %v9669
    %v9671 = vpop.xlane.xlu0 %9670
    %v9672 = vsel %vm9171, %v9660, -inf
    %9673 = vmax.xlane.f32.xlu0 %v9672
    %v9674 = vpop.xlane.xlu0 %9673
    %v9675 = vsel %vm9171, %v9661, -inf
    %9676 = vmax.xlane.f32.xlu0 %v9675
    %v9677 = vpop.xlane.xlu0 %9676
    %v9678 = vsel %vm9171, %v9662, -inf
    %9679 = vmax.xlane.f32.xlu0 %v9678
    %v9680 = vpop.xlane.xlu0 %9679
    %v9681 = vsel %vm9171, %v9663, -inf
    %9682 = vmax.xlane.f32.xlu0 %v9681
    %v9683 = vpop.xlane.xlu0 %9682
    %v9684 = vsel %vm9171, %v9664, -inf
    %9685 = vmax.xlane.f32.xlu0 %v9684
    %v9686 = vpop.xlane.xlu0 %9685
    %v9687 = vsel %vm9171, %v9665, -inf
    %9688 = vmax.xlane.f32.xlu0 %v9687
    %v9689 = vpop.xlane.xlu0 %9688
    %v9690 = vsub.f32 %v9658, %v9668
    %v9691 = vsub.f32 %v9659, %v9671
    %v9692 = vsub.f32 %v9660, %v9674
    %v9693 = vsub.f32 %v9661, %v9677
    %v9694 = vsub.f32 %v9662, %v9680
    %v9695 = vsub.f32 %v9663, %v9683
    %v9696 = vsub.f32 %v9664, %v9686
    %v9697 = vsub.f32 %v9665, %v9689
    %v9698 = vmul.f32 %v9690, 1.442695
    %v9699 = vpow.pop %v9698
    %v9700 = vmul.f32 %v9691, 1.442695
    %v9701 = vpow.pop %v9700
    %v9702 = vmul.f32 %v9692, 1.442695
    %v9703 = vpow.pop %v9702
    %v9704 = vmul.f32 %v9693, 1.442695
    %v9705 = vpow.pop %v9704
    %v9706 = vmul.f32 %v9694, 1.442695
    %v9707 = vpow.pop %v9706
    %v9708 = vmul.f32 %v9695, 1.442695
    %v9709 = vpow.pop %v9708
    %v9710 = vmul.f32 %v9696, 1.442695
    %v9711 = vpow.pop %v9710
    %v9712 = vmul.f32 %v9697, 1.442695
    %v9713 = vpow.pop %v9712
    %v9714 = vsel %vm9171, %v9699, 0.0
    %9715 = vadd.xlane.f32.xlu0 %v9714
    %v9716 = vpop.xlane.xlu0 %9715
    %v9717 = vsel %vm9171, %v9701, 0.0
    %9718 = vadd.xlane.f32.xlu0 %v9717
    %v9719 = vpop.xlane.xlu0 %9718
    %v9720 = vsel %vm9171, %v9703, 0.0
    %9721 = vadd.xlane.f32.xlu0 %v9720
    %v9722 = vpop.xlane.xlu0 %9721
    %v9723 = vsel %vm9171, %v9705, 0.0
    %9724 = vadd.xlane.f32.xlu0 %v9723
    %v9725 = vpop.xlane.xlu0 %9724
    %v9726 = vsel %vm9171, %v9707, 0.0
    %9727 = vadd.xlane.f32.xlu0 %v9726
    %v9728 = vpop.xlane.xlu0 %9727
    %v9729 = vsel %vm9171, %v9709, 0.0
    %9730 = vadd.xlane.f32.xlu0 %v9729
    %v9731 = vpop.xlane.xlu0 %9730
    %v9732 = vsel %vm9171, %v9711, 0.0
    %9733 = vadd.xlane.f32.xlu0 %v9732
    %v9734 = vpop.xlane.xlu0 %9733
    %v9735 = vsel %vm9171, %v9713, 0.0
    %9736 = vadd.xlane.f32.xlu0 %v9735
    %v9737 = vpop.xlane.xlu0 %9736
    %v9738 = vrcp.pop %v9716
    %v9739 = vmul.f32 %v9699, %v9738
    %v9740 = vrcp.pop %v9719
    %v9741 = vmul.f32 %v9701, %v9740
    %v9742 = vrcp.pop %v9722
    %v9743 = vmul.f32 %v9703, %v9742
    %v9744 = vrcp.pop %v9725
    %v9745 = vmul.f32 %v9705, %v9744
    %v9746 = vrcp.pop %v9728
    %v9747 = vmul.f32 %v9707, %v9746
    %v9748 = vrcp.pop %v9731
    %v9749 = vmul.f32 %v9709, %v9748
    %v9750 = vrcp.pop %v9734
    %v9751 = vmul.f32 %v9711, %v9750
    %v9752 = vrcp.pop %v9737
    %v9753 = vmul.f32 %v9713, %v9752
    %v9754 = vld [vmem:[%s7818] sm:$0xff]
    %v9755 = vld [vmem:[%s7818 + $0x8] sm:$0xff]
    %v9756 = vld [vmem:[%s7818 + $0x10] sm:$0xff]
    %v9757 = vld [vmem:[%s7818 + $0x18] sm:$0xff]
    %v9758 = vld [vmem:[%s7818 + $0x20] sm:$0xff]
    %v9759 = vld [vmem:[%s7818 + $0x28] sm:$0xff]
    %v9760 = vld [vmem:[%s7818 + $0x30] sm:$0xff]
    %v9761 = vld [vmem:[%s7818 + $0x38] sm:$0xff]
    %v9763 = vsel %vm9171, %v9739, 0
    %v9766 = vsel %vm9171, %v9741, 0
    %9768 = vmatprep.subr.mxu0 0.0
    %9769 = vmatpush1.msra.mxu0 %v9754
    %9770 = vmatprep.subr.mxu0 0.0
    %9771 = vmatpush1.msra.mxu0 %v9755
    %9772 = vmatprep.subr.mxu0 0.0
    %9773 = vmatpush1.msra.mxu0 0.0
    %9774 = vmatprep.subr.mxu0 0.0
    %9775 = vmatpush1.msra.mxu0 0.0
    %9776 = vmatprep.subr.mxu0 0.0
    %9777 = vmatpush1.msra.mxu0 0.0
    %9778 = vmatprep.subr.mxu0 0.0
    %9779 = vmatpush1.msra.mxu0 0.0
    %9780 = vmatprep.subr.mxu0 0.0
    %9781 = vmatpush1.msra.mxu0 0.0
    %9782 = vmatprep.subr.mxu0 0.0
    %9783 = vmatpush1.msra.mxu0 0.0
    %9784 = vmatprep.subr.mxu0 0.0
    %9785 = vmatpush1.msra.mxu0 0.0
    %9786 = vmatprep.subr.mxu0 0.0
    %9787 = vmatpush1.msra.mxu0 0.0
    %9788 = vmatprep.subr.mxu0 0.0
    %9789 = vmatpush1.msra.mxu0 0.0
    %9790 = vmatprep.subr.mxu0 0.0
    %9791 = vmatpush1.msra.mxu0 0.0
    %9792 = vmatprep.subr.mxu0 0.0
    %9793 = vmatpush1.msra.mxu0 0.0
    %9794 = vmatprep.subr.mxu0 0.0
    %9795 = vmatpush1.msra.mxu0 0.0
    %9796 = vmatprep.subr.mxu0 0.0
    %9797 = vmatpush1.msra.mxu0 0.0
    %9798 = vmatprep.subr.mxu0 0.0
    %9799 = vmatpush1.msra.mxu0 0.0
    %9800 = vmatprep.subr.mxu0 0.0
    %9801 = vmatpush1.msra.mxu0 0.0
    %9802 = vmatprep.subr.mxu0 0.0
    %9803 = vmatpush1.msra.mxu0 0.0
    %9804 = vmatprep.subr.mxu0 0.0
    %9805 = vmatpush1.msra.mxu0 0.0
    %9806 = vmatprep.subr.mxu0 0.0
    %9807 = vmatpush1.msra.mxu0 0.0
    %9808 = vmatprep.subr.mxu0 0.0
    %9809 = vmatpush1.msra.mxu0 0.0
    %9810 = vmatprep.subr.mxu0 0.0
    %9811 = vmatpush1.msra.mxu0 0.0
    %9812 = vmatprep.subr.mxu0 0.0
    %9813 = vmatpush1.msra.mxu0 0.0
    %9814 = vmatprep.subr.mxu0 0.0
    %9815 = vmatpush1.msra.mxu0 0.0
    %9816 = vmatprep.subr.mxu0 0.0
    %9817 = vmatpush1.msra.mxu0 0.0
    %9818 = vmatprep.subr.mxu0 0.0
    %9819 = vmatpush1.msra.mxu0 0.0
    %9820 = vmatprep.subr.mxu0 0.0
    %9821 = vmatpush1.msra.mxu0 0.0
    %9822 = vmatprep.subr.mxu0 0.0
    %9823 = vmatpush1.msra.mxu0 0.0
    %9824 = vmatprep.subr.mxu0 0.0
    %9825 = vmatpush1.msra.mxu0 0.0
    %9826 = vmatprep.subr.mxu0 0.0
    %9827 = vmatpush1.msra.mxu0 0.0
    %9828 = vmatprep.subr.mxu0 0.0
    %9829 = vmatpush1.msra.mxu0 0.0
    %9830 = vmatprep.subr.mxu0 0.0
    %9831 = vmatpush1.msra.mxu0 0.0
    %9832 = vmatprep.mubr.f32.mxu0 0.0
    %9833 = vmatmul.mubr.f32.gmra.mrb[0].mxu0 %v9763
    %v9834 = vpop.f32.mrb[0].mxu0
    %v9835 = vadd.f32 0.0, %v9834
    %v9836 = vpop.f32.mrb[0].mxu0
    %9837 = vmatprep.mubr.f32.mxu0 0.0
    %9838 = vmatmul.mubr.f32.gmra.mrb[0].mxu0 %v9766
    %v9839 = vpop.f32.mrb[0].mxu0
    %v9840 = vadd.f32 0.0, %v9839
    %v9841 = vpop.f32.mrb[0].mxu0
    %9842 = vdwg.mxu0
    %v9844 = vsel %vm9171, %v9743, 0
    %v9847 = vsel %vm9171, %v9745, 0
    %9849 = vmatprep.subr.mxu0 0.0
    %9850 = vmatpush1.msra.mxu0 %v9756
    %9851 = vmatprep.subr.mxu0 0.0
    %9852 = vmatpush1.msra.mxu0 %v9757
    %9853 = vmatprep.subr.mxu0 0.0
    %9854 = vmatpush1.msra.mxu0 0.0
    %9855 = vmatprep.subr.mxu0 0.0
    %9856 = vmatpush1.msra.mxu0 0.0
    %9857 = vmatprep.subr.mxu0 0.0
    %9858 = vmatpush1.msra.mxu0 0.0
    %9859 = vmatprep.subr.mxu0 0.0
    %9860 = vmatpush1.msra.mxu0 0.0
    %9861 = vmatprep.subr.mxu0 0.0
    %9862 = vmatpush1.msra.mxu0 0.0
    %9863 = vmatprep.subr.mxu0 0.0
    %9864 = vmatpush1.msra.mxu0 0.0
    %9865 = vmatprep.subr.mxu0 0.0
    %9866 = vmatpush1.msra.mxu0 0.0
    %9867 = vmatprep.subr.mxu0 0.0
    %9868 = vmatpush1.msra.mxu0 0.0
    %9869 = vmatprep.subr.mxu0 0.0
    %9870 = vmatpush1.msra.mxu0 0.0
    %9871 = vmatprep.subr.mxu0 0.0
    %9872 = vmatpush1.msra.mxu0 0.0
    %9873 = vmatprep.subr.mxu0 0.0
    %9874 = vmatpush1.msra.mxu0 0.0
    %9875 = vmatprep.subr.mxu0 0.0
    %9876 = vmatpush1.msra.mxu0 0.0
    %9877 = vmatprep.subr.mxu0 0.0
    %9878 = vmatpush1.msra.mxu0 0.0
    %9879 = vmatprep.subr.mxu0 0.0
    %9880 = vmatpush1.msra.mxu0 0.0
    %9881 = vmatprep.subr.mxu0 0.0
    %9882 = vmatpush1.msra.mxu0 0.0
    %9883 = vmatprep.subr.mxu0 0.0
    %9884 = vmatpush1.msra.mxu0 0.0
    %9885 = vmatprep.subr.mxu0 0.0
    %9886 = vmatpush1.msra.mxu0 0.0
    %9887 = vmatprep.subr.mxu0 0.0
    %9888 = vmatpush1.msra.mxu0 0.0
    %9889 = vmatprep.subr.mxu0 0.0
    %9890 = vmatpush1.msra.mxu0 0.0
    %9891 = vmatprep.subr.mxu0 0.0
    %9892 = vmatpush1.msra.mxu0 0.0
    %9893 = vmatprep.subr.mxu0 0.0
    %9894 = vmatpush1.msra.mxu0 0.0
    %9895 = vmatprep.subr.mxu0 0.0
    %9896 = vmatpush1.msra.mxu0 0.0
    %9897 = vmatprep.subr.mxu0 0.0
    %9898 = vmatpush1.msra.mxu0 0.0
    %9899 = vmatprep.subr.mxu0 0.0
    %9900 = vmatpush1.msra.mxu0 0.0
    %9901 = vmatprep.subr.mxu0 0.0
    %9902 = vmatpush1.msra.mxu0 0.0
    %9903 = vmatprep.subr.mxu0 0.0
    %9904 = vmatpush1.msra.mxu0 0.0
    %9905 = vmatprep.subr.mxu0 0.0
    %9906 = vmatpush1.msra.mxu0 0.0
    %9907 = vmatprep.subr.mxu0 0.0
    %9908 = vmatpush1.msra.mxu0 0.0
    %9909 = vmatprep.subr.mxu0 0.0
    %9910 = vmatpush1.msra.mxu0 0.0
    %9911 = vmatprep.subr.mxu0 0.0
    %9912 = vmatpush1.msra.mxu0 0.0
    %9913 = vmatprep.mubr.f32.mxu0 0.0
    %9914 = vmatmul.mubr.f32.gmra.mrb[0].mxu0 %v9844
    %v9915 = vpop.f32.mrb[0].mxu0
    %v9916 = vadd.f32 0.0, %v9915
    %v9917 = vpop.f32.mrb[0].mxu0
    %9918 = vmatprep.mubr.f32.mxu0 0.0
    %9919 = vmatmul.mubr.f32.gmra.mrb[0].mxu0 %v9847
    %v9920 = vpop.f32.mrb[0].mxu0
    %v9921 = vadd.f32 0.0, %v9920
    %v9922 = vpop.f32.mrb[0].mxu0
    %9923 = vdwg.mxu0
    %v9925 = vsel %vm9171, %v9747, 0
    %v9928 = vsel %vm9171, %v9749, 0
    %9930 = vmatprep.subr.mxu0 0.0
    %9931 = vmatpush1.msra.mxu0 %v9758
    %9932 = vmatprep.subr.mxu0 0.0
    %9933 = vmatpush1.msra.mxu0 %v9759
    %9934 = vmatprep.subr.mxu0 0.0
    %9935 = vmatpush1.msra.mxu0 0.0
    %9936 = vmatprep.subr.mxu0 0.0
    %9937 = vmatpush1.msra.mxu0 0.0
    %9938 = vmatprep.subr.mxu0 0.0
    %9939 = vmatpush1.msra.mxu0 0.0
    %9940 = vmatprep.subr.mxu0 0.0
    %9941 = vmatpush1.msra.mxu0 0.0
    %9942 = vmatprep.subr.mxu0 0.0
    %9943 = vmatpush1.msra.mxu0 0.0
    %9944 = vmatprep.subr.mxu0 0.0
    %9945 = vmatpush1.msra.mxu0 0.0
    %9946 = vmatprep.subr.mxu0 0.0
    %9947 = vmatpush1.msra.mxu0 0.0
    %9948 = vmatprep.subr.mxu0 0.0
    %9949 = vmatpush1.msra.mxu0 0.0
    %9950 = vmatprep.subr.mxu0 0.0
    %9951 = vmatpush1.msra.mxu0 0.0
    %9952 = vmatprep.subr.mxu0 0.0
    %9953 = vmatpush1.msra.mxu0 0.0
    %9954 = vmatprep.subr.mxu0 0.0
    %9955 = vmatpush1.msra.mxu0 0.0
    %9956 = vmatprep.subr.mxu0 0.0
    %9957 = vmatpush1.msra.mxu0 0.0
    %9958 = vmatprep.subr.mxu0 0.0
    %9959 = vmatpush1.msra.mxu0 0.0
    %9960 = vmatprep.subr.mxu0 0.0
    %9961 = vmatpush1.msra.mxu0 0.0
    %9962 = vmatprep.subr.mxu0 0.0
    %9963 = vmatpush1.msra.mxu0 0.0
    %9964 = vmatprep.subr.mxu0 0.0
    %9965 = vmatpush1.msra.mxu0 0.0
    %9966 = vmatprep.subr.mxu0 0.0
    %9967 = vmatpush1.msra.mxu0 0.0
    %9968 = vmatprep.subr.mxu0 0.0
    %9969 = vmatpush1.msra.mxu0 0.0
    %9970 = vmatprep.subr.mxu0 0.0
    %9971 = vmatpush1.msra.mxu0 0.0
    %9972 = vmatprep.subr.mxu0 0.0
    %9973 = vmatpush1.msra.mxu0 0.0
    %9974 = vmatprep.subr.mxu0 0.0
    %9975 = vmatpush1.msra.mxu0 0.0
    %9976 = vmatprep.subr.mxu0 0.0
    %9977 = vmatpush1.msra.mxu0 0.0
    %9978 = vmatprep.subr.mxu0 0.0
    %9979 = vmatpush1.msra.mxu0 0.0
    %9980 = vmatprep.subr.mxu0 0.0
    %9981 = vmatpush1.msra.mxu0 0.0
    %9982 = vmatprep.subr.mxu0 0.0
    %9983 = vmatpush1.msra.mxu0 0.0
    %9984 = vmatprep.subr.mxu0 0.0
    %9985 = vmatpush1.msra.mxu0 0.0
    %9986 = vmatprep.subr.mxu0 0.0
    %9987 = vmatpush1.msra.mxu0 0.0
    %9988 = vmatprep.subr.mxu0 0.0
    %9989 = vmatpush1.msra.mxu0 0.0
    %9990 = vmatprep.subr.mxu0 0.0
    %9991 = vmatpush1.msra.mxu0 0.0
    %9992 = vmatprep.subr.mxu0 0.0
    %9993 = vmatpush1.msra.mxu0 0.0
    %9994 = vmatprep.mubr.f32.mxu0 0.0
    %9995 = vmatmul.mubr.f32.gmra.mrb[0].mxu0 %v9925
    %v9996 = vpop.f32.mrb[0].mxu0
    %v9997 = vadd.f32 0.0, %v9996
    %v9998 = vpop.f32.mrb[0].mxu0
    %9999 = vmatprep.mubr.f32.mxu0 0.0
    %10000 = vmatmul.mubr.f32.gmra.mrb[0].mxu0 %v9928
    %v10001 = vpop.f32.mrb[0].mxu0
    %v10002 = vadd.f32 0.0, %v10001
    %v10003 = vpop.f32.mrb[0].mxu0
    %10004 = vdwg.mxu0
    %v10006 = vsel %vm9171, %v9751, 0
    %v10009 = vsel %vm9171, %v9753, 0
    %10011 = vmatprep.subr.mxu0 0.0
    %10012 = vmatpush1.msra.mxu0 %v9760
    %10013 = vmatprep.subr.mxu0 0.0
    %10014 = vmatpush1.msra.mxu0 %v9761
    %10015 = vmatprep.subr.mxu0 0.0
    %10016 = vmatpush1.msra.mxu0 0.0
    %10017 = vmatprep.subr.mxu0 0.0
    %10018 = vmatpush1.msra.mxu0 0.0
    %10019 = vmatprep.subr.mxu0 0.0
    %10020 = vmatpush1.msra.mxu0 0.0
    %10021 = vmatprep.subr.mxu0 0.0
    %10022 = vmatpush1.msra.mxu0 0.0
    %10023 = vmatprep.subr.mxu0 0.0
    %10024 = vmatpush1.msra.mxu0 0.0
    %10025 = vmatprep.subr.mxu0 0.0
    %10026 = vmatpush1.msra.mxu0 0.0
    %10027 = vmatprep.subr.mxu0 0.0
    %10028 = vmatpush1.msra.mxu0 0.0
    %10029 = vmatprep.subr.mxu0 0.0
    %10030 = vmatpush1.msra.mxu0 0.0
    %10031 = vmatprep.subr.mxu0 0.0
    %10032 = vmatpush1.msra.mxu0 0.0
    %10033 = vmatprep.subr.mxu0 0.0
    %10034 = vmatpush1.msra.mxu0 0.0
    %10035 = vmatprep.subr.mxu0 0.0
    %10036 = vmatpush1.msra.mxu0 0.0
    %10037 = vmatprep.subr.mxu0 0.0
    %10038 = vmatpush1.msra.mxu0 0.0
    %10039 = vmatprep.subr.mxu0 0.0
    %10040 = vmatpush1.msra.mxu0 0.0
    %10041 = vmatprep.subr.mxu0 0.0
    %10042 = vmatpush1.msra.mxu0 0.0
    %10043 = vmatprep.subr.mxu0 0.0
    %10044 = vmatpush1.msra.mxu0 0.0
    %10045 = vmatprep.subr.mxu0 0.0
    %10046 = vmatpush1.msra.mxu0 0.0
    %10047 = vmatprep.subr.mxu0 0.0
    %10048 = vmatpush1.msra.mxu0 0.0
    %10049 = vmatprep.subr.mxu0 0.0
    %10050 = vmatpush1.msra.mxu0 0.0
    %10051 = vmatprep.subr.mxu0 0.0
    %10052 = vmatpush1.msra.mxu0 0.0
    %10053 = vmatprep.subr.mxu0 0.0
    %10054 = vmatpush1.msra.mxu0 0.0
    %10055 = vmatprep.subr.mxu0 0.0
    %10056 = vmatpush1.msra.mxu0 0.0
    %10057 = vmatprep.subr.mxu0 0.0
    %10058 = vmatpush1.msra.mxu0 0.0
    %10059 = vmatprep.subr.mxu0 0.0
    %10060 = vmatpush1.msra.mxu0 0.0
    %10061 = vmatprep.subr.mxu0 0.0
    %10062 = vmatpush1.msra.mxu0 0.0
    %10063 = vmatprep.subr.mxu0 0.0
    %10064 = vmatpush1.msra.mxu0 0.0
    %10065 = vmatprep.subr.mxu0 0.0
    %10066 = vmatpush1.msra.mxu0 0.0
    %10067 = vmatprep.subr.mxu0 0.0
    %10068 = vmatpush1.msra.mxu0 0.0
    %10069 = vmatprep.subr.mxu0 0.0
    %10070 = vmatpush1.msra.mxu0 0.0
    %10071 = vmatprep.subr.mxu0 0.0
    %10072 = vmatpush1.msra.mxu0 0.0
    %10073 = vmatprep.subr.mxu0 0.0
    %10074 = vmatpush1.msra.mxu0 0.0
    %10075 = vmatprep.mubr.f32.mxu0 0.0
    %10076 = vmatmul.mubr.f32.gmra.mrb[0].mxu0 %v10006
    %v10077 = vpop.f32.mrb[0].mxu0
    %v10078 = vadd.f32 0.0, %v10077
    %v10079 = vpop.f32.mrb[0].mxu0
    %10080 = vmatprep.mubr.f32.mxu0 0.0
    %10081 = vmatmul.mubr.f32.gmra.mrb[0].mxu0 %v10009
    %v10082 = vpop.f32.mrb[0].mxu0
    %v10083 = vadd.f32 0.0, %v10082
    %v10084 = vpop.f32.mrb[0].mxu0
    %10085 = vdwg.mxu0
    %v10086 = vmul.f32 %v9592, %v9835
    %v10087 = vmul.f32 %v9592, %v9840
    %v10088 = vmul.f32 %v9592, %v9916
    %v10089 = vmul.f32 %v9592, %v9921
    %v10090 = vmul.f32 %v9592, %v9997
    %v10091 = vmul.f32 %v9592, %v10002
    %v10092 = vmul.f32 %v9592, %v10078
    %v10093 = vmul.f32 %v9592, %v10083
    %v10094 = vadd.f32 %v10086, %v9754
    %v10095 = vadd.f32 %v10087, %v9755
    %v10096 = vadd.f32 %v10088, %v9756
    %v10097 = vadd.f32 %v10089, %v9757
    %v10098 = vadd.f32 %v10090, %v9758
    %v10099 = vadd.f32 %v10091, %v9759
    %v10100 = vadd.f32 %v10092, %v9760
    %v10101 = vadd.f32 %v10093, %v9761
    %s10102 = scalar_lea.vmem %s3, 64
    %v10103 = vld [vmem:[%s10102] sm:$0xff]
    %v10104 = vld [vmem:[%s10102 + $0x8] sm:$0xff]
    %v10105 = vld [vmem:[%s10102 + $0x10] sm:$0xff]
    %v10106 = vld [vmem:[%s10102 + $0x18] sm:$0xff]
    %v10107 = vld [vmem:[%s10102 + $0x20] sm:$0xff]
    %v10108 = vld [vmem:[%s10102 + $0x28] sm:$0xff]
    %v10109 = vld [vmem:[%s10102 + $0x30] sm:$0xff]
    %v10110 = vld [vmem:[%s10102 + $0x38] sm:$0xff]
    %v10111 = vadd.f32 %v10094, %v10103
    %v10112 = vadd.f32 %v10095, %v10104
    %v10113 = vadd.f32 %v10096, %v10105
    %v10114 = vadd.f32 %v10097, %v10106
    %v10115 = vadd.f32 %v10098, %v10107
    %v10116 = vadd.f32 %v10099, %v10108
    %v10117 = vadd.f32 %v10100, %v10109
    %v10118 = vadd.f32 %v10101, %v10110
    %s10119 = scalar_lea.vmem [#allocation7], 64
    %10120 = vst.msk [vmem:[%s10119] sm:$0xff] %vm9171, %v10111
    %10121 = vst.msk [vmem:[%s10119 + $0x8] sm:$0xff] %vm9171, %v10112
    %10122 = vst.msk [vmem:[%s10119 + $0x10] sm:$0xff] %vm9171, %v10113
    %10123 = vst.msk [vmem:[%s10119 + $0x18] sm:$0xff] %vm9171, %v10114
    %10124 = vst.msk [vmem:[%s10119 + $0x20] sm:$0xff] %vm9171, %v10115
    %10125 = vst.msk [vmem:[%s10119 + $0x28] sm:$0xff] %vm9171, %v10116
    %10126 = vst.msk [vmem:[%s10119 + $0x30] sm:$0xff] %vm9171, %v10117
    %10127 = vst.msk [vmem:[%s10119 + $0x38] sm:$0xff] %vm9171, %v10118
    // Predicated region
    $region58: #{_lambda_.1} parent=1 // pred_check
      _
    $region59: #{_lambda_.1} parent=1 // pred_check_branch
      %10129 = sbr.rel (0) target = $region61
    $region60: #{_lambda_.1} parent=1 // pred_region
      %s10131 = ssub.s32 2048, 2048
      %10132 = vsyncadd [#allocation8], %s10131
      %s10133 = sshll.u32 [#allocation7], 4
      %s10134 = int_to_ptr.vmem [resolvable:$true] %s10133
      %10139 = dma.vmem_to_hbm [thread:$0]  %s10134, 2048, %s14, [#allocation8], 128, 128, 8
    $region61: #{_lambda_.1} parent=1 // pred_fallthru
      _
    // Predicated region
    $region62: #{_lambda_.1} parent=1 // pred_check
      _
    $region63: #{_lambda_.1} parent=1 // pred_check_branch
      %10141 = sbr.rel (0) target = $region65
    $region64: #{_lambda_.1} parent=1 // pred_region
      %10142 = dma.done [#allocation8], 2048
    $region65: #{_lambda_.1} parent=1 // pred_fallthru
      _
    %10143 = vsyncpa [#allocation8], 1

</llo_original>
